<compile_context>
chip_gen: v7x
topology: tpu7x:2x2x1
jax: 0.10.0
libtpu: 0.0.40
codegen_flags: <defaults>
</compile_context>

<pallas_src>
import functools

import jax
import jax.numpy as jnp
from jax.experimental import pallas as pl
from jax.experimental.pallas import tpu as pltpu

_BN_EPS = 1e-5


# --------------------------------- kernel ---------------------------------
def _resblock_kernel(x_ref, w1_ref, g1_ref, b1_ref, w2_ref, g2_ref, b2_ref,
                     o_ref, pad_ref, *, ksize):
    n, h, w, c = x_ref.shape            # c = lane-padded channel count (multiple of 128)
    p = (ksize - 1) // 2
    m = n * h * w
    f32 = jnp.float32

    # Zero only the halo of the padded scratch, once for both stages
    # (each stage's staging write fully overwrites the interior).
    pad_ref[:, :p, :, :] = jnp.zeros((n, p, w + 2 * p, c), f32)
    pad_ref[:, h + p:, :, :] = jnp.zeros((n, p, w + 2 * p, c), f32)
    pad_ref[:, :, :p, :] = jnp.zeros((n, h + 2 * p, p, c), f32)
    pad_ref[:, :, w + p:, :] = jnp.zeros((n, h + 2 * p, p, c), f32)

    x = x_ref[...].astype(f32)

    def stage(inp4, w_ref, g_ref, b_ref):
        # depthwise 3x3 (pad=1) + pointwise 1x1, fused into k*k MXU matmuls.
        pad_ref[:, p:h + p, p:w + p, :] = inp4
        acc = jnp.zeros((m, c), f32)
        for dy in range(ksize):
            for dx in range(ksize):
                t = dy * ksize + dx
                win = pad_ref[:, dy:dy + h, dx:dx + w, :].reshape(m, c)
                acc = acc + jnp.dot(win, w_ref[t], preferred_element_type=f32)

        # Activation.
        y = jnp.tanh(acc)

        # Fused training-mode BatchNorm over the M = N*H*W rows (per channel/lane):
        # single sum / sum-of-squares pass, gamma/beta folded into one scale+shift.
        inv_m = 1.0 / m
        mean = jnp.sum(y, axis=0, keepdims=True) * inv_m          # (1, C)
        ex2 = jnp.sum(y * y, axis=0, keepdims=True) * inv_m       # (1, C)
        var = ex2 - mean * mean                                   # safe: |tanh| <= 1
        scale = g_ref[...] * jax.lax.rsqrt(var + _BN_EPS)
        shift = b_ref[...] - mean * scale
        return (y * scale + shift).reshape(n, h, w, c)

    out = stage(x, w1_ref, g1_ref, b1_ref)
    out = stage(out, w2_ref, g2_ref, b2_ref)
    o_ref[...] = (out + x).astype(o_ref.dtype)                    # residual add


# --------------------------------- wrapper ---------------------------------
def _full_spec(shape):
    nd = len(shape)
    return pl.BlockSpec(shape, lambda i, _nd=nd: (0,) * _nd)


def _res_block_padded_nhwc(x, w1, g1, b1, w2, g2, b2, *, ksize):
    n, h, w, c = x.shape
    p = (ksize - 1) // 2
    kernel = functools.partial(_resblock_kernel, ksize=ksize)
    return pl.pallas_call(
        kernel,
        out_shape=jax.ShapeDtypeStruct((n, h, w, c), x.dtype),
        grid_spec=pltpu.PrefetchScalarGridSpec(
            num_scalar_prefetch=0,
            grid=(1,),
            in_specs=[_full_spec(x.shape),
                      _full_spec(w1.shape), _full_spec(g1.shape), _full_spec(b1.shape),
                      _full_spec(w2.shape), _full_spec(g2.shape), _full_spec(b2.shape)],
            out_specs=_full_spec((n, h, w, c)),
            scratch_shapes=[pltpu.VMEM((n, h + 2 * p, w + 2 * p, c), jnp.float32)]),
        compiler_params=pltpu.CompilerParams(dimension_semantics=("arbitrary",)),
    )(x, w1, g1, b1, w2, g2, b2)


def _fuse_and_pad(dw, pw, g, b, cp):
    """Fuse depthwise+pointwise weights and zero-pad channels to the lane-dense size."""
    kk, c = dw.shape
    fused = dw[:, :, None] * pw[None, :, :]                       # (k*k, C, C)
    fused = jnp.pad(fused, ((0, 0), (0, cp - c), (0, cp - c)))
    gp = jnp.pad(g, ((0, 0), (0, cp - c)))
    bp = jnp.pad(b, ((0, 0), (0, cp - c)))
    return fused, gp, bp


def res_block_forward(x_nchw, params, *, ksize=3):
    """Public entry point: NCHW in / NCHW out, matching the PyTorch module."""
    n, c, h, w = x_nchw.shape
    cp = ((c + 127) // 128) * 128                                 # lane-dense channels
    x = jnp.transpose(x_nchw, (0, 2, 3, 1))                       # NCHW -> NHWC (glue)
    x = jnp.pad(x, ((0, 0), (0, 0), (0, 0), (0, cp - c)))
    w1, g1, b1 = _fuse_and_pad(params["dw1"], params["pw1"], params["g1"], params["b1"], cp)
    w2, g2, b2 = _fuse_and_pad(params["dw2"], params["pw2"], params["g2"], params["b2"], cp)
    y = _res_block_padded_nhwc(x, w1, g1, b1, w2, g2, b2, ksize=ksize)
    return jnp.transpose(y[..., :c], (0, 3, 1, 2))                # NHWC -> NCHW


# ---------------- pure-JAX reference (unfused, mirrors the PyTorch module) ----------------
def _stage_ref(x, dw, pw, gamma, beta, ksize):
    n, h, w, c = x.shape
    p = (ksize - 1) // 2
    xp = jnp.pad(x, ((0, 0), (p, p), (p, p), (0, 0)))
    acc = jnp.zeros_like(x)
    for dy in range(ksize):
        for dx in range(ksize):
            acc = acc + xp[:, dy:dy + h, dx:dx + w, :] * dw[dy * ksize + dx]
    y = jnp.zeros_like(x)
    for ci in range(c):
        y = y + acc[..., ci:ci + 1] * pw[ci:ci + 1, :]
    y = jnp.tanh(y)
    mean = jnp.mean(y, axis=(0, 1, 2), keepdims=True)
    var = jnp.mean((y - mean) ** 2, axis=(0, 1, 2), keepdims=True)
    y = (y - mean) * jax.lax.rsqrt(var + _BN_EPS)
    return y * gamma.reshape(1, 1, 1, c) + beta.reshape(1, 1, 1, c)


def res_block_reference(x_nchw, params, *, ksize=3):
    x = jnp.transpose(x_nchw, (0, 2, 3, 1))
    o = _stage_ref(x, params["dw1"], params["pw1"], params["g1"], params["b1"], ksize)
    o = _stage_ref(o, params["dw2"], params["pw2"], params["g2"], params["b2"], ksize)
    return jnp.transpose(o + x, (0, 3, 1, 2))


def make_params(key, c, ksize=3):
    """Deterministic synthetic parameters (shapes from the module's __init__)."""
    ks = jax.random.split(key, 8)
    params = {}
    for i, tag in enumerate(("1", "2")):
        # PyTorch depthwise weight: (C, 1, k, k)  -> kernel layout (k*k, C)
        w_dw = 0.3 * jax.random.normal(ks[4 * i + 0], (c, 1, ksize, ksize), jnp.float32)
        params["dw" + tag] = jnp.transpose(w_dw.reshape(c, ksize * ksize), (1, 0))
        # PyTorch pointwise weight: (Cout, Cin, 1, 1) -> kernel layout (Cin, Cout)
        w_pw = 0.5 * jax.random.normal(ks[4 * i + 1], (c, c, 1, 1), jnp.float32)
        params["pw" + tag] = jnp.transpose(w_pw[:, :, 0, 0], (1, 0))
        # BatchNorm2d affine parameters (gamma, beta), shape (C,) -> (1, C)
        params["g" + tag] = 1.0 + 0.1 * jax.random.normal(ks[4 * i + 2], (1, c), jnp.float32)
        params["b" + tag] = 0.1 * jax.random.normal(ks[4 * i + 3], (1, c), jnp.float32)
    return params


if __name__ == "__main__":
    key = jax.random.PRNGKey(0)
    kx, kp = jax.random.split(key)

    N, C, H, W = 2, 4, 16, 16                       # NCHW, as the PyTorch module expects
    x = jax.random.normal(kx, (N, C, H, W), jnp.float32)
    params = make_params(kp, C, ksize=3)

    out = jax.block_until_ready(res_block_forward(x, params))
    ref = jax.block_until_ready(res_block_reference(x, params))

    assert out.shape == x.shape and out.dtype == x.dtype
    max_err = float(jnp.max(jnp.abs(out - ref)))
    # tolerance covers MXU f32 pass rounding + the fused E[y^2]-mean^2 BN variance
    assert max_err < 2e-3, f"mismatch vs reference: max abs err = {max_err}"
    print("KERNEL_OK")
</pallas_src>

<mosaic_0001>
module attributes {stable_mosaic.version = 11 : i64} {
  func.func @_resblock_kernel(%arg0: i32, %arg1: memref<2x16x16x128xf32, #tpu.memory_space<vmem>>, %arg2: memref<9x128x128xf32, #tpu.memory_space<vmem>>, %arg3: memref<1x128xf32, #tpu.memory_space<vmem>>, %arg4: memref<1x128xf32, #tpu.memory_space<vmem>>, %arg5: memref<9x128x128xf32, #tpu.memory_space<vmem>>, %arg6: memref<1x128xf32, #tpu.memory_space<vmem>>, %arg7: memref<1x128xf32, #tpu.memory_space<vmem>>, %arg8: memref<2x16x16x128xf32, #tpu.memory_space<vmem>>, %arg9: memref<2x18x18x128xf32, #tpu.memory_space<vmem>>) attributes {dimension_semantics = [#tpu.dimension_semantics<arbitrary>], iteration_bounds = array<i64: 1>, scalar_prefetch = 0 : i64, scratch_operands = 1 : i64, tpu.core_type = #tpu.core_type<tc>, window_params = [{pipeline_mode = #tpu.pipeline_mode<synchronous>, transform_indices = @transform_0, window_bounds = array<i64: 2, 16, 16, 128>}, {pipeline_mode = #tpu.pipeline_mode<synchronous>, transform_indices = @transform_1, window_bounds = array<i64: 9, 128, 128>}, {pipeline_mode = #tpu.pipeline_mode<synchronous>, transform_indices = @transform_2, window_bounds = array<i64: 1, 128>}, {pipeline_mode = #tpu.pipeline_mode<synchronous>, transform_indices = @transform_3, window_bounds = array<i64: 1, 128>}, {pipeline_mode = #tpu.pipeline_mode<synchronous>, transform_indices = @transform_4, window_bounds = array<i64: 9, 128, 128>}, {pipeline_mode = #tpu.pipeline_mode<synchronous>, transform_indices = @transform_5, window_bounds = array<i64: 1, 128>}, {pipeline_mode = #tpu.pipeline_mode<synchronous>, transform_indices = @transform_6, window_bounds = array<i64: 1, 128>}, {pipeline_mode = #tpu.pipeline_mode<synchronous>, transform_indices = @transform_7, window_bounds = array<i64: 2, 16, 16, 128>}]} {
    %cst = arith.constant 0.000000e+00 : f32
    %0 = vector.broadcast %cst : f32 to vector<2x1x18x128xf32>
    %c0 = arith.constant 0 : index
    %c0_0 = arith.constant 0 : index
    %c0_1 = arith.constant 0 : index
    %c0_2 = arith.constant 0 : index
    %1 = vector.load %arg9[%c0, %c0_0, %c0_1, %c0_2] : memref<2x18x18x128xf32, #tpu.memory_space<vmem>>, vector<2x1x18x128xf32>
    tpu.vector_store %arg9[%c0, %c0_0, %c0_1, %c0_2], %0 {strides = array<i32>} : memref<2x18x18x128xf32, #tpu.memory_space<vmem>>, vector<2x1x18x128xf32>,
    %cst_3 = arith.constant 0.000000e+00 : f32
    %2 = vector.broadcast %cst_3 : f32 to vector<2x1x18x128xf32>
    %c0_4 = arith.constant 0 : index
    %c17 = arith.constant 17 : index
    %c0_5 = arith.constant 0 : index
    %c0_6 = arith.constant 0 : index
    %3 = vector.load %arg9[%c0_4, %c17, %c0_5, %c0_6] : memref<2x18x18x128xf32, #tpu.memory_space<vmem>>, vector<2x1x18x128xf32>
    tpu.vector_store %arg9[%c0_4, %c17, %c0_5, %c0_6], %2 {strides = array<i32>} : memref<2x18x18x128xf32, #tpu.memory_space<vmem>>, vector<2x1x18x128xf32>,
    %cst_7 = arith.constant 0.000000e+00 : f32
    %4 = vector.broadcast %cst_7 : f32 to vector<2x18x1x128xf32>
    %c0_8 = arith.constant 0 : index
    %c0_9 = arith.constant 0 : index
    %c0_10 = arith.constant 0 : index
    %c0_11 = arith.constant 0 : index
    %5 = vector.load %arg9[%c0_8, %c0_9, %c0_10, %c0_11] : memref<2x18x18x128xf32, #tpu.memory_space<vmem>>, vector<2x18x1x128xf32>
    tpu.vector_store %arg9[%c0_8, %c0_9, %c0_10, %c0_11], %4 {strides = array<i32>} : memref<2x18x18x128xf32, #tpu.memory_space<vmem>>, vector<2x18x1x128xf32>,
    %cst_12 = arith.constant 0.000000e+00 : f32
    %6 = vector.broadcast %cst_12 : f32 to vector<2x18x1x128xf32>
    %c0_13 = arith.constant 0 : index
    %c0_14 = arith.constant 0 : index
    %c17_15 = arith.constant 17 : index
    %c0_16 = arith.constant 0 : index
    %7 = vector.load %arg9[%c0_13, %c0_14, %c17_15, %c0_16] : memref<2x18x18x128xf32, #tpu.memory_space<vmem>>, vector<2x18x1x128xf32>
    tpu.vector_store %arg9[%c0_13, %c0_14, %c17_15, %c0_16], %6 {strides = array<i32>} : memref<2x18x18x128xf32, #tpu.memory_space<vmem>>, vector<2x18x1x128xf32>,
    %c0_17 = arith.constant 0 : index
    %c0_18 = arith.constant 0 : index
    %c0_19 = arith.constant 0 : index
    %c0_20 = arith.constant 0 : index
    %8 = vector.load %arg1[%c0_17, %c0_18, %c0_19, %c0_20] : memref<2x16x16x128xf32, #tpu.memory_space<vmem>>, vector<2x16x16x128xf32>
    %c0_21 = arith.constant 0 : index
    %c1 = arith.constant 1 : index
    %c1_22 = arith.constant 1 : index
    %c0_23 = arith.constant 0 : index
    %9 = vector.load %arg9[%c0_21, %c1, %c1_22, %c0_23] : memref<2x18x18x128xf32, #tpu.memory_space<vmem>>, vector<2x16x16x128xf32>
    tpu.vector_store %arg9[%c0_21, %c1, %c1_22, %c0_23], %8 {strides = array<i32>} : memref<2x18x18x128xf32, #tpu.memory_space<vmem>>, vector<2x16x16x128xf32>,
    %cst_24 = arith.constant 0.000000e+00 : f32
    %10 = vector.broadcast %cst_24 : f32 to vector<512x128xf32>
    %c0_25 = arith.constant 0 : index
    %c0_26 = arith.constant 0 : index
    %c0_27 = arith.constant 0 : index
    %c0_28 = arith.constant 0 : index
    %11 = vector.load %arg9[%c0_25, %c0_26, %c0_27, %c0_28] : memref<2x18x18x128xf32, #tpu.memory_space<vmem>>, vector<2x16x16x128xf32>
    %12 = vector.shape_cast %11 : vector<2x16x16x128xf32> to vector<512x128xf32>
    %c0_29 = arith.constant 0 : index
    %c0_30 = arith.constant 0 : index
    %c0_31 = arith.constant 0 : index
    %13 = vector.load %arg2[%c0_29, %c0_30, %c0_31] : memref<9x128x128xf32, #tpu.memory_space<vmem>>, vector<1x128x128xf32>
    %14 = vector.shape_cast %13 : vector<1x128x128xf32> to vector<128x128xf32>
    %cst_32 = arith.constant dense<0.000000e+00> : vector<512x128xf32>
    %15 = tpu.matmul %12, %14, %cst_32 {dimension_numbers = #tpu.dot_dimension_numbers<[1], [0], [0], [1], [0, 0, 1, 1], [], []>} : vector<512x128xf32>, vector<128x128xf32>, vector<512x128xf32> -> vector<512x128xf32>
    %16 = arith.addf %10, %15 : vector<512x128xf32>
    %c0_33 = arith.constant 0 : index
    %c0_34 = arith.constant 0 : index
    %c1_35 = arith.constant 1 : index
    %c0_36 = arith.constant 0 : index
    %17 = vector.load %arg9[%c0_33, %c0_34, %c1_35, %c0_36] : memref<2x18x18x128xf32, #tpu.memory_space<vmem>>, vector<2x16x16x128xf32>
    %18 = vector.shape_cast %17 : vector<2x16x16x128xf32> to vector<512x128xf32>
    %c1_37 = arith.constant 1 : index
    %c0_38 = arith.constant 0 : index
    %c0_39 = arith.constant 0 : index
    %19 = vector.load %arg2[%c1_37, %c0_38, %c0_39] : memref<9x128x128xf32, #tpu.memory_space<vmem>>, vector<1x128x128xf32>
    %20 = vector.shape_cast %19 : vector<1x128x128xf32> to vector<128x128xf32>
    %cst_40 = arith.constant dense<0.000000e+00> : vector<512x128xf32>
    %21 = tpu.matmul %18, %20, %cst_40 {dimension_numbers = #tpu.dot_dimension_numbers<[1], [0], [0], [1], [0, 0, 1, 1], [], []>} : vector<512x128xf32>, vector<128x128xf32>, vector<512x128xf32> -> vector<512x128xf32>
    %22 = arith.addf %16, %21 : vector<512x128xf32>
    %c0_41 = arith.constant 0 : index
    %c0_42 = arith.constant 0 : index
    %c2 = arith.constant 2 : index
    %c0_43 = arith.constant 0 : index
    %23 = vector.load %arg9[%c0_41, %c0_42, %c2, %c0_43] : memref<2x18x18x128xf32, #tpu.memory_space<vmem>>, vector<2x16x16x128xf32>
    %24 = vector.shape_cast %23 : vector<2x16x16x128xf32> to vector<512x128xf32>
    %c2_44 = arith.constant 2 : index
    %c0_45 = arith.constant 0 : index
    %c0_46 = arith.constant 0 : index
    %25 = vector.load %arg2[%c2_44, %c0_45, %c0_46] : memref<9x128x128xf32, #tpu.memory_space<vmem>>, vector<1x128x128xf32>
    %26 = vector.shape_cast %25 : vector<1x128x128xf32> to vector<128x128xf32>
    %cst_47 = arith.constant dense<0.000000e+00> : vector<512x128xf32>
    %27 = tpu.matmul %24, %26, %cst_47 {dimension_numbers = #tpu.dot_dimension_numbers<[1], [0], [0], [1], [0, 0, 1, 1], [], []>} : vector<512x128xf32>, vector<128x128xf32>, vector<512x128xf32> -> vector<512x128xf32>
    %28 = arith.addf %22, %27 : vector<512x128xf32>
    %c0_48 = arith.constant 0 : index
    %c1_49 = arith.constant 1 : index
    %c0_50 = arith.constant 0 : index
    %c0_51 = arith.constant 0 : index
    %29 = vector.load %arg9[%c0_48, %c1_49, %c0_50, %c0_51] : memref<2x18x18x128xf32, #tpu.memory_space<vmem>>, vector<2x16x16x128xf32>
    %30 = vector.shape_cast %29 : vector<2x16x16x128xf32> to vector<512x128xf32>
    %c3 = arith.constant 3 : index
    %c0_52 = arith.constant 0 : index
    %c0_53 = arith.constant 0 : index
    %31 = vector.load %arg2[%c3, %c0_52, %c0_53] : memref<9x128x128xf32, #tpu.memory_space<vmem>>, vector<1x128x128xf32>
    %32 = vector.shape_cast %31 : vector<1x128x128xf32> to vector<128x128xf32>
    %cst_54 = arith.constant dense<0.000000e+00> : vector<512x128xf32>
    %33 = tpu.matmul %30, %32, %cst_54 {dimension_numbers = #tpu.dot_dimension_numbers<[1], [0], [0], [1], [0, 0, 1, 1], [], []>} : vector<512x128xf32>, vector<128x128xf32>, vector<512x128xf32> -> vector<512x128xf32>
    %34 = arith.addf %28, %33 : vector<512x128xf32>
    %c0_55 = arith.constant 0 : index
    %c1_56 = arith.constant 1 : index
    %c1_57 = arith.constant 1 : index
    %c0_58 = arith.constant 0 : index
    %35 = vector.load %arg9[%c0_55, %c1_56, %c1_57, %c0_58] : memref<2x18x18x128xf32, #tpu.memory_space<vmem>>, vector<2x16x16x128xf32>
    %36 = vector.shape_cast %35 : vector<2x16x16x128xf32> to vector<512x128xf32>
    %c4 = arith.constant 4 : index
    %c0_59 = arith.constant 0 : index
    %c0_60 = arith.constant 0 : index
    %37 = vector.load %arg2[%c4, %c0_59, %c0_60] : memref<9x128x128xf32, #tpu.memory_space<vmem>>, vector<1x128x128xf32>
    %38 = vector.shape_cast %37 : vector<1x128x128xf32> to vector<128x128xf32>
    %cst_61 = arith.constant dense<0.000000e+00> : vector<512x128xf32>
    %39 = tpu.matmul %36, %38, %cst_61 {dimension_numbers = #tpu.dot_dimension_numbers<[1], [0], [0], [1], [0, 0, 1, 1], [], []>} : vector<512x128xf32>, vector<128x128xf32>, vector<512x128xf32> -> vector<512x128xf32>
    %40 = arith.addf %34, %39 : vector<512x128xf32>
    %c0_62 = arith.constant 0 : index
    %c1_63 = arith.constant 1 : index
    %c2_64 = arith.constant 2 : index
    %c0_65 = arith.constant 0 : index
    %41 = vector.load %arg9[%c0_62, %c1_63, %c2_64, %c0_65] : memref<2x18x18x128xf32, #tpu.memory_space<vmem>>, vector<2x16x16x128xf32>
    %42 = vector.shape_cast %41 : vector<2x16x16x128xf32> to vector<512x128xf32>
    %c5 = arith.constant 5 : index
    %c0_66 = arith.constant 0 : index
    %c0_67 = arith.constant 0 : index
    %43 = vector.load %arg2[%c5, %c0_66, %c0_67] : memref<9x128x128xf32, #tpu.memory_space<vmem>>, vector<1x128x128xf32>
    %44 = vector.shape_cast %43 : vector<1x128x128xf32> to vector<128x128xf32>
    %cst_68 = arith.constant dense<0.000000e+00> : vector<512x128xf32>
    %45 = tpu.matmul %42, %44, %cst_68 {dimension_numbers = #tpu.dot_dimension_numbers<[1], [0], [0], [1], [0, 0, 1, 1], [], []>} : vector<512x128xf32>, vector<128x128xf32>, vector<512x128xf32> -> vector<512x128xf32>
    %46 = arith.addf %40, %45 : vector<512x128xf32>
    %c0_69 = arith.constant 0 : index
    %c2_70 = arith.constant 2 : index
    %c0_71 = arith.constant 0 : index
    %c0_72 = arith.constant 0 : index
    %47 = vector.load %arg9[%c0_69, %c2_70, %c0_71, %c0_72] : memref<2x18x18x128xf32, #tpu.memory_space<vmem>>, vector<2x16x16x128xf32>
    %48 = vector.shape_cast %47 : vector<2x16x16x128xf32> to vector<512x128xf32>
    %c6 = arith.constant 6 : index
    %c0_73 = arith.constant 0 : index
    %c0_74 = arith.constant 0 : index
    %49 = vector.load %arg2[%c6, %c0_73, %c0_74] : memref<9x128x128xf32, #tpu.memory_space<vmem>>, vector<1x128x128xf32>
    %50 = vector.shape_cast %49 : vector<1x128x128xf32> to vector<128x128xf32>
    %cst_75 = arith.constant dense<0.000000e+00> : vector<512x128xf32>
    %51 = tpu.matmul %48, %50, %cst_75 {dimension_numbers = #tpu.dot_dimension_numbers<[1], [0], [0], [1], [0, 0, 1, 1], [], []>} : vector<512x128xf32>, vector<128x128xf32>, vector<512x128xf32> -> vector<512x128xf32>
    %52 = arith.addf %46, %51 : vector<512x128xf32>
    %c0_76 = arith.constant 0 : index
    %c2_77 = arith.constant 2 : index
    %c1_78 = arith.constant 1 : index
    %c0_79 = arith.constant 0 : index
    %53 = vector.load %arg9[%c0_76, %c2_77, %c1_78, %c0_79] : memref<2x18x18x128xf32, #tpu.memory_space<vmem>>, vector<2x16x16x128xf32>
    %54 = vector.shape_cast %53 : vector<2x16x16x128xf32> to vector<512x128xf32>
    %c7 = arith.constant 7 : index
    %c0_80 = arith.constant 0 : index
    %c0_81 = arith.constant 0 : index
    %55 = vector.load %arg2[%c7, %c0_80, %c0_81] : memref<9x128x128xf32, #tpu.memory_space<vmem>>, vector<1x128x128xf32>
    %56 = vector.shape_cast %55 : vector<1x128x128xf32> to vector<128x128xf32>
    %cst_82 = arith.constant dense<0.000000e+00> : vector<512x128xf32>
    %57 = tpu.matmul %54, %56, %cst_82 {dimension_numbers = #tpu.dot_dimension_numbers<[1], [0], [0], [1], [0, 0, 1, 1], [], []>} : vector<512x128xf32>, vector<128x128xf32>, vector<512x128xf32> -> vector<512x128xf32>
    %58 = arith.addf %52, %57 : vector<512x128xf32>
    %c0_83 = arith.constant 0 : index
    %c2_84 = arith.constant 2 : index
    %c2_85 = arith.constant 2 : index
    %c0_86 = arith.constant 0 : index
    %59 = vector.load %arg9[%c0_83, %c2_84, %c2_85, %c0_86] : memref<2x18x18x128xf32, #tpu.memory_space<vmem>>, vector<2x16x16x128xf32>
    %60 = vector.shape_cast %59 : vector<2x16x16x128xf32> to vector<512x128xf32>
    %c8 = arith.constant 8 : index
    %c0_87 = arith.constant 0 : index
    %c0_88 = arith.constant 0 : index
    %61 = vector.load %arg2[%c8, %c0_87, %c0_88] : memref<9x128x128xf32, #tpu.memory_space<vmem>>, vector<1x128x128xf32>
    %62 = vector.shape_cast %61 : vector<1x128x128xf32> to vector<128x128xf32>
    %cst_89 = arith.constant dense<0.000000e+00> : vector<512x128xf32>
    %63 = tpu.matmul %60, %62, %cst_89 {dimension_numbers = #tpu.dot_dimension_numbers<[1], [0], [0], [1], [0, 0, 1, 1], [], []>} : vector<512x128xf32>, vector<128x128xf32>, vector<512x128xf32> -> vector<512x128xf32>
    %64 = arith.addf %58, %63 : vector<512x128xf32>
    %65 = math.tanh %64 : vector<512x128xf32>
    %cst_90 = arith.constant dense<0.000000e+00> : vector<128xf32>
    %66 = vector.multi_reduction <add>, %65, %cst_90 [0] : vector<512x128xf32> to vector<128xf32>
    %67 = vector.shape_cast %66 : vector<128xf32> to vector<1x128xf32>
    %cst_91 = arith.constant 0.001953125 : f32
    %68 = vector.broadcast %cst_91 : f32 to vector<1x128xf32>
    %69 = arith.mulf %67, %68 : vector<1x128xf32>
    %70 = arith.mulf %65, %65 : vector<512x128xf32>
    %cst_92 = arith.constant dense<0.000000e+00> : vector<128xf32>
    %71 = vector.multi_reduction <add>, %70, %cst_92 [0] : vector<512x128xf32> to vector<128xf32>
    %72 = vector.shape_cast %71 : vector<128xf32> to vector<1x128xf32>
    %cst_93 = arith.constant 0.001953125 : f32
    %73 = vector.broadcast %cst_93 : f32 to vector<1x128xf32>
    %74 = arith.mulf %72, %73 : vector<1x128xf32>
    %75 = arith.mulf %69, %69 : vector<1x128xf32>
    %76 = arith.subf %74, %75 : vector<1x128xf32>
    %c0_94 = arith.constant 0 : index
    %c0_95 = arith.constant 0 : index
    %77 = vector.load %arg3[%c0_94, %c0_95] : memref<1x128xf32, #tpu.memory_space<vmem>>, vector<1x128xf32>
    %cst_96 = arith.constant 9.99999974E-6 : f32
    %78 = vector.broadcast %cst_96 : f32 to vector<1x128xf32>
    %79 = arith.addf %76, %78 : vector<1x128xf32>
    %80 = math.rsqrt %79 : vector<1x128xf32>
    %81 = arith.mulf %77, %80 : vector<1x128xf32>
    %c0_97 = arith.constant 0 : index
    %c0_98 = arith.constant 0 : index
    %82 = vector.load %arg4[%c0_97, %c0_98] : memref<1x128xf32, #tpu.memory_space<vmem>>, vector<1x128xf32>
    %83 = arith.mulf %69, %81 : vector<1x128xf32>
    %84 = arith.subf %82, %83 : vector<1x128xf32>
    %85 = vector.broadcast %81 : vector<1x128xf32> to vector<512x128xf32>
    %86 = arith.mulf %65, %85 : vector<512x128xf32>
    %87 = vector.broadcast %84 : vector<1x128xf32> to vector<512x128xf32>
    %88 = arith.addf %86, %87 : vector<512x128xf32>
    %89 = vector.shape_cast %88 : vector<512x128xf32> to vector<2x16x16x128xf32>
    %c0_99 = arith.constant 0 : index
    %c1_100 = arith.constant 1 : index
    %c1_101 = arith.constant 1 : index
    %c0_102 = arith.constant 0 : index
    %90 = vector.load %arg9[%c0_99, %c1_100, %c1_101, %c0_102] : memref<2x18x18x128xf32, #tpu.memory_space<vmem>>, vector<2x16x16x128xf32>
    tpu.vector_store %arg9[%c0_99, %c1_100, %c1_101, %c0_102], %89 {strides = array<i32>} : memref<2x18x18x128xf32, #tpu.memory_space<vmem>>, vector<2x16x16x128xf32>,
    %cst_103 = arith.constant 0.000000e+00 : f32
    %91 = vector.broadcast %cst_103 : f32 to vector<512x128xf32>
    %c0_104 = arith.constant 0 : index
    %c0_105 = arith.constant 0 : index
    %c0_106 = arith.constant 0 : index
    %c0_107 = arith.constant 0 : index
    %92 = vector.load %arg9[%c0_104, %c0_105, %c0_106, %c0_107] : memref<2x18x18x128xf32, #tpu.memory_space<vmem>>, vector<2x16x16x128xf32>
    %93 = vector.shape_cast %92 : vector<2x16x16x128xf32> to vector<512x128xf32>
    %c0_108 = arith.constant 0 : index
    %c0_109 = arith.constant 0 : index
    %c0_110 = arith.constant 0 : index
    %94 = vector.load %arg5[%c0_108, %c0_109, %c0_110] : memref<9x128x128xf32, #tpu.memory_space<vmem>>, vector<1x128x128xf32>
    %95 = vector.shape_cast %94 : vector<1x128x128xf32> to vector<128x128xf32>
    %cst_111 = arith.constant dense<0.000000e+00> : vector<512x128xf32>
    %96 = tpu.matmul %93, %95, %cst_111 {dimension_numbers = #tpu.dot_dimension_numbers<[1], [0], [0], [1], [0, 0, 1, 1], [], []>} : vector<512x128xf32>, vector<128x128xf32>, vector<512x128xf32> -> vector<512x128xf32>
    %97 = arith.addf %91, %96 : vector<512x128xf32>
    %c0_112 = arith.constant 0 : index
    %c0_113 = arith.constant 0 : index
    %c1_114 = arith.constant 1 : index
    %c0_115 = arith.constant 0 : index
    %98 = vector.load %arg9[%c0_112, %c0_113, %c1_114, %c0_115] : memref<2x18x18x128xf32, #tpu.memory_space<vmem>>, vector<2x16x16x128xf32>
    %99 = vector.shape_cast %98 : vector<2x16x16x128xf32> to vector<512x128xf32>
    %c1_116 = arith.constant 1 : index
    %c0_117 = arith.constant 0 : index
    %c0_118 = arith.constant 0 : index
    %100 = vector.load %arg5[%c1_116, %c0_117, %c0_118] : memref<9x128x128xf32, #tpu.memory_space<vmem>>, vector<1x128x128xf32>
    %101 = vector.shape_cast %100 : vector<1x128x128xf32> to vector<128x128xf32>
    %cst_119 = arith.constant dense<0.000000e+00> : vector<512x128xf32>
    %102 = tpu.matmul %99, %101, %cst_119 {dimension_numbers = #tpu.dot_dimension_numbers<[1], [0], [0], [1], [0, 0, 1, 1], [], []>} : vector<512x128xf32>, vector<128x128xf32>, vector<512x128xf32> -> vector<512x128xf32>
    %103 = arith.addf %97, %102 : vector<512x128xf32>
    %c0_120 = arith.constant 0 : index
    %c0_121 = arith.constant 0 : index
    %c2_122 = arith.constant 2 : index
    %c0_123 = arith.constant 0 : index
    %104 = vector.load %arg9[%c0_120, %c0_121, %c2_122, %c0_123] : memref<2x18x18x128xf32, #tpu.memory_space<vmem>>, vector<2x16x16x128xf32>
    %105 = vector.shape_cast %104 : vector<2x16x16x128xf32> to vector<512x128xf32>
    %c2_124 = arith.constant 2 : index
    %c0_125 = arith.constant 0 : index
    %c0_126 = arith.constant 0 : index
    %106 = vector.load %arg5[%c2_124, %c0_125, %c0_126] : memref<9x128x128xf32, #tpu.memory_space<vmem>>, vector<1x128x128xf32>
    %107 = vector.shape_cast %106 : vector<1x128x128xf32> to vector<128x128xf32>
    %cst_127 = arith.constant dense<0.000000e+00> : vector<512x128xf32>
    %108 = tpu.matmul %105, %107, %cst_127 {dimension_numbers = #tpu.dot_dimension_numbers<[1], [0], [0], [1], [0, 0, 1, 1], [], []>} : vector<512x128xf32>, vector<128x128xf32>, vector<512x128xf32> -> vector<512x128xf32>
    %109 = arith.addf %103, %108 : vector<512x128xf32>
    %c0_128 = arith.constant 0 : index
    %c1_129 = arith.constant 1 : index
    %c0_130 = arith.constant 0 : index
    %c0_131 = arith.constant 0 : index
    %110 = vector.load %arg9[%c0_128, %c1_129, %c0_130, %c0_131] : memref<2x18x18x128xf32, #tpu.memory_space<vmem>>, vector<2x16x16x128xf32>
    %111 = vector.shape_cast %110 : vector<2x16x16x128xf32> to vector<512x128xf32>
    %c3_132 = arith.constant 3 : index
    %c0_133 = arith.constant 0 : index
    %c0_134 = arith.constant 0 : index
    %112 = vector.load %arg5[%c3_132, %c0_133, %c0_134] : memref<9x128x128xf32, #tpu.memory_space<vmem>>, vector<1x128x128xf32>
    %113 = vector.shape_cast %112 : vector<1x128x128xf32> to vector<128x128xf32>
    %cst_135 = arith.constant dense<0.000000e+00> : vector<512x128xf32>
    %114 = tpu.matmul %111, %113, %cst_135 {dimension_numbers = #tpu.dot_dimension_numbers<[1], [0], [0], [1], [0, 0, 1, 1], [], []>} : vector<512x128xf32>, vector<128x128xf32>, vector<512x128xf32> -> vector<512x128xf32>
    %115 = arith.addf %109, %114 : vector<512x128xf32>
    %c0_136 = arith.constant 0 : index
    %c1_137 = arith.constant 1 : index
    %c1_138 = arith.constant 1 : index
    %c0_139 = arith.constant 0 : index
    %116 = vector.load %arg9[%c0_136, %c1_137, %c1_138, %c0_139] : memref<2x18x18x128xf32, #tpu.memory_space<vmem>>, vector<2x16x16x128xf32>
    %117 = vector.shape_cast %116 : vector<2x16x16x128xf32> to vector<512x128xf32>
    %c4_140 = arith.constant 4 : index
    %c0_141 = arith.constant 0 : index
    %c0_142 = arith.constant 0 : index
    %118 = vector.load %arg5[%c4_140, %c0_141, %c0_142] : memref<9x128x128xf32, #tpu.memory_space<vmem>>, vector<1x128x128xf32>
    %119 = vector.shape_cast %118 : vector<1x128x128xf32> to vector<128x128xf32>
    %cst_143 = arith.constant dense<0.000000e+00> : vector<512x128xf32>
    %120 = tpu.matmul %117, %119, %cst_143 {dimension_numbers = #tpu.dot_dimension_numbers<[1], [0], [0], [1], [0, 0, 1, 1], [], []>} : vector<512x128xf32>, vector<128x128xf32>, vector<512x128xf32> -> vector<512x128xf32>
    %121 = arith.addf %115, %120 : vector<512x128xf32>
    %c0_144 = arith.constant 0 : index
    %c1_145 = arith.constant 1 : index
    %c2_146 = arith.constant 2 : index
    %c0_147 = arith.constant 0 : index
    %122 = vector.load %arg9[%c0_144, %c1_145, %c2_146, %c0_147] : memref<2x18x18x128xf32, #tpu.memory_space<vmem>>, vector<2x16x16x128xf32>
    %123 = vector.shape_cast %122 : vector<2x16x16x128xf32> to vector<512x128xf32>
    %c5_148 = arith.constant 5 : index
    %c0_149 = arith.constant 0 : index
    %c0_150 = arith.constant 0 : index
    %124 = vector.load %arg5[%c5_148, %c0_149, %c0_150] : memref<9x128x128xf32, #tpu.memory_space<vmem>>, vector<1x128x128xf32>
    %125 = vector.shape_cast %124 : vector<1x128x128xf32> to vector<128x128xf32>
    %cst_151 = arith.constant dense<0.000000e+00> : vector<512x128xf32>
    %126 = tpu.matmul %123, %125, %cst_151 {dimension_numbers = #tpu.dot_dimension_numbers<[1], [0], [0], [1], [0, 0, 1, 1], [], []>} : vector<512x128xf32>, vector<128x128xf32>, vector<512x128xf32> -> vector<512x128xf32>
    %127 = arith.addf %121, %126 : vector<512x128xf32>
    %c0_152 = arith.constant 0 : index
    %c2_153 = arith.constant 2 : index
    %c0_154 = arith.constant 0 : index
    %c0_155 = arith.constant 0 : index
    %128 = vector.load %arg9[%c0_152, %c2_153, %c0_154, %c0_155] : memref<2x18x18x128xf32, #tpu.memory_space<vmem>>, vector<2x16x16x128xf32>
    %129 = vector.shape_cast %128 : vector<2x16x16x128xf32> to vector<512x128xf32>
    %c6_156 = arith.constant 6 : index
    %c0_157 = arith.constant 0 : index
    %c0_158 = arith.constant 0 : index
    %130 = vector.load %arg5[%c6_156, %c0_157, %c0_158] : memref<9x128x128xf32, #tpu.memory_space<vmem>>, vector<1x128x128xf32>
    %131 = vector.shape_cast %130 : vector<1x128x128xf32> to vector<128x128xf32>
    %cst_159 = arith.constant dense<0.000000e+00> : vector<512x128xf32>
    %132 = tpu.matmul %129, %131, %cst_159 {dimension_numbers = #tpu.dot_dimension_numbers<[1], [0], [0], [1], [0, 0, 1, 1], [], []>} : vector<512x128xf32>, vector<128x128xf32>, vector<512x128xf32> -> vector<512x128xf32>
    %133 = arith.addf %127, %132 : vector<512x128xf32>
    %c0_160 = arith.constant 0 : index
    %c2_161 = arith.constant 2 : index
    %c1_162 = arith.constant 1 : index
    %c0_163 = arith.constant 0 : index
    %134 = vector.load %arg9[%c0_160, %c2_161, %c1_162, %c0_163] : memref<2x18x18x128xf32, #tpu.memory_space<vmem>>, vector<2x16x16x128xf32>
    %135 = vector.shape_cast %134 : vector<2x16x16x128xf32> to vector<512x128xf32>
    %c7_164 = arith.constant 7 : index
    %c0_165 = arith.constant 0 : index
    %c0_166 = arith.constant 0 : index
    %136 = vector.load %arg5[%c7_164, %c0_165, %c0_166] : memref<9x128x128xf32, #tpu.memory_space<vmem>>, vector<1x128x128xf32>
    %137 = vector.shape_cast %136 : vector<1x128x128xf32> to vector<128x128xf32>
    %cst_167 = arith.constant dense<0.000000e+00> : vector<512x128xf32>
    %138 = tpu.matmul %135, %137, %cst_167 {dimension_numbers = #tpu.dot_dimension_numbers<[1], [0], [0], [1], [0, 0, 1, 1], [], []>} : vector<512x128xf32>, vector<128x128xf32>, vector<512x128xf32> -> vector<512x128xf32>
    %139 = arith.addf %133, %138 : vector<512x128xf32>
    %c0_168 = arith.constant 0 : index
    %c2_169 = arith.constant 2 : index
    %c2_170 = arith.constant 2 : index
    %c0_171 = arith.constant 0 : index
    %140 = vector.load %arg9[%c0_168, %c2_169, %c2_170, %c0_171] : memref<2x18x18x128xf32, #tpu.memory_space<vmem>>, vector<2x16x16x128xf32>
    %141 = vector.shape_cast %140 : vector<2x16x16x128xf32> to vector<512x128xf32>
    %c8_172 = arith.constant 8 : index
    %c0_173 = arith.constant 0 : index
    %c0_174 = arith.constant 0 : index
    %142 = vector.load %arg5[%c8_172, %c0_173, %c0_174] : memref<9x128x128xf32, #tpu.memory_space<vmem>>, vector<1x128x128xf32>
    %143 = vector.shape_cast %142 : vector<1x128x128xf32> to vector<128x128xf32>
    %cst_175 = arith.constant dense<0.000000e+00> : vector<512x128xf32>
    %144 = tpu.matmul %141, %143, %cst_175 {dimension_numbers = #tpu.dot_dimension_numbers<[1], [0], [0], [1], [0, 0, 1, 1], [], []>} : vector<512x128xf32>, vector<128x128xf32>, vector<512x128xf32> -> vector<512x128xf32>
    %145 = arith.addf %139, %144 : vector<512x128xf32>
    %146 = math.tanh %145 : vector<512x128xf32>
    %cst_176 = arith.constant dense<0.000000e+00> : vector<128xf32>
    %147 = vector.multi_reduction <add>, %146, %cst_176 [0] : vector<512x128xf32> to vector<128xf32>
    %148 = vector.shape_cast %147 : vector<128xf32> to vector<1x128xf32>
    %cst_177 = arith.constant 0.001953125 : f32
    %149 = vector.broadcast %cst_177 : f32 to vector<1x128xf32>
    %150 = arith.mulf %148, %149 : vector<1x128xf32>
    %151 = arith.mulf %146, %146 : vector<512x128xf32>
    %cst_178 = arith.constant dense<0.000000e+00> : vector<128xf32>
    %152 = vector.multi_reduction <add>, %151, %cst_178 [0] : vector<512x128xf32> to vector<128xf32>
    %153 = vector.shape_cast %152 : vector<128xf32> to vector<1x128xf32>
    %cst_179 = arith.constant 0.001953125 : f32
    %154 = vector.broadcast %cst_179 : f32 to vector<1x128xf32>
    %155 = arith.mulf %153, %154 : vector<1x128xf32>
    %156 = arith.mulf %150, %150 : vector<1x128xf32>
    %157 = arith.subf %155, %156 : vector<1x128xf32>
    %c0_180 = arith.constant 0 : index
    %c0_181 = arith.constant 0 : index
    %158 = vector.load %arg6[%c0_180, %c0_181] : memref<1x128xf32, #tpu.memory_space<vmem>>, vector<1x128xf32>
    %cst_182 = arith.constant 9.99999974E-6 : f32
    %159 = vector.broadcast %cst_182 : f32 to vector<1x128xf32>
    %160 = arith.addf %157, %159 : vector<1x128xf32>
    %161 = math.rsqrt %160 : vector<1x128xf32>
    %162 = arith.mulf %158, %161 : vector<1x128xf32>
    %c0_183 = arith.constant 0 : index
    %c0_184 = arith.constant 0 : index
    %163 = vector.load %arg7[%c0_183, %c0_184] : memref<1x128xf32, #tpu.memory_space<vmem>>, vector<1x128xf32>
    %164 = arith.mulf %150, %162 : vector<1x128xf32>
    %165 = arith.subf %163, %164 : vector<1x128xf32>
    %166 = vector.broadcast %162 : vector<1x128xf32> to vector<512x128xf32>
    %167 = arith.mulf %146, %166 : vector<512x128xf32>
    %168 = vector.broadcast %165 : vector<1x128xf32> to vector<512x128xf32>
    %169 = arith.addf %167, %168 : vector<512x128xf32>
    %170 = vector.shape_cast %169 : vector<512x128xf32> to vector<2x16x16x128xf32>
    %171 = arith.addf %170, %8 : vector<2x16x16x128xf32>
    %c0_185 = arith.constant 0 : index
    %c0_186 = arith.constant 0 : index
    %c0_187 = arith.constant 0 : index
    %c0_188 = arith.constant 0 : index
    %172 = vector.load %arg8[%c0_185, %c0_186, %c0_187, %c0_188] : memref<2x16x16x128xf32, #tpu.memory_space<vmem>>, vector<2x16x16x128xf32>
    tpu.vector_store %arg8[%c0_185, %c0_186, %c0_187, %c0_188], %171 {strides = array<i32>} : memref<2x16x16x128xf32, #tpu.memory_space<vmem>>, vector<2x16x16x128xf32>,
    return
  }
  func.func @transform_0(%arg0: i32) -> (i32, i32, i32, i32) {
    %c0_i32 = arith.constant 0 : i32
    %c0_i32_0 = arith.constant 0 : i32
    %c0_i32_1 = arith.constant 0 : i32
    %c0_i32_2 = arith.constant 0 : i32
    %c0_i32_3 = arith.constant 0 : i32
    return %c0_i32, %c0_i32_0, %c0_i32_1, %c0_i32_2 : i32, i32, i32, i32
  }
  func.func @transform_1(%arg0: i32) -> (i32, i32, i32) {
    %c0_i32 = arith.constant 0 : i32
    %c0_i32_0 = arith.constant 0 : i32
    %c0_i32_1 = arith.constant 0 : i32
    %c0_i32_2 = arith.constant 0 : i32
    return %c0_i32, %c0_i32_0, %c0_i32_1 : i32, i32, i32
  }
  func.func @transform_2(%arg0: i32) -> (i32, i32) {
    %c0_i32 = arith.constant 0 : i32
    %c0_i32_0 = arith.constant 0 : i32
    %c0_i32_1 = arith.constant 0 : i32
    return %c0_i32, %c0_i32_0 : i32, i32
  }
  func.func @transform_3(%arg0: i32) -> (i32, i32) {
    %c0_i32 = arith.constant 0 : i32
    %c0_i32_0 = arith.constant 0 : i32
    %c0_i32_1 = arith.constant 0 : i32
    return %c0_i32, %c0_i32_0 : i32, i32
  }
  func.func @transform_4(%arg0: i32) -> (i32, i32, i32) {
    %c0_i32 = arith.constant 0 : i32
    %c0_i32_0 = arith.constant 0 : i32
    %c0_i32_1 = arith.constant 0 : i32
    %c0_i32_2 = arith.constant 0 : i32
    return %c0_i32, %c0_i32_0, %c0_i32_1 : i32, i32, i32
  }
  func.func @transform_5(%arg0: i32) -> (i32, i32) {
    %c0_i32 = arith.constant 0 : i32
    %c0_i32_0 = arith.constant 0 : i32
    %c0_i32_1 = arith.constant 0 : i32
    return %c0_i32, %c0_i32_0 : i32, i32
  }
  func.func @transform_6(%arg0: i32) -> (i32, i32) {
    %c0_i32 = arith.constant 0 : i32
    %c0_i32_0 = arith.constant 0 : i32
    %c0_i32_1 = arith.constant 0 : i32
    return %c0_i32, %c0_i32_0 : i32, i32
  }
  func.func @transform_7(%arg0: i32) -> (i32, i32, i32, i32) {
    %c0_i32 = arith.constant 0 : i32
    %c0_i32_0 = arith.constant 0 : i32
    %c0_i32_1 = arith.constant 0 : i32
    %c0_i32_2 = arith.constant 0 : i32
    %c0_i32_3 = arith.constant 0 : i32
    return %c0_i32, %c0_i32_0, %c0_i32_1, %c0_i32_2 : i32, i32, i32, i32
  }
}

</mosaic_0001>

<llo_original>
// kernel: tpu_custom_call.1
$region0: #{tpu_custom_call.1}
  #allocation0 [shape = 'u32[]', space=smem, size = 0x4, offset = 0x4, fixed_abs, tag = 'smem constant byte address 0x4 - core index']
  #allocation1 [shape = 'u32[144,128]{1,0:T(1,128)}', space=vmem, size = 0x12000, scoped, tag = 'internal scratch']
  #allocation2 [shape = 'f32[2,18,18,128]{3,2,1,0:T(8,128)}', space=vmem, size = 0x6c000, scoped, tag = 'scratch operand']
  %s0 = inlined_call_operand.hbm [shape: f32[2,16,16,128], index: 0, kind: input, shape index: {}]
  %s1 = inlined_call_operand.hbm [shape: f32[9,128,128], index: 1, kind: input, shape index: {}]
  %s2 = inlined_call_operand.vmem [shape: f32[1,128], index: 2, kind: input, shape index: {}]
  %s3 = inlined_call_operand.vmem [shape: f32[1,128], index: 3, kind: input, shape index: {}]
  %s4 = inlined_call_operand.hbm [shape: f32[9,128,128], index: 4, kind: input, shape index: {}]
  %s5 = inlined_call_operand.vmem [shape: f32[1,128], index: 5, kind: input, shape index: {}]
  %s6 = inlined_call_operand.vmem [shape: f32[1,128], index: 6, kind: input, shape index: {}]
  %s7 = inlined_call_operand.hbm [shape: f32[2,16,16,128], index: 7, kind: output, shape index: {}]
  %s8 = sld [smem:[#allocation0]]
  $region50: #{tpu_custom_call.1} parent=0
    _
  %s10 = ssub.s32 1, %s8
  %s11 = scalar_select 0, %s10, %s8
  $region1: #{tpu_custom_call.1} parent=0
    #allocation3 [shape = 'u8[262144]{0}', space=vmem, size = 0x40000, scoped, tag = 'input window, operand 0, single buffered']
    #allocation4 [shape = 's32[1]{0}', space=sflag, size = 0x4, scoped, tag = 'scoped memory for tpu_custom_call.1']
    #allocation5 [shape = 's32[1]{0}', space=sflag, size = 0x4, scoped, tag = 'scoped memory for tpu_custom_call.1']
    #allocation6 [shape = 'u8[589824]{0}', space=vmem, size = 0x90000, scoped, tag = 'input window, operand 1, single buffered']
    #allocation7 [shape = 's32[1]{0}', space=sflag, size = 0x4, scoped, tag = 'scoped memory for tpu_custom_call.1']
    #allocation8 [shape = 'u8[589824]{0}', space=vmem, size = 0x90000, scoped, tag = 'input window, operand 4, single buffered']
    #allocation9 [shape = 'u8[262144]{0}', space=vmem, size = 0x40000, scoped, tag = 'output window, operand 0, single buffered']
    %12 = vsyncpa [#allocation4], 0
    %13 = vsyncpa [#allocation7], 0
    %14 = vsyncpa [#allocation5], 0
    // Predicated region
    $region2: #{tpu_custom_call.1} parent=1 // pred_check
      _
    $region3: #{tpu_custom_call.1} parent=1 // pred_check_branch
      %16 = sbr.rel (0) target = $region5
    $region4: #{tpu_custom_call.1} parent=1 // pred_region
      %s18 = ssub.s32 8192, 8192
      %19 = vsyncadd [#allocation4], %s18
      %s20 = sshll.u32 [#allocation3], 4
      %s21 = int_to_ptr.vmem [resolvable:$true] %s20
      %26 = dma.hbm_to_vmem [thread:$0]  %s0, 8192, %s21, [#allocation4], 128, 128, 8
    $region5: #{tpu_custom_call.1} parent=1 // pred_fallthru
      _
    // Predicated region
    $region6: #{tpu_custom_call.1} parent=1 // pred_check
      _
    $region7: #{tpu_custom_call.1} parent=1 // pred_check_branch
      %28 = sbr.rel (0) target = $region9
    $region8: #{tpu_custom_call.1} parent=1 // pred_region
      %s30 = ssub.s32 18432, 18432
      %31 = vsyncadd [#allocation7], %s30
      %s32 = sshll.u32 [#allocation6], 4
      %s33 = int_to_ptr.vmem [resolvable:$true] %s32
      %38 = dma.hbm_to_vmem [thread:$0]  %s1, 18432, %s33, [#allocation7], 128, 128, 8
    $region9: #{tpu_custom_call.1} parent=1 // pred_fallthru
      _
    // Predicated region
    $region10: #{tpu_custom_call.1} parent=1 // pred_check
      _
    $region11: #{tpu_custom_call.1} parent=1 // pred_check_branch
      %40 = sbr.rel (0) target = $region13
    $region12: #{tpu_custom_call.1} parent=1 // pred_region
      _
    $region13: #{tpu_custom_call.1} parent=1 // pred_fallthru
      _
    // Predicated region
    $region14: #{tpu_custom_call.1} parent=1 // pred_check
      _
    $region15: #{tpu_custom_call.1} parent=1 // pred_check_branch
      %42 = sbr.rel (0) target = $region17
    $region16: #{tpu_custom_call.1} parent=1 // pred_region
      _
    $region17: #{tpu_custom_call.1} parent=1 // pred_fallthru
      _
    // Predicated region
    $region18: #{tpu_custom_call.1} parent=1 // pred_check
      _
    $region19: #{tpu_custom_call.1} parent=1 // pred_check_branch
      %44 = sbr.rel (0) target = $region21
    $region20: #{tpu_custom_call.1} parent=1 // pred_region
      %s46 = ssub.s32 18432, 18432
      %47 = vsyncadd [#allocation7], %s46
      %s48 = sshll.u32 [#allocation8], 4
      %s49 = int_to_ptr.vmem [resolvable:$true] %s48
      %54 = dma.hbm_to_vmem [thread:$0]  %s4, 18432, %s49, [#allocation7], 128, 128, 8
    $region21: #{tpu_custom_call.1} parent=1 // pred_fallthru
      _
    // Predicated region
    $region22: #{tpu_custom_call.1} parent=1 // pred_check
      _
    $region23: #{tpu_custom_call.1} parent=1 // pred_check_branch
      %56 = sbr.rel (0) target = $region25
    $region24: #{tpu_custom_call.1} parent=1 // pred_region
      _
    $region25: #{tpu_custom_call.1} parent=1 // pred_fallthru
      _
    // Predicated region
    $region26: #{tpu_custom_call.1} parent=1 // pred_check
      _
    $region27: #{tpu_custom_call.1} parent=1 // pred_check_branch
      %58 = sbr.rel (0) target = $region29
    $region28: #{tpu_custom_call.1} parent=1 // pred_region
      _
    $region29: #{tpu_custom_call.1} parent=1 // pred_fallthru
      _
    // Predicated region
    $region30: #{tpu_custom_call.1} parent=1 // pred_check
      _
    $region31: #{tpu_custom_call.1} parent=1 // pred_check_branch
      %60 = sbr.rel (0) target = $region33
    $region32: #{tpu_custom_call.1} parent=1 // pred_region
      %61 = dma.done [#allocation4], 8192
    $region33: #{tpu_custom_call.1} parent=1 // pred_fallthru
      _
    // Predicated region
    $region34: #{tpu_custom_call.1} parent=1 // pred_check
      _
    $region35: #{tpu_custom_call.1} parent=1 // pred_check_branch
      %63 = sbr.rel (0) target = $region37
    $region36: #{tpu_custom_call.1} parent=1 // pred_region
      %64 = dma.done [#allocation7], 18432
    $region37: #{tpu_custom_call.1} parent=1 // pred_fallthru
      _
    // Predicated region
    $region38: #{tpu_custom_call.1} parent=1 // pred_check
      _
    $region39: #{tpu_custom_call.1} parent=1 // pred_check_branch
      %66 = sbr.rel (0) target = $region41
    $region40: #{tpu_custom_call.1} parent=1 // pred_region
      %67 = dma.done [#allocation7], 18432
    $region41: #{tpu_custom_call.1} parent=1 // pred_fallthru
      _
    %68 = vst [vmem:[#allocation2] sm:$0xff] 0.0
    %69 = vst [vmem:[#allocation2 + $0x8] sm:$0xff] 0.0
    %70 = vst [vmem:[#allocation2 + $0x10] sm:$0x3] 0.0
    %71 = vst [vmem:[#allocation2 + $0x1b0] sm:$0xff] 0.0
    %72 = vst [vmem:[#allocation2 + $0x1b8] sm:$0xff] 0.0
    %73 = vst [vmem:[#allocation2 + $0x1c0] sm:$0x3] 0.0
    %s74 = scalar_lea.vmem [#allocation2], 408
    %75 = vst [vmem:[%s74] sm:$0xff] 0.0
    %76 = vst [vmem:[%s74 + $0x8] sm:$0xff] 0.0
    %77 = vst [vmem:[%s74 + $0x10] sm:$0x3] 0.0
    %78 = vst [vmem:[%s74 + $0x1b0] sm:$0xff] 0.0
    %79 = vst [vmem:[%s74 + $0x1b8] sm:$0xff] 0.0
    %80 = vst [vmem:[%s74 + $0x1c0] sm:$0x3] 0.0
    %81 = vst [vmem:[#allocation2] sm:$0x1] 0.0
    %82 = vst [vmem:[#allocation2 + $0x18] sm:$0x1] 0.0
    %83 = vst [vmem:[#allocation2 + $0x30] sm:$0x1] 0.0
    %84 = vst [vmem:[#allocation2 + $0x48] sm:$0x1] 0.0
    %85 = vst [vmem:[#allocation2 + $0x60] sm:$0x1] 0.0
    %86 = vst [vmem:[#allocation2 + $0x78] sm:$0x1] 0.0
    %87 = vst [vmem:[#allocation2 + $0x90] sm:$0x1] 0.0
    %88 = vst [vmem:[#allocation2 + $0xa8] sm:$0x1] 0.0
    %89 = vst [vmem:[#allocation2 + $0xc0] sm:$0x1] 0.0
    %90 = vst [vmem:[#allocation2 + $0xd8] sm:$0x1] 0.0
    %91 = vst [vmem:[#allocation2 + $0xf0] sm:$0x1] 0.0
    %92 = vst [vmem:[#allocation2 + $0x108] sm:$0x1] 0.0
    %93 = vst [vmem:[#allocation2 + $0x120] sm:$0x1] 0.0
    %94 = vst [vmem:[#allocation2 + $0x138] sm:$0x1] 0.0
    %95 = vst [vmem:[#allocation2 + $0x150] sm:$0x1] 0.0
    %96 = vst [vmem:[#allocation2 + $0x168] sm:$0x1] 0.0
    %97 = vst [vmem:[#allocation2 + $0x180] sm:$0x1] 0.0
    %98 = vst [vmem:[#allocation2 + $0x198] sm:$0x1] 0.0
    %99 = vst [vmem:[#allocation2 + $0x1b0] sm:$0x1] 0.0
    %100 = vst [vmem:[#allocation2 + $0x1c8] sm:$0x1] 0.0
    %101 = vst [vmem:[#allocation2 + $0x1e0] sm:$0x1] 0.0
    %102 = vst [vmem:[#allocation2 + $0x1f8] sm:$0x1] 0.0
    %103 = vst [vmem:[#allocation2 + $0x210] sm:$0x1] 0.0
    %104 = vst [vmem:[#allocation2 + $0x228] sm:$0x1] 0.0
    %105 = vst [vmem:[#allocation2 + $0x240] sm:$0x1] 0.0
    %106 = vst [vmem:[#allocation2 + $0x258] sm:$0x1] 0.0
    %107 = vst [vmem:[#allocation2 + $0x270] sm:$0x1] 0.0
    %108 = vst [vmem:[#allocation2 + $0x288] sm:$0x1] 0.0
    %109 = vst [vmem:[#allocation2 + $0x2a0] sm:$0x1] 0.0
    %110 = vst [vmem:[#allocation2 + $0x2b8] sm:$0x1] 0.0
    %111 = vst [vmem:[#allocation2 + $0x2d0] sm:$0x1] 0.0
    %112 = vst [vmem:[#allocation2 + $0x2e8] sm:$0x1] 0.0
    %113 = vst [vmem:[#allocation2 + $0x300] sm:$0x1] 0.0
    %114 = vst [vmem:[#allocation2 + $0x318] sm:$0x1] 0.0
    %115 = vst [vmem:[#allocation2 + $0x330] sm:$0x1] 0.0
    %116 = vst [vmem:[#allocation2 + $0x348] sm:$0x1] 0.0
    %117 = vst [vmem:[#allocation2 + $0x11] sm:$0x1] 0.0
    %118 = vst [vmem:[#allocation2 + $0x29] sm:$0x1] 0.0
    %119 = vst [vmem:[#allocation2 + $0x41] sm:$0x1] 0.0
    %120 = vst [vmem:[#allocation2 + $0x59] sm:$0x1] 0.0
    %121 = vst [vmem:[#allocation2 + $0x71] sm:$0x1] 0.0
    %122 = vst [vmem:[#allocation2 + $0x89] sm:$0x1] 0.0
    %123 = vst [vmem:[#allocation2 + $0xa1] sm:$0x1] 0.0
    %124 = vst [vmem:[#allocation2 + $0xb9] sm:$0x1] 0.0
    %125 = vst [vmem:[#allocation2 + $0xd1] sm:$0x1] 0.0
    %126 = vst [vmem:[#allocation2 + $0xe9] sm:$0x1] 0.0
    %127 = vst [vmem:[#allocation2 + $0x101] sm:$0x1] 0.0
    %128 = vst [vmem:[#allocation2 + $0x119] sm:$0x1] 0.0
    %129 = vst [vmem:[#allocation2 + $0x131] sm:$0x1] 0.0
    %130 = vst [vmem:[#allocation2 + $0x149] sm:$0x1] 0.0
    %131 = vst [vmem:[#allocation2 + $0x161] sm:$0x1] 0.0
    %132 = vst [vmem:[#allocation2 + $0x179] sm:$0x1] 0.0
    %133 = vst [vmem:[#allocation2 + $0x191] sm:$0x1] 0.0
    %134 = vst [vmem:[#allocation2 + $0x1a9] sm:$0x1] 0.0
    %135 = vst [vmem:[#allocation2 + $0x1c1] sm:$0x1] 0.0
    %136 = vst [vmem:[#allocation2 + $0x1d9] sm:$0x1] 0.0
    %137 = vst [vmem:[#allocation2 + $0x1f1] sm:$0x1] 0.0
    %138 = vst [vmem:[#allocation2 + $0x209] sm:$0x1] 0.0
    %139 = vst [vmem:[#allocation2 + $0x221] sm:$0x1] 0.0
    %140 = vst [vmem:[#allocation2 + $0x239] sm:$0x1] 0.0
    %141 = vst [vmem:[#allocation2 + $0x251] sm:$0x1] 0.0
    %142 = vst [vmem:[#allocation2 + $0x269] sm:$0x1] 0.0
    %143 = vst [vmem:[#allocation2 + $0x281] sm:$0x1] 0.0
    %144 = vst [vmem:[#allocation2 + $0x299] sm:$0x1] 0.0
    %145 = vst [vmem:[#allocation2 + $0x2b1] sm:$0x1] 0.0
    %146 = vst [vmem:[#allocation2 + $0x2c9] sm:$0x1] 0.0
    %147 = vst [vmem:[#allocation2 + $0x2e1] sm:$0x1] 0.0
    %148 = vst [vmem:[#allocation2 + $0x2f9] sm:$0x1] 0.0
    %149 = vst [vmem:[#allocation2 + $0x311] sm:$0x1] 0.0
    %150 = vst [vmem:[#allocation2 + $0x329] sm:$0x1] 0.0
    %151 = vst [vmem:[#allocation2 + $0x341] sm:$0x1] 0.0
    %152 = vst [vmem:[#allocation2 + $0x359] sm:$0x1] 0.0
    %v153 = vld [vmem:[#allocation3] sm:$0xff]
    %v154 = vld [vmem:[#allocation3 + $0x8] sm:$0xff]
    %v155 = vld [vmem:[#allocation3 + $0x10] sm:$0xff]
    %v156 = vld [vmem:[#allocation3 + $0x18] sm:$0xff]
    %v157 = vld [vmem:[#allocation3 + $0x20] sm:$0xff]
    %v158 = vld [vmem:[#allocation3 + $0x28] sm:$0xff]
    %v159 = vld [vmem:[#allocation3 + $0x30] sm:$0xff]
    %v160 = vld [vmem:[#allocation3 + $0x38] sm:$0xff]
    %v161 = vld [vmem:[#allocation3 + $0x40] sm:$0xff]
    %v162 = vld [vmem:[#allocation3 + $0x48] sm:$0xff]
    %v163 = vld [vmem:[#allocation3 + $0x50] sm:$0xff]
    %v164 = vld [vmem:[#allocation3 + $0x58] sm:$0xff]
    %v165 = vld [vmem:[#allocation3 + $0x60] sm:$0xff]
    %v166 = vld [vmem:[#allocation3 + $0x68] sm:$0xff]
    %v167 = vld [vmem:[#allocation3 + $0x70] sm:$0xff]
    %v168 = vld [vmem:[#allocation3 + $0x78] sm:$0xff]
    %v169 = vld [vmem:[#allocation3 + $0x80] sm:$0xff]
    %v170 = vld [vmem:[#allocation3 + $0x88] sm:$0xff]
    %v171 = vld [vmem:[#allocation3 + $0x90] sm:$0xff]
    %v172 = vld [vmem:[#allocation3 + $0x98] sm:$0xff]
    %v173 = vld [vmem:[#allocation3 + $0xa0] sm:$0xff]
    %v174 = vld [vmem:[#allocation3 + $0xa8] sm:$0xff]
    %v175 = vld [vmem:[#allocation3 + $0xb0] sm:$0xff]
    %v176 = vld [vmem:[#allocation3 + $0xb8] sm:$0xff]
    %v177 = vld [vmem:[#allocation3 + $0xc0] sm:$0xff]
    %v178 = vld [vmem:[#allocation3 + $0xc8] sm:$0xff]
    %v179 = vld [vmem:[#allocation3 + $0xd0] sm:$0xff]
    %v180 = vld [vmem:[#allocation3 + $0xd8] sm:$0xff]
    %v181 = vld [vmem:[#allocation3 + $0xe0] sm:$0xff]
    %v182 = vld [vmem:[#allocation3 + $0xe8] sm:$0xff]
    %v183 = vld [vmem:[#allocation3 + $0xf0] sm:$0xff]
    %v184 = vld [vmem:[#allocation3 + $0xf8] sm:$0xff]
    %v185 = vld [vmem:[#allocation3 + $0x100] sm:$0xff]
    %v186 = vld [vmem:[#allocation3 + $0x108] sm:$0xff]
    %v187 = vld [vmem:[#allocation3 + $0x110] sm:$0xff]
    %v188 = vld [vmem:[#allocation3 + $0x118] sm:$0xff]
    %v189 = vld [vmem:[#allocation3 + $0x120] sm:$0xff]
    %v190 = vld [vmem:[#allocation3 + $0x128] sm:$0xff]
    %v191 = vld [vmem:[#allocation3 + $0x130] sm:$0xff]
    %v192 = vld [vmem:[#allocation3 + $0x138] sm:$0xff]
    %v193 = vld [vmem:[#allocation3 + $0x140] sm:$0xff]
    %v194 = vld [vmem:[#allocation3 + $0x148] sm:$0xff]
    %v195 = vld [vmem:[#allocation3 + $0x150] sm:$0xff]
    %v196 = vld [vmem:[#allocation3 + $0x158] sm:$0xff]
    %v197 = vld [vmem:[#allocation3 + $0x160] sm:$0xff]
    %v198 = vld [vmem:[#allocation3 + $0x168] sm:$0xff]
    %v199 = vld [vmem:[#allocation3 + $0x170] sm:$0xff]
    %v200 = vld [vmem:[#allocation3 + $0x178] sm:$0xff]
    %v201 = vld [vmem:[#allocation3 + $0x180] sm:$0xff]
    %v202 = vld [vmem:[#allocation3 + $0x188] sm:$0xff]
    %v203 = vld [vmem:[#allocation3 + $0x190] sm:$0xff]
    %v204 = vld [vmem:[#allocation3 + $0x198] sm:$0xff]
    %v205 = vld [vmem:[#allocation3 + $0x1a0] sm:$0xff]
    %v206 = vld [vmem:[#allocation3 + $0x1a8] sm:$0xff]
    %v207 = vld [vmem:[#allocation3 + $0x1b0] sm:$0xff]
    %v208 = vld [vmem:[#allocation3 + $0x1b8] sm:$0xff]
    %v209 = vld [vmem:[#allocation3 + $0x1c0] sm:$0xff]
    %v210 = vld [vmem:[#allocation3 + $0x1c8] sm:$0xff]
    %v211 = vld [vmem:[#allocation3 + $0x1d0] sm:$0xff]
    %v212 = vld [vmem:[#allocation3 + $0x1d8] sm:$0xff]
    %v213 = vld [vmem:[#allocation3 + $0x1e0] sm:$0xff]
    %v214 = vld [vmem:[#allocation3 + $0x1e8] sm:$0xff]
    %v215 = vld [vmem:[#allocation3 + $0x1f0] sm:$0xff]
    %v216 = vld [vmem:[#allocation3 + $0x1f8] sm:$0xff]
    %s217 = scalar_lea.vmem [#allocation2], 24
    %218 = vst [vmem:[%s217 + $0x1] sm:$0xff] %v153
    %219 = vst [vmem:[%s217 + $0x9] sm:$0xff] %v154
    %220 = vst [vmem:[%s217 + $0x19] sm:$0xff] %v155
    %221 = vst [vmem:[%s217 + $0x21] sm:$0xff] %v156
    %222 = vst [vmem:[%s217 + $0x31] sm:$0xff] %v157
    %223 = vst [vmem:[%s217 + $0x39] sm:$0xff] %v158
    %224 = vst [vmem:[%s217 + $0x49] sm:$0xff] %v159
    %225 = vst [vmem:[%s217 + $0x51] sm:$0xff] %v160
    %226 = vst [vmem:[%s217 + $0x61] sm:$0xff] %v161
    %227 = vst [vmem:[%s217 + $0x69] sm:$0xff] %v162
    %228 = vst [vmem:[%s217 + $0x79] sm:$0xff] %v163
    %229 = vst [vmem:[%s217 + $0x81] sm:$0xff] %v164
    %230 = vst [vmem:[%s217 + $0x91] sm:$0xff] %v165
    %231 = vst [vmem:[%s217 + $0x99] sm:$0xff] %v166
    %232 = vst [vmem:[%s217 + $0xa9] sm:$0xff] %v167
    %233 = vst [vmem:[%s217 + $0xb1] sm:$0xff] %v168
    %234 = vst [vmem:[%s217 + $0xc1] sm:$0xff] %v169
    %235 = vst [vmem:[%s217 + $0xc9] sm:$0xff] %v170
    %236 = vst [vmem:[%s217 + $0xd9] sm:$0xff] %v171
    %237 = vst [vmem:[%s217 + $0xe1] sm:$0xff] %v172
    %238 = vst [vmem:[%s217 + $0xf1] sm:$0xff] %v173
    %239 = vst [vmem:[%s217 + $0xf9] sm:$0xff] %v174
    %240 = vst [vmem:[%s217 + $0x109] sm:$0xff] %v175
    %241 = vst [vmem:[%s217 + $0x111] sm:$0xff] %v176
    %242 = vst [vmem:[%s217 + $0x121] sm:$0xff] %v177
    %243 = vst [vmem:[%s217 + $0x129] sm:$0xff] %v178
    %244 = vst [vmem:[%s217 + $0x139] sm:$0xff] %v179
    %245 = vst [vmem:[%s217 + $0x141] sm:$0xff] %v180
    %246 = vst [vmem:[%s217 + $0x151] sm:$0xff] %v181
    %247 = vst [vmem:[%s217 + $0x159] sm:$0xff] %v182
    %248 = vst [vmem:[%s217 + $0x169] sm:$0xff] %v183
    %249 = vst [vmem:[%s217 + $0x171] sm:$0xff] %v184
    %250 = vst [vmem:[%s217 + $0x1b1] sm:$0xff] %v185
    %251 = vst [vmem:[%s217 + $0x1b9] sm:$0xff] %v186
    %252 = vst [vmem:[%s217 + $0x1c9] sm:$0xff] %v187
    %253 = vst [vmem:[%s217 + $0x1d1] sm:$0xff] %v188
    %254 = vst [vmem:[%s217 + $0x1e1] sm:$0xff] %v189
    %255 = vst [vmem:[%s217 + $0x1e9] sm:$0xff] %v190
    %256 = vst [vmem:[%s217 + $0x1f9] sm:$0xff] %v191
    %257 = vst [vmem:[%s217 + $0x201] sm:$0xff] %v192
    %258 = vst [vmem:[%s217 + $0x211] sm:$0xff] %v193
    %259 = vst [vmem:[%s217 + $0x219] sm:$0xff] %v194
    %260 = vst [vmem:[%s217 + $0x229] sm:$0xff] %v195
    %261 = vst [vmem:[%s217 + $0x231] sm:$0xff] %v196
    %262 = vst [vmem:[%s217 + $0x241] sm:$0xff] %v197
    %263 = vst [vmem:[%s217 + $0x249] sm:$0xff] %v198
    %264 = vst [vmem:[%s217 + $0x259] sm:$0xff] %v199
    %265 = vst [vmem:[%s217 + $0x261] sm:$0xff] %v200
    %266 = vst [vmem:[%s217 + $0x271] sm:$0xff] %v201
    %267 = vst [vmem:[%s217 + $0x279] sm:$0xff] %v202
    %268 = vst [vmem:[%s217 + $0x289] sm:$0xff] %v203
    %269 = vst [vmem:[%s217 + $0x291] sm:$0xff] %v204
    %270 = vst [vmem:[%s217 + $0x2a1] sm:$0xff] %v205
    %271 = vst [vmem:[%s217 + $0x2a9] sm:$0xff] %v206
    %272 = vst [vmem:[%s217 + $0x2b9] sm:$0xff] %v207
    %273 = vst [vmem:[%s217 + $0x2c1] sm:$0xff] %v208
    %274 = vst [vmem:[%s217 + $0x2d1] sm:$0xff] %v209
    %275 = vst [vmem:[%s217 + $0x2d9] sm:$0xff] %v210
    %276 = vst [vmem:[%s217 + $0x2e9] sm:$0xff] %v211
    %277 = vst [vmem:[%s217 + $0x2f1] sm:$0xff] %v212
    %278 = vst [vmem:[%s217 + $0x301] sm:$0xff] %v213
    %279 = vst [vmem:[%s217 + $0x309] sm:$0xff] %v214
    %280 = vst [vmem:[%s217 + $0x319] sm:$0xff] %v215
    %281 = vst [vmem:[%s217 + $0x321] sm:$0xff] %v216
    %v282 = vld [vmem:[#allocation2] sm:$0xff]
    %v283 = vld [vmem:[#allocation2 + $0x8] sm:$0xff]
    %v284 = vld [vmem:[#allocation2 + $0x18] sm:$0xff]
    %v285 = vld [vmem:[#allocation2 + $0x20] sm:$0xff]
    %v286 = vld [vmem:[#allocation2 + $0x30] sm:$0xff]
    %v287 = vld [vmem:[#allocation2 + $0x38] sm:$0xff]
    %v288 = vld [vmem:[#allocation2 + $0x48] sm:$0xff]
    %v289 = vld [vmem:[#allocation2 + $0x50] sm:$0xff]
    %v290 = vld [vmem:[#allocation2 + $0x60] sm:$0xff]
    %v291 = vld [vmem:[#allocation2 + $0x68] sm:$0xff]
    %v292 = vld [vmem:[#allocation2 + $0x78] sm:$0xff]
    %v293 = vld [vmem:[#allocation2 + $0x80] sm:$0xff]
    %v294 = vld [vmem:[#allocation2 + $0x90] sm:$0xff]
    %v295 = vld [vmem:[#allocation2 + $0x98] sm:$0xff]
    %v296 = vld [vmem:[#allocation2 + $0xa8] sm:$0xff]
    %v297 = vld [vmem:[#allocation2 + $0xb0] sm:$0xff]
    %v298 = vld [vmem:[#allocation2 + $0xc0] sm:$0xff]
    %v299 = vld [vmem:[#allocation2 + $0xc8] sm:$0xff]
    %v300 = vld [vmem:[#allocation2 + $0xd8] sm:$0xff]
    %v301 = vld [vmem:[#allocation2 + $0xe0] sm:$0xff]
    %v302 = vld [vmem:[#allocation2 + $0xf0] sm:$0xff]
    %v303 = vld [vmem:[#allocation2 + $0xf8] sm:$0xff]
    %v304 = vld [vmem:[#allocation2 + $0x108] sm:$0xff]
    %v305 = vld [vmem:[#allocation2 + $0x110] sm:$0xff]
    %v306 = vld [vmem:[#allocation2 + $0x120] sm:$0xff]
    %v307 = vld [vmem:[#allocation2 + $0x128] sm:$0xff]
    %v308 = vld [vmem:[#allocation2 + $0x138] sm:$0xff]
    %v309 = vld [vmem:[#allocation2 + $0x140] sm:$0xff]
    %v310 = vld [vmem:[#allocation2 + $0x150] sm:$0xff]
    %v311 = vld [vmem:[#allocation2 + $0x158] sm:$0xff]
    %v312 = vld [vmem:[#allocation2 + $0x168] sm:$0xff]
    %v313 = vld [vmem:[#allocation2 + $0x170] sm:$0xff]
    %v314 = vld [vmem:[#allocation2 + $0x1b0] sm:$0xff]
    %v315 = vld [vmem:[#allocation2 + $0x1b8] sm:$0xff]
    %v316 = vld [vmem:[#allocation2 + $0x1c8] sm:$0xff]
    %v317 = vld [vmem:[#allocation2 + $0x1d0] sm:$0xff]
    %v318 = vld [vmem:[#allocation2 + $0x1e0] sm:$0xff]
    %v319 = vld [vmem:[#allocation2 + $0x1e8] sm:$0xff]
    %v320 = vld [vmem:[#allocation2 + $0x1f8] sm:$0xff]
    %v321 = vld [vmem:[#allocation2 + $0x200] sm:$0xff]
    %v322 = vld [vmem:[#allocation2 + $0x210] sm:$0xff]
    %v323 = vld [vmem:[#allocation2 + $0x218] sm:$0xff]
    %v324 = vld [vmem:[#allocation2 + $0x228] sm:$0xff]
    %v325 = vld [vmem:[#allocation2 + $0x230] sm:$0xff]
    %v326 = vld [vmem:[#allocation2 + $0x240] sm:$0xff]
    %v327 = vld [vmem:[#allocation2 + $0x248] sm:$0xff]
    %v328 = vld [vmem:[#allocation2 + $0x258] sm:$0xff]
    %v329 = vld [vmem:[#allocation2 + $0x260] sm:$0xff]
    %v330 = vld [vmem:[#allocation2 + $0x270] sm:$0xff]
    %v331 = vld [vmem:[#allocation2 + $0x278] sm:$0xff]
    %v332 = vld [vmem:[#allocation2 + $0x288] sm:$0xff]
    %v333 = vld [vmem:[#allocation2 + $0x290] sm:$0xff]
    %v334 = vld [vmem:[#allocation2 + $0x2a0] sm:$0xff]
    %v335 = vld [vmem:[#allocation2 + $0x2a8] sm:$0xff]
    %v336 = vld [vmem:[#allocation2 + $0x2b8] sm:$0xff]
    %v337 = vld [vmem:[#allocation2 + $0x2c0] sm:$0xff]
    %v338 = vld [vmem:[#allocation2 + $0x2d0] sm:$0xff]
    %v339 = vld [vmem:[#allocation2 + $0x2d8] sm:$0xff]
    %v340 = vld [vmem:[#allocation2 + $0x2e8] sm:$0xff]
    %v341 = vld [vmem:[#allocation2 + $0x2f0] sm:$0xff]
    %v342 = vld [vmem:[#allocation2 + $0x300] sm:$0xff]
    %v343 = vld [vmem:[#allocation2 + $0x308] sm:$0xff]
    %v344 = vld [vmem:[#allocation2 + $0x318] sm:$0xff]
    %v345 = vld [vmem:[#allocation2 + $0x320] sm:$0xff]
    %v346 = vld [vmem:[#allocation6] sm:$0xff]
    %v347 = vld [vmem:[#allocation6 + $0x8] sm:$0xff]
    %v348 = vld [vmem:[#allocation6 + $0x10] sm:$0xff]
    %v349 = vld [vmem:[#allocation6 + $0x18] sm:$0xff]
    %v350 = vld [vmem:[#allocation6 + $0x20] sm:$0xff]
    %v351 = vld [vmem:[#allocation6 + $0x28] sm:$0xff]
    %v352 = vld [vmem:[#allocation6 + $0x30] sm:$0xff]
    %v353 = vld [vmem:[#allocation6 + $0x38] sm:$0xff]
    %v354 = vld [vmem:[#allocation6 + $0x40] sm:$0xff]
    %v355 = vld [vmem:[#allocation6 + $0x48] sm:$0xff]
    %v356 = vld [vmem:[#allocation6 + $0x50] sm:$0xff]
    %v357 = vld [vmem:[#allocation6 + $0x58] sm:$0xff]
    %v358 = vld [vmem:[#allocation6 + $0x60] sm:$0xff]
    %v359 = vld [vmem:[#allocation6 + $0x68] sm:$0xff]
    %v360 = vld [vmem:[#allocation6 + $0x70] sm:$0xff]
    %v361 = vld [vmem:[#allocation6 + $0x78] sm:$0xff]
    %v362 = vld [vmem:[#allocation2 + $0x1] sm:$0xff]
    %v363 = vld [vmem:[#allocation2 + $0x9] sm:$0xff]
    %v364 = vld [vmem:[#allocation2 + $0x19] sm:$0xff]
    %v365 = vld [vmem:[#allocation2 + $0x21] sm:$0xff]
    %v366 = vld [vmem:[#allocation2 + $0x31] sm:$0xff]
    %v367 = vld [vmem:[#allocation2 + $0x39] sm:$0xff]
    %v368 = vld [vmem:[#allocation2 + $0x49] sm:$0xff]
    %v369 = vld [vmem:[#allocation2 + $0x51] sm:$0xff]
    %v370 = vld [vmem:[#allocation2 + $0x61] sm:$0xff]
    %v371 = vld [vmem:[#allocation2 + $0x69] sm:$0xff]
    %v372 = vld [vmem:[#allocation2 + $0x79] sm:$0xff]
    %v373 = vld [vmem:[#allocation2 + $0x81] sm:$0xff]
    %v374 = vld [vmem:[#allocation2 + $0x91] sm:$0xff]
    %v375 = vld [vmem:[#allocation2 + $0x99] sm:$0xff]
    %v376 = vld [vmem:[#allocation2 + $0xa9] sm:$0xff]
    %v377 = vld [vmem:[#allocation2 + $0xb1] sm:$0xff]
    %v378 = vld [vmem:[#allocation2 + $0xc1] sm:$0xff]
    %v379 = vld [vmem:[#allocation2 + $0xc9] sm:$0xff]
    %v380 = vld [vmem:[#allocation2 + $0xd9] sm:$0xff]
    %v381 = vld [vmem:[#allocation2 + $0xe1] sm:$0xff]
    %v382 = vld [vmem:[#allocation2 + $0xf1] sm:$0xff]
    %v383 = vld [vmem:[#allocation2 + $0xf9] sm:$0xff]
    %v384 = vld [vmem:[#allocation2 + $0x109] sm:$0xff]
    %v385 = vld [vmem:[#allocation2 + $0x111] sm:$0xff]
    %v386 = vld [vmem:[#allocation2 + $0x121] sm:$0xff]
    %v387 = vld [vmem:[#allocation2 + $0x129] sm:$0xff]
    %v388 = vld [vmem:[#allocation2 + $0x139] sm:$0xff]
    %v389 = vld [vmem:[#allocation2 + $0x141] sm:$0xff]
    %v390 = vld [vmem:[#allocation2 + $0x151] sm:$0xff]
    %v391 = vld [vmem:[#allocation2 + $0x159] sm:$0xff]
    %v392 = vld [vmem:[#allocation2 + $0x169] sm:$0xff]
    %v393 = vld [vmem:[#allocation2 + $0x171] sm:$0xff]
    %v394 = vld [vmem:[#allocation2 + $0x1b1] sm:$0xff]
    %v395 = vld [vmem:[#allocation2 + $0x1b9] sm:$0xff]
    %v396 = vld [vmem:[#allocation2 + $0x1c9] sm:$0xff]
    %v397 = vld [vmem:[#allocation2 + $0x1d1] sm:$0xff]
    %v398 = vld [vmem:[#allocation2 + $0x1e1] sm:$0xff]
    %v399 = vld [vmem:[#allocation2 + $0x1e9] sm:$0xff]
    %v400 = vld [vmem:[#allocation2 + $0x1f9] sm:$0xff]
    %v401 = vld [vmem:[#allocation2 + $0x201] sm:$0xff]
    %v402 = vld [vmem:[#allocation2 + $0x211] sm:$0xff]
    %v403 = vld [vmem:[#allocation2 + $0x219] sm:$0xff]
    %v404 = vld [vmem:[#allocation2 + $0x229] sm:$0xff]
    %v405 = vld [vmem:[#allocation2 + $0x231] sm:$0xff]
    %v406 = vld [vmem:[#allocation2 + $0x241] sm:$0xff]
    %v407 = vld [vmem:[#allocation2 + $0x249] sm:$0xff]
    %v408 = vld [vmem:[#allocation2 + $0x259] sm:$0xff]
    %v409 = vld [vmem:[#allocation2 + $0x261] sm:$0xff]
    %v410 = vld [vmem:[#allocation2 + $0x271] sm:$0xff]
    %v411 = vld [vmem:[#allocation2 + $0x279] sm:$0xff]
    %v412 = vld [vmem:[#allocation2 + $0x289] sm:$0xff]
    %v413 = vld [vmem:[#allocation2 + $0x291] sm:$0xff]
    %v414 = vld [vmem:[#allocation2 + $0x2a1] sm:$0xff]
    %v415 = vld [vmem:[#allocation2 + $0x2a9] sm:$0xff]
    %v416 = vld [vmem:[#allocation2 + $0x2b9] sm:$0xff]
    %v417 = vld [vmem:[#allocation2 + $0x2c1] sm:$0xff]
    %v418 = vld [vmem:[#allocation2 + $0x2d1] sm:$0xff]
    %v419 = vld [vmem:[#allocation2 + $0x2d9] sm:$0xff]
    %v420 = vld [vmem:[#allocation2 + $0x2e9] sm:$0xff]
    %v421 = vld [vmem:[#allocation2 + $0x2f1] sm:$0xff]
    %v422 = vld [vmem:[#allocation2 + $0x301] sm:$0xff]
    %v423 = vld [vmem:[#allocation2 + $0x309] sm:$0xff]
    %v424 = vld [vmem:[#allocation2 + $0x319] sm:$0xff]
    %v425 = vld [vmem:[#allocation2 + $0x321] sm:$0xff]
    %s426 = scalar_lea.vmem [#allocation6], 128
    %v427 = vld [vmem:[%s426] sm:$0xff]
    %v428 = vld [vmem:[%s426 + $0x8] sm:$0xff]
    %v429 = vld [vmem:[%s426 + $0x10] sm:$0xff]
    %v430 = vld [vmem:[%s426 + $0x18] sm:$0xff]
    %v431 = vld [vmem:[%s426 + $0x20] sm:$0xff]
    %v432 = vld [vmem:[%s426 + $0x28] sm:$0xff]
    %v433 = vld [vmem:[%s426 + $0x30] sm:$0xff]
    %v434 = vld [vmem:[%s426 + $0x38] sm:$0xff]
    %v435 = vld [vmem:[%s426 + $0x40] sm:$0xff]
    %v436 = vld [vmem:[%s426 + $0x48] sm:$0xff]
    %v437 = vld [vmem:[%s426 + $0x50] sm:$0xff]
    %v438 = vld [vmem:[%s426 + $0x58] sm:$0xff]
    %v439 = vld [vmem:[%s426 + $0x60] sm:$0xff]
    %v440 = vld [vmem:[%s426 + $0x68] sm:$0xff]
    %v441 = vld [vmem:[%s426 + $0x70] sm:$0xff]
    %v442 = vld [vmem:[%s426 + $0x78] sm:$0xff]
    %443 = vmatprep.subr.mxu0 0.0
    %444 = vmatpush1.msra.mxu0 %v427
    %445 = vmatprep.subr.mxu0 0.0
    %446 = vmatpush1.msra.mxu0 %v428
    %447 = vmatprep.subr.mxu0 0.0
    %448 = vmatpush1.msra.mxu0 %v429
    %449 = vmatprep.subr.mxu0 0.0
    %450 = vmatpush1.msra.mxu0 %v430
    %451 = vmatprep.subr.mxu0 0.0
    %452 = vmatpush1.msra.mxu0 %v431
    %453 = vmatprep.subr.mxu0 0.0
    %454 = vmatpush1.msra.mxu0 %v432
    %455 = vmatprep.subr.mxu0 0.0
    %456 = vmatpush1.msra.mxu0 %v433
    %457 = vmatprep.subr.mxu0 0.0
    %458 = vmatpush1.msra.mxu0 %v434
    %459 = vmatprep.subr.mxu0 0.0
    %460 = vmatpush1.msra.mxu0 %v435
    %461 = vmatprep.subr.mxu0 0.0
    %462 = vmatpush1.msra.mxu0 %v436
    %463 = vmatprep.subr.mxu0 0.0
    %464 = vmatpush1.msra.mxu0 %v437
    %465 = vmatprep.subr.mxu0 0.0
    %466 = vmatpush1.msra.mxu0 %v438
    %467 = vmatprep.subr.mxu0 0.0
    %468 = vmatpush1.msra.mxu0 %v439
    %469 = vmatprep.subr.mxu0 0.0
    %470 = vmatpush1.msra.mxu0 %v440
    %471 = vmatprep.subr.mxu0 0.0
    %472 = vmatpush1.msra.mxu0 %v441
    %473 = vmatprep.subr.mxu0 0.0
    %474 = vmatpush1.msra.mxu0 %v442
    %475 = vmatprep.subr.mxu0 0.0
    %476 = vmatpush1.msra.mxu0 0.0
    %477 = vmatprep.subr.mxu0 0.0
    %478 = vmatpush1.msra.mxu0 0.0
    %479 = vmatprep.subr.mxu0 0.0
    %480 = vmatpush1.msra.mxu0 0.0
    %481 = vmatprep.subr.mxu0 0.0
    %482 = vmatpush1.msra.mxu0 0.0
    %483 = vmatprep.subr.mxu0 0.0
    %484 = vmatpush1.msra.mxu0 0.0
    %485 = vmatprep.subr.mxu0 0.0
    %486 = vmatpush1.msra.mxu0 0.0
    %487 = vmatprep.subr.mxu0 0.0
    %488 = vmatpush1.msra.mxu0 0.0
    %489 = vmatprep.subr.mxu0 0.0
    %490 = vmatpush1.msra.mxu0 0.0
    %491 = vmatprep.subr.mxu0 0.0
    %492 = vmatpush1.msra.mxu0 0.0
    %493 = vmatprep.subr.mxu0 0.0
    %494 = vmatpush1.msra.mxu0 0.0
    %495 = vmatprep.subr.mxu0 0.0
    %496 = vmatpush1.msra.mxu0 0.0
    %497 = vmatprep.subr.mxu0 0.0
    %498 = vmatpush1.msra.mxu0 0.0
    %499 = vmatprep.subr.mxu0 0.0
    %500 = vmatpush1.msra.mxu0 0.0
    %501 = vmatprep.subr.mxu0 0.0
    %502 = vmatpush1.msra.mxu0 0.0
    %503 = vmatprep.subr.mxu0 0.0
    %504 = vmatpush1.msra.mxu0 0.0
    %505 = vmatprep.subr.mxu0 0.0
    %506 = vmatpush1.msra.mxu0 0.0
    %507 = vmatprep.mubr.f32.mxu0 0.0
    %508 = vmatmul.mubr.f32.gmra.mrb[0].mxu0 %v362
    %v509 = vpop.f32.mrb[0].mxu0
    %v510 = vadd.f32 0.0, %v509
    %v511 = vpop.f32.mrb[0].mxu0
    %512 = vmatprep.mubr.f32.mxu0 0.0
    %513 = vmatmul.mubr.f32.gmra.mrb[0].mxu0 %v363
    %v514 = vpop.f32.mrb[0].mxu0
    %v515 = vadd.f32 0.0, %v514
    %v516 = vpop.f32.mrb[0].mxu0
    %517 = vmatprep.mubr.f32.mxu0 0.0
    %518 = vmatmul.mubr.f32.gmra.mrb[0].mxu0 %v364
    %v519 = vpop.f32.mrb[0].mxu0
    %v520 = vadd.f32 0.0, %v519
    %v521 = vpop.f32.mrb[0].mxu0
    %522 = vmatprep.mubr.f32.mxu0 0.0
    %523 = vmatmul.mubr.f32.gmra.mrb[0].mxu0 %v365
    %v524 = vpop.f32.mrb[0].mxu0
    %v525 = vadd.f32 0.0, %v524
    %v526 = vpop.f32.mrb[0].mxu0
    %527 = vmatprep.mubr.f32.mxu0 0.0
    %528 = vmatmul.mubr.f32.gmra.mrb[0].mxu0 %v366
    %v529 = vpop.f32.mrb[0].mxu0
    %v530 = vadd.f32 0.0, %v529
    %v531 = vpop.f32.mrb[0].mxu0
    %532 = vmatprep.mubr.f32.mxu0 0.0
    %533 = vmatmul.mubr.f32.gmra.mrb[0].mxu0 %v367
    %v534 = vpop.f32.mrb[0].mxu0
    %v535 = vadd.f32 0.0, %v534
    %v536 = vpop.f32.mrb[0].mxu0
    %537 = vmatprep.mubr.f32.mxu0 0.0
    %538 = vmatmul.mubr.f32.gmra.mrb[0].mxu0 %v368
    %v539 = vpop.f32.mrb[0].mxu0
    %v540 = vadd.f32 0.0, %v539
    %v541 = vpop.f32.mrb[0].mxu0
    %542 = vmatprep.mubr.f32.mxu0 0.0
    %543 = vmatmul.mubr.f32.gmra.mrb[0].mxu0 %v369
    %v544 = vpop.f32.mrb[0].mxu0
    %v545 = vadd.f32 0.0, %v544
    %v546 = vpop.f32.mrb[0].mxu0
    %547 = vmatprep.mubr.f32.mxu0 0.0
    %548 = vmatmul.mubr.f32.gmra.mrb[0].mxu0 %v370
    %v549 = vpop.f32.mrb[0].mxu0
    %v550 = vadd.f32 0.0, %v549
    %v551 = vpop.f32.mrb[0].mxu0
    %552 = vmatprep.mubr.f32.mxu0 0.0
    %553 = vmatmul.mubr.f32.gmra.mrb[0].mxu0 %v371
    %v554 = vpop.f32.mrb[0].mxu0
    %v555 = vadd.f32 0.0, %v554
    %v556 = vpop.f32.mrb[0].mxu0
    %557 = vmatprep.mubr.f32.mxu0 0.0
    %558 = vmatmul.mubr.f32.gmra.mrb[0].mxu0 %v372
    %v559 = vpop.f32.mrb[0].mxu0
    %v560 = vadd.f32 0.0, %v559
    %v561 = vpop.f32.mrb[0].mxu0
    %562 = vmatprep.mubr.f32.mxu0 0.0
    %563 = vmatmul.mubr.f32.gmra.mrb[0].mxu0 %v373
    %v564 = vpop.f32.mrb[0].mxu0
    %v565 = vadd.f32 0.0, %v564
    %v566 = vpop.f32.mrb[0].mxu0
    %567 = vmatprep.mubr.f32.mxu0 0.0
    %568 = vmatmul.mubr.f32.gmra.mrb[0].mxu0 %v374
    %v569 = vpop.f32.mrb[0].mxu0
    %v570 = vadd.f32 0.0, %v569
    %v571 = vpop.f32.mrb[0].mxu0
    %572 = vmatprep.mubr.f32.mxu0 0.0
    %573 = vmatmul.mubr.f32.gmra.mrb[0].mxu0 %v375
    %v574 = vpop.f32.mrb[0].mxu0
    %v575 = vadd.f32 0.0, %v574
    %v576 = vpop.f32.mrb[0].mxu0
    %577 = vmatprep.mubr.f32.mxu0 0.0
    %578 = vmatmul.mubr.f32.gmra.mrb[0].mxu0 %v376
    %v579 = vpop.f32.mrb[0].mxu0
    %v580 = vadd.f32 0.0, %v579
    %v581 = vpop.f32.mrb[0].mxu0
    %582 = vmatprep.mubr.f32.mxu0 0.0
    %583 = vmatmul.mubr.f32.gmra.mrb[0].mxu0 %v377
    %v584 = vpop.f32.mrb[0].mxu0
    %v585 = vadd.f32 0.0, %v584
    %v586 = vpop.f32.mrb[0].mxu0
    %587 = vmatprep.mubr.f32.mxu0 0.0
    %588 = vmatmul.mubr.f32.gmra.mrb[0].mxu0 %v378
    %v589 = vpop.f32.mrb[0].mxu0
    %v590 = vadd.f32 0.0, %v589
    %v591 = vpop.f32.mrb[0].mxu0
    %592 = vmatprep.mubr.f32.mxu0 0.0
    %593 = vmatmul.mubr.f32.gmra.mrb[0].mxu0 %v379
    %v594 = vpop.f32.mrb[0].mxu0
    %v595 = vadd.f32 0.0, %v594
    %v596 = vpop.f32.mrb[0].mxu0
    %597 = vmatprep.mubr.f32.mxu0 0.0
    %598 = vmatmul.mubr.f32.gmra.mrb[0].mxu0 %v380
    %v599 = vpop.f32.mrb[0].mxu0
    %v600 = vadd.f32 0.0, %v599
    %v601 = vpop.f32.mrb[0].mxu0
    %602 = vmatprep.mubr.f32.mxu0 0.0
    %603 = vmatmul.mubr.f32.gmra.mrb[0].mxu0 %v381
    %v604 = vpop.f32.mrb[0].mxu0
    %v605 = vadd.f32 0.0, %v604
    %v606 = vpop.f32.mrb[0].mxu0
    %607 = vmatprep.mubr.f32.mxu0 0.0
    %608 = vmatmul.mubr.f32.gmra.mrb[0].mxu0 %v382
    %v609 = vpop.f32.mrb[0].mxu0
    %v610 = vadd.f32 0.0, %v609
    %v611 = vpop.f32.mrb[0].mxu0
    %612 = vmatprep.mubr.f32.mxu0 0.0
    %613 = vmatmul.mubr.f32.gmra.mrb[0].mxu0 %v383
    %v614 = vpop.f32.mrb[0].mxu0
    %v615 = vadd.f32 0.0, %v614
    %v616 = vpop.f32.mrb[0].mxu0
    %617 = vmatprep.mubr.f32.mxu0 0.0
    %618 = vmatmul.mubr.f32.gmra.mrb[0].mxu0 %v384
    %v619 = vpop.f32.mrb[0].mxu0
    %v620 = vadd.f32 0.0, %v619
    %v621 = vpop.f32.mrb[0].mxu0
    %622 = vmatprep.mubr.f32.mxu0 0.0
    %623 = vmatmul.mubr.f32.gmra.mrb[0].mxu0 %v385
    %v624 = vpop.f32.mrb[0].mxu0
    %v625 = vadd.f32 0.0, %v624
    %v626 = vpop.f32.mrb[0].mxu0
    %627 = vmatprep.mubr.f32.mxu0 0.0
    %628 = vmatmul.mubr.f32.gmra.mrb[0].mxu0 %v386
    %v629 = vpop.f32.mrb[0].mxu0
    %v630 = vadd.f32 0.0, %v629
    %v631 = vpop.f32.mrb[0].mxu0
    %632 = vmatprep.mubr.f32.mxu0 0.0
    %633 = vmatmul.mubr.f32.gmra.mrb[0].mxu0 %v387
    %v634 = vpop.f32.mrb[0].mxu0
    %v635 = vadd.f32 0.0, %v634
    %v636 = vpop.f32.mrb[0].mxu0
    %637 = vmatprep.mubr.f32.mxu0 0.0
    %638 = vmatmul.mubr.f32.gmra.mrb[0].mxu0 %v388
    %v639 = vpop.f32.mrb[0].mxu0
    %v640 = vadd.f32 0.0, %v639
    %v641 = vpop.f32.mrb[0].mxu0
    %642 = vmatprep.mubr.f32.mxu0 0.0
    %643 = vmatmul.mubr.f32.gmra.mrb[0].mxu0 %v389
    %v644 = vpop.f32.mrb[0].mxu0
    %v645 = vadd.f32 0.0, %v644
    %v646 = vpop.f32.mrb[0].mxu0
    %647 = vmatprep.mubr.f32.mxu0 0.0
    %648 = vmatmul.mubr.f32.gmra.mrb[0].mxu0 %v390
    %v649 = vpop.f32.mrb[0].mxu0
    %v650 = vadd.f32 0.0, %v649
    %v651 = vpop.f32.mrb[0].mxu0
    %652 = vmatprep.mubr.f32.mxu0 0.0
    %653 = vmatmul.mubr.f32.gmra.mrb[0].mxu0 %v391
    %v654 = vpop.f32.mrb[0].mxu0
    %v655 = vadd.f32 0.0, %v654
    %v656 = vpop.f32.mrb[0].mxu0
    %657 = vmatprep.mubr.f32.mxu0 0.0
    %658 = vmatmul.mubr.f32.gmra.mrb[0].mxu0 %v392
    %v659 = vpop.f32.mrb[0].mxu0
    %v660 = vadd.f32 0.0, %v659
    %v661 = vpop.f32.mrb[0].mxu0
    %662 = vmatprep.mubr.f32.mxu0 0.0
    %663 = vmatmul.mubr.f32.gmra.mrb[0].mxu0 %v393
    %v664 = vpop.f32.mrb[0].mxu0
    %v665 = vadd.f32 0.0, %v664
    %v666 = vpop.f32.mrb[0].mxu0
    %667 = vmatprep.mubr.f32.mxu0 0.0
    %668 = vmatmul.mubr.f32.gmra.mrb[0].mxu0 %v394
    %v669 = vpop.f32.mrb[0].mxu0
    %v670 = vadd.f32 0.0, %v669
    %v671 = vpop.f32.mrb[0].mxu0
    %672 = vmatprep.mubr.f32.mxu0 0.0
    %673 = vmatmul.mubr.f32.gmra.mrb[0].mxu0 %v395
    %v674 = vpop.f32.mrb[0].mxu0
    %v675 = vadd.f32 0.0, %v674
    %v676 = vpop.f32.mrb[0].mxu0
    %677 = vmatprep.mubr.f32.mxu0 0.0
    %678 = vmatmul.mubr.f32.gmra.mrb[0].mxu0 %v396
    %v679 = vpop.f32.mrb[0].mxu0
    %v680 = vadd.f32 0.0, %v679
    %v681 = vpop.f32.mrb[0].mxu0
    %682 = vmatprep.mubr.f32.mxu0 0.0
    %683 = vmatmul.mubr.f32.gmra.mrb[0].mxu0 %v397
    %v684 = vpop.f32.mrb[0].mxu0
    %v685 = vadd.f32 0.0, %v684
    %v686 = vpop.f32.mrb[0].mxu0
    %687 = vmatprep.mubr.f32.mxu0 0.0
    %688 = vmatmul.mubr.f32.gmra.mrb[0].mxu0 %v398
    %v689 = vpop.f32.mrb[0].mxu0
    %v690 = vadd.f32 0.0, %v689
    %v691 = vpop.f32.mrb[0].mxu0
    %692 = vmatprep.mubr.f32.mxu0 0.0
    %693 = vmatmul.mubr.f32.gmra.mrb[0].mxu0 %v399
    %v694 = vpop.f32.mrb[0].mxu0
    %v695 = vadd.f32 0.0, %v694
    %v696 = vpop.f32.mrb[0].mxu0
    %697 = vmatprep.mubr.f32.mxu0 0.0
    %698 = vmatmul.mubr.f32.gmra.mrb[0].mxu0 %v400
    %v699 = vpop.f32.mrb[0].mxu0
    %v700 = vadd.f32 0.0, %v699
    %v701 = vpop.f32.mrb[0].mxu0
    %702 = vmatprep.mubr.f32.mxu0 0.0
    %703 = vmatmul.mubr.f32.gmra.mrb[0].mxu0 %v401
    %v704 = vpop.f32.mrb[0].mxu0
    %v705 = vadd.f32 0.0, %v704
    %v706 = vpop.f32.mrb[0].mxu0
    %707 = vmatprep.mubr.f32.mxu0 0.0
    %708 = vmatmul.mubr.f32.gmra.mrb[0].mxu0 %v402
    %v709 = vpop.f32.mrb[0].mxu0
    %v710 = vadd.f32 0.0, %v709
    %v711 = vpop.f32.mrb[0].mxu0
    %712 = vmatprep.mubr.f32.mxu0 0.0
    %713 = vmatmul.mubr.f32.gmra.mrb[0].mxu0 %v403
    %v714 = vpop.f32.mrb[0].mxu0
    %v715 = vadd.f32 0.0, %v714
    %v716 = vpop.f32.mrb[0].mxu0
    %717 = vmatprep.mubr.f32.mxu0 0.0
    %718 = vmatmul.mubr.f32.gmra.mrb[0].mxu0 %v404
    %v719 = vpop.f32.mrb[0].mxu0
    %v720 = vadd.f32 0.0, %v719
    %v721 = vpop.f32.mrb[0].mxu0
    %722 = vmatprep.mubr.f32.mxu0 0.0
    %723 = vmatmul.mubr.f32.gmra.mrb[0].mxu0 %v405
    %v724 = vpop.f32.mrb[0].mxu0
    %v725 = vadd.f32 0.0, %v724
    %v726 = vpop.f32.mrb[0].mxu0
    %727 = vmatprep.mubr.f32.mxu0 0.0
    %728 = vmatmul.mubr.f32.gmra.mrb[0].mxu0 %v406
    %v729 = vpop.f32.mrb[0].mxu0
    %v730 = vadd.f32 0.0, %v729
    %v731 = vpop.f32.mrb[0].mxu0
    %732 = vmatprep.mubr.f32.mxu0 0.0
    %733 = vmatmul.mubr.f32.gmra.mrb[0].mxu0 %v407
    %v734 = vpop.f32.mrb[0].mxu0
    %v735 = vadd.f32 0.0, %v734
    %v736 = vpop.f32.mrb[0].mxu0
    %737 = vmatprep.mubr.f32.mxu0 0.0
    %738 = vmatmul.mubr.f32.gmra.mrb[0].mxu0 %v408
    %v739 = vpop.f32.mrb[0].mxu0
    %v740 = vadd.f32 0.0, %v739
    %v741 = vpop.f32.mrb[0].mxu0
    %742 = vmatprep.mubr.f32.mxu0 0.0
    %743 = vmatmul.mubr.f32.gmra.mrb[0].mxu0 %v409
    %v744 = vpop.f32.mrb[0].mxu0
    %v745 = vadd.f32 0.0, %v744
    %v746 = vpop.f32.mrb[0].mxu0
    %747 = vmatprep.mubr.f32.mxu0 0.0
    %748 = vmatmul.mubr.f32.gmra.mrb[0].mxu0 %v410
    %v749 = vpop.f32.mrb[0].mxu0
    %v750 = vadd.f32 0.0, %v749
    %v751 = vpop.f32.mrb[0].mxu0
    %752 = vmatprep.mubr.f32.mxu0 0.0
    %753 = vmatmul.mubr.f32.gmra.mrb[0].mxu0 %v411
    %v754 = vpop.f32.mrb[0].mxu0
    %v755 = vadd.f32 0.0, %v754
    %v756 = vpop.f32.mrb[0].mxu0
    %757 = vmatprep.mubr.f32.mxu0 0.0
    %758 = vmatmul.mubr.f32.gmra.mrb[0].mxu0 %v412
    %v759 = vpop.f32.mrb[0].mxu0
    %v760 = vadd.f32 0.0, %v759
    %v761 = vpop.f32.mrb[0].mxu0
    %762 = vmatprep.mubr.f32.mxu0 0.0
    %763 = vmatmul.mubr.f32.gmra.mrb[0].mxu0 %v413
    %v764 = vpop.f32.mrb[0].mxu0
    %v765 = vadd.f32 0.0, %v764
    %v766 = vpop.f32.mrb[0].mxu0
    %767 = vmatprep.mubr.f32.mxu0 0.0
    %768 = vmatmul.mubr.f32.gmra.mrb[0].mxu0 %v414
    %v769 = vpop.f32.mrb[0].mxu0
    %v770 = vadd.f32 0.0, %v769
    %v771 = vpop.f32.mrb[0].mxu0
    %772 = vmatprep.mubr.f32.mxu0 0.0
    %773 = vmatmul.mubr.f32.gmra.mrb[0].mxu0 %v415
    %v774 = vpop.f32.mrb[0].mxu0
    %v775 = vadd.f32 0.0, %v774
    %v776 = vpop.f32.mrb[0].mxu0
    %777 = vmatprep.mubr.f32.mxu0 0.0
    %778 = vmatmul.mubr.f32.gmra.mrb[0].mxu0 %v416
    %v779 = vpop.f32.mrb[0].mxu0
    %v780 = vadd.f32 0.0, %v779
    %v781 = vpop.f32.mrb[0].mxu0
    %782 = vmatprep.mubr.f32.mxu0 0.0
    %783 = vmatmul.mubr.f32.gmra.mrb[0].mxu0 %v417
    %v784 = vpop.f32.mrb[0].mxu0
    %v785 = vadd.f32 0.0, %v784
    %v786 = vpop.f32.mrb[0].mxu0
    %787 = vmatprep.mubr.f32.mxu0 0.0
    %788 = vmatmul.mubr.f32.gmra.mrb[0].mxu0 %v418
    %v789 = vpop.f32.mrb[0].mxu0
    %v790 = vadd.f32 0.0, %v789
    %v791 = vpop.f32.mrb[0].mxu0
    %792 = vmatprep.mubr.f32.mxu0 0.0
    %793 = vmatmul.mubr.f32.gmra.mrb[0].mxu0 %v419
    %v794 = vpop.f32.mrb[0].mxu0
    %v795 = vadd.f32 0.0, %v794
    %v796 = vpop.f32.mrb[0].mxu0
    %797 = vmatprep.mubr.f32.mxu0 0.0
    %798 = vmatmul.mubr.f32.gmra.mrb[0].mxu0 %v420
    %v799 = vpop.f32.mrb[0].mxu0
    %v800 = vadd.f32 0.0, %v799
    %v801 = vpop.f32.mrb[0].mxu0
    %802 = vmatprep.mubr.f32.mxu0 0.0
    %803 = vmatmul.mubr.f32.gmra.mrb[0].mxu0 %v421
    %v804 = vpop.f32.mrb[0].mxu0
    %v805 = vadd.f32 0.0, %v804
    %v806 = vpop.f32.mrb[0].mxu0
    %807 = vmatprep.mubr.f32.mxu0 0.0
    %808 = vmatmul.mubr.f32.gmra.mrb[0].mxu0 %v422
    %v809 = vpop.f32.mrb[0].mxu0
    %v810 = vadd.f32 0.0, %v809
    %v811 = vpop.f32.mrb[0].mxu0
    %812 = vmatprep.mubr.f32.mxu0 0.0
    %813 = vmatmul.mubr.f32.gmra.mrb[0].mxu0 %v423
    %v814 = vpop.f32.mrb[0].mxu0
    %v815 = vadd.f32 0.0, %v814
    %v816 = vpop.f32.mrb[0].mxu0
    %817 = vmatprep.mubr.f32.mxu0 0.0
    %818 = vmatmul.mubr.f32.gmra.mrb[0].mxu0 %v424
    %v819 = vpop.f32.mrb[0].mxu0
    %v820 = vadd.f32 0.0, %v819
    %v821 = vpop.f32.mrb[0].mxu0
    %822 = vmatprep.mubr.f32.mxu0 0.0
    %823 = vmatmul.mubr.f32.gmra.mrb[0].mxu0 %v425
    %v824 = vpop.f32.mrb[0].mxu0
    %v825 = vadd.f32 0.0, %v824
    %v826 = vpop.f32.mrb[0].mxu0
    %827 = vdwg.mxu0
    %828 = vmatprep.subr.mxu0 0.0
    %829 = vmatpush1.msra.mxu0 %v346
    %830 = vmatprep.subr.mxu0 0.0
    %831 = vmatpush1.msra.mxu0 %v347
    %832 = vmatprep.subr.mxu0 0.0
    %833 = vmatpush1.msra.mxu0 %v348
    %834 = vmatprep.subr.mxu0 0.0
    %835 = vmatpush1.msra.mxu0 %v349
    %836 = vmatprep.subr.mxu0 0.0
    %837 = vmatpush1.msra.mxu0 %v350
    %838 = vmatprep.subr.mxu0 0.0
    %839 = vmatpush1.msra.mxu0 %v351
    %840 = vmatprep.subr.mxu0 0.0
    %841 = vmatpush1.msra.mxu0 %v352
    %842 = vmatprep.subr.mxu0 0.0
    %843 = vmatpush1.msra.mxu0 %v353
    %844 = vmatprep.subr.mxu0 0.0
    %845 = vmatpush1.msra.mxu0 %v354
    %846 = vmatprep.subr.mxu0 0.0
    %847 = vmatpush1.msra.mxu0 %v355
    %848 = vmatprep.subr.mxu0 0.0
    %849 = vmatpush1.msra.mxu0 %v356
    %850 = vmatprep.subr.mxu0 0.0
    %851 = vmatpush1.msra.mxu0 %v357
    %852 = vmatprep.subr.mxu0 0.0
    %853 = vmatpush1.msra.mxu0 %v358
    %854 = vmatprep.subr.mxu0 0.0
    %855 = vmatpush1.msra.mxu0 %v359
    %856 = vmatprep.subr.mxu0 0.0
    %857 = vmatpush1.msra.mxu0 %v360
    %858 = vmatprep.subr.mxu0 0.0
    %859 = vmatpush1.msra.mxu0 %v361
    %860 = vmatprep.subr.mxu0 0.0
    %861 = vmatpush1.msra.mxu0 0.0
    %862 = vmatprep.subr.mxu0 0.0
    %863 = vmatpush1.msra.mxu0 0.0
    %864 = vmatprep.subr.mxu0 0.0
    %865 = vmatpush1.msra.mxu0 0.0
    %866 = vmatprep.subr.mxu0 0.0
    %867 = vmatpush1.msra.mxu0 0.0
    %868 = vmatprep.subr.mxu0 0.0
    %869 = vmatpush1.msra.mxu0 0.0
    %870 = vmatprep.subr.mxu0 0.0
    %871 = vmatpush1.msra.mxu0 0.0
    %872 = vmatprep.subr.mxu0 0.0
    %873 = vmatpush1.msra.mxu0 0.0
    %874 = vmatprep.subr.mxu0 0.0
    %875 = vmatpush1.msra.mxu0 0.0
    %876 = vmatprep.subr.mxu0 0.0
    %877 = vmatpush1.msra.mxu0 0.0
    %878 = vmatprep.subr.mxu0 0.0
    %879 = vmatpush1.msra.mxu0 0.0
    %880 = vmatprep.subr.mxu0 0.0
    %881 = vmatpush1.msra.mxu0 0.0
    %882 = vmatprep.subr.mxu0 0.0
    %883 = vmatpush1.msra.mxu0 0.0
    %884 = vmatprep.subr.mxu0 0.0
    %885 = vmatpush1.msra.mxu0 0.0
    %886 = vmatprep.subr.mxu0 0.0
    %887 = vmatpush1.msra.mxu0 0.0
    %888 = vmatprep.subr.mxu0 0.0
    %889 = vmatpush1.msra.mxu0 0.0
    %890 = vmatprep.subr.mxu0 0.0
    %891 = vmatpush1.msra.mxu0 0.0
    %892 = vmatprep.mubr.f32.mxu0 0.0
    %893 = vmatmul.mubr.f32.gmra.mrb[0].mxu0 %v282
    %v894 = vpop.f32.mrb[0].mxu0
    %v895 = vadd.f32 %v510, %v894
    %v896 = vpop.f32.mrb[0].mxu0
    %897 = vmatprep.mubr.f32.mxu0 0.0
    %898 = vmatmul.mubr.f32.gmra.mrb[0].mxu0 %v283
    %v899 = vpop.f32.mrb[0].mxu0
    %v900 = vadd.f32 %v515, %v899
    %v901 = vpop.f32.mrb[0].mxu0
    %902 = vmatprep.mubr.f32.mxu0 0.0
    %903 = vmatmul.mubr.f32.gmra.mrb[0].mxu0 %v284
    %v904 = vpop.f32.mrb[0].mxu0
    %v905 = vadd.f32 %v520, %v904
    %v906 = vpop.f32.mrb[0].mxu0
    %907 = vmatprep.mubr.f32.mxu0 0.0
    %908 = vmatmul.mubr.f32.gmra.mrb[0].mxu0 %v285
    %v909 = vpop.f32.mrb[0].mxu0
    %v910 = vadd.f32 %v525, %v909
    %v911 = vpop.f32.mrb[0].mxu0
    %912 = vmatprep.mubr.f32.mxu0 0.0
    %913 = vmatmul.mubr.f32.gmra.mrb[0].mxu0 %v286
    %v914 = vpop.f32.mrb[0].mxu0
    %v915 = vadd.f32 %v530, %v914
    %v916 = vpop.f32.mrb[0].mxu0
    %917 = vmatprep.mubr.f32.mxu0 0.0
    %918 = vmatmul.mubr.f32.gmra.mrb[0].mxu0 %v287
    %v919 = vpop.f32.mrb[0].mxu0
    %v920 = vadd.f32 %v535, %v919
    %v921 = vpop.f32.mrb[0].mxu0
    %922 = vmatprep.mubr.f32.mxu0 0.0
    %923 = vmatmul.mubr.f32.gmra.mrb[0].mxu0 %v288
    %v924 = vpop.f32.mrb[0].mxu0
    %v925 = vadd.f32 %v540, %v924
    %v926 = vpop.f32.mrb[0].mxu0
    %927 = vmatprep.mubr.f32.mxu0 0.0
    %928 = vmatmul.mubr.f32.gmra.mrb[0].mxu0 %v289
    %v929 = vpop.f32.mrb[0].mxu0
    %v930 = vadd.f32 %v545, %v929
    %v931 = vpop.f32.mrb[0].mxu0
    %932 = vmatprep.mubr.f32.mxu0 0.0
    %933 = vmatmul.mubr.f32.gmra.mrb[0].mxu0 %v290
    %v934 = vpop.f32.mrb[0].mxu0
    %v935 = vadd.f32 %v550, %v934
    %v936 = vpop.f32.mrb[0].mxu0
    %937 = vmatprep.mubr.f32.mxu0 0.0
    %938 = vmatmul.mubr.f32.gmra.mrb[0].mxu0 %v291
    %v939 = vpop.f32.mrb[0].mxu0
    %v940 = vadd.f32 %v555, %v939
    %v941 = vpop.f32.mrb[0].mxu0
    %942 = vmatprep.mubr.f32.mxu0 0.0
    %943 = vmatmul.mubr.f32.gmra.mrb[0].mxu0 %v292
    %v944 = vpop.f32.mrb[0].mxu0
    %v945 = vadd.f32 %v560, %v944
    %v946 = vpop.f32.mrb[0].mxu0
    %947 = vmatprep.mubr.f32.mxu0 0.0
    %948 = vmatmul.mubr.f32.gmra.mrb[0].mxu0 %v293
    %v949 = vpop.f32.mrb[0].mxu0
    %v950 = vadd.f32 %v565, %v949
    %v951 = vpop.f32.mrb[0].mxu0
    %952 = vmatprep.mubr.f32.mxu0 0.0
    %953 = vmatmul.mubr.f32.gmra.mrb[0].mxu0 %v294
    %v954 = vpop.f32.mrb[0].mxu0
    %v955 = vadd.f32 %v570, %v954
    %v956 = vpop.f32.mrb[0].mxu0
    %957 = vmatprep.mubr.f32.mxu0 0.0
    %958 = vmatmul.mubr.f32.gmra.mrb[0].mxu0 %v295
    %v959 = vpop.f32.mrb[0].mxu0
    %v960 = vadd.f32 %v575, %v959
    %v961 = vpop.f32.mrb[0].mxu0
    %962 = vmatprep.mubr.f32.mxu0 0.0
    %963 = vmatmul.mubr.f32.gmra.mrb[0].mxu0 %v296
    %v964 = vpop.f32.mrb[0].mxu0
    %v965 = vadd.f32 %v580, %v964
    %v966 = vpop.f32.mrb[0].mxu0
    %967 = vmatprep.mubr.f32.mxu0 0.0
    %968 = vmatmul.mubr.f32.gmra.mrb[0].mxu0 %v297
    %v969 = vpop.f32.mrb[0].mxu0
    %v970 = vadd.f32 %v585, %v969
    %v971 = vpop.f32.mrb[0].mxu0
    %972 = vmatprep.mubr.f32.mxu0 0.0
    %973 = vmatmul.mubr.f32.gmra.mrb[0].mxu0 %v298
    %v974 = vpop.f32.mrb[0].mxu0
    %v975 = vadd.f32 %v590, %v974
    %v976 = vpop.f32.mrb[0].mxu0
    %977 = vmatprep.mubr.f32.mxu0 0.0
    %978 = vmatmul.mubr.f32.gmra.mrb[0].mxu0 %v299
    %v979 = vpop.f32.mrb[0].mxu0
    %v980 = vadd.f32 %v595, %v979
    %v981 = vpop.f32.mrb[0].mxu0
    %982 = vmatprep.mubr.f32.mxu0 0.0
    %983 = vmatmul.mubr.f32.gmra.mrb[0].mxu0 %v300
    %v984 = vpop.f32.mrb[0].mxu0
    %v985 = vadd.f32 %v600, %v984
    %v986 = vpop.f32.mrb[0].mxu0
    %987 = vmatprep.mubr.f32.mxu0 0.0
    %988 = vmatmul.mubr.f32.gmra.mrb[0].mxu0 %v301
    %v989 = vpop.f32.mrb[0].mxu0
    %v990 = vadd.f32 %v605, %v989
    %v991 = vpop.f32.mrb[0].mxu0
    %992 = vmatprep.mubr.f32.mxu0 0.0
    %993 = vmatmul.mubr.f32.gmra.mrb[0].mxu0 %v302
    %v994 = vpop.f32.mrb[0].mxu0
    %v995 = vadd.f32 %v610, %v994
    %v996 = vpop.f32.mrb[0].mxu0
    %997 = vmatprep.mubr.f32.mxu0 0.0
    %998 = vmatmul.mubr.f32.gmra.mrb[0].mxu0 %v303
    %v999 = vpop.f32.mrb[0].mxu0
    %v1000 = vadd.f32 %v615, %v999
    %v1001 = vpop.f32.mrb[0].mxu0
    %1002 = vmatprep.mubr.f32.mxu0 0.0
    %1003 = vmatmul.mubr.f32.gmra.mrb[0].mxu0 %v304
    %v1004 = vpop.f32.mrb[0].mxu0
    %v1005 = vadd.f32 %v620, %v1004
    %v1006 = vpop.f32.mrb[0].mxu0
    %1007 = vmatprep.mubr.f32.mxu0 0.0
    %1008 = vmatmul.mubr.f32.gmra.mrb[0].mxu0 %v305
    %v1009 = vpop.f32.mrb[0].mxu0
    %v1010 = vadd.f32 %v625, %v1009
    %v1011 = vpop.f32.mrb[0].mxu0
    %1012 = vmatprep.mubr.f32.mxu0 0.0
    %1013 = vmatmul.mubr.f32.gmra.mrb[0].mxu0 %v306
    %v1014 = vpop.f32.mrb[0].mxu0
    %v1015 = vadd.f32 %v630, %v1014
    %v1016 = vpop.f32.mrb[0].mxu0
    %1017 = vmatprep.mubr.f32.mxu0 0.0
    %1018 = vmatmul.mubr.f32.gmra.mrb[0].mxu0 %v307
    %v1019 = vpop.f32.mrb[0].mxu0
    %v1020 = vadd.f32 %v635, %v1019
    %v1021 = vpop.f32.mrb[0].mxu0
    %1022 = vmatprep.mubr.f32.mxu0 0.0
    %1023 = vmatmul.mubr.f32.gmra.mrb[0].mxu0 %v308
    %v1024 = vpop.f32.mrb[0].mxu0
    %v1025 = vadd.f32 %v640, %v1024
    %v1026 = vpop.f32.mrb[0].mxu0
    %1027 = vmatprep.mubr.f32.mxu0 0.0
    %1028 = vmatmul.mubr.f32.gmra.mrb[0].mxu0 %v309
    %v1029 = vpop.f32.mrb[0].mxu0
    %v1030 = vadd.f32 %v645, %v1029
    %v1031 = vpop.f32.mrb[0].mxu0
    %1032 = vmatprep.mubr.f32.mxu0 0.0
    %1033 = vmatmul.mubr.f32.gmra.mrb[0].mxu0 %v310
    %v1034 = vpop.f32.mrb[0].mxu0
    %v1035 = vadd.f32 %v650, %v1034
    %v1036 = vpop.f32.mrb[0].mxu0
    %1037 = vmatprep.mubr.f32.mxu0 0.0
    %1038 = vmatmul.mubr.f32.gmra.mrb[0].mxu0 %v311
    %v1039 = vpop.f32.mrb[0].mxu0
    %v1040 = vadd.f32 %v655, %v1039
    %v1041 = vpop.f32.mrb[0].mxu0
    %1042 = vmatprep.mubr.f32.mxu0 0.0
    %1043 = vmatmul.mubr.f32.gmra.mrb[0].mxu0 %v312
    %v1044 = vpop.f32.mrb[0].mxu0
    %v1045 = vadd.f32 %v660, %v1044
    %v1046 = vpop.f32.mrb[0].mxu0
    %1047 = vmatprep.mubr.f32.mxu0 0.0
    %1048 = vmatmul.mubr.f32.gmra.mrb[0].mxu0 %v313
    %v1049 = vpop.f32.mrb[0].mxu0
    %v1050 = vadd.f32 %v665, %v1049
    %v1051 = vpop.f32.mrb[0].mxu0
    %1052 = vmatprep.mubr.f32.mxu0 0.0
    %1053 = vmatmul.mubr.f32.gmra.mrb[0].mxu0 %v314
    %v1054 = vpop.f32.mrb[0].mxu0
    %v1055 = vadd.f32 %v670, %v1054
    %v1056 = vpop.f32.mrb[0].mxu0
    %1057 = vmatprep.mubr.f32.mxu0 0.0
    %1058 = vmatmul.mubr.f32.gmra.mrb[0].mxu0 %v315
    %v1059 = vpop.f32.mrb[0].mxu0
    %v1060 = vadd.f32 %v675, %v1059
    %v1061 = vpop.f32.mrb[0].mxu0
    %1062 = vmatprep.mubr.f32.mxu0 0.0
    %1063 = vmatmul.mubr.f32.gmra.mrb[0].mxu0 %v316
    %v1064 = vpop.f32.mrb[0].mxu0
    %v1065 = vadd.f32 %v680, %v1064
    %v1066 = vpop.f32.mrb[0].mxu0
    %1067 = vmatprep.mubr.f32.mxu0 0.0
    %1068 = vmatmul.mubr.f32.gmra.mrb[0].mxu0 %v317
    %v1069 = vpop.f32.mrb[0].mxu0
    %v1070 = vadd.f32 %v685, %v1069
    %v1071 = vpop.f32.mrb[0].mxu0
    %1072 = vmatprep.mubr.f32.mxu0 0.0
    %1073 = vmatmul.mubr.f32.gmra.mrb[0].mxu0 %v318
    %v1074 = vpop.f32.mrb[0].mxu0
    %v1075 = vadd.f32 %v690, %v1074
    %v1076 = vpop.f32.mrb[0].mxu0
    %1077 = vmatprep.mubr.f32.mxu0 0.0
    %1078 = vmatmul.mubr.f32.gmra.mrb[0].mxu0 %v319
    %v1079 = vpop.f32.mrb[0].mxu0
    %v1080 = vadd.f32 %v695, %v1079
    %v1081 = vpop.f32.mrb[0].mxu0
    %1082 = vmatprep.mubr.f32.mxu0 0.0
    %1083 = vmatmul.mubr.f32.gmra.mrb[0].mxu0 %v320
    %v1084 = vpop.f32.mrb[0].mxu0
    %v1085 = vadd.f32 %v700, %v1084
    %v1086 = vpop.f32.mrb[0].mxu0
    %1087 = vmatprep.mubr.f32.mxu0 0.0
    %1088 = vmatmul.mubr.f32.gmra.mrb[0].mxu0 %v321
    %v1089 = vpop.f32.mrb[0].mxu0
    %v1090 = vadd.f32 %v705, %v1089
    %v1091 = vpop.f32.mrb[0].mxu0
    %1092 = vmatprep.mubr.f32.mxu0 0.0
    %1093 = vmatmul.mubr.f32.gmra.mrb[0].mxu0 %v322
    %v1094 = vpop.f32.mrb[0].mxu0
    %v1095 = vadd.f32 %v710, %v1094
    %v1096 = vpop.f32.mrb[0].mxu0
    %1097 = vmatprep.mubr.f32.mxu0 0.0
    %1098 = vmatmul.mubr.f32.gmra.mrb[0].mxu0 %v323
    %v1099 = vpop.f32.mrb[0].mxu0
    %v1100 = vadd.f32 %v715, %v1099
    %v1101 = vpop.f32.mrb[0].mxu0
    %1102 = vmatprep.mubr.f32.mxu0 0.0
    %1103 = vmatmul.mubr.f32.gmra.mrb[0].mxu0 %v324
    %v1104 = vpop.f32.mrb[0].mxu0
    %v1105 = vadd.f32 %v720, %v1104
    %v1106 = vpop.f32.mrb[0].mxu0
    %1107 = vmatprep.mubr.f32.mxu0 0.0
    %1108 = vmatmul.mubr.f32.gmra.mrb[0].mxu0 %v325
    %v1109 = vpop.f32.mrb[0].mxu0
    %v1110 = vadd.f32 %v725, %v1109
    %v1111 = vpop.f32.mrb[0].mxu0
    %1112 = vmatprep.mubr.f32.mxu0 0.0
    %1113 = vmatmul.mubr.f32.gmra.mrb[0].mxu0 %v326
    %v1114 = vpop.f32.mrb[0].mxu0
    %v1115 = vadd.f32 %v730, %v1114
    %v1116 = vpop.f32.mrb[0].mxu0
    %1117 = vmatprep.mubr.f32.mxu0 0.0
    %1118 = vmatmul.mubr.f32.gmra.mrb[0].mxu0 %v327
    %v1119 = vpop.f32.mrb[0].mxu0
    %v1120 = vadd.f32 %v735, %v1119
    %v1121 = vpop.f32.mrb[0].mxu0
    %1122 = vmatprep.mubr.f32.mxu0 0.0
    %1123 = vmatmul.mubr.f32.gmra.mrb[0].mxu0 %v328
    %v1124 = vpop.f32.mrb[0].mxu0
    %v1125 = vadd.f32 %v740, %v1124
    %v1126 = vpop.f32.mrb[0].mxu0
    %1127 = vmatprep.mubr.f32.mxu0 0.0
    %1128 = vmatmul.mubr.f32.gmra.mrb[0].mxu0 %v329
    %v1129 = vpop.f32.mrb[0].mxu0
    %v1130 = vadd.f32 %v745, %v1129
    %v1131 = vpop.f32.mrb[0].mxu0
    %1132 = vmatprep.mubr.f32.mxu0 0.0
    %1133 = vmatmul.mubr.f32.gmra.mrb[0].mxu0 %v330
    %v1134 = vpop.f32.mrb[0].mxu0
    %v1135 = vadd.f32 %v750, %v1134
    %v1136 = vpop.f32.mrb[0].mxu0
    %1137 = vmatprep.mubr.f32.mxu0 0.0
    %1138 = vmatmul.mubr.f32.gmra.mrb[0].mxu0 %v331
    %v1139 = vpop.f32.mrb[0].mxu0
    %v1140 = vadd.f32 %v755, %v1139
    %v1141 = vpop.f32.mrb[0].mxu0
    %1142 = vmatprep.mubr.f32.mxu0 0.0
    %1143 = vmatmul.mubr.f32.gmra.mrb[0].mxu0 %v332
    %v1144 = vpop.f32.mrb[0].mxu0
    %v1145 = vadd.f32 %v760, %v1144
    %v1146 = vpop.f32.mrb[0].mxu0
    %1147 = vmatprep.mubr.f32.mxu0 0.0
    %1148 = vmatmul.mubr.f32.gmra.mrb[0].mxu0 %v333
    %v1149 = vpop.f32.mrb[0].mxu0
    %v1150 = vadd.f32 %v765, %v1149
    %v1151 = vpop.f32.mrb[0].mxu0
    %1152 = vmatprep.mubr.f32.mxu0 0.0
    %1153 = vmatmul.mubr.f32.gmra.mrb[0].mxu0 %v334
    %v1154 = vpop.f32.mrb[0].mxu0
    %v1155 = vadd.f32 %v770, %v1154
    %v1156 = vpop.f32.mrb[0].mxu0
    %1157 = vmatprep.mubr.f32.mxu0 0.0
    %1158 = vmatmul.mubr.f32.gmra.mrb[0].mxu0 %v335
    %v1159 = vpop.f32.mrb[0].mxu0
    %v1160 = vadd.f32 %v775, %v1159
    %v1161 = vpop.f32.mrb[0].mxu0
    %1162 = vmatprep.mubr.f32.mxu0 0.0
    %1163 = vmatmul.mubr.f32.gmra.mrb[0].mxu0 %v336
    %v1164 = vpop.f32.mrb[0].mxu0
    %v1165 = vadd.f32 %v780, %v1164
    %v1166 = vpop.f32.mrb[0].mxu0
    %1167 = vmatprep.mubr.f32.mxu0 0.0
    %1168 = vmatmul.mubr.f32.gmra.mrb[0].mxu0 %v337
    %v1169 = vpop.f32.mrb[0].mxu0
    %v1170 = vadd.f32 %v785, %v1169
    %v1171 = vpop.f32.mrb[0].mxu0
    %1172 = vmatprep.mubr.f32.mxu0 0.0
    %1173 = vmatmul.mubr.f32.gmra.mrb[0].mxu0 %v338
    %v1174 = vpop.f32.mrb[0].mxu0
    %v1175 = vadd.f32 %v790, %v1174
    %v1176 = vpop.f32.mrb[0].mxu0
    %1177 = vmatprep.mubr.f32.mxu0 0.0
    %1178 = vmatmul.mubr.f32.gmra.mrb[0].mxu0 %v339
    %v1179 = vpop.f32.mrb[0].mxu0
    %v1180 = vadd.f32 %v795, %v1179
    %v1181 = vpop.f32.mrb[0].mxu0
    %1182 = vmatprep.mubr.f32.mxu0 0.0
    %1183 = vmatmul.mubr.f32.gmra.mrb[0].mxu0 %v340
    %v1184 = vpop.f32.mrb[0].mxu0
    %v1185 = vadd.f32 %v800, %v1184
    %v1186 = vpop.f32.mrb[0].mxu0
    %1187 = vmatprep.mubr.f32.mxu0 0.0
    %1188 = vmatmul.mubr.f32.gmra.mrb[0].mxu0 %v341
    %v1189 = vpop.f32.mrb[0].mxu0
    %v1190 = vadd.f32 %v805, %v1189
    %v1191 = vpop.f32.mrb[0].mxu0
    %1192 = vmatprep.mubr.f32.mxu0 0.0
    %1193 = vmatmul.mubr.f32.gmra.mrb[0].mxu0 %v342
    %v1194 = vpop.f32.mrb[0].mxu0
    %v1195 = vadd.f32 %v810, %v1194
    %v1196 = vpop.f32.mrb[0].mxu0
    %1197 = vmatprep.mubr.f32.mxu0 0.0
    %1198 = vmatmul.mubr.f32.gmra.mrb[0].mxu0 %v343
    %v1199 = vpop.f32.mrb[0].mxu0
    %v1200 = vadd.f32 %v815, %v1199
    %v1201 = vpop.f32.mrb[0].mxu0
    %1202 = vmatprep.mubr.f32.mxu0 0.0
    %1203 = vmatmul.mubr.f32.gmra.mrb[0].mxu0 %v344
    %v1204 = vpop.f32.mrb[0].mxu0
    %v1205 = vadd.f32 %v820, %v1204
    %v1206 = vpop.f32.mrb[0].mxu0
    %1207 = vmatprep.mubr.f32.mxu0 0.0
    %1208 = vmatmul.mubr.f32.gmra.mrb[0].mxu0 %v345
    %v1209 = vpop.f32.mrb[0].mxu0
    %v1210 = vadd.f32 %v825, %v1209
    %v1211 = vpop.f32.mrb[0].mxu0
    %1212 = vdwg.mxu0
    %v1213 = vld [vmem:[#allocation2 + $0x2] sm:$0xff]
    %v1214 = vld [vmem:[#allocation2 + $0xa] sm:$0xff]
    %v1215 = vld [vmem:[#allocation2 + $0x1a] sm:$0xff]
    %v1216 = vld [vmem:[#allocation2 + $0x22] sm:$0xff]
    %v1217 = vld [vmem:[#allocation2 + $0x32] sm:$0xff]
    %v1218 = vld [vmem:[#allocation2 + $0x3a] sm:$0xff]
    %v1219 = vld [vmem:[#allocation2 + $0x4a] sm:$0xff]
    %v1220 = vld [vmem:[#allocation2 + $0x52] sm:$0xff]
    %v1221 = vld [vmem:[#allocation2 + $0x62] sm:$0xff]
    %v1222 = vld [vmem:[#allocation2 + $0x6a] sm:$0xff]
    %v1223 = vld [vmem:[#allocation2 + $0x7a] sm:$0xff]
    %v1224 = vld [vmem:[#allocation2 + $0x82] sm:$0xff]
    %v1225 = vld [vmem:[#allocation2 + $0x92] sm:$0xff]
    %v1226 = vld [vmem:[#allocation2 + $0x9a] sm:$0xff]
    %v1227 = vld [vmem:[#allocation2 + $0xaa] sm:$0xff]
    %v1228 = vld [vmem:[#allocation2 + $0xb2] sm:$0xff]
    %v1229 = vld [vmem:[#allocation2 + $0xc2] sm:$0xff]
    %v1230 = vld [vmem:[#allocation2 + $0xca] sm:$0xff]
    %v1231 = vld [vmem:[#allocation2 + $0xda] sm:$0xff]
    %v1232 = vld [vmem:[#allocation2 + $0xe2] sm:$0xff]
    %v1233 = vld [vmem:[#allocation2 + $0xf2] sm:$0xff]
    %v1234 = vld [vmem:[#allocation2 + $0xfa] sm:$0xff]
    %v1235 = vld [vmem:[#allocation2 + $0x10a] sm:$0xff]
    %v1236 = vld [vmem:[#allocation2 + $0x112] sm:$0xff]
    %v1237 = vld [vmem:[#allocation2 + $0x122] sm:$0xff]
    %v1238 = vld [vmem:[#allocation2 + $0x12a] sm:$0xff]
    %v1239 = vld [vmem:[#allocation2 + $0x13a] sm:$0xff]
    %v1240 = vld [vmem:[#allocation2 + $0x142] sm:$0xff]
    %v1241 = vld [vmem:[#allocation2 + $0x152] sm:$0xff]
    %v1242 = vld [vmem:[#allocation2 + $0x15a] sm:$0xff]
    %v1243 = vld [vmem:[#allocation2 + $0x16a] sm:$0xff]
    %v1244 = vld [vmem:[#allocation2 + $0x172] sm:$0xff]
    %v1245 = vld [vmem:[#allocation2 + $0x1b2] sm:$0xff]
    %v1246 = vld [vmem:[#allocation2 + $0x1ba] sm:$0xff]
    %v1247 = vld [vmem:[#allocation2 + $0x1ca] sm:$0xff]
    %v1248 = vld [vmem:[#allocation2 + $0x1d2] sm:$0xff]
    %v1249 = vld [vmem:[#allocation2 + $0x1e2] sm:$0xff]
    %v1250 = vld [vmem:[#allocation2 + $0x1ea] sm:$0xff]
    %v1251 = vld [vmem:[#allocation2 + $0x1fa] sm:$0xff]
    %v1252 = vld [vmem:[#allocation2 + $0x202] sm:$0xff]
    %v1253 = vld [vmem:[#allocation2 + $0x212] sm:$0xff]
    %v1254 = vld [vmem:[#allocation2 + $0x21a] sm:$0xff]
    %v1255 = vld [vmem:[#allocation2 + $0x22a] sm:$0xff]
    %v1256 = vld [vmem:[#allocation2 + $0x232] sm:$0xff]
    %v1257 = vld [vmem:[#allocation2 + $0x242] sm:$0xff]
    %v1258 = vld [vmem:[#allocation2 + $0x24a] sm:$0xff]
    %v1259 = vld [vmem:[#allocation2 + $0x25a] sm:$0xff]
    %v1260 = vld [vmem:[#allocation2 + $0x262] sm:$0xff]
    %v1261 = vld [vmem:[#allocation2 + $0x272] sm:$0xff]
    %v1262 = vld [vmem:[#allocation2 + $0x27a] sm:$0xff]
    %v1263 = vld [vmem:[#allocation2 + $0x28a] sm:$0xff]
    %v1264 = vld [vmem:[#allocation2 + $0x292] sm:$0xff]
    %v1265 = vld [vmem:[#allocation2 + $0x2a2] sm:$0xff]
    %v1266 = vld [vmem:[#allocation2 + $0x2aa] sm:$0xff]
    %v1267 = vld [vmem:[#allocation2 + $0x2ba] sm:$0xff]
    %v1268 = vld [vmem:[#allocation2 + $0x2c2] sm:$0xff]
    %v1269 = vld [vmem:[#allocation2 + $0x2d2] sm:$0xff]
    %v1270 = vld [vmem:[#allocation2 + $0x2da] sm:$0xff]
    %v1271 = vld [vmem:[#allocation2 + $0x2ea] sm:$0xff]
    %v1272 = vld [vmem:[#allocation2 + $0x2f2] sm:$0xff]
    %v1273 = vld [vmem:[#allocation2 + $0x302] sm:$0xff]
    %v1274 = vld [vmem:[#allocation2 + $0x30a] sm:$0xff]
    %v1275 = vld [vmem:[#allocation2 + $0x31a] sm:$0xff]
    %v1276 = vld [vmem:[#allocation2 + $0x322] sm:$0xff]
    %s1277 = scalar_lea.vmem [#allocation6], 256
    %v1278 = vld [vmem:[%s1277] sm:$0xff]
    %v1279 = vld [vmem:[%s1277 + $0x8] sm:$0xff]
    %v1280 = vld [vmem:[%s1277 + $0x10] sm:$0xff]
    %v1281 = vld [vmem:[%s1277 + $0x18] sm:$0xff]
    %v1282 = vld [vmem:[%s1277 + $0x20] sm:$0xff]
    %v1283 = vld [vmem:[%s1277 + $0x28] sm:$0xff]
    %v1284 = vld [vmem:[%s1277 + $0x30] sm:$0xff]
    %v1285 = vld [vmem:[%s1277 + $0x38] sm:$0xff]
    %v1286 = vld [vmem:[%s1277 + $0x40] sm:$0xff]
    %v1287 = vld [vmem:[%s1277 + $0x48] sm:$0xff]
    %v1288 = vld [vmem:[%s1277 + $0x50] sm:$0xff]
    %v1289 = vld [vmem:[%s1277 + $0x58] sm:$0xff]
    %v1290 = vld [vmem:[%s1277 + $0x60] sm:$0xff]
    %v1291 = vld [vmem:[%s1277 + $0x68] sm:$0xff]
    %v1292 = vld [vmem:[%s1277 + $0x70] sm:$0xff]
    %v1293 = vld [vmem:[%s1277 + $0x78] sm:$0xff]
    %1294 = vmatprep.subr.mxu0 0.0
    %1295 = vmatpush1.msra.mxu0 %v1278
    %1296 = vmatprep.subr.mxu0 0.0
    %1297 = vmatpush1.msra.mxu0 %v1279
    %1298 = vmatprep.subr.mxu0 0.0
    %1299 = vmatpush1.msra.mxu0 %v1280
    %1300 = vmatprep.subr.mxu0 0.0
    %1301 = vmatpush1.msra.mxu0 %v1281
    %1302 = vmatprep.subr.mxu0 0.0
    %1303 = vmatpush1.msra.mxu0 %v1282
    %1304 = vmatprep.subr.mxu0 0.0
    %1305 = vmatpush1.msra.mxu0 %v1283
    %1306 = vmatprep.subr.mxu0 0.0
    %1307 = vmatpush1.msra.mxu0 %v1284
    %1308 = vmatprep.subr.mxu0 0.0
    %1309 = vmatpush1.msra.mxu0 %v1285
    %1310 = vmatprep.subr.mxu0 0.0
    %1311 = vmatpush1.msra.mxu0 %v1286
    %1312 = vmatprep.subr.mxu0 0.0
    %1313 = vmatpush1.msra.mxu0 %v1287
    %1314 = vmatprep.subr.mxu0 0.0
    %1315 = vmatpush1.msra.mxu0 %v1288
    %1316 = vmatprep.subr.mxu0 0.0
    %1317 = vmatpush1.msra.mxu0 %v1289
    %1318 = vmatprep.subr.mxu0 0.0
    %1319 = vmatpush1.msra.mxu0 %v1290
    %1320 = vmatprep.subr.mxu0 0.0
    %1321 = vmatpush1.msra.mxu0 %v1291
    %1322 = vmatprep.subr.mxu0 0.0
    %1323 = vmatpush1.msra.mxu0 %v1292
    %1324 = vmatprep.subr.mxu0 0.0
    %1325 = vmatpush1.msra.mxu0 %v1293
    %1326 = vmatprep.subr.mxu0 0.0
    %1327 = vmatpush1.msra.mxu0 0.0
    %1328 = vmatprep.subr.mxu0 0.0
    %1329 = vmatpush1.msra.mxu0 0.0
    %1330 = vmatprep.subr.mxu0 0.0
    %1331 = vmatpush1.msra.mxu0 0.0
    %1332 = vmatprep.subr.mxu0 0.0
    %1333 = vmatpush1.msra.mxu0 0.0
    %1334 = vmatprep.subr.mxu0 0.0
    %1335 = vmatpush1.msra.mxu0 0.0
    %1336 = vmatprep.subr.mxu0 0.0
    %1337 = vmatpush1.msra.mxu0 0.0
    %1338 = vmatprep.subr.mxu0 0.0
    %1339 = vmatpush1.msra.mxu0 0.0
    %1340 = vmatprep.subr.mxu0 0.0
    %1341 = vmatpush1.msra.mxu0 0.0
    %1342 = vmatprep.subr.mxu0 0.0
    %1343 = vmatpush1.msra.mxu0 0.0
    %1344 = vmatprep.subr.mxu0 0.0
    %1345 = vmatpush1.msra.mxu0 0.0
    %1346 = vmatprep.subr.mxu0 0.0
    %1347 = vmatpush1.msra.mxu0 0.0
    %1348 = vmatprep.subr.mxu0 0.0
    %1349 = vmatpush1.msra.mxu0 0.0
    %1350 = vmatprep.subr.mxu0 0.0
    %1351 = vmatpush1.msra.mxu0 0.0
    %1352 = vmatprep.subr.mxu0 0.0
    %1353 = vmatpush1.msra.mxu0 0.0
    %1354 = vmatprep.subr.mxu0 0.0
    %1355 = vmatpush1.msra.mxu0 0.0
    %1356 = vmatprep.subr.mxu0 0.0
    %1357 = vmatpush1.msra.mxu0 0.0
    %1358 = vmatprep.mubr.f32.mxu0 0.0
    %1359 = vmatmul.mubr.f32.gmra.mrb[0].mxu0 %v1213
    %v1360 = vpop.f32.mrb[0].mxu0
    %v1361 = vadd.f32 0.0, %v1360
    %v1362 = vpop.f32.mrb[0].mxu0
    %1363 = vmatprep.mubr.f32.mxu0 0.0
    %1364 = vmatmul.mubr.f32.gmra.mrb[0].mxu0 %v1214
    %v1365 = vpop.f32.mrb[0].mxu0
    %v1366 = vadd.f32 0.0, %v1365
    %v1367 = vpop.f32.mrb[0].mxu0
    %1368 = vmatprep.mubr.f32.mxu0 0.0
    %1369 = vmatmul.mubr.f32.gmra.mrb[0].mxu0 %v1215
    %v1370 = vpop.f32.mrb[0].mxu0
    %v1371 = vadd.f32 0.0, %v1370
    %v1372 = vpop.f32.mrb[0].mxu0
    %1373 = vmatprep.mubr.f32.mxu0 0.0
    %1374 = vmatmul.mubr.f32.gmra.mrb[0].mxu0 %v1216
    %v1375 = vpop.f32.mrb[0].mxu0
    %v1376 = vadd.f32 0.0, %v1375
    %v1377 = vpop.f32.mrb[0].mxu0
    %1378 = vmatprep.mubr.f32.mxu0 0.0
    %1379 = vmatmul.mubr.f32.gmra.mrb[0].mxu0 %v1217
    %v1380 = vpop.f32.mrb[0].mxu0
    %v1381 = vadd.f32 0.0, %v1380
    %v1382 = vpop.f32.mrb[0].mxu0
    %1383 = vmatprep.mubr.f32.mxu0 0.0
    %1384 = vmatmul.mubr.f32.gmra.mrb[0].mxu0 %v1218
    %v1385 = vpop.f32.mrb[0].mxu0
    %v1386 = vadd.f32 0.0, %v1385
    %v1387 = vpop.f32.mrb[0].mxu0
    %1388 = vmatprep.mubr.f32.mxu0 0.0
    %1389 = vmatmul.mubr.f32.gmra.mrb[0].mxu0 %v1219
    %v1390 = vpop.f32.mrb[0].mxu0
    %v1391 = vadd.f32 0.0, %v1390
    %v1392 = vpop.f32.mrb[0].mxu0
    %1393 = vmatprep.mubr.f32.mxu0 0.0
    %1394 = vmatmul.mubr.f32.gmra.mrb[0].mxu0 %v1220
    %v1395 = vpop.f32.mrb[0].mxu0
    %v1396 = vadd.f32 0.0, %v1395
    %v1397 = vpop.f32.mrb[0].mxu0
    %1398 = vmatprep.mubr.f32.mxu0 0.0
    %1399 = vmatmul.mubr.f32.gmra.mrb[0].mxu0 %v1221
    %v1400 = vpop.f32.mrb[0].mxu0
    %v1401 = vadd.f32 0.0, %v1400
    %v1402 = vpop.f32.mrb[0].mxu0
    %1403 = vmatprep.mubr.f32.mxu0 0.0
    %1404 = vmatmul.mubr.f32.gmra.mrb[0].mxu0 %v1222
    %v1405 = vpop.f32.mrb[0].mxu0
    %v1406 = vadd.f32 0.0, %v1405
    %v1407 = vpop.f32.mrb[0].mxu0
    %1408 = vmatprep.mubr.f32.mxu0 0.0
    %1409 = vmatmul.mubr.f32.gmra.mrb[0].mxu0 %v1223
    %v1410 = vpop.f32.mrb[0].mxu0
    %v1411 = vadd.f32 0.0, %v1410
    %v1412 = vpop.f32.mrb[0].mxu0
    %1413 = vmatprep.mubr.f32.mxu0 0.0
    %1414 = vmatmul.mubr.f32.gmra.mrb[0].mxu0 %v1224
    %v1415 = vpop.f32.mrb[0].mxu0
    %v1416 = vadd.f32 0.0, %v1415
    %v1417 = vpop.f32.mrb[0].mxu0
    %1418 = vmatprep.mubr.f32.mxu0 0.0
    %1419 = vmatmul.mubr.f32.gmra.mrb[0].mxu0 %v1225
    %v1420 = vpop.f32.mrb[0].mxu0
    %v1421 = vadd.f32 0.0, %v1420
    %v1422 = vpop.f32.mrb[0].mxu0
    %1423 = vmatprep.mubr.f32.mxu0 0.0
    %1424 = vmatmul.mubr.f32.gmra.mrb[0].mxu0 %v1226
    %v1425 = vpop.f32.mrb[0].mxu0
    %v1426 = vadd.f32 0.0, %v1425
    %v1427 = vpop.f32.mrb[0].mxu0
    %1428 = vmatprep.mubr.f32.mxu0 0.0
    %1429 = vmatmul.mubr.f32.gmra.mrb[0].mxu0 %v1227
    %v1430 = vpop.f32.mrb[0].mxu0
    %v1431 = vadd.f32 0.0, %v1430
    %v1432 = vpop.f32.mrb[0].mxu0
    %1433 = vmatprep.mubr.f32.mxu0 0.0
    %1434 = vmatmul.mubr.f32.gmra.mrb[0].mxu0 %v1228
    %v1435 = vpop.f32.mrb[0].mxu0
    %v1436 = vadd.f32 0.0, %v1435
    %v1437 = vpop.f32.mrb[0].mxu0
    %1438 = vmatprep.mubr.f32.mxu0 0.0
    %1439 = vmatmul.mubr.f32.gmra.mrb[0].mxu0 %v1229
    %v1440 = vpop.f32.mrb[0].mxu0
    %v1441 = vadd.f32 0.0, %v1440
    %v1442 = vpop.f32.mrb[0].mxu0
    %1443 = vmatprep.mubr.f32.mxu0 0.0
    %1444 = vmatmul.mubr.f32.gmra.mrb[0].mxu0 %v1230
    %v1445 = vpop.f32.mrb[0].mxu0
    %v1446 = vadd.f32 0.0, %v1445
    %v1447 = vpop.f32.mrb[0].mxu0
    %1448 = vmatprep.mubr.f32.mxu0 0.0
    %1449 = vmatmul.mubr.f32.gmra.mrb[0].mxu0 %v1231
    %v1450 = vpop.f32.mrb[0].mxu0
    %v1451 = vadd.f32 0.0, %v1450
    %v1452 = vpop.f32.mrb[0].mxu0
    %1453 = vmatprep.mubr.f32.mxu0 0.0
    %1454 = vmatmul.mubr.f32.gmra.mrb[0].mxu0 %v1232
    %v1455 = vpop.f32.mrb[0].mxu0
    %v1456 = vadd.f32 0.0, %v1455
    %v1457 = vpop.f32.mrb[0].mxu0
    %1458 = vmatprep.mubr.f32.mxu0 0.0
    %1459 = vmatmul.mubr.f32.gmra.mrb[0].mxu0 %v1233
    %v1460 = vpop.f32.mrb[0].mxu0
    %v1461 = vadd.f32 0.0, %v1460
    %v1462 = vpop.f32.mrb[0].mxu0
    %1463 = vmatprep.mubr.f32.mxu0 0.0
    %1464 = vmatmul.mubr.f32.gmra.mrb[0].mxu0 %v1234
    %v1465 = vpop.f32.mrb[0].mxu0
    %v1466 = vadd.f32 0.0, %v1465
    %v1467 = vpop.f32.mrb[0].mxu0
    %1468 = vmatprep.mubr.f32.mxu0 0.0
    %1469 = vmatmul.mubr.f32.gmra.mrb[0].mxu0 %v1235
    %v1470 = vpop.f32.mrb[0].mxu0
    %v1471 = vadd.f32 0.0, %v1470
    %v1472 = vpop.f32.mrb[0].mxu0
    %1473 = vmatprep.mubr.f32.mxu0 0.0
    %1474 = vmatmul.mubr.f32.gmra.mrb[0].mxu0 %v1236
    %v1475 = vpop.f32.mrb[0].mxu0
    %v1476 = vadd.f32 0.0, %v1475
    %v1477 = vpop.f32.mrb[0].mxu0
    %1478 = vmatprep.mubr.f32.mxu0 0.0
    %1479 = vmatmul.mubr.f32.gmra.mrb[0].mxu0 %v1237
    %v1480 = vpop.f32.mrb[0].mxu0
    %v1481 = vadd.f32 0.0, %v1480
    %v1482 = vpop.f32.mrb[0].mxu0
    %1483 = vmatprep.mubr.f32.mxu0 0.0
    %1484 = vmatmul.mubr.f32.gmra.mrb[0].mxu0 %v1238
    %v1485 = vpop.f32.mrb[0].mxu0
    %v1486 = vadd.f32 0.0, %v1485
    %v1487 = vpop.f32.mrb[0].mxu0
    %1488 = vmatprep.mubr.f32.mxu0 0.0
    %1489 = vmatmul.mubr.f32.gmra.mrb[0].mxu0 %v1239
    %v1490 = vpop.f32.mrb[0].mxu0
    %v1491 = vadd.f32 0.0, %v1490
    %v1492 = vpop.f32.mrb[0].mxu0
    %1493 = vmatprep.mubr.f32.mxu0 0.0
    %1494 = vmatmul.mubr.f32.gmra.mrb[0].mxu0 %v1240
    %v1495 = vpop.f32.mrb[0].mxu0
    %v1496 = vadd.f32 0.0, %v1495
    %v1497 = vpop.f32.mrb[0].mxu0
    %1498 = vmatprep.mubr.f32.mxu0 0.0
    %1499 = vmatmul.mubr.f32.gmra.mrb[0].mxu0 %v1241
    %v1500 = vpop.f32.mrb[0].mxu0
    %v1501 = vadd.f32 0.0, %v1500
    %v1502 = vpop.f32.mrb[0].mxu0
    %1503 = vmatprep.mubr.f32.mxu0 0.0
    %1504 = vmatmul.mubr.f32.gmra.mrb[0].mxu0 %v1242
    %v1505 = vpop.f32.mrb[0].mxu0
    %v1506 = vadd.f32 0.0, %v1505
    %v1507 = vpop.f32.mrb[0].mxu0
    %1508 = vmatprep.mubr.f32.mxu0 0.0
    %1509 = vmatmul.mubr.f32.gmra.mrb[0].mxu0 %v1243
    %v1510 = vpop.f32.mrb[0].mxu0
    %v1511 = vadd.f32 0.0, %v1510
    %v1512 = vpop.f32.mrb[0].mxu0
    %1513 = vmatprep.mubr.f32.mxu0 0.0
    %1514 = vmatmul.mubr.f32.gmra.mrb[0].mxu0 %v1244
    %v1515 = vpop.f32.mrb[0].mxu0
    %v1516 = vadd.f32 0.0, %v1515
    %v1517 = vpop.f32.mrb[0].mxu0
    %1518 = vmatprep.mubr.f32.mxu0 0.0
    %1519 = vmatmul.mubr.f32.gmra.mrb[0].mxu0 %v1245
    %v1520 = vpop.f32.mrb[0].mxu0
    %v1521 = vadd.f32 0.0, %v1520
    %v1522 = vpop.f32.mrb[0].mxu0
    %1523 = vmatprep.mubr.f32.mxu0 0.0
    %1524 = vmatmul.mubr.f32.gmra.mrb[0].mxu0 %v1246
    %v1525 = vpop.f32.mrb[0].mxu0
    %v1526 = vadd.f32 0.0, %v1525
    %v1527 = vpop.f32.mrb[0].mxu0
    %1528 = vmatprep.mubr.f32.mxu0 0.0
    %1529 = vmatmul.mubr.f32.gmra.mrb[0].mxu0 %v1247
    %v1530 = vpop.f32.mrb[0].mxu0
    %v1531 = vadd.f32 0.0, %v1530
    %v1532 = vpop.f32.mrb[0].mxu0
    %1533 = vmatprep.mubr.f32.mxu0 0.0
    %1534 = vmatmul.mubr.f32.gmra.mrb[0].mxu0 %v1248
    %v1535 = vpop.f32.mrb[0].mxu0
    %v1536 = vadd.f32 0.0, %v1535
    %v1537 = vpop.f32.mrb[0].mxu0
    %1538 = vmatprep.mubr.f32.mxu0 0.0
    %1539 = vmatmul.mubr.f32.gmra.mrb[0].mxu0 %v1249
    %v1540 = vpop.f32.mrb[0].mxu0
    %v1541 = vadd.f32 0.0, %v1540
    %v1542 = vpop.f32.mrb[0].mxu0
    %1543 = vmatprep.mubr.f32.mxu0 0.0
    %1544 = vmatmul.mubr.f32.gmra.mrb[0].mxu0 %v1250
    %v1545 = vpop.f32.mrb[0].mxu0
    %v1546 = vadd.f32 0.0, %v1545
    %v1547 = vpop.f32.mrb[0].mxu0
    %1548 = vmatprep.mubr.f32.mxu0 0.0
    %1549 = vmatmul.mubr.f32.gmra.mrb[0].mxu0 %v1251
    %v1550 = vpop.f32.mrb[0].mxu0
    %v1551 = vadd.f32 0.0, %v1550
    %v1552 = vpop.f32.mrb[0].mxu0
    %1553 = vmatprep.mubr.f32.mxu0 0.0
    %1554 = vmatmul.mubr.f32.gmra.mrb[0].mxu0 %v1252
    %v1555 = vpop.f32.mrb[0].mxu0
    %v1556 = vadd.f32 0.0, %v1555
    %v1557 = vpop.f32.mrb[0].mxu0
    %1558 = vmatprep.mubr.f32.mxu0 0.0
    %1559 = vmatmul.mubr.f32.gmra.mrb[0].mxu0 %v1253
    %v1560 = vpop.f32.mrb[0].mxu0
    %v1561 = vadd.f32 0.0, %v1560
    %v1562 = vpop.f32.mrb[0].mxu0
    %1563 = vmatprep.mubr.f32.mxu0 0.0
    %1564 = vmatmul.mubr.f32.gmra.mrb[0].mxu0 %v1254
    %v1565 = vpop.f32.mrb[0].mxu0
    %v1566 = vadd.f32 0.0, %v1565
    %v1567 = vpop.f32.mrb[0].mxu0
    %1568 = vmatprep.mubr.f32.mxu0 0.0
    %1569 = vmatmul.mubr.f32.gmra.mrb[0].mxu0 %v1255
    %v1570 = vpop.f32.mrb[0].mxu0
    %v1571 = vadd.f32 0.0, %v1570
    %v1572 = vpop.f32.mrb[0].mxu0
    %1573 = vmatprep.mubr.f32.mxu0 0.0
    %1574 = vmatmul.mubr.f32.gmra.mrb[0].mxu0 %v1256
    %v1575 = vpop.f32.mrb[0].mxu0
    %v1576 = vadd.f32 0.0, %v1575
    %v1577 = vpop.f32.mrb[0].mxu0
    %1578 = vmatprep.mubr.f32.mxu0 0.0
    %1579 = vmatmul.mubr.f32.gmra.mrb[0].mxu0 %v1257
    %v1580 = vpop.f32.mrb[0].mxu0
    %v1581 = vadd.f32 0.0, %v1580
    %v1582 = vpop.f32.mrb[0].mxu0
    %1583 = vmatprep.mubr.f32.mxu0 0.0
    %1584 = vmatmul.mubr.f32.gmra.mrb[0].mxu0 %v1258
    %v1585 = vpop.f32.mrb[0].mxu0
    %v1586 = vadd.f32 0.0, %v1585
    %v1587 = vpop.f32.mrb[0].mxu0
    %1588 = vmatprep.mubr.f32.mxu0 0.0
    %1589 = vmatmul.mubr.f32.gmra.mrb[0].mxu0 %v1259
    %v1590 = vpop.f32.mrb[0].mxu0
    %v1591 = vadd.f32 0.0, %v1590
    %v1592 = vpop.f32.mrb[0].mxu0
    %1593 = vmatprep.mubr.f32.mxu0 0.0
    %1594 = vmatmul.mubr.f32.gmra.mrb[0].mxu0 %v1260
    %v1595 = vpop.f32.mrb[0].mxu0
    %v1596 = vadd.f32 0.0, %v1595
    %v1597 = vpop.f32.mrb[0].mxu0
    %1598 = vmatprep.mubr.f32.mxu0 0.0
    %1599 = vmatmul.mubr.f32.gmra.mrb[0].mxu0 %v1261
    %v1600 = vpop.f32.mrb[0].mxu0
    %v1601 = vadd.f32 0.0, %v1600
    %v1602 = vpop.f32.mrb[0].mxu0
    %1603 = vmatprep.mubr.f32.mxu0 0.0
    %1604 = vmatmul.mubr.f32.gmra.mrb[0].mxu0 %v1262
    %v1605 = vpop.f32.mrb[0].mxu0
    %v1606 = vadd.f32 0.0, %v1605
    %v1607 = vpop.f32.mrb[0].mxu0
    %1608 = vmatprep.mubr.f32.mxu0 0.0
    %1609 = vmatmul.mubr.f32.gmra.mrb[0].mxu0 %v1263
    %v1610 = vpop.f32.mrb[0].mxu0
    %v1611 = vadd.f32 0.0, %v1610
    %v1612 = vpop.f32.mrb[0].mxu0
    %1613 = vmatprep.mubr.f32.mxu0 0.0
    %1614 = vmatmul.mubr.f32.gmra.mrb[0].mxu0 %v1264
    %v1615 = vpop.f32.mrb[0].mxu0
    %v1616 = vadd.f32 0.0, %v1615
    %v1617 = vpop.f32.mrb[0].mxu0
    %1618 = vmatprep.mubr.f32.mxu0 0.0
    %1619 = vmatmul.mubr.f32.gmra.mrb[0].mxu0 %v1265
    %v1620 = vpop.f32.mrb[0].mxu0
    %v1621 = vadd.f32 0.0, %v1620
    %v1622 = vpop.f32.mrb[0].mxu0
    %1623 = vmatprep.mubr.f32.mxu0 0.0
    %1624 = vmatmul.mubr.f32.gmra.mrb[0].mxu0 %v1266
    %v1625 = vpop.f32.mrb[0].mxu0
    %v1626 = vadd.f32 0.0, %v1625
    %v1627 = vpop.f32.mrb[0].mxu0
    %1628 = vmatprep.mubr.f32.mxu0 0.0
    %1629 = vmatmul.mubr.f32.gmra.mrb[0].mxu0 %v1267
    %v1630 = vpop.f32.mrb[0].mxu0
    %v1631 = vadd.f32 0.0, %v1630
    %v1632 = vpop.f32.mrb[0].mxu0
    %1633 = vmatprep.mubr.f32.mxu0 0.0
    %1634 = vmatmul.mubr.f32.gmra.mrb[0].mxu0 %v1268
    %v1635 = vpop.f32.mrb[0].mxu0
    %v1636 = vadd.f32 0.0, %v1635
    %v1637 = vpop.f32.mrb[0].mxu0
    %1638 = vmatprep.mubr.f32.mxu0 0.0
    %1639 = vmatmul.mubr.f32.gmra.mrb[0].mxu0 %v1269
    %v1640 = vpop.f32.mrb[0].mxu0
    %v1641 = vadd.f32 0.0, %v1640
    %v1642 = vpop.f32.mrb[0].mxu0
    %1643 = vmatprep.mubr.f32.mxu0 0.0
    %1644 = vmatmul.mubr.f32.gmra.mrb[0].mxu0 %v1270
    %v1645 = vpop.f32.mrb[0].mxu0
    %v1646 = vadd.f32 0.0, %v1645
    %v1647 = vpop.f32.mrb[0].mxu0
    %1648 = vmatprep.mubr.f32.mxu0 0.0
    %1649 = vmatmul.mubr.f32.gmra.mrb[0].mxu0 %v1271
    %v1650 = vpop.f32.mrb[0].mxu0
    %v1651 = vadd.f32 0.0, %v1650
    %v1652 = vpop.f32.mrb[0].mxu0
    %1653 = vmatprep.mubr.f32.mxu0 0.0
    %1654 = vmatmul.mubr.f32.gmra.mrb[0].mxu0 %v1272
    %v1655 = vpop.f32.mrb[0].mxu0
    %v1656 = vadd.f32 0.0, %v1655
    %v1657 = vpop.f32.mrb[0].mxu0
    %1658 = vmatprep.mubr.f32.mxu0 0.0
    %1659 = vmatmul.mubr.f32.gmra.mrb[0].mxu0 %v1273
    %v1660 = vpop.f32.mrb[0].mxu0
    %v1661 = vadd.f32 0.0, %v1660
    %v1662 = vpop.f32.mrb[0].mxu0
    %1663 = vmatprep.mubr.f32.mxu0 0.0
    %1664 = vmatmul.mubr.f32.gmra.mrb[0].mxu0 %v1274
    %v1665 = vpop.f32.mrb[0].mxu0
    %v1666 = vadd.f32 0.0, %v1665
    %v1667 = vpop.f32.mrb[0].mxu0
    %1668 = vmatprep.mubr.f32.mxu0 0.0
    %1669 = vmatmul.mubr.f32.gmra.mrb[0].mxu0 %v1275
    %v1670 = vpop.f32.mrb[0].mxu0
    %v1671 = vadd.f32 0.0, %v1670
    %v1672 = vpop.f32.mrb[0].mxu0
    %1673 = vmatprep.mubr.f32.mxu0 0.0
    %1674 = vmatmul.mubr.f32.gmra.mrb[0].mxu0 %v1276
    %v1675 = vpop.f32.mrb[0].mxu0
    %v1676 = vadd.f32 0.0, %v1675
    %v1677 = vpop.f32.mrb[0].mxu0
    %1678 = vdwg.mxu0
    %v1679 = vadd.f32 %v895, %v1361
    %v1680 = vadd.f32 %v900, %v1366
    %v1681 = vadd.f32 %v905, %v1371
    %v1682 = vadd.f32 %v910, %v1376
    %v1683 = vadd.f32 %v915, %v1381
    %v1684 = vadd.f32 %v920, %v1386
    %v1685 = vadd.f32 %v925, %v1391
    %v1686 = vadd.f32 %v930, %v1396
    %v1687 = vadd.f32 %v935, %v1401
    %v1688 = vadd.f32 %v940, %v1406
    %v1689 = vadd.f32 %v945, %v1411
    %v1690 = vadd.f32 %v950, %v1416
    %v1691 = vadd.f32 %v955, %v1421
    %v1692 = vadd.f32 %v960, %v1426
    %v1693 = vadd.f32 %v965, %v1431
    %v1694 = vadd.f32 %v970, %v1436
    %v1695 = vadd.f32 %v975, %v1441
    %v1696 = vadd.f32 %v980, %v1446
    %v1697 = vadd.f32 %v985, %v1451
    %v1698 = vadd.f32 %v990, %v1456
    %v1699 = vadd.f32 %v995, %v1461
    %v1700 = vadd.f32 %v1000, %v1466
    %v1701 = vadd.f32 %v1005, %v1471
    %v1702 = vadd.f32 %v1010, %v1476
    %v1703 = vadd.f32 %v1015, %v1481
    %v1704 = vadd.f32 %v1020, %v1486
    %v1705 = vadd.f32 %v1025, %v1491
    %v1706 = vadd.f32 %v1030, %v1496
    %v1707 = vadd.f32 %v1035, %v1501
    %v1708 = vadd.f32 %v1040, %v1506
    %v1709 = vadd.f32 %v1045, %v1511
    %v1710 = vadd.f32 %v1050, %v1516
    %v1711 = vadd.f32 %v1055, %v1521
    %v1712 = vadd.f32 %v1060, %v1526
    %v1713 = vadd.f32 %v1065, %v1531
    %v1714 = vadd.f32 %v1070, %v1536
    %v1715 = vadd.f32 %v1075, %v1541
    %v1716 = vadd.f32 %v1080, %v1546
    %v1717 = vadd.f32 %v1085, %v1551
    %v1718 = vadd.f32 %v1090, %v1556
    %v1719 = vadd.f32 %v1095, %v1561
    %v1720 = vadd.f32 %v1100, %v1566
    %v1721 = vadd.f32 %v1105, %v1571
    %v1722 = vadd.f32 %v1110, %v1576
    %v1723 = vadd.f32 %v1115, %v1581
    %v1724 = vadd.f32 %v1120, %v1586
    %v1725 = vadd.f32 %v1125, %v1591
    %v1726 = vadd.f32 %v1130, %v1596
    %v1727 = vadd.f32 %v1135, %v1601
    %v1728 = vadd.f32 %v1140, %v1606
    %v1729 = vadd.f32 %v1145, %v1611
    %v1730 = vadd.f32 %v1150, %v1616
    %v1731 = vadd.f32 %v1155, %v1621
    %v1732 = vadd.f32 %v1160, %v1626
    %v1733 = vadd.f32 %v1165, %v1631
    %v1734 = vadd.f32 %v1170, %v1636
    %v1735 = vadd.f32 %v1175, %v1641
    %v1736 = vadd.f32 %v1180, %v1646
    %v1737 = vadd.f32 %v1185, %v1651
    %v1738 = vadd.f32 %v1190, %v1656
    %v1739 = vadd.f32 %v1195, %v1661
    %v1740 = vadd.f32 %v1200, %v1666
    %v1741 = vadd.f32 %v1205, %v1671
    %v1742 = vadd.f32 %v1210, %v1676
    %v1743 = vld [vmem:[%s217] sm:$0xff]
    %v1744 = vld [vmem:[%s217 + $0x8] sm:$0xff]
    %v1745 = vld [vmem:[%s217 + $0x18] sm:$0xff]
    %v1746 = vld [vmem:[%s217 + $0x20] sm:$0xff]
    %v1747 = vld [vmem:[%s217 + $0x30] sm:$0xff]
    %v1748 = vld [vmem:[%s217 + $0x38] sm:$0xff]
    %v1749 = vld [vmem:[%s217 + $0x48] sm:$0xff]
    %v1750 = vld [vmem:[%s217 + $0x50] sm:$0xff]
    %v1751 = vld [vmem:[%s217 + $0x60] sm:$0xff]
    %v1752 = vld [vmem:[%s217 + $0x68] sm:$0xff]
    %v1753 = vld [vmem:[%s217 + $0x78] sm:$0xff]
    %v1754 = vld [vmem:[%s217 + $0x80] sm:$0xff]
    %v1755 = vld [vmem:[%s217 + $0x90] sm:$0xff]
    %v1756 = vld [vmem:[%s217 + $0x98] sm:$0xff]
    %v1757 = vld [vmem:[%s217 + $0xa8] sm:$0xff]
    %v1758 = vld [vmem:[%s217 + $0xb0] sm:$0xff]
    %v1759 = vld [vmem:[%s217 + $0xc0] sm:$0xff]
    %v1760 = vld [vmem:[%s217 + $0xc8] sm:$0xff]
    %v1761 = vld [vmem:[%s217 + $0xd8] sm:$0xff]
    %v1762 = vld [vmem:[%s217 + $0xe0] sm:$0xff]
    %v1763 = vld [vmem:[%s217 + $0xf0] sm:$0xff]
    %v1764 = vld [vmem:[%s217 + $0xf8] sm:$0xff]
    %v1765 = vld [vmem:[%s217 + $0x108] sm:$0xff]
    %v1766 = vld [vmem:[%s217 + $0x110] sm:$0xff]
    %v1767 = vld [vmem:[%s217 + $0x120] sm:$0xff]
    %v1768 = vld [vmem:[%s217 + $0x128] sm:$0xff]
    %v1769 = vld [vmem:[%s217 + $0x138] sm:$0xff]
    %v1770 = vld [vmem:[%s217 + $0x140] sm:$0xff]
    %v1771 = vld [vmem:[%s217 + $0x150] sm:$0xff]
    %v1772 = vld [vmem:[%s217 + $0x158] sm:$0xff]
    %v1773 = vld [vmem:[%s217 + $0x168] sm:$0xff]
    %v1774 = vld [vmem:[%s217 + $0x170] sm:$0xff]
    %v1775 = vld [vmem:[%s217 + $0x1b0] sm:$0xff]
    %v1776 = vld [vmem:[%s217 + $0x1b8] sm:$0xff]
    %v1777 = vld [vmem:[%s217 + $0x1c8] sm:$0xff]
    %v1778 = vld [vmem:[%s217 + $0x1d0] sm:$0xff]
    %v1779 = vld [vmem:[%s217 + $0x1e0] sm:$0xff]
    %v1780 = vld [vmem:[%s217 + $0x1e8] sm:$0xff]
    %v1781 = vld [vmem:[%s217 + $0x1f8] sm:$0xff]
    %v1782 = vld [vmem:[%s217 + $0x200] sm:$0xff]
    %v1783 = vld [vmem:[%s217 + $0x210] sm:$0xff]
    %v1784 = vld [vmem:[%s217 + $0x218] sm:$0xff]
    %v1785 = vld [vmem:[%s217 + $0x228] sm:$0xff]
    %v1786 = vld [vmem:[%s217 + $0x230] sm:$0xff]
    %v1787 = vld [vmem:[%s217 + $0x240] sm:$0xff]
    %v1788 = vld [vmem:[%s217 + $0x248] sm:$0xff]
    %v1789 = vld [vmem:[%s217 + $0x258] sm:$0xff]
    %v1790 = vld [vmem:[%s217 + $0x260] sm:$0xff]
    %v1791 = vld [vmem:[%s217 + $0x270] sm:$0xff]
    %v1792 = vld [vmem:[%s217 + $0x278] sm:$0xff]
    %v1793 = vld [vmem:[%s217 + $0x288] sm:$0xff]
    %v1794 = vld [vmem:[%s217 + $0x290] sm:$0xff]
    %v1795 = vld [vmem:[%s217 + $0x2a0] sm:$0xff]
    %v1796 = vld [vmem:[%s217 + $0x2a8] sm:$0xff]
    %v1797 = vld [vmem:[%s217 + $0x2b8] sm:$0xff]
    %v1798 = vld [vmem:[%s217 + $0x2c0] sm:$0xff]
    %v1799 = vld [vmem:[%s217 + $0x2d0] sm:$0xff]
    %v1800 = vld [vmem:[%s217 + $0x2d8] sm:$0xff]
    %v1801 = vld [vmem:[%s217 + $0x2e8] sm:$0xff]
    %v1802 = vld [vmem:[%s217 + $0x2f0] sm:$0xff]
    %v1803 = vld [vmem:[%s217 + $0x300] sm:$0xff]
    %v1804 = vld [vmem:[%s217 + $0x308] sm:$0xff]
    %v1805 = vld [vmem:[%s217 + $0x318] sm:$0xff]
    %v1806 = vld [vmem:[%s217 + $0x320] sm:$0xff]
    %s1807 = scalar_lea.vmem [#allocation6], 384
    %v1808 = vld [vmem:[%s1807] sm:$0xff]
    %v1809 = vld [vmem:[%s1807 + $0x8] sm:$0xff]
    %v1810 = vld [vmem:[%s1807 + $0x10] sm:$0xff]
    %v1811 = vld [vmem:[%s1807 + $0x18] sm:$0xff]
    %v1812 = vld [vmem:[%s1807 + $0x20] sm:$0xff]
    %v1813 = vld [vmem:[%s1807 + $0x28] sm:$0xff]
    %v1814 = vld [vmem:[%s1807 + $0x30] sm:$0xff]
    %v1815 = vld [vmem:[%s1807 + $0x38] sm:$0xff]
    %v1816 = vld [vmem:[%s1807 + $0x40] sm:$0xff]
    %v1817 = vld [vmem:[%s1807 + $0x48] sm:$0xff]
    %v1818 = vld [vmem:[%s1807 + $0x50] sm:$0xff]
    %v1819 = vld [vmem:[%s1807 + $0x58] sm:$0xff]
    %v1820 = vld [vmem:[%s1807 + $0x60] sm:$0xff]
    %v1821 = vld [vmem:[%s1807 + $0x68] sm:$0xff]
    %v1822 = vld [vmem:[%s1807 + $0x70] sm:$0xff]
    %v1823 = vld [vmem:[%s1807 + $0x78] sm:$0xff]
    %1824 = vmatprep.subr.mxu0 0.0
    %1825 = vmatpush1.msra.mxu0 %v1808
    %1826 = vmatprep.subr.mxu0 0.0
    %1827 = vmatpush1.msra.mxu0 %v1809
    %1828 = vmatprep.subr.mxu0 0.0
    %1829 = vmatpush1.msra.mxu0 %v1810
    %1830 = vmatprep.subr.mxu0 0.0
    %1831 = vmatpush1.msra.mxu0 %v1811
    %1832 = vmatprep.subr.mxu0 0.0
    %1833 = vmatpush1.msra.mxu0 %v1812
    %1834 = vmatprep.subr.mxu0 0.0
    %1835 = vmatpush1.msra.mxu0 %v1813
    %1836 = vmatprep.subr.mxu0 0.0
    %1837 = vmatpush1.msra.mxu0 %v1814
    %1838 = vmatprep.subr.mxu0 0.0
    %1839 = vmatpush1.msra.mxu0 %v1815
    %1840 = vmatprep.subr.mxu0 0.0
    %1841 = vmatpush1.msra.mxu0 %v1816
    %1842 = vmatprep.subr.mxu0 0.0
    %1843 = vmatpush1.msra.mxu0 %v1817
    %1844 = vmatprep.subr.mxu0 0.0
    %1845 = vmatpush1.msra.mxu0 %v1818
    %1846 = vmatprep.subr.mxu0 0.0
    %1847 = vmatpush1.msra.mxu0 %v1819
    %1848 = vmatprep.subr.mxu0 0.0
    %1849 = vmatpush1.msra.mxu0 %v1820
    %1850 = vmatprep.subr.mxu0 0.0
    %1851 = vmatpush1.msra.mxu0 %v1821
    %1852 = vmatprep.subr.mxu0 0.0
    %1853 = vmatpush1.msra.mxu0 %v1822
    %1854 = vmatprep.subr.mxu0 0.0
    %1855 = vmatpush1.msra.mxu0 %v1823
    %1856 = vmatprep.subr.mxu0 0.0
    %1857 = vmatpush1.msra.mxu0 0.0
    %1858 = vmatprep.subr.mxu0 0.0
    %1859 = vmatpush1.msra.mxu0 0.0
    %1860 = vmatprep.subr.mxu0 0.0
    %1861 = vmatpush1.msra.mxu0 0.0
    %1862 = vmatprep.subr.mxu0 0.0
    %1863 = vmatpush1.msra.mxu0 0.0
    %1864 = vmatprep.subr.mxu0 0.0
    %1865 = vmatpush1.msra.mxu0 0.0
    %1866 = vmatprep.subr.mxu0 0.0
    %1867 = vmatpush1.msra.mxu0 0.0
    %1868 = vmatprep.subr.mxu0 0.0
    %1869 = vmatpush1.msra.mxu0 0.0
    %1870 = vmatprep.subr.mxu0 0.0
    %1871 = vmatpush1.msra.mxu0 0.0
    %1872 = vmatprep.subr.mxu0 0.0
    %1873 = vmatpush1.msra.mxu0 0.0
    %1874 = vmatprep.subr.mxu0 0.0
    %1875 = vmatpush1.msra.mxu0 0.0
    %1876 = vmatprep.subr.mxu0 0.0
    %1877 = vmatpush1.msra.mxu0 0.0
    %1878 = vmatprep.subr.mxu0 0.0
    %1879 = vmatpush1.msra.mxu0 0.0
    %1880 = vmatprep.subr.mxu0 0.0
    %1881 = vmatpush1.msra.mxu0 0.0
    %1882 = vmatprep.subr.mxu0 0.0
    %1883 = vmatpush1.msra.mxu0 0.0
    %1884 = vmatprep.subr.mxu0 0.0
    %1885 = vmatpush1.msra.mxu0 0.0
    %1886 = vmatprep.subr.mxu0 0.0
    %1887 = vmatpush1.msra.mxu0 0.0
    %1888 = vmatprep.mubr.f32.mxu0 0.0
    %1889 = vmatmul.mubr.f32.gmra.mrb[0].mxu0 %v1743
    %v1890 = vpop.f32.mrb[0].mxu0
    %v1891 = vadd.f32 0.0, %v1890
    %v1892 = vpop.f32.mrb[0].mxu0
    %1893 = vmatprep.mubr.f32.mxu0 0.0
    %1894 = vmatmul.mubr.f32.gmra.mrb[0].mxu0 %v1744
    %v1895 = vpop.f32.mrb[0].mxu0
    %v1896 = vadd.f32 0.0, %v1895
    %v1897 = vpop.f32.mrb[0].mxu0
    %1898 = vmatprep.mubr.f32.mxu0 0.0
    %1899 = vmatmul.mubr.f32.gmra.mrb[0].mxu0 %v1745
    %v1900 = vpop.f32.mrb[0].mxu0
    %v1901 = vadd.f32 0.0, %v1900
    %v1902 = vpop.f32.mrb[0].mxu0
    %1903 = vmatprep.mubr.f32.mxu0 0.0
    %1904 = vmatmul.mubr.f32.gmra.mrb[0].mxu0 %v1746
    %v1905 = vpop.f32.mrb[0].mxu0
    %v1906 = vadd.f32 0.0, %v1905
    %v1907 = vpop.f32.mrb[0].mxu0
    %1908 = vmatprep.mubr.f32.mxu0 0.0
    %1909 = vmatmul.mubr.f32.gmra.mrb[0].mxu0 %v1747
    %v1910 = vpop.f32.mrb[0].mxu0
    %v1911 = vadd.f32 0.0, %v1910
    %v1912 = vpop.f32.mrb[0].mxu0
    %1913 = vmatprep.mubr.f32.mxu0 0.0
    %1914 = vmatmul.mubr.f32.gmra.mrb[0].mxu0 %v1748
    %v1915 = vpop.f32.mrb[0].mxu0
    %v1916 = vadd.f32 0.0, %v1915
    %v1917 = vpop.f32.mrb[0].mxu0
    %1918 = vmatprep.mubr.f32.mxu0 0.0
    %1919 = vmatmul.mubr.f32.gmra.mrb[0].mxu0 %v1749
    %v1920 = vpop.f32.mrb[0].mxu0
    %v1921 = vadd.f32 0.0, %v1920
    %v1922 = vpop.f32.mrb[0].mxu0
    %1923 = vmatprep.mubr.f32.mxu0 0.0
    %1924 = vmatmul.mubr.f32.gmra.mrb[0].mxu0 %v1750
    %v1925 = vpop.f32.mrb[0].mxu0
    %v1926 = vadd.f32 0.0, %v1925
    %v1927 = vpop.f32.mrb[0].mxu0
    %1928 = vmatprep.mubr.f32.mxu0 0.0
    %1929 = vmatmul.mubr.f32.gmra.mrb[0].mxu0 %v1751
    %v1930 = vpop.f32.mrb[0].mxu0
    %v1931 = vadd.f32 0.0, %v1930
    %v1932 = vpop.f32.mrb[0].mxu0
    %1933 = vmatprep.mubr.f32.mxu0 0.0
    %1934 = vmatmul.mubr.f32.gmra.mrb[0].mxu0 %v1752
    %v1935 = vpop.f32.mrb[0].mxu0
    %v1936 = vadd.f32 0.0, %v1935
    %v1937 = vpop.f32.mrb[0].mxu0
    %1938 = vmatprep.mubr.f32.mxu0 0.0
    %1939 = vmatmul.mubr.f32.gmra.mrb[0].mxu0 %v1753
    %v1940 = vpop.f32.mrb[0].mxu0
    %v1941 = vadd.f32 0.0, %v1940
    %v1942 = vpop.f32.mrb[0].mxu0
    %1943 = vmatprep.mubr.f32.mxu0 0.0
    %1944 = vmatmul.mubr.f32.gmra.mrb[0].mxu0 %v1754
    %v1945 = vpop.f32.mrb[0].mxu0
    %v1946 = vadd.f32 0.0, %v1945
    %v1947 = vpop.f32.mrb[0].mxu0
    %1948 = vmatprep.mubr.f32.mxu0 0.0
    %1949 = vmatmul.mubr.f32.gmra.mrb[0].mxu0 %v1755
    %v1950 = vpop.f32.mrb[0].mxu0
    %v1951 = vadd.f32 0.0, %v1950
    %v1952 = vpop.f32.mrb[0].mxu0
    %1953 = vmatprep.mubr.f32.mxu0 0.0
    %1954 = vmatmul.mubr.f32.gmra.mrb[0].mxu0 %v1756
    %v1955 = vpop.f32.mrb[0].mxu0
    %v1956 = vadd.f32 0.0, %v1955
    %v1957 = vpop.f32.mrb[0].mxu0
    %1958 = vmatprep.mubr.f32.mxu0 0.0
    %1959 = vmatmul.mubr.f32.gmra.mrb[0].mxu0 %v1757
    %v1960 = vpop.f32.mrb[0].mxu0
    %v1961 = vadd.f32 0.0, %v1960
    %v1962 = vpop.f32.mrb[0].mxu0
    %1963 = vmatprep.mubr.f32.mxu0 0.0
    %1964 = vmatmul.mubr.f32.gmra.mrb[0].mxu0 %v1758
    %v1965 = vpop.f32.mrb[0].mxu0
    %v1966 = vadd.f32 0.0, %v1965
    %v1967 = vpop.f32.mrb[0].mxu0
    %1968 = vmatprep.mubr.f32.mxu0 0.0
    %1969 = vmatmul.mubr.f32.gmra.mrb[0].mxu0 %v1759
    %v1970 = vpop.f32.mrb[0].mxu0
    %v1971 = vadd.f32 0.0, %v1970
    %v1972 = vpop.f32.mrb[0].mxu0
    %1973 = vmatprep.mubr.f32.mxu0 0.0
    %1974 = vmatmul.mubr.f32.gmra.mrb[0].mxu0 %v1760
    %v1975 = vpop.f32.mrb[0].mxu0
    %v1976 = vadd.f32 0.0, %v1975
    %v1977 = vpop.f32.mrb[0].mxu0
    %1978 = vmatprep.mubr.f32.mxu0 0.0
    %1979 = vmatmul.mubr.f32.gmra.mrb[0].mxu0 %v1761
    %v1980 = vpop.f32.mrb[0].mxu0
    %v1981 = vadd.f32 0.0, %v1980
    %v1982 = vpop.f32.mrb[0].mxu0
    %1983 = vmatprep.mubr.f32.mxu0 0.0
    %1984 = vmatmul.mubr.f32.gmra.mrb[0].mxu0 %v1762
    %v1985 = vpop.f32.mrb[0].mxu0
    %v1986 = vadd.f32 0.0, %v1985
    %v1987 = vpop.f32.mrb[0].mxu0
    %1988 = vmatprep.mubr.f32.mxu0 0.0
    %1989 = vmatmul.mubr.f32.gmra.mrb[0].mxu0 %v1763
    %v1990 = vpop.f32.mrb[0].mxu0
    %v1991 = vadd.f32 0.0, %v1990
    %v1992 = vpop.f32.mrb[0].mxu0
    %1993 = vmatprep.mubr.f32.mxu0 0.0
    %1994 = vmatmul.mubr.f32.gmra.mrb[0].mxu0 %v1764
    %v1995 = vpop.f32.mrb[0].mxu0
    %v1996 = vadd.f32 0.0, %v1995
    %v1997 = vpop.f32.mrb[0].mxu0
    %1998 = vmatprep.mubr.f32.mxu0 0.0
    %1999 = vmatmul.mubr.f32.gmra.mrb[0].mxu0 %v1765
    %v2000 = vpop.f32.mrb[0].mxu0
    %v2001 = vadd.f32 0.0, %v2000
    %v2002 = vpop.f32.mrb[0].mxu0
    %2003 = vmatprep.mubr.f32.mxu0 0.0
    %2004 = vmatmul.mubr.f32.gmra.mrb[0].mxu0 %v1766
    %v2005 = vpop.f32.mrb[0].mxu0
    %v2006 = vadd.f32 0.0, %v2005
    %v2007 = vpop.f32.mrb[0].mxu0
    %2008 = vmatprep.mubr.f32.mxu0 0.0
    %2009 = vmatmul.mubr.f32.gmra.mrb[0].mxu0 %v1767
    %v2010 = vpop.f32.mrb[0].mxu0
    %v2011 = vadd.f32 0.0, %v2010
    %v2012 = vpop.f32.mrb[0].mxu0
    %2013 = vmatprep.mubr.f32.mxu0 0.0
    %2014 = vmatmul.mubr.f32.gmra.mrb[0].mxu0 %v1768
    %v2015 = vpop.f32.mrb[0].mxu0
    %v2016 = vadd.f32 0.0, %v2015
    %v2017 = vpop.f32.mrb[0].mxu0
    %2018 = vmatprep.mubr.f32.mxu0 0.0
    %2019 = vmatmul.mubr.f32.gmra.mrb[0].mxu0 %v1769
    %v2020 = vpop.f32.mrb[0].mxu0
    %v2021 = vadd.f32 0.0, %v2020
    %v2022 = vpop.f32.mrb[0].mxu0
    %2023 = vmatprep.mubr.f32.mxu0 0.0
    %2024 = vmatmul.mubr.f32.gmra.mrb[0].mxu0 %v1770
    %v2025 = vpop.f32.mrb[0].mxu0
    %v2026 = vadd.f32 0.0, %v2025
    %v2027 = vpop.f32.mrb[0].mxu0
    %2028 = vmatprep.mubr.f32.mxu0 0.0
    %2029 = vmatmul.mubr.f32.gmra.mrb[0].mxu0 %v1771
    %v2030 = vpop.f32.mrb[0].mxu0
    %v2031 = vadd.f32 0.0, %v2030
    %v2032 = vpop.f32.mrb[0].mxu0
    %2033 = vmatprep.mubr.f32.mxu0 0.0
    %2034 = vmatmul.mubr.f32.gmra.mrb[0].mxu0 %v1772
    %v2035 = vpop.f32.mrb[0].mxu0
    %v2036 = vadd.f32 0.0, %v2035
    %v2037 = vpop.f32.mrb[0].mxu0
    %2038 = vmatprep.mubr.f32.mxu0 0.0
    %2039 = vmatmul.mubr.f32.gmra.mrb[0].mxu0 %v1773
    %v2040 = vpop.f32.mrb[0].mxu0
    %v2041 = vadd.f32 0.0, %v2040
    %v2042 = vpop.f32.mrb[0].mxu0
    %2043 = vmatprep.mubr.f32.mxu0 0.0
    %2044 = vmatmul.mubr.f32.gmra.mrb[0].mxu0 %v1774
    %v2045 = vpop.f32.mrb[0].mxu0
    %v2046 = vadd.f32 0.0, %v2045
    %v2047 = vpop.f32.mrb[0].mxu0
    %2048 = vmatprep.mubr.f32.mxu0 0.0
    %2049 = vmatmul.mubr.f32.gmra.mrb[0].mxu0 %v1775
    %v2050 = vpop.f32.mrb[0].mxu0
    %v2051 = vadd.f32 0.0, %v2050
    %v2052 = vpop.f32.mrb[0].mxu0
    %2053 = vmatprep.mubr.f32.mxu0 0.0
    %2054 = vmatmul.mubr.f32.gmra.mrb[0].mxu0 %v1776
    %v2055 = vpop.f32.mrb[0].mxu0
    %v2056 = vadd.f32 0.0, %v2055
    %v2057 = vpop.f32.mrb[0].mxu0
    %2058 = vmatprep.mubr.f32.mxu0 0.0
    %2059 = vmatmul.mubr.f32.gmra.mrb[0].mxu0 %v1777
    %v2060 = vpop.f32.mrb[0].mxu0
    %v2061 = vadd.f32 0.0, %v2060
    %v2062 = vpop.f32.mrb[0].mxu0
    %2063 = vmatprep.mubr.f32.mxu0 0.0
    %2064 = vmatmul.mubr.f32.gmra.mrb[0].mxu0 %v1778
    %v2065 = vpop.f32.mrb[0].mxu0
    %v2066 = vadd.f32 0.0, %v2065
    %v2067 = vpop.f32.mrb[0].mxu0
    %2068 = vmatprep.mubr.f32.mxu0 0.0
    %2069 = vmatmul.mubr.f32.gmra.mrb[0].mxu0 %v1779
    %v2070 = vpop.f32.mrb[0].mxu0
    %v2071 = vadd.f32 0.0, %v2070
    %v2072 = vpop.f32.mrb[0].mxu0
    %2073 = vmatprep.mubr.f32.mxu0 0.0
    %2074 = vmatmul.mubr.f32.gmra.mrb[0].mxu0 %v1780
    %v2075 = vpop.f32.mrb[0].mxu0
    %v2076 = vadd.f32 0.0, %v2075
    %v2077 = vpop.f32.mrb[0].mxu0
    %2078 = vmatprep.mubr.f32.mxu0 0.0
    %2079 = vmatmul.mubr.f32.gmra.mrb[0].mxu0 %v1781
    %v2080 = vpop.f32.mrb[0].mxu0
    %v2081 = vadd.f32 0.0, %v2080
    %v2082 = vpop.f32.mrb[0].mxu0
    %2083 = vmatprep.mubr.f32.mxu0 0.0
    %2084 = vmatmul.mubr.f32.gmra.mrb[0].mxu0 %v1782
    %v2085 = vpop.f32.mrb[0].mxu0
    %v2086 = vadd.f32 0.0, %v2085
    %v2087 = vpop.f32.mrb[0].mxu0
    %2088 = vmatprep.mubr.f32.mxu0 0.0
    %2089 = vmatmul.mubr.f32.gmra.mrb[0].mxu0 %v1783
    %v2090 = vpop.f32.mrb[0].mxu0
    %v2091 = vadd.f32 0.0, %v2090
    %v2092 = vpop.f32.mrb[0].mxu0
    %2093 = vmatprep.mubr.f32.mxu0 0.0
    %2094 = vmatmul.mubr.f32.gmra.mrb[0].mxu0 %v1784
    %v2095 = vpop.f32.mrb[0].mxu0
    %v2096 = vadd.f32 0.0, %v2095
    %v2097 = vpop.f32.mrb[0].mxu0
    %2098 = vmatprep.mubr.f32.mxu0 0.0
    %2099 = vmatmul.mubr.f32.gmra.mrb[0].mxu0 %v1785
    %v2100 = vpop.f32.mrb[0].mxu0
    %v2101 = vadd.f32 0.0, %v2100
    %v2102 = vpop.f32.mrb[0].mxu0
    %2103 = vmatprep.mubr.f32.mxu0 0.0
    %2104 = vmatmul.mubr.f32.gmra.mrb[0].mxu0 %v1786
    %v2105 = vpop.f32.mrb[0].mxu0
    %v2106 = vadd.f32 0.0, %v2105
    %v2107 = vpop.f32.mrb[0].mxu0
    %2108 = vmatprep.mubr.f32.mxu0 0.0
    %2109 = vmatmul.mubr.f32.gmra.mrb[0].mxu0 %v1787
    %v2110 = vpop.f32.mrb[0].mxu0
    %v2111 = vadd.f32 0.0, %v2110
    %v2112 = vpop.f32.mrb[0].mxu0
    %2113 = vmatprep.mubr.f32.mxu0 0.0
    %2114 = vmatmul.mubr.f32.gmra.mrb[0].mxu0 %v1788
    %v2115 = vpop.f32.mrb[0].mxu0
    %v2116 = vadd.f32 0.0, %v2115
    %v2117 = vpop.f32.mrb[0].mxu0
    %2118 = vmatprep.mubr.f32.mxu0 0.0
    %2119 = vmatmul.mubr.f32.gmra.mrb[0].mxu0 %v1789
    %v2120 = vpop.f32.mrb[0].mxu0
    %v2121 = vadd.f32 0.0, %v2120
    %v2122 = vpop.f32.mrb[0].mxu0
    %2123 = vmatprep.mubr.f32.mxu0 0.0
    %2124 = vmatmul.mubr.f32.gmra.mrb[0].mxu0 %v1790
    %v2125 = vpop.f32.mrb[0].mxu0
    %v2126 = vadd.f32 0.0, %v2125
    %v2127 = vpop.f32.mrb[0].mxu0
    %2128 = vmatprep.mubr.f32.mxu0 0.0
    %2129 = vmatmul.mubr.f32.gmra.mrb[0].mxu0 %v1791
    %v2130 = vpop.f32.mrb[0].mxu0
    %v2131 = vadd.f32 0.0, %v2130
    %v2132 = vpop.f32.mrb[0].mxu0
    %2133 = vmatprep.mubr.f32.mxu0 0.0
    %2134 = vmatmul.mubr.f32.gmra.mrb[0].mxu0 %v1792
    %v2135 = vpop.f32.mrb[0].mxu0
    %v2136 = vadd.f32 0.0, %v2135
    %v2137 = vpop.f32.mrb[0].mxu0
    %2138 = vmatprep.mubr.f32.mxu0 0.0
    %2139 = vmatmul.mubr.f32.gmra.mrb[0].mxu0 %v1793
    %v2140 = vpop.f32.mrb[0].mxu0
    %v2141 = vadd.f32 0.0, %v2140
    %v2142 = vpop.f32.mrb[0].mxu0
    %2143 = vmatprep.mubr.f32.mxu0 0.0
    %2144 = vmatmul.mubr.f32.gmra.mrb[0].mxu0 %v1794
    %v2145 = vpop.f32.mrb[0].mxu0
    %v2146 = vadd.f32 0.0, %v2145
    %v2147 = vpop.f32.mrb[0].mxu0
    %2148 = vmatprep.mubr.f32.mxu0 0.0
    %2149 = vmatmul.mubr.f32.gmra.mrb[0].mxu0 %v1795
    %v2150 = vpop.f32.mrb[0].mxu0
    %v2151 = vadd.f32 0.0, %v2150
    %v2152 = vpop.f32.mrb[0].mxu0
    %2153 = vmatprep.mubr.f32.mxu0 0.0
    %2154 = vmatmul.mubr.f32.gmra.mrb[0].mxu0 %v1796
    %v2155 = vpop.f32.mrb[0].mxu0
    %v2156 = vadd.f32 0.0, %v2155
    %v2157 = vpop.f32.mrb[0].mxu0
    %2158 = vmatprep.mubr.f32.mxu0 0.0
    %2159 = vmatmul.mubr.f32.gmra.mrb[0].mxu0 %v1797
    %v2160 = vpop.f32.mrb[0].mxu0
    %v2161 = vadd.f32 0.0, %v2160
    %v2162 = vpop.f32.mrb[0].mxu0
    %2163 = vmatprep.mubr.f32.mxu0 0.0
    %2164 = vmatmul.mubr.f32.gmra.mrb[0].mxu0 %v1798
    %v2165 = vpop.f32.mrb[0].mxu0
    %v2166 = vadd.f32 0.0, %v2165
    %v2167 = vpop.f32.mrb[0].mxu0
    %2168 = vmatprep.mubr.f32.mxu0 0.0
    %2169 = vmatmul.mubr.f32.gmra.mrb[0].mxu0 %v1799
    %v2170 = vpop.f32.mrb[0].mxu0
    %v2171 = vadd.f32 0.0, %v2170
    %v2172 = vpop.f32.mrb[0].mxu0
    %2173 = vmatprep.mubr.f32.mxu0 0.0
    %2174 = vmatmul.mubr.f32.gmra.mrb[0].mxu0 %v1800
    %v2175 = vpop.f32.mrb[0].mxu0
    %v2176 = vadd.f32 0.0, %v2175
    %v2177 = vpop.f32.mrb[0].mxu0
    %2178 = vmatprep.mubr.f32.mxu0 0.0
    %2179 = vmatmul.mubr.f32.gmra.mrb[0].mxu0 %v1801
    %v2180 = vpop.f32.mrb[0].mxu0
    %v2181 = vadd.f32 0.0, %v2180
    %v2182 = vpop.f32.mrb[0].mxu0
    %2183 = vmatprep.mubr.f32.mxu0 0.0
    %2184 = vmatmul.mubr.f32.gmra.mrb[0].mxu0 %v1802
    %v2185 = vpop.f32.mrb[0].mxu0
    %v2186 = vadd.f32 0.0, %v2185
    %v2187 = vpop.f32.mrb[0].mxu0
    %2188 = vmatprep.mubr.f32.mxu0 0.0
    %2189 = vmatmul.mubr.f32.gmra.mrb[0].mxu0 %v1803
    %v2190 = vpop.f32.mrb[0].mxu0
    %v2191 = vadd.f32 0.0, %v2190
    %v2192 = vpop.f32.mrb[0].mxu0
    %2193 = vmatprep.mubr.f32.mxu0 0.0
    %2194 = vmatmul.mubr.f32.gmra.mrb[0].mxu0 %v1804
    %v2195 = vpop.f32.mrb[0].mxu0
    %v2196 = vadd.f32 0.0, %v2195
    %v2197 = vpop.f32.mrb[0].mxu0
    %2198 = vmatprep.mubr.f32.mxu0 0.0
    %2199 = vmatmul.mubr.f32.gmra.mrb[0].mxu0 %v1805
    %v2200 = vpop.f32.mrb[0].mxu0
    %v2201 = vadd.f32 0.0, %v2200
    %v2202 = vpop.f32.mrb[0].mxu0
    %2203 = vmatprep.mubr.f32.mxu0 0.0
    %2204 = vmatmul.mubr.f32.gmra.mrb[0].mxu0 %v1806
    %v2205 = vpop.f32.mrb[0].mxu0
    %v2206 = vadd.f32 0.0, %v2205
    %v2207 = vpop.f32.mrb[0].mxu0
    %2208 = vdwg.mxu0
    %v2209 = vadd.f32 %v1679, %v1891
    %v2210 = vadd.f32 %v1680, %v1896
    %v2211 = vadd.f32 %v1681, %v1901
    %v2212 = vadd.f32 %v1682, %v1906
    %v2213 = vadd.f32 %v1683, %v1911
    %v2214 = vadd.f32 %v1684, %v1916
    %v2215 = vadd.f32 %v1685, %v1921
    %v2216 = vadd.f32 %v1686, %v1926
    %v2217 = vadd.f32 %v1687, %v1931
    %v2218 = vadd.f32 %v1688, %v1936
    %v2219 = vadd.f32 %v1689, %v1941
    %v2220 = vadd.f32 %v1690, %v1946
    %v2221 = vadd.f32 %v1691, %v1951
    %v2222 = vadd.f32 %v1692, %v1956
    %v2223 = vadd.f32 %v1693, %v1961
    %v2224 = vadd.f32 %v1694, %v1966
    %v2225 = vadd.f32 %v1695, %v1971
    %v2226 = vadd.f32 %v1696, %v1976
    %v2227 = vadd.f32 %v1697, %v1981
    %v2228 = vadd.f32 %v1698, %v1986
    %v2229 = vadd.f32 %v1699, %v1991
    %v2230 = vadd.f32 %v1700, %v1996
    %v2231 = vadd.f32 %v1701, %v2001
    %v2232 = vadd.f32 %v1702, %v2006
    %v2233 = vadd.f32 %v1703, %v2011
    %v2234 = vadd.f32 %v1704, %v2016
    %v2235 = vadd.f32 %v1705, %v2021
    %v2236 = vadd.f32 %v1706, %v2026
    %v2237 = vadd.f32 %v1707, %v2031
    %v2238 = vadd.f32 %v1708, %v2036
    %v2239 = vadd.f32 %v1709, %v2041
    %v2240 = vadd.f32 %v1710, %v2046
    %v2241 = vadd.f32 %v1711, %v2051
    %v2242 = vadd.f32 %v1712, %v2056
    %v2243 = vadd.f32 %v1713, %v2061
    %v2244 = vadd.f32 %v1714, %v2066
    %v2245 = vadd.f32 %v1715, %v2071
    %v2246 = vadd.f32 %v1716, %v2076
    %v2247 = vadd.f32 %v1717, %v2081
    %v2248 = vadd.f32 %v1718, %v2086
    %v2249 = vadd.f32 %v1719, %v2091
    %v2250 = vadd.f32 %v1720, %v2096
    %v2251 = vadd.f32 %v1721, %v2101
    %v2252 = vadd.f32 %v1722, %v2106
    %v2253 = vadd.f32 %v1723, %v2111
    %v2254 = vadd.f32 %v1724, %v2116
    %v2255 = vadd.f32 %v1725, %v2121
    %v2256 = vadd.f32 %v1726, %v2126
    %v2257 = vadd.f32 %v1727, %v2131
    %v2258 = vadd.f32 %v1728, %v2136
    %v2259 = vadd.f32 %v1729, %v2141
    %v2260 = vadd.f32 %v1730, %v2146
    %v2261 = vadd.f32 %v1731, %v2151
    %v2262 = vadd.f32 %v1732, %v2156
    %v2263 = vadd.f32 %v1733, %v2161
    %v2264 = vadd.f32 %v1734, %v2166
    %v2265 = vadd.f32 %v1735, %v2171
    %v2266 = vadd.f32 %v1736, %v2176
    %v2267 = vadd.f32 %v1737, %v2181
    %v2268 = vadd.f32 %v1738, %v2186
    %v2269 = vadd.f32 %v1739, %v2191
    %v2270 = vadd.f32 %v1740, %v2196
    %v2271 = vadd.f32 %v1741, %v2201
    %v2272 = vadd.f32 %v1742, %v2206
    %v2273 = vld [vmem:[%s217 + $0x1] sm:$0xff]
    %v2274 = vld [vmem:[%s217 + $0x9] sm:$0xff]
    %v2275 = vld [vmem:[%s217 + $0x19] sm:$0xff]
    %v2276 = vld [vmem:[%s217 + $0x21] sm:$0xff]
    %v2277 = vld [vmem:[%s217 + $0x31] sm:$0xff]
    %v2278 = vld [vmem:[%s217 + $0x39] sm:$0xff]
    %v2279 = vld [vmem:[%s217 + $0x49] sm:$0xff]
    %v2280 = vld [vmem:[%s217 + $0x51] sm:$0xff]
    %v2281 = vld [vmem:[%s217 + $0x61] sm:$0xff]
    %v2282 = vld [vmem:[%s217 + $0x69] sm:$0xff]
    %v2283 = vld [vmem:[%s217 + $0x79] sm:$0xff]
    %v2284 = vld [vmem:[%s217 + $0x81] sm:$0xff]
    %v2285 = vld [vmem:[%s217 + $0x91] sm:$0xff]
    %v2286 = vld [vmem:[%s217 + $0x99] sm:$0xff]
    %v2287 = vld [vmem:[%s217 + $0xa9] sm:$0xff]
    %v2288 = vld [vmem:[%s217 + $0xb1] sm:$0xff]
    %v2289 = vld [vmem:[%s217 + $0xc1] sm:$0xff]
    %v2290 = vld [vmem:[%s217 + $0xc9] sm:$0xff]
    %v2291 = vld [vmem:[%s217 + $0xd9] sm:$0xff]
    %v2292 = vld [vmem:[%s217 + $0xe1] sm:$0xff]
    %v2293 = vld [vmem:[%s217 + $0xf1] sm:$0xff]
    %v2294 = vld [vmem:[%s217 + $0xf9] sm:$0xff]
    %v2295 = vld [vmem:[%s217 + $0x109] sm:$0xff]
    %v2296 = vld [vmem:[%s217 + $0x111] sm:$0xff]
    %v2297 = vld [vmem:[%s217 + $0x121] sm:$0xff]
    %v2298 = vld [vmem:[%s217 + $0x129] sm:$0xff]
    %v2299 = vld [vmem:[%s217 + $0x139] sm:$0xff]
    %v2300 = vld [vmem:[%s217 + $0x141] sm:$0xff]
    %v2301 = vld [vmem:[%s217 + $0x151] sm:$0xff]
    %v2302 = vld [vmem:[%s217 + $0x159] sm:$0xff]
    %v2303 = vld [vmem:[%s217 + $0x169] sm:$0xff]
    %v2304 = vld [vmem:[%s217 + $0x171] sm:$0xff]
    %v2305 = vld [vmem:[%s217 + $0x1b1] sm:$0xff]
    %v2306 = vld [vmem:[%s217 + $0x1b9] sm:$0xff]
    %v2307 = vld [vmem:[%s217 + $0x1c9] sm:$0xff]
    %v2308 = vld [vmem:[%s217 + $0x1d1] sm:$0xff]
    %v2309 = vld [vmem:[%s217 + $0x1e1] sm:$0xff]
    %v2310 = vld [vmem:[%s217 + $0x1e9] sm:$0xff]
    %v2311 = vld [vmem:[%s217 + $0x1f9] sm:$0xff]
    %v2312 = vld [vmem:[%s217 + $0x201] sm:$0xff]
    %v2313 = vld [vmem:[%s217 + $0x211] sm:$0xff]
    %v2314 = vld [vmem:[%s217 + $0x219] sm:$0xff]
    %v2315 = vld [vmem:[%s217 + $0x229] sm:$0xff]
    %v2316 = vld [vmem:[%s217 + $0x231] sm:$0xff]
    %v2317 = vld [vmem:[%s217 + $0x241] sm:$0xff]
    %v2318 = vld [vmem:[%s217 + $0x249] sm:$0xff]
    %v2319 = vld [vmem:[%s217 + $0x259] sm:$0xff]
    %v2320 = vld [vmem:[%s217 + $0x261] sm:$0xff]
    %v2321 = vld [vmem:[%s217 + $0x271] sm:$0xff]
    %v2322 = vld [vmem:[%s217 + $0x279] sm:$0xff]
    %v2323 = vld [vmem:[%s217 + $0x289] sm:$0xff]
    %v2324 = vld [vmem:[%s217 + $0x291] sm:$0xff]
    %v2325 = vld [vmem:[%s217 + $0x2a1] sm:$0xff]
    %v2326 = vld [vmem:[%s217 + $0x2a9] sm:$0xff]
    %v2327 = vld [vmem:[%s217 + $0x2b9] sm:$0xff]
    %v2328 = vld [vmem:[%s217 + $0x2c1] sm:$0xff]
    %v2329 = vld [vmem:[%s217 + $0x2d1] sm:$0xff]
    %v2330 = vld [vmem:[%s217 + $0x2d9] sm:$0xff]
    %v2331 = vld [vmem:[%s217 + $0x2e9] sm:$0xff]
    %v2332 = vld [vmem:[%s217 + $0x2f1] sm:$0xff]
    %v2333 = vld [vmem:[%s217 + $0x301] sm:$0xff]
    %v2334 = vld [vmem:[%s217 + $0x309] sm:$0xff]
    %v2335 = vld [vmem:[%s217 + $0x319] sm:$0xff]
    %v2336 = vld [vmem:[%s217 + $0x321] sm:$0xff]
    %s2337 = scalar_lea.vmem [#allocation6], 512
    %v2338 = vld [vmem:[%s2337] sm:$0xff]
    %v2339 = vld [vmem:[%s2337 + $0x8] sm:$0xff]
    %v2340 = vld [vmem:[%s2337 + $0x10] sm:$0xff]
    %v2341 = vld [vmem:[%s2337 + $0x18] sm:$0xff]
    %v2342 = vld [vmem:[%s2337 + $0x20] sm:$0xff]
    %v2343 = vld [vmem:[%s2337 + $0x28] sm:$0xff]
    %v2344 = vld [vmem:[%s2337 + $0x30] sm:$0xff]
    %v2345 = vld [vmem:[%s2337 + $0x38] sm:$0xff]
    %v2346 = vld [vmem:[%s2337 + $0x40] sm:$0xff]
    %v2347 = vld [vmem:[%s2337 + $0x48] sm:$0xff]
    %v2348 = vld [vmem:[%s2337 + $0x50] sm:$0xff]
    %v2349 = vld [vmem:[%s2337 + $0x58] sm:$0xff]
    %v2350 = vld [vmem:[%s2337 + $0x60] sm:$0xff]
    %v2351 = vld [vmem:[%s2337 + $0x68] sm:$0xff]
    %v2352 = vld [vmem:[%s2337 + $0x70] sm:$0xff]
    %v2353 = vld [vmem:[%s2337 + $0x78] sm:$0xff]
    %2354 = vmatprep.subr.mxu0 0.0
    %2355 = vmatpush1.msra.mxu0 %v2338
    %2356 = vmatprep.subr.mxu0 0.0
    %2357 = vmatpush1.msra.mxu0 %v2339
    %2358 = vmatprep.subr.mxu0 0.0
    %2359 = vmatpush1.msra.mxu0 %v2340
    %2360 = vmatprep.subr.mxu0 0.0
    %2361 = vmatpush1.msra.mxu0 %v2341
    %2362 = vmatprep.subr.mxu0 0.0
    %2363 = vmatpush1.msra.mxu0 %v2342
    %2364 = vmatprep.subr.mxu0 0.0
    %2365 = vmatpush1.msra.mxu0 %v2343
    %2366 = vmatprep.subr.mxu0 0.0
    %2367 = vmatpush1.msra.mxu0 %v2344
    %2368 = vmatprep.subr.mxu0 0.0
    %2369 = vmatpush1.msra.mxu0 %v2345
    %2370 = vmatprep.subr.mxu0 0.0
    %2371 = vmatpush1.msra.mxu0 %v2346
    %2372 = vmatprep.subr.mxu0 0.0
    %2373 = vmatpush1.msra.mxu0 %v2347
    %2374 = vmatprep.subr.mxu0 0.0
    %2375 = vmatpush1.msra.mxu0 %v2348
    %2376 = vmatprep.subr.mxu0 0.0
    %2377 = vmatpush1.msra.mxu0 %v2349
    %2378 = vmatprep.subr.mxu0 0.0
    %2379 = vmatpush1.msra.mxu0 %v2350
    %2380 = vmatprep.subr.mxu0 0.0
    %2381 = vmatpush1.msra.mxu0 %v2351
    %2382 = vmatprep.subr.mxu0 0.0
    %2383 = vmatpush1.msra.mxu0 %v2352
    %2384 = vmatprep.subr.mxu0 0.0
    %2385 = vmatpush1.msra.mxu0 %v2353
    %2386 = vmatprep.subr.mxu0 0.0
    %2387 = vmatpush1.msra.mxu0 0.0
    %2388 = vmatprep.subr.mxu0 0.0
    %2389 = vmatpush1.msra.mxu0 0.0
    %2390 = vmatprep.subr.mxu0 0.0
    %2391 = vmatpush1.msra.mxu0 0.0
    %2392 = vmatprep.subr.mxu0 0.0
    %2393 = vmatpush1.msra.mxu0 0.0
    %2394 = vmatprep.subr.mxu0 0.0
    %2395 = vmatpush1.msra.mxu0 0.0
    %2396 = vmatprep.subr.mxu0 0.0
    %2397 = vmatpush1.msra.mxu0 0.0
    %2398 = vmatprep.subr.mxu0 0.0
    %2399 = vmatpush1.msra.mxu0 0.0
    %2400 = vmatprep.subr.mxu0 0.0
    %2401 = vmatpush1.msra.mxu0 0.0
    %2402 = vmatprep.subr.mxu0 0.0
    %2403 = vmatpush1.msra.mxu0 0.0
    %2404 = vmatprep.subr.mxu0 0.0
    %2405 = vmatpush1.msra.mxu0 0.0
    %2406 = vmatprep.subr.mxu0 0.0
    %2407 = vmatpush1.msra.mxu0 0.0
    %2408 = vmatprep.subr.mxu0 0.0
    %2409 = vmatpush1.msra.mxu0 0.0
    %2410 = vmatprep.subr.mxu0 0.0
    %2411 = vmatpush1.msra.mxu0 0.0
    %2412 = vmatprep.subr.mxu0 0.0
    %2413 = vmatpush1.msra.mxu0 0.0
    %2414 = vmatprep.subr.mxu0 0.0
    %2415 = vmatpush1.msra.mxu0 0.0
    %2416 = vmatprep.subr.mxu0 0.0
    %2417 = vmatpush1.msra.mxu0 0.0
    %2418 = vmatprep.mubr.f32.mxu0 0.0
    %2419 = vmatmul.mubr.f32.gmra.mrb[0].mxu0 %v2273
    %v2420 = vpop.f32.mrb[0].mxu0
    %v2421 = vadd.f32 0.0, %v2420
    %v2422 = vpop.f32.mrb[0].mxu0
    %2423 = vmatprep.mubr.f32.mxu0 0.0
    %2424 = vmatmul.mubr.f32.gmra.mrb[0].mxu0 %v2274
    %v2425 = vpop.f32.mrb[0].mxu0
    %v2426 = vadd.f32 0.0, %v2425
    %v2427 = vpop.f32.mrb[0].mxu0
    %2428 = vmatprep.mubr.f32.mxu0 0.0
    %2429 = vmatmul.mubr.f32.gmra.mrb[0].mxu0 %v2275
    %v2430 = vpop.f32.mrb[0].mxu0
    %v2431 = vadd.f32 0.0, %v2430
    %v2432 = vpop.f32.mrb[0].mxu0
    %2433 = vmatprep.mubr.f32.mxu0 0.0
    %2434 = vmatmul.mubr.f32.gmra.mrb[0].mxu0 %v2276
    %v2435 = vpop.f32.mrb[0].mxu0
    %v2436 = vadd.f32 0.0, %v2435
    %v2437 = vpop.f32.mrb[0].mxu0
    %2438 = vmatprep.mubr.f32.mxu0 0.0
    %2439 = vmatmul.mubr.f32.gmra.mrb[0].mxu0 %v2277
    %v2440 = vpop.f32.mrb[0].mxu0
    %v2441 = vadd.f32 0.0, %v2440
    %v2442 = vpop.f32.mrb[0].mxu0
    %2443 = vmatprep.mubr.f32.mxu0 0.0
    %2444 = vmatmul.mubr.f32.gmra.mrb[0].mxu0 %v2278
    %v2445 = vpop.f32.mrb[0].mxu0
    %v2446 = vadd.f32 0.0, %v2445
    %v2447 = vpop.f32.mrb[0].mxu0
    %2448 = vmatprep.mubr.f32.mxu0 0.0
    %2449 = vmatmul.mubr.f32.gmra.mrb[0].mxu0 %v2279
    %v2450 = vpop.f32.mrb[0].mxu0
    %v2451 = vadd.f32 0.0, %v2450
    %v2452 = vpop.f32.mrb[0].mxu0
    %2453 = vmatprep.mubr.f32.mxu0 0.0
    %2454 = vmatmul.mubr.f32.gmra.mrb[0].mxu0 %v2280
    %v2455 = vpop.f32.mrb[0].mxu0
    %v2456 = vadd.f32 0.0, %v2455
    %v2457 = vpop.f32.mrb[0].mxu0
    %2458 = vmatprep.mubr.f32.mxu0 0.0
    %2459 = vmatmul.mubr.f32.gmra.mrb[0].mxu0 %v2281
    %v2460 = vpop.f32.mrb[0].mxu0
    %v2461 = vadd.f32 0.0, %v2460
    %v2462 = vpop.f32.mrb[0].mxu0
    %2463 = vmatprep.mubr.f32.mxu0 0.0
    %2464 = vmatmul.mubr.f32.gmra.mrb[0].mxu0 %v2282
    %v2465 = vpop.f32.mrb[0].mxu0
    %v2466 = vadd.f32 0.0, %v2465
    %v2467 = vpop.f32.mrb[0].mxu0
    %2468 = vmatprep.mubr.f32.mxu0 0.0
    %2469 = vmatmul.mubr.f32.gmra.mrb[0].mxu0 %v2283
    %v2470 = vpop.f32.mrb[0].mxu0
    %v2471 = vadd.f32 0.0, %v2470
    %v2472 = vpop.f32.mrb[0].mxu0
    %2473 = vmatprep.mubr.f32.mxu0 0.0
    %2474 = vmatmul.mubr.f32.gmra.mrb[0].mxu0 %v2284
    %v2475 = vpop.f32.mrb[0].mxu0
    %v2476 = vadd.f32 0.0, %v2475
    %v2477 = vpop.f32.mrb[0].mxu0
    %2478 = vmatprep.mubr.f32.mxu0 0.0
    %2479 = vmatmul.mubr.f32.gmra.mrb[0].mxu0 %v2285
    %v2480 = vpop.f32.mrb[0].mxu0
    %v2481 = vadd.f32 0.0, %v2480
    %v2482 = vpop.f32.mrb[0].mxu0
    %2483 = vmatprep.mubr.f32.mxu0 0.0
    %2484 = vmatmul.mubr.f32.gmra.mrb[0].mxu0 %v2286
    %v2485 = vpop.f32.mrb[0].mxu0
    %v2486 = vadd.f32 0.0, %v2485
    %v2487 = vpop.f32.mrb[0].mxu0
    %2488 = vmatprep.mubr.f32.mxu0 0.0
    %2489 = vmatmul.mubr.f32.gmra.mrb[0].mxu0 %v2287
    %v2490 = vpop.f32.mrb[0].mxu0
    %v2491 = vadd.f32 0.0, %v2490
    %v2492 = vpop.f32.mrb[0].mxu0
    %2493 = vmatprep.mubr.f32.mxu0 0.0
    %2494 = vmatmul.mubr.f32.gmra.mrb[0].mxu0 %v2288
    %v2495 = vpop.f32.mrb[0].mxu0
    %v2496 = vadd.f32 0.0, %v2495
    %v2497 = vpop.f32.mrb[0].mxu0
    %2498 = vmatprep.mubr.f32.mxu0 0.0
    %2499 = vmatmul.mubr.f32.gmra.mrb[0].mxu0 %v2289
    %v2500 = vpop.f32.mrb[0].mxu0
    %v2501 = vadd.f32 0.0, %v2500
    %v2502 = vpop.f32.mrb[0].mxu0
    %2503 = vmatprep.mubr.f32.mxu0 0.0
    %2504 = vmatmul.mubr.f32.gmra.mrb[0].mxu0 %v2290
    %v2505 = vpop.f32.mrb[0].mxu0
    %v2506 = vadd.f32 0.0, %v2505
    %v2507 = vpop.f32.mrb[0].mxu0
    %2508 = vmatprep.mubr.f32.mxu0 0.0
    %2509 = vmatmul.mubr.f32.gmra.mrb[0].mxu0 %v2291
    %v2510 = vpop.f32.mrb[0].mxu0
    %v2511 = vadd.f32 0.0, %v2510
    %v2512 = vpop.f32.mrb[0].mxu0
    %2513 = vmatprep.mubr.f32.mxu0 0.0
    %2514 = vmatmul.mubr.f32.gmra.mrb[0].mxu0 %v2292
    %v2515 = vpop.f32.mrb[0].mxu0
    %v2516 = vadd.f32 0.0, %v2515
    %v2517 = vpop.f32.mrb[0].mxu0
    %2518 = vmatprep.mubr.f32.mxu0 0.0
    %2519 = vmatmul.mubr.f32.gmra.mrb[0].mxu0 %v2293
    %v2520 = vpop.f32.mrb[0].mxu0
    %v2521 = vadd.f32 0.0, %v2520
    %v2522 = vpop.f32.mrb[0].mxu0
    %2523 = vmatprep.mubr.f32.mxu0 0.0
    %2524 = vmatmul.mubr.f32.gmra.mrb[0].mxu0 %v2294
    %v2525 = vpop.f32.mrb[0].mxu0
    %v2526 = vadd.f32 0.0, %v2525
    %v2527 = vpop.f32.mrb[0].mxu0
    %2528 = vmatprep.mubr.f32.mxu0 0.0
    %2529 = vmatmul.mubr.f32.gmra.mrb[0].mxu0 %v2295
    %v2530 = vpop.f32.mrb[0].mxu0
    %v2531 = vadd.f32 0.0, %v2530
    %v2532 = vpop.f32.mrb[0].mxu0
    %2533 = vmatprep.mubr.f32.mxu0 0.0
    %2534 = vmatmul.mubr.f32.gmra.mrb[0].mxu0 %v2296
    %v2535 = vpop.f32.mrb[0].mxu0
    %v2536 = vadd.f32 0.0, %v2535
    %v2537 = vpop.f32.mrb[0].mxu0
    %2538 = vmatprep.mubr.f32.mxu0 0.0
    %2539 = vmatmul.mubr.f32.gmra.mrb[0].mxu0 %v2297
    %v2540 = vpop.f32.mrb[0].mxu0
    %v2541 = vadd.f32 0.0, %v2540
    %v2542 = vpop.f32.mrb[0].mxu0
    %2543 = vmatprep.mubr.f32.mxu0 0.0
    %2544 = vmatmul.mubr.f32.gmra.mrb[0].mxu0 %v2298
    %v2545 = vpop.f32.mrb[0].mxu0
    %v2546 = vadd.f32 0.0, %v2545
    %v2547 = vpop.f32.mrb[0].mxu0
    %2548 = vmatprep.mubr.f32.mxu0 0.0
    %2549 = vmatmul.mubr.f32.gmra.mrb[0].mxu0 %v2299
    %v2550 = vpop.f32.mrb[0].mxu0
    %v2551 = vadd.f32 0.0, %v2550
    %v2552 = vpop.f32.mrb[0].mxu0
    %2553 = vmatprep.mubr.f32.mxu0 0.0
    %2554 = vmatmul.mubr.f32.gmra.mrb[0].mxu0 %v2300
    %v2555 = vpop.f32.mrb[0].mxu0
    %v2556 = vadd.f32 0.0, %v2555
    %v2557 = vpop.f32.mrb[0].mxu0
    %2558 = vmatprep.mubr.f32.mxu0 0.0
    %2559 = vmatmul.mubr.f32.gmra.mrb[0].mxu0 %v2301
    %v2560 = vpop.f32.mrb[0].mxu0
    %v2561 = vadd.f32 0.0, %v2560
    %v2562 = vpop.f32.mrb[0].mxu0
    %2563 = vmatprep.mubr.f32.mxu0 0.0
    %2564 = vmatmul.mubr.f32.gmra.mrb[0].mxu0 %v2302
    %v2565 = vpop.f32.mrb[0].mxu0
    %v2566 = vadd.f32 0.0, %v2565
    %v2567 = vpop.f32.mrb[0].mxu0
    %2568 = vmatprep.mubr.f32.mxu0 0.0
    %2569 = vmatmul.mubr.f32.gmra.mrb[0].mxu0 %v2303
    %v2570 = vpop.f32.mrb[0].mxu0
    %v2571 = vadd.f32 0.0, %v2570
    %v2572 = vpop.f32.mrb[0].mxu0
    %2573 = vmatprep.mubr.f32.mxu0 0.0
    %2574 = vmatmul.mubr.f32.gmra.mrb[0].mxu0 %v2304
    %v2575 = vpop.f32.mrb[0].mxu0
    %v2576 = vadd.f32 0.0, %v2575
    %v2577 = vpop.f32.mrb[0].mxu0
    %2578 = vmatprep.mubr.f32.mxu0 0.0
    %2579 = vmatmul.mubr.f32.gmra.mrb[0].mxu0 %v2305
    %v2580 = vpop.f32.mrb[0].mxu0
    %v2581 = vadd.f32 0.0, %v2580
    %v2582 = vpop.f32.mrb[0].mxu0
    %2583 = vmatprep.mubr.f32.mxu0 0.0
    %2584 = vmatmul.mubr.f32.gmra.mrb[0].mxu0 %v2306
    %v2585 = vpop.f32.mrb[0].mxu0
    %v2586 = vadd.f32 0.0, %v2585
    %v2587 = vpop.f32.mrb[0].mxu0
    %2588 = vmatprep.mubr.f32.mxu0 0.0
    %2589 = vmatmul.mubr.f32.gmra.mrb[0].mxu0 %v2307
    %v2590 = vpop.f32.mrb[0].mxu0
    %v2591 = vadd.f32 0.0, %v2590
    %v2592 = vpop.f32.mrb[0].mxu0
    %2593 = vmatprep.mubr.f32.mxu0 0.0
    %2594 = vmatmul.mubr.f32.gmra.mrb[0].mxu0 %v2308
    %v2595 = vpop.f32.mrb[0].mxu0
    %v2596 = vadd.f32 0.0, %v2595
    %v2597 = vpop.f32.mrb[0].mxu0
    %2598 = vmatprep.mubr.f32.mxu0 0.0
    %2599 = vmatmul.mubr.f32.gmra.mrb[0].mxu0 %v2309
    %v2600 = vpop.f32.mrb[0].mxu0
    %v2601 = vadd.f32 0.0, %v2600
    %v2602 = vpop.f32.mrb[0].mxu0
    %2603 = vmatprep.mubr.f32.mxu0 0.0
    %2604 = vmatmul.mubr.f32.gmra.mrb[0].mxu0 %v2310
    %v2605 = vpop.f32.mrb[0].mxu0
    %v2606 = vadd.f32 0.0, %v2605
    %v2607 = vpop.f32.mrb[0].mxu0
    %2608 = vmatprep.mubr.f32.mxu0 0.0
    %2609 = vmatmul.mubr.f32.gmra.mrb[0].mxu0 %v2311
    %v2610 = vpop.f32.mrb[0].mxu0
    %v2611 = vadd.f32 0.0, %v2610
    %v2612 = vpop.f32.mrb[0].mxu0
    %2613 = vmatprep.mubr.f32.mxu0 0.0
    %2614 = vmatmul.mubr.f32.gmra.mrb[0].mxu0 %v2312
    %v2615 = vpop.f32.mrb[0].mxu0
    %v2616 = vadd.f32 0.0, %v2615
    %v2617 = vpop.f32.mrb[0].mxu0
    %2618 = vmatprep.mubr.f32.mxu0 0.0
    %2619 = vmatmul.mubr.f32.gmra.mrb[0].mxu0 %v2313
    %v2620 = vpop.f32.mrb[0].mxu0
    %v2621 = vadd.f32 0.0, %v2620
    %v2622 = vpop.f32.mrb[0].mxu0
    %2623 = vmatprep.mubr.f32.mxu0 0.0
    %2624 = vmatmul.mubr.f32.gmra.mrb[0].mxu0 %v2314
    %v2625 = vpop.f32.mrb[0].mxu0
    %v2626 = vadd.f32 0.0, %v2625
    %v2627 = vpop.f32.mrb[0].mxu0
    %2628 = vmatprep.mubr.f32.mxu0 0.0
    %2629 = vmatmul.mubr.f32.gmra.mrb[0].mxu0 %v2315
    %v2630 = vpop.f32.mrb[0].mxu0
    %v2631 = vadd.f32 0.0, %v2630
    %v2632 = vpop.f32.mrb[0].mxu0
    %2633 = vmatprep.mubr.f32.mxu0 0.0
    %2634 = vmatmul.mubr.f32.gmra.mrb[0].mxu0 %v2316
    %v2635 = vpop.f32.mrb[0].mxu0
    %v2636 = vadd.f32 0.0, %v2635
    %v2637 = vpop.f32.mrb[0].mxu0
    %2638 = vmatprep.mubr.f32.mxu0 0.0
    %2639 = vmatmul.mubr.f32.gmra.mrb[0].mxu0 %v2317
    %v2640 = vpop.f32.mrb[0].mxu0
    %v2641 = vadd.f32 0.0, %v2640
    %v2642 = vpop.f32.mrb[0].mxu0
    %2643 = vmatprep.mubr.f32.mxu0 0.0
    %2644 = vmatmul.mubr.f32.gmra.mrb[0].mxu0 %v2318
    %v2645 = vpop.f32.mrb[0].mxu0
    %v2646 = vadd.f32 0.0, %v2645
    %v2647 = vpop.f32.mrb[0].mxu0
    %2648 = vmatprep.mubr.f32.mxu0 0.0
    %2649 = vmatmul.mubr.f32.gmra.mrb[0].mxu0 %v2319
    %v2650 = vpop.f32.mrb[0].mxu0
    %v2651 = vadd.f32 0.0, %v2650
    %v2652 = vpop.f32.mrb[0].mxu0
    %2653 = vmatprep.mubr.f32.mxu0 0.0
    %2654 = vmatmul.mubr.f32.gmra.mrb[0].mxu0 %v2320
    %v2655 = vpop.f32.mrb[0].mxu0
    %v2656 = vadd.f32 0.0, %v2655
    %v2657 = vpop.f32.mrb[0].mxu0
    %2658 = vmatprep.mubr.f32.mxu0 0.0
    %2659 = vmatmul.mubr.f32.gmra.mrb[0].mxu0 %v2321
    %v2660 = vpop.f32.mrb[0].mxu0
    %v2661 = vadd.f32 0.0, %v2660
    %v2662 = vpop.f32.mrb[0].mxu0
    %2663 = vmatprep.mubr.f32.mxu0 0.0
    %2664 = vmatmul.mubr.f32.gmra.mrb[0].mxu0 %v2322
    %v2665 = vpop.f32.mrb[0].mxu0
    %v2666 = vadd.f32 0.0, %v2665
    %v2667 = vpop.f32.mrb[0].mxu0
    %2668 = vmatprep.mubr.f32.mxu0 0.0
    %2669 = vmatmul.mubr.f32.gmra.mrb[0].mxu0 %v2323
    %v2670 = vpop.f32.mrb[0].mxu0
    %v2671 = vadd.f32 0.0, %v2670
    %v2672 = vpop.f32.mrb[0].mxu0
    %2673 = vmatprep.mubr.f32.mxu0 0.0
    %2674 = vmatmul.mubr.f32.gmra.mrb[0].mxu0 %v2324
    %v2675 = vpop.f32.mrb[0].mxu0
    %v2676 = vadd.f32 0.0, %v2675
    %v2677 = vpop.f32.mrb[0].mxu0
    %2678 = vmatprep.mubr.f32.mxu0 0.0
    %2679 = vmatmul.mubr.f32.gmra.mrb[0].mxu0 %v2325
    %v2680 = vpop.f32.mrb[0].mxu0
    %v2681 = vadd.f32 0.0, %v2680
    %v2682 = vpop.f32.mrb[0].mxu0
    %2683 = vmatprep.mubr.f32.mxu0 0.0
    %2684 = vmatmul.mubr.f32.gmra.mrb[0].mxu0 %v2326
    %v2685 = vpop.f32.mrb[0].mxu0
    %v2686 = vadd.f32 0.0, %v2685
    %v2687 = vpop.f32.mrb[0].mxu0
    %2688 = vmatprep.mubr.f32.mxu0 0.0
    %2689 = vmatmul.mubr.f32.gmra.mrb[0].mxu0 %v2327
    %v2690 = vpop.f32.mrb[0].mxu0
    %v2691 = vadd.f32 0.0, %v2690
    %v2692 = vpop.f32.mrb[0].mxu0
    %2693 = vmatprep.mubr.f32.mxu0 0.0
    %2694 = vmatmul.mubr.f32.gmra.mrb[0].mxu0 %v2328
    %v2695 = vpop.f32.mrb[0].mxu0
    %v2696 = vadd.f32 0.0, %v2695
    %v2697 = vpop.f32.mrb[0].mxu0
    %2698 = vmatprep.mubr.f32.mxu0 0.0
    %2699 = vmatmul.mubr.f32.gmra.mrb[0].mxu0 %v2329
    %v2700 = vpop.f32.mrb[0].mxu0
    %v2701 = vadd.f32 0.0, %v2700
    %v2702 = vpop.f32.mrb[0].mxu0
    %2703 = vmatprep.mubr.f32.mxu0 0.0
    %2704 = vmatmul.mubr.f32.gmra.mrb[0].mxu0 %v2330
    %v2705 = vpop.f32.mrb[0].mxu0
    %v2706 = vadd.f32 0.0, %v2705
    %v2707 = vpop.f32.mrb[0].mxu0
    %2708 = vmatprep.mubr.f32.mxu0 0.0
    %2709 = vmatmul.mubr.f32.gmra.mrb[0].mxu0 %v2331
    %v2710 = vpop.f32.mrb[0].mxu0
    %v2711 = vadd.f32 0.0, %v2710
    %v2712 = vpop.f32.mrb[0].mxu0
    %2713 = vmatprep.mubr.f32.mxu0 0.0
    %2714 = vmatmul.mubr.f32.gmra.mrb[0].mxu0 %v2332
    %v2715 = vpop.f32.mrb[0].mxu0
    %v2716 = vadd.f32 0.0, %v2715
    %v2717 = vpop.f32.mrb[0].mxu0
    %2718 = vmatprep.mubr.f32.mxu0 0.0
    %2719 = vmatmul.mubr.f32.gmra.mrb[0].mxu0 %v2333
    %v2720 = vpop.f32.mrb[0].mxu0
    %v2721 = vadd.f32 0.0, %v2720
    %v2722 = vpop.f32.mrb[0].mxu0
    %2723 = vmatprep.mubr.f32.mxu0 0.0
    %2724 = vmatmul.mubr.f32.gmra.mrb[0].mxu0 %v2334
    %v2725 = vpop.f32.mrb[0].mxu0
    %v2726 = vadd.f32 0.0, %v2725
    %v2727 = vpop.f32.mrb[0].mxu0
    %2728 = vmatprep.mubr.f32.mxu0 0.0
    %2729 = vmatmul.mubr.f32.gmra.mrb[0].mxu0 %v2335
    %v2730 = vpop.f32.mrb[0].mxu0
    %v2731 = vadd.f32 0.0, %v2730
    %v2732 = vpop.f32.mrb[0].mxu0
    %2733 = vmatprep.mubr.f32.mxu0 0.0
    %2734 = vmatmul.mubr.f32.gmra.mrb[0].mxu0 %v2336
    %v2735 = vpop.f32.mrb[0].mxu0
    %v2736 = vadd.f32 0.0, %v2735
    %v2737 = vpop.f32.mrb[0].mxu0
    %2738 = vdwg.mxu0
    %v2739 = vadd.f32 %v2209, %v2421
    %v2740 = vadd.f32 %v2210, %v2426
    %v2741 = vadd.f32 %v2211, %v2431
    %v2742 = vadd.f32 %v2212, %v2436
    %v2743 = vadd.f32 %v2213, %v2441
    %v2744 = vadd.f32 %v2214, %v2446
    %v2745 = vadd.f32 %v2215, %v2451
    %v2746 = vadd.f32 %v2216, %v2456
    %v2747 = vadd.f32 %v2217, %v2461
    %v2748 = vadd.f32 %v2218, %v2466
    %v2749 = vadd.f32 %v2219, %v2471
    %v2750 = vadd.f32 %v2220, %v2476
    %v2751 = vadd.f32 %v2221, %v2481
    %v2752 = vadd.f32 %v2222, %v2486
    %v2753 = vadd.f32 %v2223, %v2491
    %v2754 = vadd.f32 %v2224, %v2496
    %v2755 = vadd.f32 %v2225, %v2501
    %v2756 = vadd.f32 %v2226, %v2506
    %v2757 = vadd.f32 %v2227, %v2511
    %v2758 = vadd.f32 %v2228, %v2516
    %v2759 = vadd.f32 %v2229, %v2521
    %v2760 = vadd.f32 %v2230, %v2526
    %v2761 = vadd.f32 %v2231, %v2531
    %v2762 = vadd.f32 %v2232, %v2536
    %v2763 = vadd.f32 %v2233, %v2541
    %v2764 = vadd.f32 %v2234, %v2546
    %v2765 = vadd.f32 %v2235, %v2551
    %v2766 = vadd.f32 %v2236, %v2556
    %v2767 = vadd.f32 %v2237, %v2561
    %v2768 = vadd.f32 %v2238, %v2566
    %v2769 = vadd.f32 %v2239, %v2571
    %v2770 = vadd.f32 %v2240, %v2576
    %v2771 = vadd.f32 %v2241, %v2581
    %v2772 = vadd.f32 %v2242, %v2586
    %v2773 = vadd.f32 %v2243, %v2591
    %v2774 = vadd.f32 %v2244, %v2596
    %v2775 = vadd.f32 %v2245, %v2601
    %v2776 = vadd.f32 %v2246, %v2606
    %v2777 = vadd.f32 %v2247, %v2611
    %v2778 = vadd.f32 %v2248, %v2616
    %v2779 = vadd.f32 %v2249, %v2621
    %v2780 = vadd.f32 %v2250, %v2626
    %v2781 = vadd.f32 %v2251, %v2631
    %v2782 = vadd.f32 %v2252, %v2636
    %v2783 = vadd.f32 %v2253, %v2641
    %v2784 = vadd.f32 %v2254, %v2646
    %v2785 = vadd.f32 %v2255, %v2651
    %v2786 = vadd.f32 %v2256, %v2656
    %v2787 = vadd.f32 %v2257, %v2661
    %v2788 = vadd.f32 %v2258, %v2666
    %v2789 = vadd.f32 %v2259, %v2671
    %v2790 = vadd.f32 %v2260, %v2676
    %v2791 = vadd.f32 %v2261, %v2681
    %v2792 = vadd.f32 %v2262, %v2686
    %v2793 = vadd.f32 %v2263, %v2691
    %v2794 = vadd.f32 %v2264, %v2696
    %v2795 = vadd.f32 %v2265, %v2701
    %v2796 = vadd.f32 %v2266, %v2706
    %v2797 = vadd.f32 %v2267, %v2711
    %v2798 = vadd.f32 %v2268, %v2716
    %v2799 = vadd.f32 %v2269, %v2721
    %v2800 = vadd.f32 %v2270, %v2726
    %v2801 = vadd.f32 %v2271, %v2731
    %v2802 = vadd.f32 %v2272, %v2736
    %v2803 = vld [vmem:[%s217 + $0x2] sm:$0xff]
    %v2804 = vld [vmem:[%s217 + $0xa] sm:$0xff]
    %v2805 = vld [vmem:[%s217 + $0x1a] sm:$0xff]
    %v2806 = vld [vmem:[%s217 + $0x22] sm:$0xff]
    %v2807 = vld [vmem:[%s217 + $0x32] sm:$0xff]
    %v2808 = vld [vmem:[%s217 + $0x3a] sm:$0xff]
    %v2809 = vld [vmem:[%s217 + $0x4a] sm:$0xff]
    %v2810 = vld [vmem:[%s217 + $0x52] sm:$0xff]
    %v2811 = vld [vmem:[%s217 + $0x62] sm:$0xff]
    %v2812 = vld [vmem:[%s217 + $0x6a] sm:$0xff]
    %v2813 = vld [vmem:[%s217 + $0x7a] sm:$0xff]
    %v2814 = vld [vmem:[%s217 + $0x82] sm:$0xff]
    %v2815 = vld [vmem:[%s217 + $0x92] sm:$0xff]
    %v2816 = vld [vmem:[%s217 + $0x9a] sm:$0xff]
    %v2817 = vld [vmem:[%s217 + $0xaa] sm:$0xff]
    %v2818 = vld [vmem:[%s217 + $0xb2] sm:$0xff]
    %v2819 = vld [vmem:[%s217 + $0xc2] sm:$0xff]
    %v2820 = vld [vmem:[%s217 + $0xca] sm:$0xff]
    %v2821 = vld [vmem:[%s217 + $0xda] sm:$0xff]
    %v2822 = vld [vmem:[%s217 + $0xe2] sm:$0xff]
    %v2823 = vld [vmem:[%s217 + $0xf2] sm:$0xff]
    %v2824 = vld [vmem:[%s217 + $0xfa] sm:$0xff]
    %v2825 = vld [vmem:[%s217 + $0x10a] sm:$0xff]
    %v2826 = vld [vmem:[%s217 + $0x112] sm:$0xff]
    %v2827 = vld [vmem:[%s217 + $0x122] sm:$0xff]
    %v2828 = vld [vmem:[%s217 + $0x12a] sm:$0xff]
    %v2829 = vld [vmem:[%s217 + $0x13a] sm:$0xff]
    %v2830 = vld [vmem:[%s217 + $0x142] sm:$0xff]
    %v2831 = vld [vmem:[%s217 + $0x152] sm:$0xff]
    %v2832 = vld [vmem:[%s217 + $0x15a] sm:$0xff]
    %v2833 = vld [vmem:[%s217 + $0x16a] sm:$0xff]
    %v2834 = vld [vmem:[%s217 + $0x172] sm:$0xff]
    %v2835 = vld [vmem:[%s217 + $0x1b2] sm:$0xff]
    %v2836 = vld [vmem:[%s217 + $0x1ba] sm:$0xff]
    %v2837 = vld [vmem:[%s217 + $0x1ca] sm:$0xff]
    %v2838 = vld [vmem:[%s217 + $0x1d2] sm:$0xff]
    %v2839 = vld [vmem:[%s217 + $0x1e2] sm:$0xff]
    %v2840 = vld [vmem:[%s217 + $0x1ea] sm:$0xff]
    %v2841 = vld [vmem:[%s217 + $0x1fa] sm:$0xff]
    %v2842 = vld [vmem:[%s217 + $0x202] sm:$0xff]
    %v2843 = vld [vmem:[%s217 + $0x212] sm:$0xff]
    %v2844 = vld [vmem:[%s217 + $0x21a] sm:$0xff]
    %v2845 = vld [vmem:[%s217 + $0x22a] sm:$0xff]
    %v2846 = vld [vmem:[%s217 + $0x232] sm:$0xff]
    %v2847 = vld [vmem:[%s217 + $0x242] sm:$0xff]
    %v2848 = vld [vmem:[%s217 + $0x24a] sm:$0xff]
    %v2849 = vld [vmem:[%s217 + $0x25a] sm:$0xff]
    %v2850 = vld [vmem:[%s217 + $0x262] sm:$0xff]
    %v2851 = vld [vmem:[%s217 + $0x272] sm:$0xff]
    %v2852 = vld [vmem:[%s217 + $0x27a] sm:$0xff]
    %v2853 = vld [vmem:[%s217 + $0x28a] sm:$0xff]
    %v2854 = vld [vmem:[%s217 + $0x292] sm:$0xff]
    %v2855 = vld [vmem:[%s217 + $0x2a2] sm:$0xff]
    %v2856 = vld [vmem:[%s217 + $0x2aa] sm:$0xff]
    %v2857 = vld [vmem:[%s217 + $0x2ba] sm:$0xff]
    %v2858 = vld [vmem:[%s217 + $0x2c2] sm:$0xff]
    %v2859 = vld [vmem:[%s217 + $0x2d2] sm:$0xff]
    %v2860 = vld [vmem:[%s217 + $0x2da] sm:$0xff]
    %v2861 = vld [vmem:[%s217 + $0x2ea] sm:$0xff]
    %v2862 = vld [vmem:[%s217 + $0x2f2] sm:$0xff]
    %v2863 = vld [vmem:[%s217 + $0x302] sm:$0xff]
    %v2864 = vld [vmem:[%s217 + $0x30a] sm:$0xff]
    %v2865 = vld [vmem:[%s217 + $0x31a] sm:$0xff]
    %v2866 = vld [vmem:[%s217 + $0x322] sm:$0xff]
    %s2867 = scalar_lea.vmem [#allocation6], 640
    %v2868 = vld [vmem:[%s2867] sm:$0xff]
    %v2869 = vld [vmem:[%s2867 + $0x8] sm:$0xff]
    %v2870 = vld [vmem:[%s2867 + $0x10] sm:$0xff]
    %v2871 = vld [vmem:[%s2867 + $0x18] sm:$0xff]
    %v2872 = vld [vmem:[%s2867 + $0x20] sm:$0xff]
    %v2873 = vld [vmem:[%s2867 + $0x28] sm:$0xff]
    %v2874 = vld [vmem:[%s2867 + $0x30] sm:$0xff]
    %v2875 = vld [vmem:[%s2867 + $0x38] sm:$0xff]
    %v2876 = vld [vmem:[%s2867 + $0x40] sm:$0xff]
    %v2877 = vld [vmem:[%s2867 + $0x48] sm:$0xff]
    %v2878 = vld [vmem:[%s2867 + $0x50] sm:$0xff]
    %v2879 = vld [vmem:[%s2867 + $0x58] sm:$0xff]
    %v2880 = vld [vmem:[%s2867 + $0x60] sm:$0xff]
    %v2881 = vld [vmem:[%s2867 + $0x68] sm:$0xff]
    %v2882 = vld [vmem:[%s2867 + $0x70] sm:$0xff]
    %v2883 = vld [vmem:[%s2867 + $0x78] sm:$0xff]
    %2884 = vmatprep.subr.mxu0 0.0
    %2885 = vmatpush1.msra.mxu0 %v2868
    %2886 = vmatprep.subr.mxu0 0.0
    %2887 = vmatpush1.msra.mxu0 %v2869
    %2888 = vmatprep.subr.mxu0 0.0
    %2889 = vmatpush1.msra.mxu0 %v2870
    %2890 = vmatprep.subr.mxu0 0.0
    %2891 = vmatpush1.msra.mxu0 %v2871
    %2892 = vmatprep.subr.mxu0 0.0
    %2893 = vmatpush1.msra.mxu0 %v2872
    %2894 = vmatprep.subr.mxu0 0.0
    %2895 = vmatpush1.msra.mxu0 %v2873
    %2896 = vmatprep.subr.mxu0 0.0
    %2897 = vmatpush1.msra.mxu0 %v2874
    %2898 = vmatprep.subr.mxu0 0.0
    %2899 = vmatpush1.msra.mxu0 %v2875
    %2900 = vmatprep.subr.mxu0 0.0
    %2901 = vmatpush1.msra.mxu0 %v2876
    %2902 = vmatprep.subr.mxu0 0.0
    %2903 = vmatpush1.msra.mxu0 %v2877
    %2904 = vmatprep.subr.mxu0 0.0
    %2905 = vmatpush1.msra.mxu0 %v2878
    %2906 = vmatprep.subr.mxu0 0.0
    %2907 = vmatpush1.msra.mxu0 %v2879
    %2908 = vmatprep.subr.mxu0 0.0
    %2909 = vmatpush1.msra.mxu0 %v2880
    %2910 = vmatprep.subr.mxu0 0.0
    %2911 = vmatpush1.msra.mxu0 %v2881
    %2912 = vmatprep.subr.mxu0 0.0
    %2913 = vmatpush1.msra.mxu0 %v2882
    %2914 = vmatprep.subr.mxu0 0.0
    %2915 = vmatpush1.msra.mxu0 %v2883
    %2916 = vmatprep.subr.mxu0 0.0
    %2917 = vmatpush1.msra.mxu0 0.0
    %2918 = vmatprep.subr.mxu0 0.0
    %2919 = vmatpush1.msra.mxu0 0.0
    %2920 = vmatprep.subr.mxu0 0.0
    %2921 = vmatpush1.msra.mxu0 0.0
    %2922 = vmatprep.subr.mxu0 0.0
    %2923 = vmatpush1.msra.mxu0 0.0
    %2924 = vmatprep.subr.mxu0 0.0
    %2925 = vmatpush1.msra.mxu0 0.0
    %2926 = vmatprep.subr.mxu0 0.0
    %2927 = vmatpush1.msra.mxu0 0.0
    %2928 = vmatprep.subr.mxu0 0.0
    %2929 = vmatpush1.msra.mxu0 0.0
    %2930 = vmatprep.subr.mxu0 0.0
    %2931 = vmatpush1.msra.mxu0 0.0
    %2932 = vmatprep.subr.mxu0 0.0
    %2933 = vmatpush1.msra.mxu0 0.0
    %2934 = vmatprep.subr.mxu0 0.0
    %2935 = vmatpush1.msra.mxu0 0.0
    %2936 = vmatprep.subr.mxu0 0.0
    %2937 = vmatpush1.msra.mxu0 0.0
    %2938 = vmatprep.subr.mxu0 0.0
    %2939 = vmatpush1.msra.mxu0 0.0
    %2940 = vmatprep.subr.mxu0 0.0
    %2941 = vmatpush1.msra.mxu0 0.0
    %2942 = vmatprep.subr.mxu0 0.0
    %2943 = vmatpush1.msra.mxu0 0.0
    %2944 = vmatprep.subr.mxu0 0.0
    %2945 = vmatpush1.msra.mxu0 0.0
    %2946 = vmatprep.subr.mxu0 0.0
    %2947 = vmatpush1.msra.mxu0 0.0
    %2948 = vmatprep.mubr.f32.mxu0 0.0
    %2949 = vmatmul.mubr.f32.gmra.mrb[0].mxu0 %v2803
    %v2950 = vpop.f32.mrb[0].mxu0
    %v2951 = vadd.f32 0.0, %v2950
    %v2952 = vpop.f32.mrb[0].mxu0
    %2953 = vmatprep.mubr.f32.mxu0 0.0
    %2954 = vmatmul.mubr.f32.gmra.mrb[0].mxu0 %v2804
    %v2955 = vpop.f32.mrb[0].mxu0
    %v2956 = vadd.f32 0.0, %v2955
    %v2957 = vpop.f32.mrb[0].mxu0
    %2958 = vmatprep.mubr.f32.mxu0 0.0
    %2959 = vmatmul.mubr.f32.gmra.mrb[0].mxu0 %v2805
    %v2960 = vpop.f32.mrb[0].mxu0
    %v2961 = vadd.f32 0.0, %v2960
    %v2962 = vpop.f32.mrb[0].mxu0
    %2963 = vmatprep.mubr.f32.mxu0 0.0
    %2964 = vmatmul.mubr.f32.gmra.mrb[0].mxu0 %v2806
    %v2965 = vpop.f32.mrb[0].mxu0
    %v2966 = vadd.f32 0.0, %v2965
    %v2967 = vpop.f32.mrb[0].mxu0
    %2968 = vmatprep.mubr.f32.mxu0 0.0
    %2969 = vmatmul.mubr.f32.gmra.mrb[0].mxu0 %v2807
    %v2970 = vpop.f32.mrb[0].mxu0
    %v2971 = vadd.f32 0.0, %v2970
    %v2972 = vpop.f32.mrb[0].mxu0
    %2973 = vmatprep.mubr.f32.mxu0 0.0
    %2974 = vmatmul.mubr.f32.gmra.mrb[0].mxu0 %v2808
    %v2975 = vpop.f32.mrb[0].mxu0
    %v2976 = vadd.f32 0.0, %v2975
    %v2977 = vpop.f32.mrb[0].mxu0
    %2978 = vmatprep.mubr.f32.mxu0 0.0
    %2979 = vmatmul.mubr.f32.gmra.mrb[0].mxu0 %v2809
    %v2980 = vpop.f32.mrb[0].mxu0
    %v2981 = vadd.f32 0.0, %v2980
    %v2982 = vpop.f32.mrb[0].mxu0
    %2983 = vmatprep.mubr.f32.mxu0 0.0
    %2984 = vmatmul.mubr.f32.gmra.mrb[0].mxu0 %v2810
    %v2985 = vpop.f32.mrb[0].mxu0
    %v2986 = vadd.f32 0.0, %v2985
    %v2987 = vpop.f32.mrb[0].mxu0
    %2988 = vmatprep.mubr.f32.mxu0 0.0
    %2989 = vmatmul.mubr.f32.gmra.mrb[0].mxu0 %v2811
    %v2990 = vpop.f32.mrb[0].mxu0
    %v2991 = vadd.f32 0.0, %v2990
    %v2992 = vpop.f32.mrb[0].mxu0
    %2993 = vmatprep.mubr.f32.mxu0 0.0
    %2994 = vmatmul.mubr.f32.gmra.mrb[0].mxu0 %v2812
    %v2995 = vpop.f32.mrb[0].mxu0
    %v2996 = vadd.f32 0.0, %v2995
    %v2997 = vpop.f32.mrb[0].mxu0
    %2998 = vmatprep.mubr.f32.mxu0 0.0
    %2999 = vmatmul.mubr.f32.gmra.mrb[0].mxu0 %v2813
    %v3000 = vpop.f32.mrb[0].mxu0
    %v3001 = vadd.f32 0.0, %v3000
    %v3002 = vpop.f32.mrb[0].mxu0
    %3003 = vmatprep.mubr.f32.mxu0 0.0
    %3004 = vmatmul.mubr.f32.gmra.mrb[0].mxu0 %v2814
    %v3005 = vpop.f32.mrb[0].mxu0
    %v3006 = vadd.f32 0.0, %v3005
    %v3007 = vpop.f32.mrb[0].mxu0
    %3008 = vmatprep.mubr.f32.mxu0 0.0
    %3009 = vmatmul.mubr.f32.gmra.mrb[0].mxu0 %v2815
    %v3010 = vpop.f32.mrb[0].mxu0
    %v3011 = vadd.f32 0.0, %v3010
    %v3012 = vpop.f32.mrb[0].mxu0
    %3013 = vmatprep.mubr.f32.mxu0 0.0
    %3014 = vmatmul.mubr.f32.gmra.mrb[0].mxu0 %v2816
    %v3015 = vpop.f32.mrb[0].mxu0
    %v3016 = vadd.f32 0.0, %v3015
    %v3017 = vpop.f32.mrb[0].mxu0
    %3018 = vmatprep.mubr.f32.mxu0 0.0
    %3019 = vmatmul.mubr.f32.gmra.mrb[0].mxu0 %v2817
    %v3020 = vpop.f32.mrb[0].mxu0
    %v3021 = vadd.f32 0.0, %v3020
    %v3022 = vpop.f32.mrb[0].mxu0
    %3023 = vmatprep.mubr.f32.mxu0 0.0
    %3024 = vmatmul.mubr.f32.gmra.mrb[0].mxu0 %v2818
    %v3025 = vpop.f32.mrb[0].mxu0
    %v3026 = vadd.f32 0.0, %v3025
    %v3027 = vpop.f32.mrb[0].mxu0
    %3028 = vmatprep.mubr.f32.mxu0 0.0
    %3029 = vmatmul.mubr.f32.gmra.mrb[0].mxu0 %v2819
    %v3030 = vpop.f32.mrb[0].mxu0
    %v3031 = vadd.f32 0.0, %v3030
    %v3032 = vpop.f32.mrb[0].mxu0
    %3033 = vmatprep.mubr.f32.mxu0 0.0
    %3034 = vmatmul.mubr.f32.gmra.mrb[0].mxu0 %v2820
    %v3035 = vpop.f32.mrb[0].mxu0
    %v3036 = vadd.f32 0.0, %v3035
    %v3037 = vpop.f32.mrb[0].mxu0
    %3038 = vmatprep.mubr.f32.mxu0 0.0
    %3039 = vmatmul.mubr.f32.gmra.mrb[0].mxu0 %v2821
    %v3040 = vpop.f32.mrb[0].mxu0
    %v3041 = vadd.f32 0.0, %v3040
    %v3042 = vpop.f32.mrb[0].mxu0
    %3043 = vmatprep.mubr.f32.mxu0 0.0
    %3044 = vmatmul.mubr.f32.gmra.mrb[0].mxu0 %v2822
    %v3045 = vpop.f32.mrb[0].mxu0
    %v3046 = vadd.f32 0.0, %v3045
    %v3047 = vpop.f32.mrb[0].mxu0
    %3048 = vmatprep.mubr.f32.mxu0 0.0
    %3049 = vmatmul.mubr.f32.gmra.mrb[0].mxu0 %v2823
    %v3050 = vpop.f32.mrb[0].mxu0
    %v3051 = vadd.f32 0.0, %v3050
    %v3052 = vpop.f32.mrb[0].mxu0
    %3053 = vmatprep.mubr.f32.mxu0 0.0
    %3054 = vmatmul.mubr.f32.gmra.mrb[0].mxu0 %v2824
    %v3055 = vpop.f32.mrb[0].mxu0
    %v3056 = vadd.f32 0.0, %v3055
    %v3057 = vpop.f32.mrb[0].mxu0
    %3058 = vmatprep.mubr.f32.mxu0 0.0
    %3059 = vmatmul.mubr.f32.gmra.mrb[0].mxu0 %v2825
    %v3060 = vpop.f32.mrb[0].mxu0
    %v3061 = vadd.f32 0.0, %v3060
    %v3062 = vpop.f32.mrb[0].mxu0
    %3063 = vmatprep.mubr.f32.mxu0 0.0
    %3064 = vmatmul.mubr.f32.gmra.mrb[0].mxu0 %v2826
    %v3065 = vpop.f32.mrb[0].mxu0
    %v3066 = vadd.f32 0.0, %v3065
    %v3067 = vpop.f32.mrb[0].mxu0
    %3068 = vmatprep.mubr.f32.mxu0 0.0
    %3069 = vmatmul.mubr.f32.gmra.mrb[0].mxu0 %v2827
    %v3070 = vpop.f32.mrb[0].mxu0
    %v3071 = vadd.f32 0.0, %v3070
    %v3072 = vpop.f32.mrb[0].mxu0
    %3073 = vmatprep.mubr.f32.mxu0 0.0
    %3074 = vmatmul.mubr.f32.gmra.mrb[0].mxu0 %v2828
    %v3075 = vpop.f32.mrb[0].mxu0
    %v3076 = vadd.f32 0.0, %v3075
    %v3077 = vpop.f32.mrb[0].mxu0
    %3078 = vmatprep.mubr.f32.mxu0 0.0
    %3079 = vmatmul.mubr.f32.gmra.mrb[0].mxu0 %v2829
    %v3080 = vpop.f32.mrb[0].mxu0
    %v3081 = vadd.f32 0.0, %v3080
    %v3082 = vpop.f32.mrb[0].mxu0
    %3083 = vmatprep.mubr.f32.mxu0 0.0
    %3084 = vmatmul.mubr.f32.gmra.mrb[0].mxu0 %v2830
    %v3085 = vpop.f32.mrb[0].mxu0
    %v3086 = vadd.f32 0.0, %v3085
    %v3087 = vpop.f32.mrb[0].mxu0
    %3088 = vmatprep.mubr.f32.mxu0 0.0
    %3089 = vmatmul.mubr.f32.gmra.mrb[0].mxu0 %v2831
    %v3090 = vpop.f32.mrb[0].mxu0
    %v3091 = vadd.f32 0.0, %v3090
    %v3092 = vpop.f32.mrb[0].mxu0
    %3093 = vmatprep.mubr.f32.mxu0 0.0
    %3094 = vmatmul.mubr.f32.gmra.mrb[0].mxu0 %v2832
    %v3095 = vpop.f32.mrb[0].mxu0
    %v3096 = vadd.f32 0.0, %v3095
    %v3097 = vpop.f32.mrb[0].mxu0
    %3098 = vmatprep.mubr.f32.mxu0 0.0
    %3099 = vmatmul.mubr.f32.gmra.mrb[0].mxu0 %v2833
    %v3100 = vpop.f32.mrb[0].mxu0
    %v3101 = vadd.f32 0.0, %v3100
    %v3102 = vpop.f32.mrb[0].mxu0
    %3103 = vmatprep.mubr.f32.mxu0 0.0
    %3104 = vmatmul.mubr.f32.gmra.mrb[0].mxu0 %v2834
    %v3105 = vpop.f32.mrb[0].mxu0
    %v3106 = vadd.f32 0.0, %v3105
    %v3107 = vpop.f32.mrb[0].mxu0
    %3108 = vmatprep.mubr.f32.mxu0 0.0
    %3109 = vmatmul.mubr.f32.gmra.mrb[0].mxu0 %v2835
    %v3110 = vpop.f32.mrb[0].mxu0
    %v3111 = vadd.f32 0.0, %v3110
    %v3112 = vpop.f32.mrb[0].mxu0
    %3113 = vmatprep.mubr.f32.mxu0 0.0
    %3114 = vmatmul.mubr.f32.gmra.mrb[0].mxu0 %v2836
    %v3115 = vpop.f32.mrb[0].mxu0
    %v3116 = vadd.f32 0.0, %v3115
    %v3117 = vpop.f32.mrb[0].mxu0
    %3118 = vmatprep.mubr.f32.mxu0 0.0
    %3119 = vmatmul.mubr.f32.gmra.mrb[0].mxu0 %v2837
    %v3120 = vpop.f32.mrb[0].mxu0
    %v3121 = vadd.f32 0.0, %v3120
    %v3122 = vpop.f32.mrb[0].mxu0
    %3123 = vmatprep.mubr.f32.mxu0 0.0
    %3124 = vmatmul.mubr.f32.gmra.mrb[0].mxu0 %v2838
    %v3125 = vpop.f32.mrb[0].mxu0
    %v3126 = vadd.f32 0.0, %v3125
    %v3127 = vpop.f32.mrb[0].mxu0
    %3128 = vmatprep.mubr.f32.mxu0 0.0
    %3129 = vmatmul.mubr.f32.gmra.mrb[0].mxu0 %v2839
    %v3130 = vpop.f32.mrb[0].mxu0
    %v3131 = vadd.f32 0.0, %v3130
    %v3132 = vpop.f32.mrb[0].mxu0
    %3133 = vmatprep.mubr.f32.mxu0 0.0
    %3134 = vmatmul.mubr.f32.gmra.mrb[0].mxu0 %v2840
    %v3135 = vpop.f32.mrb[0].mxu0
    %v3136 = vadd.f32 0.0, %v3135
    %v3137 = vpop.f32.mrb[0].mxu0
    %3138 = vmatprep.mubr.f32.mxu0 0.0
    %3139 = vmatmul.mubr.f32.gmra.mrb[0].mxu0 %v2841
    %v3140 = vpop.f32.mrb[0].mxu0
    %v3141 = vadd.f32 0.0, %v3140
    %v3142 = vpop.f32.mrb[0].mxu0
    %3143 = vmatprep.mubr.f32.mxu0 0.0
    %3144 = vmatmul.mubr.f32.gmra.mrb[0].mxu0 %v2842
    %v3145 = vpop.f32.mrb[0].mxu0
    %v3146 = vadd.f32 0.0, %v3145
    %v3147 = vpop.f32.mrb[0].mxu0
    %3148 = vmatprep.mubr.f32.mxu0 0.0
    %3149 = vmatmul.mubr.f32.gmra.mrb[0].mxu0 %v2843
    %v3150 = vpop.f32.mrb[0].mxu0
    %v3151 = vadd.f32 0.0, %v3150
    %v3152 = vpop.f32.mrb[0].mxu0
    %3153 = vmatprep.mubr.f32.mxu0 0.0
    %3154 = vmatmul.mubr.f32.gmra.mrb[0].mxu0 %v2844
    %v3155 = vpop.f32.mrb[0].mxu0
    %v3156 = vadd.f32 0.0, %v3155
    %v3157 = vpop.f32.mrb[0].mxu0
    %3158 = vmatprep.mubr.f32.mxu0 0.0
    %3159 = vmatmul.mubr.f32.gmra.mrb[0].mxu0 %v2845
    %v3160 = vpop.f32.mrb[0].mxu0
    %v3161 = vadd.f32 0.0, %v3160
    %v3162 = vpop.f32.mrb[0].mxu0
    %3163 = vmatprep.mubr.f32.mxu0 0.0
    %3164 = vmatmul.mubr.f32.gmra.mrb[0].mxu0 %v2846
    %v3165 = vpop.f32.mrb[0].mxu0
    %v3166 = vadd.f32 0.0, %v3165
    %v3167 = vpop.f32.mrb[0].mxu0
    %3168 = vmatprep.mubr.f32.mxu0 0.0
    %3169 = vmatmul.mubr.f32.gmra.mrb[0].mxu0 %v2847
    %v3170 = vpop.f32.mrb[0].mxu0
    %v3171 = vadd.f32 0.0, %v3170
    %v3172 = vpop.f32.mrb[0].mxu0
    %3173 = vmatprep.mubr.f32.mxu0 0.0
    %3174 = vmatmul.mubr.f32.gmra.mrb[0].mxu0 %v2848
    %v3175 = vpop.f32.mrb[0].mxu0
    %v3176 = vadd.f32 0.0, %v3175
    %v3177 = vpop.f32.mrb[0].mxu0
    %3178 = vmatprep.mubr.f32.mxu0 0.0
    %3179 = vmatmul.mubr.f32.gmra.mrb[0].mxu0 %v2849
    %v3180 = vpop.f32.mrb[0].mxu0
    %v3181 = vadd.f32 0.0, %v3180
    %v3182 = vpop.f32.mrb[0].mxu0
    %3183 = vmatprep.mubr.f32.mxu0 0.0
    %3184 = vmatmul.mubr.f32.gmra.mrb[0].mxu0 %v2850
    %v3185 = vpop.f32.mrb[0].mxu0
    %v3186 = vadd.f32 0.0, %v3185
    %v3187 = vpop.f32.mrb[0].mxu0
    %3188 = vmatprep.mubr.f32.mxu0 0.0
    %3189 = vmatmul.mubr.f32.gmra.mrb[0].mxu0 %v2851
    %v3190 = vpop.f32.mrb[0].mxu0
    %v3191 = vadd.f32 0.0, %v3190
    %v3192 = vpop.f32.mrb[0].mxu0
    %3193 = vmatprep.mubr.f32.mxu0 0.0
    %3194 = vmatmul.mubr.f32.gmra.mrb[0].mxu0 %v2852
    %v3195 = vpop.f32.mrb[0].mxu0
    %v3196 = vadd.f32 0.0, %v3195
    %v3197 = vpop.f32.mrb[0].mxu0
    %3198 = vmatprep.mubr.f32.mxu0 0.0
    %3199 = vmatmul.mubr.f32.gmra.mrb[0].mxu0 %v2853
    %v3200 = vpop.f32.mrb[0].mxu0
    %v3201 = vadd.f32 0.0, %v3200
    %v3202 = vpop.f32.mrb[0].mxu0
    %3203 = vmatprep.mubr.f32.mxu0 0.0
    %3204 = vmatmul.mubr.f32.gmra.mrb[0].mxu0 %v2854
    %v3205 = vpop.f32.mrb[0].mxu0
    %v3206 = vadd.f32 0.0, %v3205
    %v3207 = vpop.f32.mrb[0].mxu0
    %3208 = vmatprep.mubr.f32.mxu0 0.0
    %3209 = vmatmul.mubr.f32.gmra.mrb[0].mxu0 %v2855
    %v3210 = vpop.f32.mrb[0].mxu0
    %v3211 = vadd.f32 0.0, %v3210
    %v3212 = vpop.f32.mrb[0].mxu0
    %3213 = vmatprep.mubr.f32.mxu0 0.0
    %3214 = vmatmul.mubr.f32.gmra.mrb[0].mxu0 %v2856
    %v3215 = vpop.f32.mrb[0].mxu0
    %v3216 = vadd.f32 0.0, %v3215
    %v3217 = vpop.f32.mrb[0].mxu0
    %3218 = vmatprep.mubr.f32.mxu0 0.0
    %3219 = vmatmul.mubr.f32.gmra.mrb[0].mxu0 %v2857
    %v3220 = vpop.f32.mrb[0].mxu0
    %v3221 = vadd.f32 0.0, %v3220
    %v3222 = vpop.f32.mrb[0].mxu0
    %3223 = vmatprep.mubr.f32.mxu0 0.0
    %3224 = vmatmul.mubr.f32.gmra.mrb[0].mxu0 %v2858
    %v3225 = vpop.f32.mrb[0].mxu0
    %v3226 = vadd.f32 0.0, %v3225
    %v3227 = vpop.f32.mrb[0].mxu0
    %3228 = vmatprep.mubr.f32.mxu0 0.0
    %3229 = vmatmul.mubr.f32.gmra.mrb[0].mxu0 %v2859
    %v3230 = vpop.f32.mrb[0].mxu0
    %v3231 = vadd.f32 0.0, %v3230
    %v3232 = vpop.f32.mrb[0].mxu0
    %3233 = vmatprep.mubr.f32.mxu0 0.0
    %3234 = vmatmul.mubr.f32.gmra.mrb[0].mxu0 %v2860
    %v3235 = vpop.f32.mrb[0].mxu0
    %v3236 = vadd.f32 0.0, %v3235
    %v3237 = vpop.f32.mrb[0].mxu0
    %3238 = vmatprep.mubr.f32.mxu0 0.0
    %3239 = vmatmul.mubr.f32.gmra.mrb[0].mxu0 %v2861
    %v3240 = vpop.f32.mrb[0].mxu0
    %v3241 = vadd.f32 0.0, %v3240
    %v3242 = vpop.f32.mrb[0].mxu0
    %3243 = vmatprep.mubr.f32.mxu0 0.0
    %3244 = vmatmul.mubr.f32.gmra.mrb[0].mxu0 %v2862
    %v3245 = vpop.f32.mrb[0].mxu0
    %v3246 = vadd.f32 0.0, %v3245
    %v3247 = vpop.f32.mrb[0].mxu0
    %3248 = vmatprep.mubr.f32.mxu0 0.0
    %3249 = vmatmul.mubr.f32.gmra.mrb[0].mxu0 %v2863
    %v3250 = vpop.f32.mrb[0].mxu0
    %v3251 = vadd.f32 0.0, %v3250
    %v3252 = vpop.f32.mrb[0].mxu0
    %3253 = vmatprep.mubr.f32.mxu0 0.0
    %3254 = vmatmul.mubr.f32.gmra.mrb[0].mxu0 %v2864
    %v3255 = vpop.f32.mrb[0].mxu0
    %v3256 = vadd.f32 0.0, %v3255
    %v3257 = vpop.f32.mrb[0].mxu0
    %3258 = vmatprep.mubr.f32.mxu0 0.0
    %3259 = vmatmul.mubr.f32.gmra.mrb[0].mxu0 %v2865
    %v3260 = vpop.f32.mrb[0].mxu0
    %v3261 = vadd.f32 0.0, %v3260
    %v3262 = vpop.f32.mrb[0].mxu0
    %3263 = vmatprep.mubr.f32.mxu0 0.0
    %3264 = vmatmul.mubr.f32.gmra.mrb[0].mxu0 %v2866
    %v3265 = vpop.f32.mrb[0].mxu0
    %v3266 = vadd.f32 0.0, %v3265
    %v3267 = vpop.f32.mrb[0].mxu0
    %3268 = vdwg.mxu0
    %v3269 = vadd.f32 %v2739, %v2951
    %v3270 = vadd.f32 %v2740, %v2956
    %v3271 = vadd.f32 %v2741, %v2961
    %v3272 = vadd.f32 %v2742, %v2966
    %v3273 = vadd.f32 %v2743, %v2971
    %v3274 = vadd.f32 %v2744, %v2976
    %v3275 = vadd.f32 %v2745, %v2981
    %v3276 = vadd.f32 %v2746, %v2986
    %v3277 = vadd.f32 %v2747, %v2991
    %v3278 = vadd.f32 %v2748, %v2996
    %v3279 = vadd.f32 %v2749, %v3001
    %v3280 = vadd.f32 %v2750, %v3006
    %v3281 = vadd.f32 %v2751, %v3011
    %v3282 = vadd.f32 %v2752, %v3016
    %v3283 = vadd.f32 %v2753, %v3021
    %v3284 = vadd.f32 %v2754, %v3026
    %v3285 = vadd.f32 %v2755, %v3031
    %v3286 = vadd.f32 %v2756, %v3036
    %v3287 = vadd.f32 %v2757, %v3041
    %v3288 = vadd.f32 %v2758, %v3046
    %v3289 = vadd.f32 %v2759, %v3051
    %v3290 = vadd.f32 %v2760, %v3056
    %v3291 = vadd.f32 %v2761, %v3061
    %v3292 = vadd.f32 %v2762, %v3066
    %v3293 = vadd.f32 %v2763, %v3071
    %v3294 = vadd.f32 %v2764, %v3076
    %v3295 = vadd.f32 %v2765, %v3081
    %v3296 = vadd.f32 %v2766, %v3086
    %v3297 = vadd.f32 %v2767, %v3091
    %v3298 = vadd.f32 %v2768, %v3096
    %v3299 = vadd.f32 %v2769, %v3101
    %v3300 = vadd.f32 %v2770, %v3106
    %v3301 = vadd.f32 %v2771, %v3111
    %v3302 = vadd.f32 %v2772, %v3116
    %v3303 = vadd.f32 %v2773, %v3121
    %v3304 = vadd.f32 %v2774, %v3126
    %v3305 = vadd.f32 %v2775, %v3131
    %v3306 = vadd.f32 %v2776, %v3136
    %v3307 = vadd.f32 %v2777, %v3141
    %v3308 = vadd.f32 %v2778, %v3146
    %v3309 = vadd.f32 %v2779, %v3151
    %v3310 = vadd.f32 %v2780, %v3156
    %v3311 = vadd.f32 %v2781, %v3161
    %v3312 = vadd.f32 %v2782, %v3166
    %v3313 = vadd.f32 %v2783, %v3171
    %v3314 = vadd.f32 %v2784, %v3176
    %v3315 = vadd.f32 %v2785, %v3181
    %v3316 = vadd.f32 %v2786, %v3186
    %v3317 = vadd.f32 %v2787, %v3191
    %v3318 = vadd.f32 %v2788, %v3196
    %v3319 = vadd.f32 %v2789, %v3201
    %v3320 = vadd.f32 %v2790, %v3206
    %v3321 = vadd.f32 %v2791, %v3211
    %v3322 = vadd.f32 %v2792, %v3216
    %v3323 = vadd.f32 %v2793, %v3221
    %v3324 = vadd.f32 %v2794, %v3226
    %v3325 = vadd.f32 %v2795, %v3231
    %v3326 = vadd.f32 %v2796, %v3236
    %v3327 = vadd.f32 %v2797, %v3241
    %v3328 = vadd.f32 %v2798, %v3246
    %v3329 = vadd.f32 %v2799, %v3251
    %v3330 = vadd.f32 %v2800, %v3256
    %v3331 = vadd.f32 %v2801, %v3261
    %v3332 = vadd.f32 %v2802, %v3266
    %s3333 = scalar_lea.vmem [#allocation2], 48
    %v3334 = vld [vmem:[%s3333] sm:$0xff]
    %v3335 = vld [vmem:[%s3333 + $0x8] sm:$0xff]
    %v3336 = vld [vmem:[%s3333 + $0x18] sm:$0xff]
    %v3337 = vld [vmem:[%s3333 + $0x20] sm:$0xff]
    %v3338 = vld [vmem:[%s3333 + $0x30] sm:$0xff]
    %v3339 = vld [vmem:[%s3333 + $0x38] sm:$0xff]
    %v3340 = vld [vmem:[%s3333 + $0x48] sm:$0xff]
    %v3341 = vld [vmem:[%s3333 + $0x50] sm:$0xff]
    %v3342 = vld [vmem:[%s3333 + $0x60] sm:$0xff]
    %v3343 = vld [vmem:[%s3333 + $0x68] sm:$0xff]
    %v3344 = vld [vmem:[%s3333 + $0x78] sm:$0xff]
    %v3345 = vld [vmem:[%s3333 + $0x80] sm:$0xff]
    %v3346 = vld [vmem:[%s3333 + $0x90] sm:$0xff]
    %v3347 = vld [vmem:[%s3333 + $0x98] sm:$0xff]
    %v3348 = vld [vmem:[%s3333 + $0xa8] sm:$0xff]
    %v3349 = vld [vmem:[%s3333 + $0xb0] sm:$0xff]
    %v3350 = vld [vmem:[%s3333 + $0xc0] sm:$0xff]
    %v3351 = vld [vmem:[%s3333 + $0xc8] sm:$0xff]
    %v3352 = vld [vmem:[%s3333 + $0xd8] sm:$0xff]
    %v3353 = vld [vmem:[%s3333 + $0xe0] sm:$0xff]
    %v3354 = vld [vmem:[%s3333 + $0xf0] sm:$0xff]
    %v3355 = vld [vmem:[%s3333 + $0xf8] sm:$0xff]
    %v3356 = vld [vmem:[%s3333 + $0x108] sm:$0xff]
    %v3357 = vld [vmem:[%s3333 + $0x110] sm:$0xff]
    %v3358 = vld [vmem:[%s3333 + $0x120] sm:$0xff]
    %v3359 = vld [vmem:[%s3333 + $0x128] sm:$0xff]
    %v3360 = vld [vmem:[%s3333 + $0x138] sm:$0xff]
    %v3361 = vld [vmem:[%s3333 + $0x140] sm:$0xff]
    %v3362 = vld [vmem:[%s3333 + $0x150] sm:$0xff]
    %v3363 = vld [vmem:[%s3333 + $0x158] sm:$0xff]
    %v3364 = vld [vmem:[%s3333 + $0x168] sm:$0xff]
    %v3365 = vld [vmem:[%s3333 + $0x170] sm:$0xff]
    %v3366 = vld [vmem:[%s3333 + $0x1b0] sm:$0xff]
    %v3367 = vld [vmem:[%s3333 + $0x1b8] sm:$0xff]
    %v3368 = vld [vmem:[%s3333 + $0x1c8] sm:$0xff]
    %v3369 = vld [vmem:[%s3333 + $0x1d0] sm:$0xff]
    %v3370 = vld [vmem:[%s3333 + $0x1e0] sm:$0xff]
    %v3371 = vld [vmem:[%s3333 + $0x1e8] sm:$0xff]
    %v3372 = vld [vmem:[%s3333 + $0x1f8] sm:$0xff]
    %v3373 = vld [vmem:[%s3333 + $0x200] sm:$0xff]
    %v3374 = vld [vmem:[%s3333 + $0x210] sm:$0xff]
    %v3375 = vld [vmem:[%s3333 + $0x218] sm:$0xff]
    %v3376 = vld [vmem:[%s3333 + $0x228] sm:$0xff]
    %v3377 = vld [vmem:[%s3333 + $0x230] sm:$0xff]
    %v3378 = vld [vmem:[%s3333 + $0x240] sm:$0xff]
    %v3379 = vld [vmem:[%s3333 + $0x248] sm:$0xff]
    %v3380 = vld [vmem:[%s3333 + $0x258] sm:$0xff]
    %v3381 = vld [vmem:[%s3333 + $0x260] sm:$0xff]
    %v3382 = vld [vmem:[%s3333 + $0x270] sm:$0xff]
    %v3383 = vld [vmem:[%s3333 + $0x278] sm:$0xff]
    %v3384 = vld [vmem:[%s3333 + $0x288] sm:$0xff]
    %v3385 = vld [vmem:[%s3333 + $0x290] sm:$0xff]
    %v3386 = vld [vmem:[%s3333 + $0x2a0] sm:$0xff]
    %v3387 = vld [vmem:[%s3333 + $0x2a8] sm:$0xff]
    %v3388 = vld [vmem:[%s3333 + $0x2b8] sm:$0xff]
    %v3389 = vld [vmem:[%s3333 + $0x2c0] sm:$0xff]
    %v3390 = vld [vmem:[%s3333 + $0x2d0] sm:$0xff]
    %v3391 = vld [vmem:[%s3333 + $0x2d8] sm:$0xff]
    %v3392 = vld [vmem:[%s3333 + $0x2e8] sm:$0xff]
    %v3393 = vld [vmem:[%s3333 + $0x2f0] sm:$0xff]
    %v3394 = vld [vmem:[%s3333 + $0x300] sm:$0xff]
    %v3395 = vld [vmem:[%s3333 + $0x308] sm:$0xff]
    %v3396 = vld [vmem:[%s3333 + $0x318] sm:$0xff]
    %v3397 = vld [vmem:[%s3333 + $0x320] sm:$0xff]
    %s3398 = scalar_lea.vmem [#allocation6], 768
    %v3399 = vld [vmem:[%s3398] sm:$0xff]
    %v3400 = vld [vmem:[%s3398 + $0x8] sm:$0xff]
    %v3401 = vld [vmem:[%s3398 + $0x10] sm:$0xff]
    %v3402 = vld [vmem:[%s3398 + $0x18] sm:$0xff]
    %v3403 = vld [vmem:[%s3398 + $0x20] sm:$0xff]
    %v3404 = vld [vmem:[%s3398 + $0x28] sm:$0xff]
    %v3405 = vld [vmem:[%s3398 + $0x30] sm:$0xff]
    %v3406 = vld [vmem:[%s3398 + $0x38] sm:$0xff]
    %v3407 = vld [vmem:[%s3398 + $0x40] sm:$0xff]
    %v3408 = vld [vmem:[%s3398 + $0x48] sm:$0xff]
    %v3409 = vld [vmem:[%s3398 + $0x50] sm:$0xff]
    %v3410 = vld [vmem:[%s3398 + $0x58] sm:$0xff]
    %v3411 = vld [vmem:[%s3398 + $0x60] sm:$0xff]
    %v3412 = vld [vmem:[%s3398 + $0x68] sm:$0xff]
    %v3413 = vld [vmem:[%s3398 + $0x70] sm:$0xff]
    %v3414 = vld [vmem:[%s3398 + $0x78] sm:$0xff]
    %3415 = vmatprep.subr.mxu0 0.0
    %3416 = vmatpush1.msra.mxu0 %v3399
    %3417 = vmatprep.subr.mxu0 0.0
    %3418 = vmatpush1.msra.mxu0 %v3400
    %3419 = vmatprep.subr.mxu0 0.0
    %3420 = vmatpush1.msra.mxu0 %v3401
    %3421 = vmatprep.subr.mxu0 0.0
    %3422 = vmatpush1.msra.mxu0 %v3402
    %3423 = vmatprep.subr.mxu0 0.0
    %3424 = vmatpush1.msra.mxu0 %v3403
    %3425 = vmatprep.subr.mxu0 0.0
    %3426 = vmatpush1.msra.mxu0 %v3404
    %3427 = vmatprep.subr.mxu0 0.0
    %3428 = vmatpush1.msra.mxu0 %v3405
    %3429 = vmatprep.subr.mxu0 0.0
    %3430 = vmatpush1.msra.mxu0 %v3406
    %3431 = vmatprep.subr.mxu0 0.0
    %3432 = vmatpush1.msra.mxu0 %v3407
    %3433 = vmatprep.subr.mxu0 0.0
    %3434 = vmatpush1.msra.mxu0 %v3408
    %3435 = vmatprep.subr.mxu0 0.0
    %3436 = vmatpush1.msra.mxu0 %v3409
    %3437 = vmatprep.subr.mxu0 0.0
    %3438 = vmatpush1.msra.mxu0 %v3410
    %3439 = vmatprep.subr.mxu0 0.0
    %3440 = vmatpush1.msra.mxu0 %v3411
    %3441 = vmatprep.subr.mxu0 0.0
    %3442 = vmatpush1.msra.mxu0 %v3412
    %3443 = vmatprep.subr.mxu0 0.0
    %3444 = vmatpush1.msra.mxu0 %v3413
    %3445 = vmatprep.subr.mxu0 0.0
    %3446 = vmatpush1.msra.mxu0 %v3414
    %3447 = vmatprep.subr.mxu0 0.0
    %3448 = vmatpush1.msra.mxu0 0.0
    %3449 = vmatprep.subr.mxu0 0.0
    %3450 = vmatpush1.msra.mxu0 0.0
    %3451 = vmatprep.subr.mxu0 0.0
    %3452 = vmatpush1.msra.mxu0 0.0
    %3453 = vmatprep.subr.mxu0 0.0
    %3454 = vmatpush1.msra.mxu0 0.0
    %3455 = vmatprep.subr.mxu0 0.0
    %3456 = vmatpush1.msra.mxu0 0.0
    %3457 = vmatprep.subr.mxu0 0.0
    %3458 = vmatpush1.msra.mxu0 0.0
    %3459 = vmatprep.subr.mxu0 0.0
    %3460 = vmatpush1.msra.mxu0 0.0
    %3461 = vmatprep.subr.mxu0 0.0
    %3462 = vmatpush1.msra.mxu0 0.0
    %3463 = vmatprep.subr.mxu0 0.0
    %3464 = vmatpush1.msra.mxu0 0.0
    %3465 = vmatprep.subr.mxu0 0.0
    %3466 = vmatpush1.msra.mxu0 0.0
    %3467 = vmatprep.subr.mxu0 0.0
    %3468 = vmatpush1.msra.mxu0 0.0
    %3469 = vmatprep.subr.mxu0 0.0
    %3470 = vmatpush1.msra.mxu0 0.0
    %3471 = vmatprep.subr.mxu0 0.0
    %3472 = vmatpush1.msra.mxu0 0.0
    %3473 = vmatprep.subr.mxu0 0.0
    %3474 = vmatpush1.msra.mxu0 0.0
    %3475 = vmatprep.subr.mxu0 0.0
    %3476 = vmatpush1.msra.mxu0 0.0
    %3477 = vmatprep.subr.mxu0 0.0
    %3478 = vmatpush1.msra.mxu0 0.0
    %3479 = vmatprep.mubr.f32.mxu0 0.0
    %3480 = vmatmul.mubr.f32.gmra.mrb[0].mxu0 %v3334
    %v3481 = vpop.f32.mrb[0].mxu0
    %v3482 = vadd.f32 0.0, %v3481
    %v3483 = vpop.f32.mrb[0].mxu0
    %3484 = vmatprep.mubr.f32.mxu0 0.0
    %3485 = vmatmul.mubr.f32.gmra.mrb[0].mxu0 %v3335
    %v3486 = vpop.f32.mrb[0].mxu0
    %v3487 = vadd.f32 0.0, %v3486
    %v3488 = vpop.f32.mrb[0].mxu0
    %3489 = vmatprep.mubr.f32.mxu0 0.0
    %3490 = vmatmul.mubr.f32.gmra.mrb[0].mxu0 %v3336
    %v3491 = vpop.f32.mrb[0].mxu0
    %v3492 = vadd.f32 0.0, %v3491
    %v3493 = vpop.f32.mrb[0].mxu0
    %3494 = vmatprep.mubr.f32.mxu0 0.0
    %3495 = vmatmul.mubr.f32.gmra.mrb[0].mxu0 %v3337
    %v3496 = vpop.f32.mrb[0].mxu0
    %v3497 = vadd.f32 0.0, %v3496
    %v3498 = vpop.f32.mrb[0].mxu0
    %3499 = vmatprep.mubr.f32.mxu0 0.0
    %3500 = vmatmul.mubr.f32.gmra.mrb[0].mxu0 %v3338
    %v3501 = vpop.f32.mrb[0].mxu0
    %v3502 = vadd.f32 0.0, %v3501
    %v3503 = vpop.f32.mrb[0].mxu0
    %3504 = vmatprep.mubr.f32.mxu0 0.0
    %3505 = vmatmul.mubr.f32.gmra.mrb[0].mxu0 %v3339
    %v3506 = vpop.f32.mrb[0].mxu0
    %v3507 = vadd.f32 0.0, %v3506
    %v3508 = vpop.f32.mrb[0].mxu0
    %3509 = vmatprep.mubr.f32.mxu0 0.0
    %3510 = vmatmul.mubr.f32.gmra.mrb[0].mxu0 %v3340
    %v3511 = vpop.f32.mrb[0].mxu0
    %v3512 = vadd.f32 0.0, %v3511
    %v3513 = vpop.f32.mrb[0].mxu0
    %3514 = vmatprep.mubr.f32.mxu0 0.0
    %3515 = vmatmul.mubr.f32.gmra.mrb[0].mxu0 %v3341
    %v3516 = vpop.f32.mrb[0].mxu0
    %v3517 = vadd.f32 0.0, %v3516
    %v3518 = vpop.f32.mrb[0].mxu0
    %3519 = vmatprep.mubr.f32.mxu0 0.0
    %3520 = vmatmul.mubr.f32.gmra.mrb[0].mxu0 %v3342
    %v3521 = vpop.f32.mrb[0].mxu0
    %v3522 = vadd.f32 0.0, %v3521
    %v3523 = vpop.f32.mrb[0].mxu0
    %3524 = vmatprep.mubr.f32.mxu0 0.0
    %3525 = vmatmul.mubr.f32.gmra.mrb[0].mxu0 %v3343
    %v3526 = vpop.f32.mrb[0].mxu0
    %v3527 = vadd.f32 0.0, %v3526
    %v3528 = vpop.f32.mrb[0].mxu0
    %3529 = vmatprep.mubr.f32.mxu0 0.0
    %3530 = vmatmul.mubr.f32.gmra.mrb[0].mxu0 %v3344
    %v3531 = vpop.f32.mrb[0].mxu0
    %v3532 = vadd.f32 0.0, %v3531
    %v3533 = vpop.f32.mrb[0].mxu0
    %3534 = vmatprep.mubr.f32.mxu0 0.0
    %3535 = vmatmul.mubr.f32.gmra.mrb[0].mxu0 %v3345
    %v3536 = vpop.f32.mrb[0].mxu0
    %v3537 = vadd.f32 0.0, %v3536
    %v3538 = vpop.f32.mrb[0].mxu0
    %3539 = vmatprep.mubr.f32.mxu0 0.0
    %3540 = vmatmul.mubr.f32.gmra.mrb[0].mxu0 %v3346
    %v3541 = vpop.f32.mrb[0].mxu0
    %v3542 = vadd.f32 0.0, %v3541
    %v3543 = vpop.f32.mrb[0].mxu0
    %3544 = vmatprep.mubr.f32.mxu0 0.0
    %3545 = vmatmul.mubr.f32.gmra.mrb[0].mxu0 %v3347
    %v3546 = vpop.f32.mrb[0].mxu0
    %v3547 = vadd.f32 0.0, %v3546
    %v3548 = vpop.f32.mrb[0].mxu0
    %3549 = vmatprep.mubr.f32.mxu0 0.0
    %3550 = vmatmul.mubr.f32.gmra.mrb[0].mxu0 %v3348
    %v3551 = vpop.f32.mrb[0].mxu0
    %v3552 = vadd.f32 0.0, %v3551
    %v3553 = vpop.f32.mrb[0].mxu0
    %3554 = vmatprep.mubr.f32.mxu0 0.0
    %3555 = vmatmul.mubr.f32.gmra.mrb[0].mxu0 %v3349
    %v3556 = vpop.f32.mrb[0].mxu0
    %v3557 = vadd.f32 0.0, %v3556
    %v3558 = vpop.f32.mrb[0].mxu0
    %3559 = vmatprep.mubr.f32.mxu0 0.0
    %3560 = vmatmul.mubr.f32.gmra.mrb[0].mxu0 %v3350
    %v3561 = vpop.f32.mrb[0].mxu0
    %v3562 = vadd.f32 0.0, %v3561
    %v3563 = vpop.f32.mrb[0].mxu0
    %3564 = vmatprep.mubr.f32.mxu0 0.0
    %3565 = vmatmul.mubr.f32.gmra.mrb[0].mxu0 %v3351
    %v3566 = vpop.f32.mrb[0].mxu0
    %v3567 = vadd.f32 0.0, %v3566
    %v3568 = vpop.f32.mrb[0].mxu0
    %3569 = vmatprep.mubr.f32.mxu0 0.0
    %3570 = vmatmul.mubr.f32.gmra.mrb[0].mxu0 %v3352
    %v3571 = vpop.f32.mrb[0].mxu0
    %v3572 = vadd.f32 0.0, %v3571
    %v3573 = vpop.f32.mrb[0].mxu0
    %3574 = vmatprep.mubr.f32.mxu0 0.0
    %3575 = vmatmul.mubr.f32.gmra.mrb[0].mxu0 %v3353
    %v3576 = vpop.f32.mrb[0].mxu0
    %v3577 = vadd.f32 0.0, %v3576
    %v3578 = vpop.f32.mrb[0].mxu0
    %3579 = vmatprep.mubr.f32.mxu0 0.0
    %3580 = vmatmul.mubr.f32.gmra.mrb[0].mxu0 %v3354
    %v3581 = vpop.f32.mrb[0].mxu0
    %v3582 = vadd.f32 0.0, %v3581
    %v3583 = vpop.f32.mrb[0].mxu0
    %3584 = vmatprep.mubr.f32.mxu0 0.0
    %3585 = vmatmul.mubr.f32.gmra.mrb[0].mxu0 %v3355
    %v3586 = vpop.f32.mrb[0].mxu0
    %v3587 = vadd.f32 0.0, %v3586
    %v3588 = vpop.f32.mrb[0].mxu0
    %3589 = vmatprep.mubr.f32.mxu0 0.0
    %3590 = vmatmul.mubr.f32.gmra.mrb[0].mxu0 %v3356
    %v3591 = vpop.f32.mrb[0].mxu0
    %v3592 = vadd.f32 0.0, %v3591
    %v3593 = vpop.f32.mrb[0].mxu0
    %3594 = vmatprep.mubr.f32.mxu0 0.0
    %3595 = vmatmul.mubr.f32.gmra.mrb[0].mxu0 %v3357
    %v3596 = vpop.f32.mrb[0].mxu0
    %v3597 = vadd.f32 0.0, %v3596
    %v3598 = vpop.f32.mrb[0].mxu0
    %3599 = vmatprep.mubr.f32.mxu0 0.0
    %3600 = vmatmul.mubr.f32.gmra.mrb[0].mxu0 %v3358
    %v3601 = vpop.f32.mrb[0].mxu0
    %v3602 = vadd.f32 0.0, %v3601
    %v3603 = vpop.f32.mrb[0].mxu0
    %3604 = vmatprep.mubr.f32.mxu0 0.0
    %3605 = vmatmul.mubr.f32.gmra.mrb[0].mxu0 %v3359
    %v3606 = vpop.f32.mrb[0].mxu0
    %v3607 = vadd.f32 0.0, %v3606
    %v3608 = vpop.f32.mrb[0].mxu0
    %3609 = vmatprep.mubr.f32.mxu0 0.0
    %3610 = vmatmul.mubr.f32.gmra.mrb[0].mxu0 %v3360
    %v3611 = vpop.f32.mrb[0].mxu0
    %v3612 = vadd.f32 0.0, %v3611
    %v3613 = vpop.f32.mrb[0].mxu0
    %3614 = vmatprep.mubr.f32.mxu0 0.0
    %3615 = vmatmul.mubr.f32.gmra.mrb[0].mxu0 %v3361
    %v3616 = vpop.f32.mrb[0].mxu0
    %v3617 = vadd.f32 0.0, %v3616
    %v3618 = vpop.f32.mrb[0].mxu0
    %3619 = vmatprep.mubr.f32.mxu0 0.0
    %3620 = vmatmul.mubr.f32.gmra.mrb[0].mxu0 %v3362
    %v3621 = vpop.f32.mrb[0].mxu0
    %v3622 = vadd.f32 0.0, %v3621
    %v3623 = vpop.f32.mrb[0].mxu0
    %3624 = vmatprep.mubr.f32.mxu0 0.0
    %3625 = vmatmul.mubr.f32.gmra.mrb[0].mxu0 %v3363
    %v3626 = vpop.f32.mrb[0].mxu0
    %v3627 = vadd.f32 0.0, %v3626
    %v3628 = vpop.f32.mrb[0].mxu0
    %3629 = vmatprep.mubr.f32.mxu0 0.0
    %3630 = vmatmul.mubr.f32.gmra.mrb[0].mxu0 %v3364
    %v3631 = vpop.f32.mrb[0].mxu0
    %v3632 = vadd.f32 0.0, %v3631
    %v3633 = vpop.f32.mrb[0].mxu0
    %3634 = vmatprep.mubr.f32.mxu0 0.0
    %3635 = vmatmul.mubr.f32.gmra.mrb[0].mxu0 %v3365
    %v3636 = vpop.f32.mrb[0].mxu0
    %v3637 = vadd.f32 0.0, %v3636
    %v3638 = vpop.f32.mrb[0].mxu0
    %3639 = vmatprep.mubr.f32.mxu0 0.0
    %3640 = vmatmul.mubr.f32.gmra.mrb[0].mxu0 %v3366
    %v3641 = vpop.f32.mrb[0].mxu0
    %v3642 = vadd.f32 0.0, %v3641
    %v3643 = vpop.f32.mrb[0].mxu0
    %3644 = vmatprep.mubr.f32.mxu0 0.0
    %3645 = vmatmul.mubr.f32.gmra.mrb[0].mxu0 %v3367
    %v3646 = vpop.f32.mrb[0].mxu0
    %v3647 = vadd.f32 0.0, %v3646
    %v3648 = vpop.f32.mrb[0].mxu0
    %3649 = vmatprep.mubr.f32.mxu0 0.0
    %3650 = vmatmul.mubr.f32.gmra.mrb[0].mxu0 %v3368
    %v3651 = vpop.f32.mrb[0].mxu0
    %v3652 = vadd.f32 0.0, %v3651
    %v3653 = vpop.f32.mrb[0].mxu0
    %3654 = vmatprep.mubr.f32.mxu0 0.0
    %3655 = vmatmul.mubr.f32.gmra.mrb[0].mxu0 %v3369
    %v3656 = vpop.f32.mrb[0].mxu0
    %v3657 = vadd.f32 0.0, %v3656
    %v3658 = vpop.f32.mrb[0].mxu0
    %3659 = vmatprep.mubr.f32.mxu0 0.0
    %3660 = vmatmul.mubr.f32.gmra.mrb[0].mxu0 %v3370
    %v3661 = vpop.f32.mrb[0].mxu0
    %v3662 = vadd.f32 0.0, %v3661
    %v3663 = vpop.f32.mrb[0].mxu0
    %3664 = vmatprep.mubr.f32.mxu0 0.0
    %3665 = vmatmul.mubr.f32.gmra.mrb[0].mxu0 %v3371
    %v3666 = vpop.f32.mrb[0].mxu0
    %v3667 = vadd.f32 0.0, %v3666
    %v3668 = vpop.f32.mrb[0].mxu0
    %3669 = vmatprep.mubr.f32.mxu0 0.0
    %3670 = vmatmul.mubr.f32.gmra.mrb[0].mxu0 %v3372
    %v3671 = vpop.f32.mrb[0].mxu0
    %v3672 = vadd.f32 0.0, %v3671
    %v3673 = vpop.f32.mrb[0].mxu0
    %3674 = vmatprep.mubr.f32.mxu0 0.0
    %3675 = vmatmul.mubr.f32.gmra.mrb[0].mxu0 %v3373
    %v3676 = vpop.f32.mrb[0].mxu0
    %v3677 = vadd.f32 0.0, %v3676
    %v3678 = vpop.f32.mrb[0].mxu0
    %3679 = vmatprep.mubr.f32.mxu0 0.0
    %3680 = vmatmul.mubr.f32.gmra.mrb[0].mxu0 %v3374
    %v3681 = vpop.f32.mrb[0].mxu0
    %v3682 = vadd.f32 0.0, %v3681
    %v3683 = vpop.f32.mrb[0].mxu0
    %3684 = vmatprep.mubr.f32.mxu0 0.0
    %3685 = vmatmul.mubr.f32.gmra.mrb[0].mxu0 %v3375
    %v3686 = vpop.f32.mrb[0].mxu0
    %v3687 = vadd.f32 0.0, %v3686
    %v3688 = vpop.f32.mrb[0].mxu0
    %3689 = vmatprep.mubr.f32.mxu0 0.0
    %3690 = vmatmul.mubr.f32.gmra.mrb[0].mxu0 %v3376
    %v3691 = vpop.f32.mrb[0].mxu0
    %v3692 = vadd.f32 0.0, %v3691
    %v3693 = vpop.f32.mrb[0].mxu0
    %3694 = vmatprep.mubr.f32.mxu0 0.0
    %3695 = vmatmul.mubr.f32.gmra.mrb[0].mxu0 %v3377
    %v3696 = vpop.f32.mrb[0].mxu0
    %v3697 = vadd.f32 0.0, %v3696
    %v3698 = vpop.f32.mrb[0].mxu0
    %3699 = vmatprep.mubr.f32.mxu0 0.0
    %3700 = vmatmul.mubr.f32.gmra.mrb[0].mxu0 %v3378
    %v3701 = vpop.f32.mrb[0].mxu0
    %v3702 = vadd.f32 0.0, %v3701
    %v3703 = vpop.f32.mrb[0].mxu0
    %3704 = vmatprep.mubr.f32.mxu0 0.0
    %3705 = vmatmul.mubr.f32.gmra.mrb[0].mxu0 %v3379
    %v3706 = vpop.f32.mrb[0].mxu0
    %v3707 = vadd.f32 0.0, %v3706
    %v3708 = vpop.f32.mrb[0].mxu0
    %3709 = vmatprep.mubr.f32.mxu0 0.0
    %3710 = vmatmul.mubr.f32.gmra.mrb[0].mxu0 %v3380
    %v3711 = vpop.f32.mrb[0].mxu0
    %v3712 = vadd.f32 0.0, %v3711
    %v3713 = vpop.f32.mrb[0].mxu0
    %3714 = vmatprep.mubr.f32.mxu0 0.0
    %3715 = vmatmul.mubr.f32.gmra.mrb[0].mxu0 %v3381
    %v3716 = vpop.f32.mrb[0].mxu0
    %v3717 = vadd.f32 0.0, %v3716
    %v3718 = vpop.f32.mrb[0].mxu0
    %3719 = vmatprep.mubr.f32.mxu0 0.0
    %3720 = vmatmul.mubr.f32.gmra.mrb[0].mxu0 %v3382
    %v3721 = vpop.f32.mrb[0].mxu0
    %v3722 = vadd.f32 0.0, %v3721
    %v3723 = vpop.f32.mrb[0].mxu0
    %3724 = vmatprep.mubr.f32.mxu0 0.0
    %3725 = vmatmul.mubr.f32.gmra.mrb[0].mxu0 %v3383
    %v3726 = vpop.f32.mrb[0].mxu0
    %v3727 = vadd.f32 0.0, %v3726
    %v3728 = vpop.f32.mrb[0].mxu0
    %3729 = vmatprep.mubr.f32.mxu0 0.0
    %3730 = vmatmul.mubr.f32.gmra.mrb[0].mxu0 %v3384
    %v3731 = vpop.f32.mrb[0].mxu0
    %v3732 = vadd.f32 0.0, %v3731
    %v3733 = vpop.f32.mrb[0].mxu0
    %3734 = vmatprep.mubr.f32.mxu0 0.0
    %3735 = vmatmul.mubr.f32.gmra.mrb[0].mxu0 %v3385
    %v3736 = vpop.f32.mrb[0].mxu0
    %v3737 = vadd.f32 0.0, %v3736
    %v3738 = vpop.f32.mrb[0].mxu0
    %3739 = vmatprep.mubr.f32.mxu0 0.0
    %3740 = vmatmul.mubr.f32.gmra.mrb[0].mxu0 %v3386
    %v3741 = vpop.f32.mrb[0].mxu0
    %v3742 = vadd.f32 0.0, %v3741
    %v3743 = vpop.f32.mrb[0].mxu0
    %3744 = vmatprep.mubr.f32.mxu0 0.0
    %3745 = vmatmul.mubr.f32.gmra.mrb[0].mxu0 %v3387
    %v3746 = vpop.f32.mrb[0].mxu0
    %v3747 = vadd.f32 0.0, %v3746
    %v3748 = vpop.f32.mrb[0].mxu0
    %3749 = vmatprep.mubr.f32.mxu0 0.0
    %3750 = vmatmul.mubr.f32.gmra.mrb[0].mxu0 %v3388
    %v3751 = vpop.f32.mrb[0].mxu0
    %v3752 = vadd.f32 0.0, %v3751
    %v3753 = vpop.f32.mrb[0].mxu0
    %3754 = vmatprep.mubr.f32.mxu0 0.0
    %3755 = vmatmul.mubr.f32.gmra.mrb[0].mxu0 %v3389
    %v3756 = vpop.f32.mrb[0].mxu0
    %v3757 = vadd.f32 0.0, %v3756
    %v3758 = vpop.f32.mrb[0].mxu0
    %3759 = vmatprep.mubr.f32.mxu0 0.0
    %3760 = vmatmul.mubr.f32.gmra.mrb[0].mxu0 %v3390
    %v3761 = vpop.f32.mrb[0].mxu0
    %v3762 = vadd.f32 0.0, %v3761
    %v3763 = vpop.f32.mrb[0].mxu0
    %3764 = vmatprep.mubr.f32.mxu0 0.0
    %3765 = vmatmul.mubr.f32.gmra.mrb[0].mxu0 %v3391
    %v3766 = vpop.f32.mrb[0].mxu0
    %v3767 = vadd.f32 0.0, %v3766
    %v3768 = vpop.f32.mrb[0].mxu0
    %3769 = vmatprep.mubr.f32.mxu0 0.0
    %3770 = vmatmul.mubr.f32.gmra.mrb[0].mxu0 %v3392
    %v3771 = vpop.f32.mrb[0].mxu0
    %v3772 = vadd.f32 0.0, %v3771
    %v3773 = vpop.f32.mrb[0].mxu0
    %3774 = vmatprep.mubr.f32.mxu0 0.0
    %3775 = vmatmul.mubr.f32.gmra.mrb[0].mxu0 %v3393
    %v3776 = vpop.f32.mrb[0].mxu0
    %v3777 = vadd.f32 0.0, %v3776
    %v3778 = vpop.f32.mrb[0].mxu0
    %3779 = vmatprep.mubr.f32.mxu0 0.0
    %3780 = vmatmul.mubr.f32.gmra.mrb[0].mxu0 %v3394
    %v3781 = vpop.f32.mrb[0].mxu0
    %v3782 = vadd.f32 0.0, %v3781
    %v3783 = vpop.f32.mrb[0].mxu0
    %3784 = vmatprep.mubr.f32.mxu0 0.0
    %3785 = vmatmul.mubr.f32.gmra.mrb[0].mxu0 %v3395
    %v3786 = vpop.f32.mrb[0].mxu0
    %v3787 = vadd.f32 0.0, %v3786
    %v3788 = vpop.f32.mrb[0].mxu0
    %3789 = vmatprep.mubr.f32.mxu0 0.0
    %3790 = vmatmul.mubr.f32.gmra.mrb[0].mxu0 %v3396
    %v3791 = vpop.f32.mrb[0].mxu0
    %v3792 = vadd.f32 0.0, %v3791
    %v3793 = vpop.f32.mrb[0].mxu0
    %3794 = vmatprep.mubr.f32.mxu0 0.0
    %3795 = vmatmul.mubr.f32.gmra.mrb[0].mxu0 %v3397
    %v3796 = vpop.f32.mrb[0].mxu0
    %v3797 = vadd.f32 0.0, %v3796
    %v3798 = vpop.f32.mrb[0].mxu0
    %3799 = vdwg.mxu0
    %v3800 = vadd.f32 %v3269, %v3482
    %v3801 = vadd.f32 %v3270, %v3487
    %v3802 = vadd.f32 %v3271, %v3492
    %v3803 = vadd.f32 %v3272, %v3497
    %v3804 = vadd.f32 %v3273, %v3502
    %v3805 = vadd.f32 %v3274, %v3507
    %v3806 = vadd.f32 %v3275, %v3512
    %v3807 = vadd.f32 %v3276, %v3517
    %v3808 = vadd.f32 %v3277, %v3522
    %v3809 = vadd.f32 %v3278, %v3527
    %v3810 = vadd.f32 %v3279, %v3532
    %v3811 = vadd.f32 %v3280, %v3537
    %v3812 = vadd.f32 %v3281, %v3542
    %v3813 = vadd.f32 %v3282, %v3547
    %v3814 = vadd.f32 %v3283, %v3552
    %v3815 = vadd.f32 %v3284, %v3557
    %v3816 = vadd.f32 %v3285, %v3562
    %v3817 = vadd.f32 %v3286, %v3567
    %v3818 = vadd.f32 %v3287, %v3572
    %v3819 = vadd.f32 %v3288, %v3577
    %v3820 = vadd.f32 %v3289, %v3582
    %v3821 = vadd.f32 %v3290, %v3587
    %v3822 = vadd.f32 %v3291, %v3592
    %v3823 = vadd.f32 %v3292, %v3597
    %v3824 = vadd.f32 %v3293, %v3602
    %v3825 = vadd.f32 %v3294, %v3607
    %v3826 = vadd.f32 %v3295, %v3612
    %v3827 = vadd.f32 %v3296, %v3617
    %v3828 = vadd.f32 %v3297, %v3622
    %v3829 = vadd.f32 %v3298, %v3627
    %v3830 = vadd.f32 %v3299, %v3632
    %v3831 = vadd.f32 %v3300, %v3637
    %v3832 = vadd.f32 %v3301, %v3642
    %v3833 = vadd.f32 %v3302, %v3647
    %v3834 = vadd.f32 %v3303, %v3652
    %v3835 = vadd.f32 %v3304, %v3657
    %v3836 = vadd.f32 %v3305, %v3662
    %v3837 = vadd.f32 %v3306, %v3667
    %v3838 = vadd.f32 %v3307, %v3672
    %v3839 = vadd.f32 %v3308, %v3677
    %v3840 = vadd.f32 %v3309, %v3682
    %v3841 = vadd.f32 %v3310, %v3687
    %v3842 = vadd.f32 %v3311, %v3692
    %v3843 = vadd.f32 %v3312, %v3697
    %v3844 = vadd.f32 %v3313, %v3702
    %v3845 = vadd.f32 %v3314, %v3707
    %v3846 = vadd.f32 %v3315, %v3712
    %v3847 = vadd.f32 %v3316, %v3717
    %v3848 = vadd.f32 %v3317, %v3722
    %v3849 = vadd.f32 %v3318, %v3727
    %v3850 = vadd.f32 %v3319, %v3732
    %v3851 = vadd.f32 %v3320, %v3737
    %v3852 = vadd.f32 %v3321, %v3742
    %v3853 = vadd.f32 %v3322, %v3747
    %v3854 = vadd.f32 %v3323, %v3752
    %v3855 = vadd.f32 %v3324, %v3757
    %v3856 = vadd.f32 %v3325, %v3762
    %v3857 = vadd.f32 %v3326, %v3767
    %v3858 = vadd.f32 %v3327, %v3772
    %v3859 = vadd.f32 %v3328, %v3777
    %v3860 = vadd.f32 %v3329, %v3782
    %v3861 = vadd.f32 %v3330, %v3787
    %v3862 = vadd.f32 %v3331, %v3792
    %v3863 = vadd.f32 %v3332, %v3797
    %v3864 = vld [vmem:[%s3333 + $0x1] sm:$0xff]
    %v3865 = vld [vmem:[%s3333 + $0x9] sm:$0xff]
    %v3866 = vld [vmem:[%s3333 + $0x19] sm:$0xff]
    %v3867 = vld [vmem:[%s3333 + $0x21] sm:$0xff]
    %v3868 = vld [vmem:[%s3333 + $0x31] sm:$0xff]
    %v3869 = vld [vmem:[%s3333 + $0x39] sm:$0xff]
    %v3870 = vld [vmem:[%s3333 + $0x49] sm:$0xff]
    %v3871 = vld [vmem:[%s3333 + $0x51] sm:$0xff]
    %v3872 = vld [vmem:[%s3333 + $0x61] sm:$0xff]
    %v3873 = vld [vmem:[%s3333 + $0x69] sm:$0xff]
    %v3874 = vld [vmem:[%s3333 + $0x79] sm:$0xff]
    %v3875 = vld [vmem:[%s3333 + $0x81] sm:$0xff]
    %v3876 = vld [vmem:[%s3333 + $0x91] sm:$0xff]
    %v3877 = vld [vmem:[%s3333 + $0x99] sm:$0xff]
    %v3878 = vld [vmem:[%s3333 + $0xa9] sm:$0xff]
    %v3879 = vld [vmem:[%s3333 + $0xb1] sm:$0xff]
    %v3880 = vld [vmem:[%s3333 + $0xc1] sm:$0xff]
    %v3881 = vld [vmem:[%s3333 + $0xc9] sm:$0xff]
    %v3882 = vld [vmem:[%s3333 + $0xd9] sm:$0xff]
    %v3883 = vld [vmem:[%s3333 + $0xe1] sm:$0xff]
    %v3884 = vld [vmem:[%s3333 + $0xf1] sm:$0xff]
    %v3885 = vld [vmem:[%s3333 + $0xf9] sm:$0xff]
    %v3886 = vld [vmem:[%s3333 + $0x109] sm:$0xff]
    %v3887 = vld [vmem:[%s3333 + $0x111] sm:$0xff]
    %v3888 = vld [vmem:[%s3333 + $0x121] sm:$0xff]
    %v3889 = vld [vmem:[%s3333 + $0x129] sm:$0xff]
    %v3890 = vld [vmem:[%s3333 + $0x139] sm:$0xff]
    %v3891 = vld [vmem:[%s3333 + $0x141] sm:$0xff]
    %v3892 = vld [vmem:[%s3333 + $0x151] sm:$0xff]
    %v3893 = vld [vmem:[%s3333 + $0x159] sm:$0xff]
    %v3894 = vld [vmem:[%s3333 + $0x169] sm:$0xff]
    %v3895 = vld [vmem:[%s3333 + $0x171] sm:$0xff]
    %v3896 = vld [vmem:[%s3333 + $0x1b1] sm:$0xff]
    %v3897 = vld [vmem:[%s3333 + $0x1b9] sm:$0xff]
    %v3898 = vld [vmem:[%s3333 + $0x1c9] sm:$0xff]
    %v3899 = vld [vmem:[%s3333 + $0x1d1] sm:$0xff]
    %v3900 = vld [vmem:[%s3333 + $0x1e1] sm:$0xff]
    %v3901 = vld [vmem:[%s3333 + $0x1e9] sm:$0xff]
    %v3902 = vld [vmem:[%s3333 + $0x1f9] sm:$0xff]
    %v3903 = vld [vmem:[%s3333 + $0x201] sm:$0xff]
    %v3904 = vld [vmem:[%s3333 + $0x211] sm:$0xff]
    %v3905 = vld [vmem:[%s3333 + $0x219] sm:$0xff]
    %v3906 = vld [vmem:[%s3333 + $0x229] sm:$0xff]
    %v3907 = vld [vmem:[%s3333 + $0x231] sm:$0xff]
    %v3908 = vld [vmem:[%s3333 + $0x241] sm:$0xff]
    %v3909 = vld [vmem:[%s3333 + $0x249] sm:$0xff]
    %v3910 = vld [vmem:[%s3333 + $0x259] sm:$0xff]
    %v3911 = vld [vmem:[%s3333 + $0x261] sm:$0xff]
    %v3912 = vld [vmem:[%s3333 + $0x271] sm:$0xff]
    %v3913 = vld [vmem:[%s3333 + $0x279] sm:$0xff]
    %v3914 = vld [vmem:[%s3333 + $0x289] sm:$0xff]
    %v3915 = vld [vmem:[%s3333 + $0x291] sm:$0xff]
    %v3916 = vld [vmem:[%s3333 + $0x2a1] sm:$0xff]
    %v3917 = vld [vmem:[%s3333 + $0x2a9] sm:$0xff]
    %v3918 = vld [vmem:[%s3333 + $0x2b9] sm:$0xff]
    %v3919 = vld [vmem:[%s3333 + $0x2c1] sm:$0xff]
    %v3920 = vld [vmem:[%s3333 + $0x2d1] sm:$0xff]
    %v3921 = vld [vmem:[%s3333 + $0x2d9] sm:$0xff]
    %v3922 = vld [vmem:[%s3333 + $0x2e9] sm:$0xff]
    %v3923 = vld [vmem:[%s3333 + $0x2f1] sm:$0xff]
    %v3924 = vld [vmem:[%s3333 + $0x301] sm:$0xff]
    %v3925 = vld [vmem:[%s3333 + $0x309] sm:$0xff]
    %v3926 = vld [vmem:[%s3333 + $0x319] sm:$0xff]
    %v3927 = vld [vmem:[%s3333 + $0x321] sm:$0xff]
    %s3928 = scalar_lea.vmem [#allocation6], 896
    %v3929 = vld [vmem:[%s3928] sm:$0xff]
    %v3930 = vld [vmem:[%s3928 + $0x8] sm:$0xff]
    %v3931 = vld [vmem:[%s3928 + $0x10] sm:$0xff]
    %v3932 = vld [vmem:[%s3928 + $0x18] sm:$0xff]
    %v3933 = vld [vmem:[%s3928 + $0x20] sm:$0xff]
    %v3934 = vld [vmem:[%s3928 + $0x28] sm:$0xff]
    %v3935 = vld [vmem:[%s3928 + $0x30] sm:$0xff]
    %v3936 = vld [vmem:[%s3928 + $0x38] sm:$0xff]
    %v3937 = vld [vmem:[%s3928 + $0x40] sm:$0xff]
    %v3938 = vld [vmem:[%s3928 + $0x48] sm:$0xff]
    %v3939 = vld [vmem:[%s3928 + $0x50] sm:$0xff]
    %v3940 = vld [vmem:[%s3928 + $0x58] sm:$0xff]
    %v3941 = vld [vmem:[%s3928 + $0x60] sm:$0xff]
    %v3942 = vld [vmem:[%s3928 + $0x68] sm:$0xff]
    %v3943 = vld [vmem:[%s3928 + $0x70] sm:$0xff]
    %v3944 = vld [vmem:[%s3928 + $0x78] sm:$0xff]
    %3945 = vmatprep.subr.mxu0 0.0
    %3946 = vmatpush1.msra.mxu0 %v3929
    %3947 = vmatprep.subr.mxu0 0.0
    %3948 = vmatpush1.msra.mxu0 %v3930
    %3949 = vmatprep.subr.mxu0 0.0
    %3950 = vmatpush1.msra.mxu0 %v3931
    %3951 = vmatprep.subr.mxu0 0.0
    %3952 = vmatpush1.msra.mxu0 %v3932
    %3953 = vmatprep.subr.mxu0 0.0
    %3954 = vmatpush1.msra.mxu0 %v3933
    %3955 = vmatprep.subr.mxu0 0.0
    %3956 = vmatpush1.msra.mxu0 %v3934
    %3957 = vmatprep.subr.mxu0 0.0
    %3958 = vmatpush1.msra.mxu0 %v3935
    %3959 = vmatprep.subr.mxu0 0.0
    %3960 = vmatpush1.msra.mxu0 %v3936
    %3961 = vmatprep.subr.mxu0 0.0
    %3962 = vmatpush1.msra.mxu0 %v3937
    %3963 = vmatprep.subr.mxu0 0.0
    %3964 = vmatpush1.msra.mxu0 %v3938
    %3965 = vmatprep.subr.mxu0 0.0
    %3966 = vmatpush1.msra.mxu0 %v3939
    %3967 = vmatprep.subr.mxu0 0.0
    %3968 = vmatpush1.msra.mxu0 %v3940
    %3969 = vmatprep.subr.mxu0 0.0
    %3970 = vmatpush1.msra.mxu0 %v3941
    %3971 = vmatprep.subr.mxu0 0.0
    %3972 = vmatpush1.msra.mxu0 %v3942
    %3973 = vmatprep.subr.mxu0 0.0
    %3974 = vmatpush1.msra.mxu0 %v3943
    %3975 = vmatprep.subr.mxu0 0.0
    %3976 = vmatpush1.msra.mxu0 %v3944
    %3977 = vmatprep.subr.mxu0 0.0
    %3978 = vmatpush1.msra.mxu0 0.0
    %3979 = vmatprep.subr.mxu0 0.0
    %3980 = vmatpush1.msra.mxu0 0.0
    %3981 = vmatprep.subr.mxu0 0.0
    %3982 = vmatpush1.msra.mxu0 0.0
    %3983 = vmatprep.subr.mxu0 0.0
    %3984 = vmatpush1.msra.mxu0 0.0
    %3985 = vmatprep.subr.mxu0 0.0
    %3986 = vmatpush1.msra.mxu0 0.0
    %3987 = vmatprep.subr.mxu0 0.0
    %3988 = vmatpush1.msra.mxu0 0.0
    %3989 = vmatprep.subr.mxu0 0.0
    %3990 = vmatpush1.msra.mxu0 0.0
    %3991 = vmatprep.subr.mxu0 0.0
    %3992 = vmatpush1.msra.mxu0 0.0
    %3993 = vmatprep.subr.mxu0 0.0
    %3994 = vmatpush1.msra.mxu0 0.0
    %3995 = vmatprep.subr.mxu0 0.0
    %3996 = vmatpush1.msra.mxu0 0.0
    %3997 = vmatprep.subr.mxu0 0.0
    %3998 = vmatpush1.msra.mxu0 0.0
    %3999 = vmatprep.subr.mxu0 0.0
    %4000 = vmatpush1.msra.mxu0 0.0
    %4001 = vmatprep.subr.mxu0 0.0
    %4002 = vmatpush1.msra.mxu0 0.0
    %4003 = vmatprep.subr.mxu0 0.0
    %4004 = vmatpush1.msra.mxu0 0.0
    %4005 = vmatprep.subr.mxu0 0.0
    %4006 = vmatpush1.msra.mxu0 0.0
    %4007 = vmatprep.subr.mxu0 0.0
    %4008 = vmatpush1.msra.mxu0 0.0
    %4009 = vmatprep.mubr.f32.mxu0 0.0
    %4010 = vmatmul.mubr.f32.gmra.mrb[0].mxu0 %v3864
    %v4011 = vpop.f32.mrb[0].mxu0
    %v4012 = vadd.f32 0.0, %v4011
    %v4013 = vpop.f32.mrb[0].mxu0
    %4014 = vmatprep.mubr.f32.mxu0 0.0
    %4015 = vmatmul.mubr.f32.gmra.mrb[0].mxu0 %v3865
    %v4016 = vpop.f32.mrb[0].mxu0
    %v4017 = vadd.f32 0.0, %v4016
    %v4018 = vpop.f32.mrb[0].mxu0
    %4019 = vmatprep.mubr.f32.mxu0 0.0
    %4020 = vmatmul.mubr.f32.gmra.mrb[0].mxu0 %v3866
    %v4021 = vpop.f32.mrb[0].mxu0
    %v4022 = vadd.f32 0.0, %v4021
    %v4023 = vpop.f32.mrb[0].mxu0
    %4024 = vmatprep.mubr.f32.mxu0 0.0
    %4025 = vmatmul.mubr.f32.gmra.mrb[0].mxu0 %v3867
    %v4026 = vpop.f32.mrb[0].mxu0
    %v4027 = vadd.f32 0.0, %v4026
    %v4028 = vpop.f32.mrb[0].mxu0
    %4029 = vmatprep.mubr.f32.mxu0 0.0
    %4030 = vmatmul.mubr.f32.gmra.mrb[0].mxu0 %v3868
    %v4031 = vpop.f32.mrb[0].mxu0
    %v4032 = vadd.f32 0.0, %v4031
    %v4033 = vpop.f32.mrb[0].mxu0
    %4034 = vmatprep.mubr.f32.mxu0 0.0
    %4035 = vmatmul.mubr.f32.gmra.mrb[0].mxu0 %v3869
    %v4036 = vpop.f32.mrb[0].mxu0
    %v4037 = vadd.f32 0.0, %v4036
    %v4038 = vpop.f32.mrb[0].mxu0
    %4039 = vmatprep.mubr.f32.mxu0 0.0
    %4040 = vmatmul.mubr.f32.gmra.mrb[0].mxu0 %v3870
    %v4041 = vpop.f32.mrb[0].mxu0
    %v4042 = vadd.f32 0.0, %v4041
    %v4043 = vpop.f32.mrb[0].mxu0
    %4044 = vmatprep.mubr.f32.mxu0 0.0
    %4045 = vmatmul.mubr.f32.gmra.mrb[0].mxu0 %v3871
    %v4046 = vpop.f32.mrb[0].mxu0
    %v4047 = vadd.f32 0.0, %v4046
    %v4048 = vpop.f32.mrb[0].mxu0
    %4049 = vmatprep.mubr.f32.mxu0 0.0
    %4050 = vmatmul.mubr.f32.gmra.mrb[0].mxu0 %v3872
    %v4051 = vpop.f32.mrb[0].mxu0
    %v4052 = vadd.f32 0.0, %v4051
    %v4053 = vpop.f32.mrb[0].mxu0
    %4054 = vmatprep.mubr.f32.mxu0 0.0
    %4055 = vmatmul.mubr.f32.gmra.mrb[0].mxu0 %v3873
    %v4056 = vpop.f32.mrb[0].mxu0
    %v4057 = vadd.f32 0.0, %v4056
    %v4058 = vpop.f32.mrb[0].mxu0
    %4059 = vmatprep.mubr.f32.mxu0 0.0
    %4060 = vmatmul.mubr.f32.gmra.mrb[0].mxu0 %v3874
    %v4061 = vpop.f32.mrb[0].mxu0
    %v4062 = vadd.f32 0.0, %v4061
    %v4063 = vpop.f32.mrb[0].mxu0
    %4064 = vmatprep.mubr.f32.mxu0 0.0
    %4065 = vmatmul.mubr.f32.gmra.mrb[0].mxu0 %v3875
    %v4066 = vpop.f32.mrb[0].mxu0
    %v4067 = vadd.f32 0.0, %v4066
    %v4068 = vpop.f32.mrb[0].mxu0
    %4069 = vmatprep.mubr.f32.mxu0 0.0
    %4070 = vmatmul.mubr.f32.gmra.mrb[0].mxu0 %v3876
    %v4071 = vpop.f32.mrb[0].mxu0
    %v4072 = vadd.f32 0.0, %v4071
    %v4073 = vpop.f32.mrb[0].mxu0
    %4074 = vmatprep.mubr.f32.mxu0 0.0
    %4075 = vmatmul.mubr.f32.gmra.mrb[0].mxu0 %v3877
    %v4076 = vpop.f32.mrb[0].mxu0
    %v4077 = vadd.f32 0.0, %v4076
    %v4078 = vpop.f32.mrb[0].mxu0
    %4079 = vmatprep.mubr.f32.mxu0 0.0
    %4080 = vmatmul.mubr.f32.gmra.mrb[0].mxu0 %v3878
    %v4081 = vpop.f32.mrb[0].mxu0
    %v4082 = vadd.f32 0.0, %v4081
    %v4083 = vpop.f32.mrb[0].mxu0
    %4084 = vmatprep.mubr.f32.mxu0 0.0
    %4085 = vmatmul.mubr.f32.gmra.mrb[0].mxu0 %v3879
    %v4086 = vpop.f32.mrb[0].mxu0
    %v4087 = vadd.f32 0.0, %v4086
    %v4088 = vpop.f32.mrb[0].mxu0
    %4089 = vmatprep.mubr.f32.mxu0 0.0
    %4090 = vmatmul.mubr.f32.gmra.mrb[0].mxu0 %v3880
    %v4091 = vpop.f32.mrb[0].mxu0
    %v4092 = vadd.f32 0.0, %v4091
    %v4093 = vpop.f32.mrb[0].mxu0
    %4094 = vmatprep.mubr.f32.mxu0 0.0
    %4095 = vmatmul.mubr.f32.gmra.mrb[0].mxu0 %v3881
    %v4096 = vpop.f32.mrb[0].mxu0
    %v4097 = vadd.f32 0.0, %v4096
    %v4098 = vpop.f32.mrb[0].mxu0
    %4099 = vmatprep.mubr.f32.mxu0 0.0
    %4100 = vmatmul.mubr.f32.gmra.mrb[0].mxu0 %v3882
    %v4101 = vpop.f32.mrb[0].mxu0
    %v4102 = vadd.f32 0.0, %v4101
    %v4103 = vpop.f32.mrb[0].mxu0
    %4104 = vmatprep.mubr.f32.mxu0 0.0
    %4105 = vmatmul.mubr.f32.gmra.mrb[0].mxu0 %v3883
    %v4106 = vpop.f32.mrb[0].mxu0
    %v4107 = vadd.f32 0.0, %v4106
    %v4108 = vpop.f32.mrb[0].mxu0
    %4109 = vmatprep.mubr.f32.mxu0 0.0
    %4110 = vmatmul.mubr.f32.gmra.mrb[0].mxu0 %v3884
    %v4111 = vpop.f32.mrb[0].mxu0
    %v4112 = vadd.f32 0.0, %v4111
    %v4113 = vpop.f32.mrb[0].mxu0
    %4114 = vmatprep.mubr.f32.mxu0 0.0
    %4115 = vmatmul.mubr.f32.gmra.mrb[0].mxu0 %v3885
    %v4116 = vpop.f32.mrb[0].mxu0
    %v4117 = vadd.f32 0.0, %v4116
    %v4118 = vpop.f32.mrb[0].mxu0
    %4119 = vmatprep.mubr.f32.mxu0 0.0
    %4120 = vmatmul.mubr.f32.gmra.mrb[0].mxu0 %v3886
    %v4121 = vpop.f32.mrb[0].mxu0
    %v4122 = vadd.f32 0.0, %v4121
    %v4123 = vpop.f32.mrb[0].mxu0
    %4124 = vmatprep.mubr.f32.mxu0 0.0
    %4125 = vmatmul.mubr.f32.gmra.mrb[0].mxu0 %v3887
    %v4126 = vpop.f32.mrb[0].mxu0
    %v4127 = vadd.f32 0.0, %v4126
    %v4128 = vpop.f32.mrb[0].mxu0
    %4129 = vmatprep.mubr.f32.mxu0 0.0
    %4130 = vmatmul.mubr.f32.gmra.mrb[0].mxu0 %v3888
    %v4131 = vpop.f32.mrb[0].mxu0
    %v4132 = vadd.f32 0.0, %v4131
    %v4133 = vpop.f32.mrb[0].mxu0
    %4134 = vmatprep.mubr.f32.mxu0 0.0
    %4135 = vmatmul.mubr.f32.gmra.mrb[0].mxu0 %v3889
    %v4136 = vpop.f32.mrb[0].mxu0
    %v4137 = vadd.f32 0.0, %v4136
    %v4138 = vpop.f32.mrb[0].mxu0
    %4139 = vmatprep.mubr.f32.mxu0 0.0
    %4140 = vmatmul.mubr.f32.gmra.mrb[0].mxu0 %v3890
    %v4141 = vpop.f32.mrb[0].mxu0
    %v4142 = vadd.f32 0.0, %v4141
    %v4143 = vpop.f32.mrb[0].mxu0
    %4144 = vmatprep.mubr.f32.mxu0 0.0
    %4145 = vmatmul.mubr.f32.gmra.mrb[0].mxu0 %v3891
    %v4146 = vpop.f32.mrb[0].mxu0
    %v4147 = vadd.f32 0.0, %v4146
    %v4148 = vpop.f32.mrb[0].mxu0
    %4149 = vmatprep.mubr.f32.mxu0 0.0
    %4150 = vmatmul.mubr.f32.gmra.mrb[0].mxu0 %v3892
    %v4151 = vpop.f32.mrb[0].mxu0
    %v4152 = vadd.f32 0.0, %v4151
    %v4153 = vpop.f32.mrb[0].mxu0
    %4154 = vmatprep.mubr.f32.mxu0 0.0
    %4155 = vmatmul.mubr.f32.gmra.mrb[0].mxu0 %v3893
    %v4156 = vpop.f32.mrb[0].mxu0
    %v4157 = vadd.f32 0.0, %v4156
    %v4158 = vpop.f32.mrb[0].mxu0
    %4159 = vmatprep.mubr.f32.mxu0 0.0
    %4160 = vmatmul.mubr.f32.gmra.mrb[0].mxu0 %v3894
    %v4161 = vpop.f32.mrb[0].mxu0
    %v4162 = vadd.f32 0.0, %v4161
    %v4163 = vpop.f32.mrb[0].mxu0
    %4164 = vmatprep.mubr.f32.mxu0 0.0
    %4165 = vmatmul.mubr.f32.gmra.mrb[0].mxu0 %v3895
    %v4166 = vpop.f32.mrb[0].mxu0
    %v4167 = vadd.f32 0.0, %v4166
    %v4168 = vpop.f32.mrb[0].mxu0
    %4169 = vmatprep.mubr.f32.mxu0 0.0
    %4170 = vmatmul.mubr.f32.gmra.mrb[0].mxu0 %v3896
    %v4171 = vpop.f32.mrb[0].mxu0
    %v4172 = vadd.f32 0.0, %v4171
    %v4173 = vpop.f32.mrb[0].mxu0
    %4174 = vmatprep.mubr.f32.mxu0 0.0
    %4175 = vmatmul.mubr.f32.gmra.mrb[0].mxu0 %v3897
    %v4176 = vpop.f32.mrb[0].mxu0
    %v4177 = vadd.f32 0.0, %v4176
    %v4178 = vpop.f32.mrb[0].mxu0
    %4179 = vmatprep.mubr.f32.mxu0 0.0
    %4180 = vmatmul.mubr.f32.gmra.mrb[0].mxu0 %v3898
    %v4181 = vpop.f32.mrb[0].mxu0
    %v4182 = vadd.f32 0.0, %v4181
    %v4183 = vpop.f32.mrb[0].mxu0
    %4184 = vmatprep.mubr.f32.mxu0 0.0
    %4185 = vmatmul.mubr.f32.gmra.mrb[0].mxu0 %v3899
    %v4186 = vpop.f32.mrb[0].mxu0
    %v4187 = vadd.f32 0.0, %v4186
    %v4188 = vpop.f32.mrb[0].mxu0
    %4189 = vmatprep.mubr.f32.mxu0 0.0
    %4190 = vmatmul.mubr.f32.gmra.mrb[0].mxu0 %v3900
    %v4191 = vpop.f32.mrb[0].mxu0
    %v4192 = vadd.f32 0.0, %v4191
    %v4193 = vpop.f32.mrb[0].mxu0
    %4194 = vmatprep.mubr.f32.mxu0 0.0
    %4195 = vmatmul.mubr.f32.gmra.mrb[0].mxu0 %v3901
    %v4196 = vpop.f32.mrb[0].mxu0
    %v4197 = vadd.f32 0.0, %v4196
    %v4198 = vpop.f32.mrb[0].mxu0
    %4199 = vmatprep.mubr.f32.mxu0 0.0
    %4200 = vmatmul.mubr.f32.gmra.mrb[0].mxu0 %v3902
    %v4201 = vpop.f32.mrb[0].mxu0
    %v4202 = vadd.f32 0.0, %v4201
    %v4203 = vpop.f32.mrb[0].mxu0
    %4204 = vmatprep.mubr.f32.mxu0 0.0
    %4205 = vmatmul.mubr.f32.gmra.mrb[0].mxu0 %v3903
    %v4206 = vpop.f32.mrb[0].mxu0
    %v4207 = vadd.f32 0.0, %v4206
    %v4208 = vpop.f32.mrb[0].mxu0
    %4209 = vmatprep.mubr.f32.mxu0 0.0
    %4210 = vmatmul.mubr.f32.gmra.mrb[0].mxu0 %v3904
    %v4211 = vpop.f32.mrb[0].mxu0
    %v4212 = vadd.f32 0.0, %v4211
    %v4213 = vpop.f32.mrb[0].mxu0
    %4214 = vmatprep.mubr.f32.mxu0 0.0
    %4215 = vmatmul.mubr.f32.gmra.mrb[0].mxu0 %v3905
    %v4216 = vpop.f32.mrb[0].mxu0
    %v4217 = vadd.f32 0.0, %v4216
    %v4218 = vpop.f32.mrb[0].mxu0
    %4219 = vmatprep.mubr.f32.mxu0 0.0
    %4220 = vmatmul.mubr.f32.gmra.mrb[0].mxu0 %v3906
    %v4221 = vpop.f32.mrb[0].mxu0
    %v4222 = vadd.f32 0.0, %v4221
    %v4223 = vpop.f32.mrb[0].mxu0
    %4224 = vmatprep.mubr.f32.mxu0 0.0
    %4225 = vmatmul.mubr.f32.gmra.mrb[0].mxu0 %v3907
    %v4226 = vpop.f32.mrb[0].mxu0
    %v4227 = vadd.f32 0.0, %v4226
    %v4228 = vpop.f32.mrb[0].mxu0
    %4229 = vmatprep.mubr.f32.mxu0 0.0
    %4230 = vmatmul.mubr.f32.gmra.mrb[0].mxu0 %v3908
    %v4231 = vpop.f32.mrb[0].mxu0
    %v4232 = vadd.f32 0.0, %v4231
    %v4233 = vpop.f32.mrb[0].mxu0
    %4234 = vmatprep.mubr.f32.mxu0 0.0
    %4235 = vmatmul.mubr.f32.gmra.mrb[0].mxu0 %v3909
    %v4236 = vpop.f32.mrb[0].mxu0
    %v4237 = vadd.f32 0.0, %v4236
    %v4238 = vpop.f32.mrb[0].mxu0
    %4239 = vmatprep.mubr.f32.mxu0 0.0
    %4240 = vmatmul.mubr.f32.gmra.mrb[0].mxu0 %v3910
    %v4241 = vpop.f32.mrb[0].mxu0
    %v4242 = vadd.f32 0.0, %v4241
    %v4243 = vpop.f32.mrb[0].mxu0
    %4244 = vmatprep.mubr.f32.mxu0 0.0
    %4245 = vmatmul.mubr.f32.gmra.mrb[0].mxu0 %v3911
    %v4246 = vpop.f32.mrb[0].mxu0
    %v4247 = vadd.f32 0.0, %v4246
    %v4248 = vpop.f32.mrb[0].mxu0
    %4249 = vmatprep.mubr.f32.mxu0 0.0
    %4250 = vmatmul.mubr.f32.gmra.mrb[0].mxu0 %v3912
    %v4251 = vpop.f32.mrb[0].mxu0
    %v4252 = vadd.f32 0.0, %v4251
    %v4253 = vpop.f32.mrb[0].mxu0
    %4254 = vmatprep.mubr.f32.mxu0 0.0
    %4255 = vmatmul.mubr.f32.gmra.mrb[0].mxu0 %v3913
    %v4256 = vpop.f32.mrb[0].mxu0
    %v4257 = vadd.f32 0.0, %v4256
    %v4258 = vpop.f32.mrb[0].mxu0
    %4259 = vmatprep.mubr.f32.mxu0 0.0
    %4260 = vmatmul.mubr.f32.gmra.mrb[0].mxu0 %v3914
    %v4261 = vpop.f32.mrb[0].mxu0
    %v4262 = vadd.f32 0.0, %v4261
    %v4263 = vpop.f32.mrb[0].mxu0
    %4264 = vmatprep.mubr.f32.mxu0 0.0
    %4265 = vmatmul.mubr.f32.gmra.mrb[0].mxu0 %v3915
    %v4266 = vpop.f32.mrb[0].mxu0
    %v4267 = vadd.f32 0.0, %v4266
    %v4268 = vpop.f32.mrb[0].mxu0
    %4269 = vmatprep.mubr.f32.mxu0 0.0
    %4270 = vmatmul.mubr.f32.gmra.mrb[0].mxu0 %v3916
    %v4271 = vpop.f32.mrb[0].mxu0
    %v4272 = vadd.f32 0.0, %v4271
    %v4273 = vpop.f32.mrb[0].mxu0
    %4274 = vmatprep.mubr.f32.mxu0 0.0
    %4275 = vmatmul.mubr.f32.gmra.mrb[0].mxu0 %v3917
    %v4276 = vpop.f32.mrb[0].mxu0
    %v4277 = vadd.f32 0.0, %v4276
    %v4278 = vpop.f32.mrb[0].mxu0
    %4279 = vmatprep.mubr.f32.mxu0 0.0
    %4280 = vmatmul.mubr.f32.gmra.mrb[0].mxu0 %v3918
    %v4281 = vpop.f32.mrb[0].mxu0
    %v4282 = vadd.f32 0.0, %v4281
    %v4283 = vpop.f32.mrb[0].mxu0
    %4284 = vmatprep.mubr.f32.mxu0 0.0
    %4285 = vmatmul.mubr.f32.gmra.mrb[0].mxu0 %v3919
    %v4286 = vpop.f32.mrb[0].mxu0
    %v4287 = vadd.f32 0.0, %v4286
    %v4288 = vpop.f32.mrb[0].mxu0
    %4289 = vmatprep.mubr.f32.mxu0 0.0
    %4290 = vmatmul.mubr.f32.gmra.mrb[0].mxu0 %v3920
    %v4291 = vpop.f32.mrb[0].mxu0
    %v4292 = vadd.f32 0.0, %v4291
    %v4293 = vpop.f32.mrb[0].mxu0
    %4294 = vmatprep.mubr.f32.mxu0 0.0
    %4295 = vmatmul.mubr.f32.gmra.mrb[0].mxu0 %v3921
    %v4296 = vpop.f32.mrb[0].mxu0
    %v4297 = vadd.f32 0.0, %v4296
    %v4298 = vpop.f32.mrb[0].mxu0
    %4299 = vmatprep.mubr.f32.mxu0 0.0
    %4300 = vmatmul.mubr.f32.gmra.mrb[0].mxu0 %v3922
    %v4301 = vpop.f32.mrb[0].mxu0
    %v4302 = vadd.f32 0.0, %v4301
    %v4303 = vpop.f32.mrb[0].mxu0
    %4304 = vmatprep.mubr.f32.mxu0 0.0
    %4305 = vmatmul.mubr.f32.gmra.mrb[0].mxu0 %v3923
    %v4306 = vpop.f32.mrb[0].mxu0
    %v4307 = vadd.f32 0.0, %v4306
    %v4308 = vpop.f32.mrb[0].mxu0
    %4309 = vmatprep.mubr.f32.mxu0 0.0
    %4310 = vmatmul.mubr.f32.gmra.mrb[0].mxu0 %v3924
    %v4311 = vpop.f32.mrb[0].mxu0
    %v4312 = vadd.f32 0.0, %v4311
    %v4313 = vpop.f32.mrb[0].mxu0
    %4314 = vmatprep.mubr.f32.mxu0 0.0
    %4315 = vmatmul.mubr.f32.gmra.mrb[0].mxu0 %v3925
    %v4316 = vpop.f32.mrb[0].mxu0
    %v4317 = vadd.f32 0.0, %v4316
    %v4318 = vpop.f32.mrb[0].mxu0
    %4319 = vmatprep.mubr.f32.mxu0 0.0
    %4320 = vmatmul.mubr.f32.gmra.mrb[0].mxu0 %v3926
    %v4321 = vpop.f32.mrb[0].mxu0
    %v4322 = vadd.f32 0.0, %v4321
    %v4323 = vpop.f32.mrb[0].mxu0
    %4324 = vmatprep.mubr.f32.mxu0 0.0
    %4325 = vmatmul.mubr.f32.gmra.mrb[0].mxu0 %v3927
    %v4326 = vpop.f32.mrb[0].mxu0
    %v4327 = vadd.f32 0.0, %v4326
    %v4328 = vpop.f32.mrb[0].mxu0
    %4329 = vdwg.mxu0
    %v4330 = vadd.f32 %v3800, %v4012
    %v4331 = vadd.f32 %v3801, %v4017
    %v4332 = vadd.f32 %v3802, %v4022
    %v4333 = vadd.f32 %v3803, %v4027
    %v4334 = vadd.f32 %v3804, %v4032
    %v4335 = vadd.f32 %v3805, %v4037
    %v4336 = vadd.f32 %v3806, %v4042
    %v4337 = vadd.f32 %v3807, %v4047
    %v4338 = vadd.f32 %v3808, %v4052
    %v4339 = vadd.f32 %v3809, %v4057
    %v4340 = vadd.f32 %v3810, %v4062
    %v4341 = vadd.f32 %v3811, %v4067
    %v4342 = vadd.f32 %v3812, %v4072
    %v4343 = vadd.f32 %v3813, %v4077
    %v4344 = vadd.f32 %v3814, %v4082
    %v4345 = vadd.f32 %v3815, %v4087
    %v4346 = vadd.f32 %v3816, %v4092
    %v4347 = vadd.f32 %v3817, %v4097
    %v4348 = vadd.f32 %v3818, %v4102
    %v4349 = vadd.f32 %v3819, %v4107
    %v4350 = vadd.f32 %v3820, %v4112
    %v4351 = vadd.f32 %v3821, %v4117
    %v4352 = vadd.f32 %v3822, %v4122
    %v4353 = vadd.f32 %v3823, %v4127
    %v4354 = vadd.f32 %v3824, %v4132
    %v4355 = vadd.f32 %v3825, %v4137
    %v4356 = vadd.f32 %v3826, %v4142
    %v4357 = vadd.f32 %v3827, %v4147
    %v4358 = vadd.f32 %v3828, %v4152
    %v4359 = vadd.f32 %v3829, %v4157
    %v4360 = vadd.f32 %v3830, %v4162
    %v4361 = vadd.f32 %v3831, %v4167
    %v4362 = vadd.f32 %v3832, %v4172
    %v4363 = vadd.f32 %v3833, %v4177
    %v4364 = vadd.f32 %v3834, %v4182
    %v4365 = vadd.f32 %v3835, %v4187
    %v4366 = vadd.f32 %v3836, %v4192
    %v4367 = vadd.f32 %v3837, %v4197
    %v4368 = vadd.f32 %v3838, %v4202
    %v4369 = vadd.f32 %v3839, %v4207
    %v4370 = vadd.f32 %v3840, %v4212
    %v4371 = vadd.f32 %v3841, %v4217
    %v4372 = vadd.f32 %v3842, %v4222
    %v4373 = vadd.f32 %v3843, %v4227
    %v4374 = vadd.f32 %v3844, %v4232
    %v4375 = vadd.f32 %v3845, %v4237
    %v4376 = vadd.f32 %v3846, %v4242
    %v4377 = vadd.f32 %v3847, %v4247
    %v4378 = vadd.f32 %v3848, %v4252
    %v4379 = vadd.f32 %v3849, %v4257
    %v4380 = vadd.f32 %v3850, %v4262
    %v4381 = vadd.f32 %v3851, %v4267
    %v4382 = vadd.f32 %v3852, %v4272
    %v4383 = vadd.f32 %v3853, %v4277
    %v4384 = vadd.f32 %v3854, %v4282
    %v4385 = vadd.f32 %v3855, %v4287
    %v4386 = vadd.f32 %v3856, %v4292
    %v4387 = vadd.f32 %v3857, %v4297
    %v4388 = vadd.f32 %v3858, %v4302
    %v4389 = vadd.f32 %v3859, %v4307
    %v4390 = vadd.f32 %v3860, %v4312
    %v4391 = vadd.f32 %v3861, %v4317
    %v4392 = vadd.f32 %v3862, %v4322
    %v4393 = vadd.f32 %v3863, %v4327
    %v4394 = vld [vmem:[%s3333 + $0x2] sm:$0xff]
    %v4395 = vld [vmem:[%s3333 + $0xa] sm:$0xff]
    %v4396 = vld [vmem:[%s3333 + $0x1a] sm:$0xff]
    %v4397 = vld [vmem:[%s3333 + $0x22] sm:$0xff]
    %v4398 = vld [vmem:[%s3333 + $0x32] sm:$0xff]
    %v4399 = vld [vmem:[%s3333 + $0x3a] sm:$0xff]
    %v4400 = vld [vmem:[%s3333 + $0x4a] sm:$0xff]
    %v4401 = vld [vmem:[%s3333 + $0x52] sm:$0xff]
    %v4402 = vld [vmem:[%s3333 + $0x62] sm:$0xff]
    %v4403 = vld [vmem:[%s3333 + $0x6a] sm:$0xff]
    %v4404 = vld [vmem:[%s3333 + $0x7a] sm:$0xff]
    %v4405 = vld [vmem:[%s3333 + $0x82] sm:$0xff]
    %v4406 = vld [vmem:[%s3333 + $0x92] sm:$0xff]
    %v4407 = vld [vmem:[%s3333 + $0x9a] sm:$0xff]
    %v4408 = vld [vmem:[%s3333 + $0xaa] sm:$0xff]
    %v4409 = vld [vmem:[%s3333 + $0xb2] sm:$0xff]
    %v4410 = vld [vmem:[%s3333 + $0xc2] sm:$0xff]
    %v4411 = vld [vmem:[%s3333 + $0xca] sm:$0xff]
    %v4412 = vld [vmem:[%s3333 + $0xda] sm:$0xff]
    %v4413 = vld [vmem:[%s3333 + $0xe2] sm:$0xff]
    %v4414 = vld [vmem:[%s3333 + $0xf2] sm:$0xff]
    %v4415 = vld [vmem:[%s3333 + $0xfa] sm:$0xff]
    %v4416 = vld [vmem:[%s3333 + $0x10a] sm:$0xff]
    %v4417 = vld [vmem:[%s3333 + $0x112] sm:$0xff]
    %v4418 = vld [vmem:[%s3333 + $0x122] sm:$0xff]
    %v4419 = vld [vmem:[%s3333 + $0x12a] sm:$0xff]
    %v4420 = vld [vmem:[%s3333 + $0x13a] sm:$0xff]
    %v4421 = vld [vmem:[%s3333 + $0x142] sm:$0xff]
    %v4422 = vld [vmem:[%s3333 + $0x152] sm:$0xff]
    %v4423 = vld [vmem:[%s3333 + $0x15a] sm:$0xff]
    %v4424 = vld [vmem:[%s3333 + $0x16a] sm:$0xff]
    %v4425 = vld [vmem:[%s3333 + $0x172] sm:$0xff]
    %v4426 = vld [vmem:[%s3333 + $0x1b2] sm:$0xff]
    %v4427 = vld [vmem:[%s3333 + $0x1ba] sm:$0xff]
    %v4428 = vld [vmem:[%s3333 + $0x1ca] sm:$0xff]
    %v4429 = vld [vmem:[%s3333 + $0x1d2] sm:$0xff]
    %v4430 = vld [vmem:[%s3333 + $0x1e2] sm:$0xff]
    %v4431 = vld [vmem:[%s3333 + $0x1ea] sm:$0xff]
    %v4432 = vld [vmem:[%s3333 + $0x1fa] sm:$0xff]
    %v4433 = vld [vmem:[%s3333 + $0x202] sm:$0xff]
    %v4434 = vld [vmem:[%s3333 + $0x212] sm:$0xff]
    %v4435 = vld [vmem:[%s3333 + $0x21a] sm:$0xff]
    %v4436 = vld [vmem:[%s3333 + $0x22a] sm:$0xff]
    %v4437 = vld [vmem:[%s3333 + $0x232] sm:$0xff]
    %v4438 = vld [vmem:[%s3333 + $0x242] sm:$0xff]
    %v4439 = vld [vmem:[%s3333 + $0x24a] sm:$0xff]
    %v4440 = vld [vmem:[%s3333 + $0x25a] sm:$0xff]
    %v4441 = vld [vmem:[%s3333 + $0x262] sm:$0xff]
    %v4442 = vld [vmem:[%s3333 + $0x272] sm:$0xff]
    %v4443 = vld [vmem:[%s3333 + $0x27a] sm:$0xff]
    %v4444 = vld [vmem:[%s3333 + $0x28a] sm:$0xff]
    %v4445 = vld [vmem:[%s3333 + $0x292] sm:$0xff]
    %v4446 = vld [vmem:[%s3333 + $0x2a2] sm:$0xff]
    %v4447 = vld [vmem:[%s3333 + $0x2aa] sm:$0xff]
    %v4448 = vld [vmem:[%s3333 + $0x2ba] sm:$0xff]
    %v4449 = vld [vmem:[%s3333 + $0x2c2] sm:$0xff]
    %v4450 = vld [vmem:[%s3333 + $0x2d2] sm:$0xff]
    %v4451 = vld [vmem:[%s3333 + $0x2da] sm:$0xff]
    %v4452 = vld [vmem:[%s3333 + $0x2ea] sm:$0xff]
    %v4453 = vld [vmem:[%s3333 + $0x2f2] sm:$0xff]
    %v4454 = vld [vmem:[%s3333 + $0x302] sm:$0xff]
    %v4455 = vld [vmem:[%s3333 + $0x30a] sm:$0xff]
    %v4456 = vld [vmem:[%s3333 + $0x31a] sm:$0xff]
    %v4457 = vld [vmem:[%s3333 + $0x322] sm:$0xff]
    %s4458 = scalar_lea.vmem [#allocation6], 1024
    %v4459 = vld [vmem:[%s4458] sm:$0xff]
    %v4460 = vld [vmem:[%s4458 + $0x8] sm:$0xff]
    %v4461 = vld [vmem:[%s4458 + $0x10] sm:$0xff]
    %v4462 = vld [vmem:[%s4458 + $0x18] sm:$0xff]
    %v4463 = vld [vmem:[%s4458 + $0x20] sm:$0xff]
    %v4464 = vld [vmem:[%s4458 + $0x28] sm:$0xff]
    %v4465 = vld [vmem:[%s4458 + $0x30] sm:$0xff]
    %v4466 = vld [vmem:[%s4458 + $0x38] sm:$0xff]
    %v4467 = vld [vmem:[%s4458 + $0x40] sm:$0xff]
    %v4468 = vld [vmem:[%s4458 + $0x48] sm:$0xff]
    %v4469 = vld [vmem:[%s4458 + $0x50] sm:$0xff]
    %v4470 = vld [vmem:[%s4458 + $0x58] sm:$0xff]
    %v4471 = vld [vmem:[%s4458 + $0x60] sm:$0xff]
    %v4472 = vld [vmem:[%s4458 + $0x68] sm:$0xff]
    %v4473 = vld [vmem:[%s4458 + $0x70] sm:$0xff]
    %v4474 = vld [vmem:[%s4458 + $0x78] sm:$0xff]
    %4475 = vmatprep.subr.mxu0 0.0
    %4476 = vmatpush1.msra.mxu0 %v4459
    %4477 = vmatprep.subr.mxu0 0.0
    %4478 = vmatpush1.msra.mxu0 %v4460
    %4479 = vmatprep.subr.mxu0 0.0
    %4480 = vmatpush1.msra.mxu0 %v4461
    %4481 = vmatprep.subr.mxu0 0.0
    %4482 = vmatpush1.msra.mxu0 %v4462
    %4483 = vmatprep.subr.mxu0 0.0
    %4484 = vmatpush1.msra.mxu0 %v4463
    %4485 = vmatprep.subr.mxu0 0.0
    %4486 = vmatpush1.msra.mxu0 %v4464
    %4487 = vmatprep.subr.mxu0 0.0
    %4488 = vmatpush1.msra.mxu0 %v4465
    %4489 = vmatprep.subr.mxu0 0.0
    %4490 = vmatpush1.msra.mxu0 %v4466
    %4491 = vmatprep.subr.mxu0 0.0
    %4492 = vmatpush1.msra.mxu0 %v4467
    %4493 = vmatprep.subr.mxu0 0.0
    %4494 = vmatpush1.msra.mxu0 %v4468
    %4495 = vmatprep.subr.mxu0 0.0
    %4496 = vmatpush1.msra.mxu0 %v4469
    %4497 = vmatprep.subr.mxu0 0.0
    %4498 = vmatpush1.msra.mxu0 %v4470
    %4499 = vmatprep.subr.mxu0 0.0
    %4500 = vmatpush1.msra.mxu0 %v4471
    %4501 = vmatprep.subr.mxu0 0.0
    %4502 = vmatpush1.msra.mxu0 %v4472
    %4503 = vmatprep.subr.mxu0 0.0
    %4504 = vmatpush1.msra.mxu0 %v4473
    %4505 = vmatprep.subr.mxu0 0.0
    %4506 = vmatpush1.msra.mxu0 %v4474
    %4507 = vmatprep.subr.mxu0 0.0
    %4508 = vmatpush1.msra.mxu0 0.0
    %4509 = vmatprep.subr.mxu0 0.0
    %4510 = vmatpush1.msra.mxu0 0.0
    %4511 = vmatprep.subr.mxu0 0.0
    %4512 = vmatpush1.msra.mxu0 0.0
    %4513 = vmatprep.subr.mxu0 0.0
    %4514 = vmatpush1.msra.mxu0 0.0
    %4515 = vmatprep.subr.mxu0 0.0
    %4516 = vmatpush1.msra.mxu0 0.0
    %4517 = vmatprep.subr.mxu0 0.0
    %4518 = vmatpush1.msra.mxu0 0.0
    %4519 = vmatprep.subr.mxu0 0.0
    %4520 = vmatpush1.msra.mxu0 0.0
    %4521 = vmatprep.subr.mxu0 0.0
    %4522 = vmatpush1.msra.mxu0 0.0
    %4523 = vmatprep.subr.mxu0 0.0
    %4524 = vmatpush1.msra.mxu0 0.0
    %4525 = vmatprep.subr.mxu0 0.0
    %4526 = vmatpush1.msra.mxu0 0.0
    %4527 = vmatprep.subr.mxu0 0.0
    %4528 = vmatpush1.msra.mxu0 0.0
    %4529 = vmatprep.subr.mxu0 0.0
    %4530 = vmatpush1.msra.mxu0 0.0
    %4531 = vmatprep.subr.mxu0 0.0
    %4532 = vmatpush1.msra.mxu0 0.0
    %4533 = vmatprep.subr.mxu0 0.0
    %4534 = vmatpush1.msra.mxu0 0.0
    %4535 = vmatprep.subr.mxu0 0.0
    %4536 = vmatpush1.msra.mxu0 0.0
    %4537 = vmatprep.subr.mxu0 0.0
    %4538 = vmatpush1.msra.mxu0 0.0
    %4539 = vmatprep.mubr.f32.mxu0 0.0
    %4540 = vmatmul.mubr.f32.gmra.mrb[0].mxu0 %v4394
    %v4541 = vpop.f32.mrb[0].mxu0
    %v4542 = vadd.f32 0.0, %v4541
    %v4543 = vpop.f32.mrb[0].mxu0
    %4544 = vmatprep.mubr.f32.mxu0 0.0
    %4545 = vmatmul.mubr.f32.gmra.mrb[0].mxu0 %v4395
    %v4546 = vpop.f32.mrb[0].mxu0
    %v4547 = vadd.f32 0.0, %v4546
    %v4548 = vpop.f32.mrb[0].mxu0
    %4549 = vmatprep.mubr.f32.mxu0 0.0
    %4550 = vmatmul.mubr.f32.gmra.mrb[0].mxu0 %v4396
    %v4551 = vpop.f32.mrb[0].mxu0
    %v4552 = vadd.f32 0.0, %v4551
    %v4553 = vpop.f32.mrb[0].mxu0
    %4554 = vmatprep.mubr.f32.mxu0 0.0
    %4555 = vmatmul.mubr.f32.gmra.mrb[0].mxu0 %v4397
    %v4556 = vpop.f32.mrb[0].mxu0
    %v4557 = vadd.f32 0.0, %v4556
    %v4558 = vpop.f32.mrb[0].mxu0
    %4559 = vmatprep.mubr.f32.mxu0 0.0
    %4560 = vmatmul.mubr.f32.gmra.mrb[0].mxu0 %v4398
    %v4561 = vpop.f32.mrb[0].mxu0
    %v4562 = vadd.f32 0.0, %v4561
    %v4563 = vpop.f32.mrb[0].mxu0
    %4564 = vmatprep.mubr.f32.mxu0 0.0
    %4565 = vmatmul.mubr.f32.gmra.mrb[0].mxu0 %v4399
    %v4566 = vpop.f32.mrb[0].mxu0
    %v4567 = vadd.f32 0.0, %v4566
    %v4568 = vpop.f32.mrb[0].mxu0
    %4569 = vmatprep.mubr.f32.mxu0 0.0
    %4570 = vmatmul.mubr.f32.gmra.mrb[0].mxu0 %v4400
    %v4571 = vpop.f32.mrb[0].mxu0
    %v4572 = vadd.f32 0.0, %v4571
    %v4573 = vpop.f32.mrb[0].mxu0
    %4574 = vmatprep.mubr.f32.mxu0 0.0
    %4575 = vmatmul.mubr.f32.gmra.mrb[0].mxu0 %v4401
    %v4576 = vpop.f32.mrb[0].mxu0
    %v4577 = vadd.f32 0.0, %v4576
    %v4578 = vpop.f32.mrb[0].mxu0
    %4579 = vmatprep.mubr.f32.mxu0 0.0
    %4580 = vmatmul.mubr.f32.gmra.mrb[0].mxu0 %v4402
    %v4581 = vpop.f32.mrb[0].mxu0
    %v4582 = vadd.f32 0.0, %v4581
    %v4583 = vpop.f32.mrb[0].mxu0
    %4584 = vmatprep.mubr.f32.mxu0 0.0
    %4585 = vmatmul.mubr.f32.gmra.mrb[0].mxu0 %v4403
    %v4586 = vpop.f32.mrb[0].mxu0
    %v4587 = vadd.f32 0.0, %v4586
    %v4588 = vpop.f32.mrb[0].mxu0
    %4589 = vmatprep.mubr.f32.mxu0 0.0
    %4590 = vmatmul.mubr.f32.gmra.mrb[0].mxu0 %v4404
    %v4591 = vpop.f32.mrb[0].mxu0
    %v4592 = vadd.f32 0.0, %v4591
    %v4593 = vpop.f32.mrb[0].mxu0
    %4594 = vmatprep.mubr.f32.mxu0 0.0
    %4595 = vmatmul.mubr.f32.gmra.mrb[0].mxu0 %v4405
    %v4596 = vpop.f32.mrb[0].mxu0
    %v4597 = vadd.f32 0.0, %v4596
    %v4598 = vpop.f32.mrb[0].mxu0
    %4599 = vmatprep.mubr.f32.mxu0 0.0
    %4600 = vmatmul.mubr.f32.gmra.mrb[0].mxu0 %v4406
    %v4601 = vpop.f32.mrb[0].mxu0
    %v4602 = vadd.f32 0.0, %v4601
    %v4603 = vpop.f32.mrb[0].mxu0
    %4604 = vmatprep.mubr.f32.mxu0 0.0
    %4605 = vmatmul.mubr.f32.gmra.mrb[0].mxu0 %v4407
    %v4606 = vpop.f32.mrb[0].mxu0
    %v4607 = vadd.f32 0.0, %v4606
    %v4608 = vpop.f32.mrb[0].mxu0
    %4609 = vmatprep.mubr.f32.mxu0 0.0
    %4610 = vmatmul.mubr.f32.gmra.mrb[0].mxu0 %v4408
    %v4611 = vpop.f32.mrb[0].mxu0
    %v4612 = vadd.f32 0.0, %v4611
    %v4613 = vpop.f32.mrb[0].mxu0
    %4614 = vmatprep.mubr.f32.mxu0 0.0
    %4615 = vmatmul.mubr.f32.gmra.mrb[0].mxu0 %v4409
    %v4616 = vpop.f32.mrb[0].mxu0
    %v4617 = vadd.f32 0.0, %v4616
    %v4618 = vpop.f32.mrb[0].mxu0
    %4619 = vmatprep.mubr.f32.mxu0 0.0
    %4620 = vmatmul.mubr.f32.gmra.mrb[0].mxu0 %v4410
    %v4621 = vpop.f32.mrb[0].mxu0
    %v4622 = vadd.f32 0.0, %v4621
    %v4623 = vpop.f32.mrb[0].mxu0
    %4624 = vmatprep.mubr.f32.mxu0 0.0
    %4625 = vmatmul.mubr.f32.gmra.mrb[0].mxu0 %v4411
    %v4626 = vpop.f32.mrb[0].mxu0
    %v4627 = vadd.f32 0.0, %v4626
    %v4628 = vpop.f32.mrb[0].mxu0
    %4629 = vmatprep.mubr.f32.mxu0 0.0
    %4630 = vmatmul.mubr.f32.gmra.mrb[0].mxu0 %v4412
    %v4631 = vpop.f32.mrb[0].mxu0
    %v4632 = vadd.f32 0.0, %v4631
    %v4633 = vpop.f32.mrb[0].mxu0
    %4634 = vmatprep.mubr.f32.mxu0 0.0
    %4635 = vmatmul.mubr.f32.gmra.mrb[0].mxu0 %v4413
    %v4636 = vpop.f32.mrb[0].mxu0
    %v4637 = vadd.f32 0.0, %v4636
    %v4638 = vpop.f32.mrb[0].mxu0
    %4639 = vmatprep.mubr.f32.mxu0 0.0
    %4640 = vmatmul.mubr.f32.gmra.mrb[0].mxu0 %v4414
    %v4641 = vpop.f32.mrb[0].mxu0
    %v4642 = vadd.f32 0.0, %v4641
    %v4643 = vpop.f32.mrb[0].mxu0
    %4644 = vmatprep.mubr.f32.mxu0 0.0
    %4645 = vmatmul.mubr.f32.gmra.mrb[0].mxu0 %v4415
    %v4646 = vpop.f32.mrb[0].mxu0
    %v4647 = vadd.f32 0.0, %v4646
    %v4648 = vpop.f32.mrb[0].mxu0
    %4649 = vmatprep.mubr.f32.mxu0 0.0
    %4650 = vmatmul.mubr.f32.gmra.mrb[0].mxu0 %v4416
    %v4651 = vpop.f32.mrb[0].mxu0
    %v4652 = vadd.f32 0.0, %v4651
    %v4653 = vpop.f32.mrb[0].mxu0
    %4654 = vmatprep.mubr.f32.mxu0 0.0
    %4655 = vmatmul.mubr.f32.gmra.mrb[0].mxu0 %v4417
    %v4656 = vpop.f32.mrb[0].mxu0
    %v4657 = vadd.f32 0.0, %v4656
    %v4658 = vpop.f32.mrb[0].mxu0
    %4659 = vmatprep.mubr.f32.mxu0 0.0
    %4660 = vmatmul.mubr.f32.gmra.mrb[0].mxu0 %v4418
    %v4661 = vpop.f32.mrb[0].mxu0
    %v4662 = vadd.f32 0.0, %v4661
    %v4663 = vpop.f32.mrb[0].mxu0
    %4664 = vmatprep.mubr.f32.mxu0 0.0
    %4665 = vmatmul.mubr.f32.gmra.mrb[0].mxu0 %v4419
    %v4666 = vpop.f32.mrb[0].mxu0
    %v4667 = vadd.f32 0.0, %v4666
    %v4668 = vpop.f32.mrb[0].mxu0
    %4669 = vmatprep.mubr.f32.mxu0 0.0
    %4670 = vmatmul.mubr.f32.gmra.mrb[0].mxu0 %v4420
    %v4671 = vpop.f32.mrb[0].mxu0
    %v4672 = vadd.f32 0.0, %v4671
    %v4673 = vpop.f32.mrb[0].mxu0
    %4674 = vmatprep.mubr.f32.mxu0 0.0
    %4675 = vmatmul.mubr.f32.gmra.mrb[0].mxu0 %v4421
    %v4676 = vpop.f32.mrb[0].mxu0
    %v4677 = vadd.f32 0.0, %v4676
    %v4678 = vpop.f32.mrb[0].mxu0
    %4679 = vmatprep.mubr.f32.mxu0 0.0
    %4680 = vmatmul.mubr.f32.gmra.mrb[0].mxu0 %v4422
    %v4681 = vpop.f32.mrb[0].mxu0
    %v4682 = vadd.f32 0.0, %v4681
    %v4683 = vpop.f32.mrb[0].mxu0
    %4684 = vmatprep.mubr.f32.mxu0 0.0
    %4685 = vmatmul.mubr.f32.gmra.mrb[0].mxu0 %v4423
    %v4686 = vpop.f32.mrb[0].mxu0
    %v4687 = vadd.f32 0.0, %v4686
    %v4688 = vpop.f32.mrb[0].mxu0
    %4689 = vmatprep.mubr.f32.mxu0 0.0
    %4690 = vmatmul.mubr.f32.gmra.mrb[0].mxu0 %v4424
    %v4691 = vpop.f32.mrb[0].mxu0
    %v4692 = vadd.f32 0.0, %v4691
    %v4693 = vpop.f32.mrb[0].mxu0
    %4694 = vmatprep.mubr.f32.mxu0 0.0
    %4695 = vmatmul.mubr.f32.gmra.mrb[0].mxu0 %v4425
    %v4696 = vpop.f32.mrb[0].mxu0
    %v4697 = vadd.f32 0.0, %v4696
    %v4698 = vpop.f32.mrb[0].mxu0
    %4699 = vmatprep.mubr.f32.mxu0 0.0
    %4700 = vmatmul.mubr.f32.gmra.mrb[0].mxu0 %v4426
    %v4701 = vpop.f32.mrb[0].mxu0
    %v4702 = vadd.f32 0.0, %v4701
    %v4703 = vpop.f32.mrb[0].mxu0
    %4704 = vmatprep.mubr.f32.mxu0 0.0
    %4705 = vmatmul.mubr.f32.gmra.mrb[0].mxu0 %v4427
    %v4706 = vpop.f32.mrb[0].mxu0
    %v4707 = vadd.f32 0.0, %v4706
    %v4708 = vpop.f32.mrb[0].mxu0
    %4709 = vmatprep.mubr.f32.mxu0 0.0
    %4710 = vmatmul.mubr.f32.gmra.mrb[0].mxu0 %v4428
    %v4711 = vpop.f32.mrb[0].mxu0
    %v4712 = vadd.f32 0.0, %v4711
    %v4713 = vpop.f32.mrb[0].mxu0
    %4714 = vmatprep.mubr.f32.mxu0 0.0
    %4715 = vmatmul.mubr.f32.gmra.mrb[0].mxu0 %v4429
    %v4716 = vpop.f32.mrb[0].mxu0
    %v4717 = vadd.f32 0.0, %v4716
    %v4718 = vpop.f32.mrb[0].mxu0
    %4719 = vmatprep.mubr.f32.mxu0 0.0
    %4720 = vmatmul.mubr.f32.gmra.mrb[0].mxu0 %v4430
    %v4721 = vpop.f32.mrb[0].mxu0
    %v4722 = vadd.f32 0.0, %v4721
    %v4723 = vpop.f32.mrb[0].mxu0
    %4724 = vmatprep.mubr.f32.mxu0 0.0
    %4725 = vmatmul.mubr.f32.gmra.mrb[0].mxu0 %v4431
    %v4726 = vpop.f32.mrb[0].mxu0
    %v4727 = vadd.f32 0.0, %v4726
    %v4728 = vpop.f32.mrb[0].mxu0
    %4729 = vmatprep.mubr.f32.mxu0 0.0
    %4730 = vmatmul.mubr.f32.gmra.mrb[0].mxu0 %v4432
    %v4731 = vpop.f32.mrb[0].mxu0
    %v4732 = vadd.f32 0.0, %v4731
    %v4733 = vpop.f32.mrb[0].mxu0
    %4734 = vmatprep.mubr.f32.mxu0 0.0
    %4735 = vmatmul.mubr.f32.gmra.mrb[0].mxu0 %v4433
    %v4736 = vpop.f32.mrb[0].mxu0
    %v4737 = vadd.f32 0.0, %v4736
    %v4738 = vpop.f32.mrb[0].mxu0
    %4739 = vmatprep.mubr.f32.mxu0 0.0
    %4740 = vmatmul.mubr.f32.gmra.mrb[0].mxu0 %v4434
    %v4741 = vpop.f32.mrb[0].mxu0
    %v4742 = vadd.f32 0.0, %v4741
    %v4743 = vpop.f32.mrb[0].mxu0
    %4744 = vmatprep.mubr.f32.mxu0 0.0
    %4745 = vmatmul.mubr.f32.gmra.mrb[0].mxu0 %v4435
    %v4746 = vpop.f32.mrb[0].mxu0
    %v4747 = vadd.f32 0.0, %v4746
    %v4748 = vpop.f32.mrb[0].mxu0
    %4749 = vmatprep.mubr.f32.mxu0 0.0
    %4750 = vmatmul.mubr.f32.gmra.mrb[0].mxu0 %v4436
    %v4751 = vpop.f32.mrb[0].mxu0
    %v4752 = vadd.f32 0.0, %v4751
    %v4753 = vpop.f32.mrb[0].mxu0
    %4754 = vmatprep.mubr.f32.mxu0 0.0
    %4755 = vmatmul.mubr.f32.gmra.mrb[0].mxu0 %v4437
    %v4756 = vpop.f32.mrb[0].mxu0
    %v4757 = vadd.f32 0.0, %v4756
    %v4758 = vpop.f32.mrb[0].mxu0
    %4759 = vmatprep.mubr.f32.mxu0 0.0
    %4760 = vmatmul.mubr.f32.gmra.mrb[0].mxu0 %v4438
    %v4761 = vpop.f32.mrb[0].mxu0
    %v4762 = vadd.f32 0.0, %v4761
    %v4763 = vpop.f32.mrb[0].mxu0
    %4764 = vmatprep.mubr.f32.mxu0 0.0
    %4765 = vmatmul.mubr.f32.gmra.mrb[0].mxu0 %v4439
    %v4766 = vpop.f32.mrb[0].mxu0
    %v4767 = vadd.f32 0.0, %v4766
    %v4768 = vpop.f32.mrb[0].mxu0
    %4769 = vmatprep.mubr.f32.mxu0 0.0
    %4770 = vmatmul.mubr.f32.gmra.mrb[0].mxu0 %v4440
    %v4771 = vpop.f32.mrb[0].mxu0
    %v4772 = vadd.f32 0.0, %v4771
    %v4773 = vpop.f32.mrb[0].mxu0
    %4774 = vmatprep.mubr.f32.mxu0 0.0
    %4775 = vmatmul.mubr.f32.gmra.mrb[0].mxu0 %v4441
    %v4776 = vpop.f32.mrb[0].mxu0
    %v4777 = vadd.f32 0.0, %v4776
    %v4778 = vpop.f32.mrb[0].mxu0
    %4779 = vmatprep.mubr.f32.mxu0 0.0
    %4780 = vmatmul.mubr.f32.gmra.mrb[0].mxu0 %v4442
    %v4781 = vpop.f32.mrb[0].mxu0
    %v4782 = vadd.f32 0.0, %v4781
    %v4783 = vpop.f32.mrb[0].mxu0
    %4784 = vmatprep.mubr.f32.mxu0 0.0
    %4785 = vmatmul.mubr.f32.gmra.mrb[0].mxu0 %v4443
    %v4786 = vpop.f32.mrb[0].mxu0
    %v4787 = vadd.f32 0.0, %v4786
    %v4788 = vpop.f32.mrb[0].mxu0
    %4789 = vmatprep.mubr.f32.mxu0 0.0
    %4790 = vmatmul.mubr.f32.gmra.mrb[0].mxu0 %v4444
    %v4791 = vpop.f32.mrb[0].mxu0
    %v4792 = vadd.f32 0.0, %v4791
    %v4793 = vpop.f32.mrb[0].mxu0
    %4794 = vmatprep.mubr.f32.mxu0 0.0
    %4795 = vmatmul.mubr.f32.gmra.mrb[0].mxu0 %v4445
    %v4796 = vpop.f32.mrb[0].mxu0
    %v4797 = vadd.f32 0.0, %v4796
    %v4798 = vpop.f32.mrb[0].mxu0
    %4799 = vmatprep.mubr.f32.mxu0 0.0
    %4800 = vmatmul.mubr.f32.gmra.mrb[0].mxu0 %v4446
    %v4801 = vpop.f32.mrb[0].mxu0
    %v4802 = vadd.f32 0.0, %v4801
    %v4803 = vpop.f32.mrb[0].mxu0
    %4804 = vmatprep.mubr.f32.mxu0 0.0
    %4805 = vmatmul.mubr.f32.gmra.mrb[0].mxu0 %v4447
    %v4806 = vpop.f32.mrb[0].mxu0
    %v4807 = vadd.f32 0.0, %v4806
    %v4808 = vpop.f32.mrb[0].mxu0
    %4809 = vmatprep.mubr.f32.mxu0 0.0
    %4810 = vmatmul.mubr.f32.gmra.mrb[0].mxu0 %v4448
    %v4811 = vpop.f32.mrb[0].mxu0
    %v4812 = vadd.f32 0.0, %v4811
    %v4813 = vpop.f32.mrb[0].mxu0
    %4814 = vmatprep.mubr.f32.mxu0 0.0
    %4815 = vmatmul.mubr.f32.gmra.mrb[0].mxu0 %v4449
    %v4816 = vpop.f32.mrb[0].mxu0
    %v4817 = vadd.f32 0.0, %v4816
    %v4818 = vpop.f32.mrb[0].mxu0
    %4819 = vmatprep.mubr.f32.mxu0 0.0
    %4820 = vmatmul.mubr.f32.gmra.mrb[0].mxu0 %v4450
    %v4821 = vpop.f32.mrb[0].mxu0
    %v4822 = vadd.f32 0.0, %v4821
    %v4823 = vpop.f32.mrb[0].mxu0
    %4824 = vmatprep.mubr.f32.mxu0 0.0
    %4825 = vmatmul.mubr.f32.gmra.mrb[0].mxu0 %v4451
    %v4826 = vpop.f32.mrb[0].mxu0
    %v4827 = vadd.f32 0.0, %v4826
    %v4828 = vpop.f32.mrb[0].mxu0
    %4829 = vmatprep.mubr.f32.mxu0 0.0
    %4830 = vmatmul.mubr.f32.gmra.mrb[0].mxu0 %v4452
    %v4831 = vpop.f32.mrb[0].mxu0
    %v4832 = vadd.f32 0.0, %v4831
    %v4833 = vpop.f32.mrb[0].mxu0
    %4834 = vmatprep.mubr.f32.mxu0 0.0
    %4835 = vmatmul.mubr.f32.gmra.mrb[0].mxu0 %v4453
    %v4836 = vpop.f32.mrb[0].mxu0
    %v4837 = vadd.f32 0.0, %v4836
    %v4838 = vpop.f32.mrb[0].mxu0
    %4839 = vmatprep.mubr.f32.mxu0 0.0
    %4840 = vmatmul.mubr.f32.gmra.mrb[0].mxu0 %v4454
    %v4841 = vpop.f32.mrb[0].mxu0
    %v4842 = vadd.f32 0.0, %v4841
    %v4843 = vpop.f32.mrb[0].mxu0
    %4844 = vmatprep.mubr.f32.mxu0 0.0
    %4845 = vmatmul.mubr.f32.gmra.mrb[0].mxu0 %v4455
    %v4846 = vpop.f32.mrb[0].mxu0
    %v4847 = vadd.f32 0.0, %v4846
    %v4848 = vpop.f32.mrb[0].mxu0
    %4849 = vmatprep.mubr.f32.mxu0 0.0
    %4850 = vmatmul.mubr.f32.gmra.mrb[0].mxu0 %v4456
    %v4851 = vpop.f32.mrb[0].mxu0
    %v4852 = vadd.f32 0.0, %v4851
    %v4853 = vpop.f32.mrb[0].mxu0
    %4854 = vmatprep.mubr.f32.mxu0 0.0
    %4855 = vmatmul.mubr.f32.gmra.mrb[0].mxu0 %v4457
    %v4856 = vpop.f32.mrb[0].mxu0
    %v4857 = vadd.f32 0.0, %v4856
    %v4858 = vpop.f32.mrb[0].mxu0
    %4859 = vdwg.mxu0
    %v4860 = vadd.f32 %v4330, %v4542
    %v4861 = vadd.f32 %v4331, %v4547
    %v4862 = vadd.f32 %v4332, %v4552
    %v4863 = vadd.f32 %v4333, %v4557
    %v4864 = vadd.f32 %v4334, %v4562
    %v4865 = vadd.f32 %v4335, %v4567
    %v4866 = vadd.f32 %v4336, %v4572
    %v4867 = vadd.f32 %v4337, %v4577
    %v4868 = vadd.f32 %v4338, %v4582
    %v4869 = vadd.f32 %v4339, %v4587
    %v4870 = vadd.f32 %v4340, %v4592
    %v4871 = vadd.f32 %v4341, %v4597
    %v4872 = vadd.f32 %v4342, %v4602
    %v4873 = vadd.f32 %v4343, %v4607
    %v4874 = vadd.f32 %v4344, %v4612
    %v4875 = vadd.f32 %v4345, %v4617
    %v4876 = vadd.f32 %v4346, %v4622
    %v4877 = vadd.f32 %v4347, %v4627
    %v4878 = vadd.f32 %v4348, %v4632
    %v4879 = vadd.f32 %v4349, %v4637
    %v4880 = vadd.f32 %v4350, %v4642
    %v4881 = vadd.f32 %v4351, %v4647
    %v4882 = vadd.f32 %v4352, %v4652
    %v4883 = vadd.f32 %v4353, %v4657
    %v4884 = vadd.f32 %v4354, %v4662
    %v4885 = vadd.f32 %v4355, %v4667
    %v4886 = vadd.f32 %v4356, %v4672
    %v4887 = vadd.f32 %v4357, %v4677
    %v4888 = vadd.f32 %v4358, %v4682
    %v4889 = vadd.f32 %v4359, %v4687
    %v4890 = vadd.f32 %v4360, %v4692
    %v4891 = vadd.f32 %v4361, %v4697
    %v4892 = vadd.f32 %v4362, %v4702
    %v4893 = vadd.f32 %v4363, %v4707
    %v4894 = vadd.f32 %v4364, %v4712
    %v4895 = vadd.f32 %v4365, %v4717
    %v4896 = vadd.f32 %v4366, %v4722
    %v4897 = vadd.f32 %v4367, %v4727
    %v4898 = vadd.f32 %v4368, %v4732
    %v4899 = vadd.f32 %v4369, %v4737
    %v4900 = vadd.f32 %v4370, %v4742
    %v4901 = vadd.f32 %v4371, %v4747
    %v4902 = vadd.f32 %v4372, %v4752
    %v4903 = vadd.f32 %v4373, %v4757
    %v4904 = vadd.f32 %v4374, %v4762
    %v4905 = vadd.f32 %v4375, %v4767
    %v4906 = vadd.f32 %v4376, %v4772
    %v4907 = vadd.f32 %v4377, %v4777
    %v4908 = vadd.f32 %v4378, %v4782
    %v4909 = vadd.f32 %v4379, %v4787
    %v4910 = vadd.f32 %v4380, %v4792
    %v4911 = vadd.f32 %v4381, %v4797
    %v4912 = vadd.f32 %v4382, %v4802
    %v4913 = vadd.f32 %v4383, %v4807
    %v4914 = vadd.f32 %v4384, %v4812
    %v4915 = vadd.f32 %v4385, %v4817
    %v4916 = vadd.f32 %v4386, %v4822
    %v4917 = vadd.f32 %v4387, %v4827
    %v4918 = vadd.f32 %v4388, %v4832
    %v4919 = vadd.f32 %v4389, %v4837
    %v4920 = vadd.f32 %v4390, %v4842
    %v4921 = vadd.f32 %v4391, %v4847
    %v4922 = vadd.f32 %v4392, %v4852
    %v4923 = vadd.f32 %v4393, %v4857
    %v4924 = vtanh.pop %v4860
    %v4925 = vtanh.pop %v4861
    %v4926 = vtanh.pop %v4862
    %v4927 = vtanh.pop %v4863
    %v4928 = vtanh.pop %v4864
    %v4929 = vtanh.pop %v4865
    %v4930 = vtanh.pop %v4866
    %v4931 = vtanh.pop %v4867
    %v4932 = vtanh.pop %v4868
    %v4933 = vtanh.pop %v4869
    %v4934 = vtanh.pop %v4870
    %v4935 = vtanh.pop %v4871
    %v4936 = vtanh.pop %v4872
    %v4937 = vtanh.pop %v4873
    %v4938 = vtanh.pop %v4874
    %v4939 = vtanh.pop %v4875
    %v4940 = vtanh.pop %v4876
    %v4941 = vtanh.pop %v4877
    %v4942 = vtanh.pop %v4878
    %v4943 = vtanh.pop %v4879
    %v4944 = vtanh.pop %v4880
    %v4945 = vtanh.pop %v4881
    %v4946 = vtanh.pop %v4882
    %v4947 = vtanh.pop %v4883
    %v4948 = vtanh.pop %v4884
    %v4949 = vtanh.pop %v4885
    %v4950 = vtanh.pop %v4886
    %v4951 = vtanh.pop %v4887
    %v4952 = vtanh.pop %v4888
    %v4953 = vtanh.pop %v4889
    %v4954 = vtanh.pop %v4890
    %v4955 = vtanh.pop %v4891
    %v4956 = vtanh.pop %v4892
    %v4957 = vtanh.pop %v4893
    %v4958 = vtanh.pop %v4894
    %v4959 = vtanh.pop %v4895
    %v4960 = vtanh.pop %v4896
    %v4961 = vtanh.pop %v4897
    %v4962 = vtanh.pop %v4898
    %v4963 = vtanh.pop %v4899
    %v4964 = vtanh.pop %v4900
    %v4965 = vtanh.pop %v4901
    %v4966 = vtanh.pop %v4902
    %v4967 = vtanh.pop %v4903
    %v4968 = vtanh.pop %v4904
    %v4969 = vtanh.pop %v4905
    %v4970 = vtanh.pop %v4906
    %v4971 = vtanh.pop %v4907
    %v4972 = vtanh.pop %v4908
    %v4973 = vtanh.pop %v4909
    %v4974 = vtanh.pop %v4910
    %v4975 = vtanh.pop %v4911
    %v4976 = vtanh.pop %v4912
    %v4977 = vtanh.pop %v4913
    %v4978 = vtanh.pop %v4914
    %v4979 = vtanh.pop %v4915
    %v4980 = vtanh.pop %v4916
    %v4981 = vtanh.pop %v4917
    %v4982 = vtanh.pop %v4918
    %v4983 = vtanh.pop %v4919
    %v4984 = vtanh.pop %v4920
    %v4985 = vtanh.pop %v4921
    %v4986 = vtanh.pop %v4922
    %v4987 = vtanh.pop %v4923
    %v4988 = vadd.f32 %v4924, %v4925
    %v4989 = vadd.f32 %v4988, %v4926
    %v4990 = vadd.f32 %v4989, %v4927
    %v4991 = vadd.f32 %v4990, %v4928
    %v4992 = vadd.f32 %v4991, %v4929
    %v4993 = vadd.f32 %v4992, %v4930
    %v4994 = vadd.f32 %v4993, %v4931
    %v4995 = vadd.f32 %v4994, %v4932
    %v4996 = vadd.f32 %v4995, %v4933
    %v4997 = vadd.f32 %v4996, %v4934
    %v4998 = vadd.f32 %v4997, %v4935
    %v4999 = vadd.f32 %v4998, %v4936
    %v5000 = vadd.f32 %v4999, %v4937
    %v5001 = vadd.f32 %v5000, %v4938
    %v5002 = vadd.f32 %v5001, %v4939
    %v5003 = vadd.f32 %v5002, %v4940
    %v5004 = vadd.f32 %v5003, %v4941
    %v5005 = vadd.f32 %v5004, %v4942
    %v5006 = vadd.f32 %v5005, %v4943
    %v5007 = vadd.f32 %v5006, %v4944
    %v5008 = vadd.f32 %v5007, %v4945
    %v5009 = vadd.f32 %v5008, %v4946
    %v5010 = vadd.f32 %v5009, %v4947
    %v5011 = vadd.f32 %v5010, %v4948
    %v5012 = vadd.f32 %v5011, %v4949
    %v5013 = vadd.f32 %v5012, %v4950
    %v5014 = vadd.f32 %v5013, %v4951
    %v5015 = vadd.f32 %v5014, %v4952
    %v5016 = vadd.f32 %v5015, %v4953
    %v5017 = vadd.f32 %v5016, %v4954
    %v5018 = vadd.f32 %v5017, %v4955
    %v5019 = vadd.f32 %v5018, %v4956
    %v5020 = vadd.f32 %v5019, %v4957
    %v5021 = vadd.f32 %v5020, %v4958
    %v5022 = vadd.f32 %v5021, %v4959
    %v5023 = vadd.f32 %v5022, %v4960
    %v5024 = vadd.f32 %v5023, %v4961
    %v5025 = vadd.f32 %v5024, %v4962
    %v5026 = vadd.f32 %v5025, %v4963
    %v5027 = vadd.f32 %v5026, %v4964
    %v5028 = vadd.f32 %v5027, %v4965
    %v5029 = vadd.f32 %v5028, %v4966
    %v5030 = vadd.f32 %v5029, %v4967
    %v5031 = vadd.f32 %v5030, %v4968
    %v5032 = vadd.f32 %v5031, %v4969
    %v5033 = vadd.f32 %v5032, %v4970
    %v5034 = vadd.f32 %v5033, %v4971
    %v5035 = vadd.f32 %v5034, %v4972
    %v5036 = vadd.f32 %v5035, %v4973
    %v5037 = vadd.f32 %v5036, %v4974
    %v5038 = vadd.f32 %v5037, %v4975
    %v5039 = vadd.f32 %v5038, %v4976
    %v5040 = vadd.f32 %v5039, %v4977
    %v5041 = vadd.f32 %v5040, %v4978
    %v5042 = vadd.f32 %v5041, %v4979
    %v5043 = vadd.f32 %v5042, %v4980
    %v5044 = vadd.f32 %v5043, %v4981
    %v5045 = vadd.f32 %v5044, %v4982
    %v5046 = vadd.f32 %v5045, %v4983
    %v5047 = vadd.f32 %v5046, %v4984
    %v5048 = vadd.f32 %v5047, %v4985
    %v5049 = vadd.f32 %v5048, %v4986
    %v5050 = vadd.f32 %v5049, %v4987
    %v5051 = vrot.slane %v5050, 4
    %v5052 = vadd.f32 %v5050, %v5051
    %v5053 = vrot.slane %v5052, 2
    %v5054 = vadd.f32 %v5052, %v5053
    %v5055 = vrot.slane %v5054, 1
    %v5056 = vadd.f32 %v5054, %v5055
    %v5057 = vmul.f32 %v5056, 0.001953125
    %v5058 = vmul.f32 %v4924, %v4924
    %v5059 = vmul.f32 %v4925, %v4925
    %v5060 = vmul.f32 %v4926, %v4926
    %v5061 = vmul.f32 %v4927, %v4927
    %v5062 = vmul.f32 %v4928, %v4928
    %v5063 = vmul.f32 %v4929, %v4929
    %v5064 = vmul.f32 %v4930, %v4930
    %v5065 = vmul.f32 %v4931, %v4931
    %v5066 = vmul.f32 %v4932, %v4932
    %v5067 = vmul.f32 %v4933, %v4933
    %v5068 = vmul.f32 %v4934, %v4934
    %v5069 = vmul.f32 %v4935, %v4935
    %v5070 = vmul.f32 %v4936, %v4936
    %v5071 = vmul.f32 %v4937, %v4937
    %v5072 = vmul.f32 %v4938, %v4938
    %v5073 = vmul.f32 %v4939, %v4939
    %v5074 = vmul.f32 %v4940, %v4940
    %v5075 = vmul.f32 %v4941, %v4941
    %v5076 = vmul.f32 %v4942, %v4942
    %v5077 = vmul.f32 %v4943, %v4943
    %v5078 = vmul.f32 %v4944, %v4944
    %v5079 = vmul.f32 %v4945, %v4945
    %v5080 = vmul.f32 %v4946, %v4946
    %v5081 = vmul.f32 %v4947, %v4947
    %v5082 = vmul.f32 %v4948, %v4948
    %v5083 = vmul.f32 %v4949, %v4949
    %v5084 = vmul.f32 %v4950, %v4950
    %v5085 = vmul.f32 %v4951, %v4951
    %v5086 = vmul.f32 %v4952, %v4952
    %v5087 = vmul.f32 %v4953, %v4953
    %v5088 = vmul.f32 %v4954, %v4954
    %v5089 = vmul.f32 %v4955, %v4955
    %v5090 = vmul.f32 %v4956, %v4956
    %v5091 = vmul.f32 %v4957, %v4957
    %v5092 = vmul.f32 %v4958, %v4958
    %v5093 = vmul.f32 %v4959, %v4959
    %v5094 = vmul.f32 %v4960, %v4960
    %v5095 = vmul.f32 %v4961, %v4961
    %v5096 = vmul.f32 %v4962, %v4962
    %v5097 = vmul.f32 %v4963, %v4963
    %v5098 = vmul.f32 %v4964, %v4964
    %v5099 = vmul.f32 %v4965, %v4965
    %v5100 = vmul.f32 %v4966, %v4966
    %v5101 = vmul.f32 %v4967, %v4967
    %v5102 = vmul.f32 %v4968, %v4968
    %v5103 = vmul.f32 %v4969, %v4969
    %v5104 = vmul.f32 %v4970, %v4970
    %v5105 = vmul.f32 %v4971, %v4971
    %v5106 = vmul.f32 %v4972, %v4972
    %v5107 = vmul.f32 %v4973, %v4973
    %v5108 = vmul.f32 %v4974, %v4974
    %v5109 = vmul.f32 %v4975, %v4975
    %v5110 = vmul.f32 %v4976, %v4976
    %v5111 = vmul.f32 %v4977, %v4977
    %v5112 = vmul.f32 %v4978, %v4978
    %v5113 = vmul.f32 %v4979, %v4979
    %v5114 = vmul.f32 %v4980, %v4980
    %v5115 = vmul.f32 %v4981, %v4981
    %v5116 = vmul.f32 %v4982, %v4982
    %v5117 = vmul.f32 %v4983, %v4983
    %v5118 = vmul.f32 %v4984, %v4984
    %v5119 = vmul.f32 %v4985, %v4985
    %v5120 = vmul.f32 %v4986, %v4986
    %v5121 = vmul.f32 %v4987, %v4987
    %v5122 = vadd.f32 %v5058, %v5059
    %v5123 = vadd.f32 %v5122, %v5060
    %v5124 = vadd.f32 %v5123, %v5061
    %v5125 = vadd.f32 %v5124, %v5062
    %v5126 = vadd.f32 %v5125, %v5063
    %v5127 = vadd.f32 %v5126, %v5064
    %v5128 = vadd.f32 %v5127, %v5065
    %v5129 = vadd.f32 %v5128, %v5066
    %v5130 = vadd.f32 %v5129, %v5067
    %v5131 = vadd.f32 %v5130, %v5068
    %v5132 = vadd.f32 %v5131, %v5069
    %v5133 = vadd.f32 %v5132, %v5070
    %v5134 = vadd.f32 %v5133, %v5071
    %v5135 = vadd.f32 %v5134, %v5072
    %v5136 = vadd.f32 %v5135, %v5073
    %v5137 = vadd.f32 %v5136, %v5074
    %v5138 = vadd.f32 %v5137, %v5075
    %v5139 = vadd.f32 %v5138, %v5076
    %v5140 = vadd.f32 %v5139, %v5077
    %v5141 = vadd.f32 %v5140, %v5078
    %v5142 = vadd.f32 %v5141, %v5079
    %v5143 = vadd.f32 %v5142, %v5080
    %v5144 = vadd.f32 %v5143, %v5081
    %v5145 = vadd.f32 %v5144, %v5082
    %v5146 = vadd.f32 %v5145, %v5083
    %v5147 = vadd.f32 %v5146, %v5084
    %v5148 = vadd.f32 %v5147, %v5085
    %v5149 = vadd.f32 %v5148, %v5086
    %v5150 = vadd.f32 %v5149, %v5087
    %v5151 = vadd.f32 %v5150, %v5088
    %v5152 = vadd.f32 %v5151, %v5089
    %v5153 = vadd.f32 %v5152, %v5090
    %v5154 = vadd.f32 %v5153, %v5091
    %v5155 = vadd.f32 %v5154, %v5092
    %v5156 = vadd.f32 %v5155, %v5093
    %v5157 = vadd.f32 %v5156, %v5094
    %v5158 = vadd.f32 %v5157, %v5095
    %v5159 = vadd.f32 %v5158, %v5096
    %v5160 = vadd.f32 %v5159, %v5097
    %v5161 = vadd.f32 %v5160, %v5098
    %v5162 = vadd.f32 %v5161, %v5099
    %v5163 = vadd.f32 %v5162, %v5100
    %v5164 = vadd.f32 %v5163, %v5101
    %v5165 = vadd.f32 %v5164, %v5102
    %v5166 = vadd.f32 %v5165, %v5103
    %v5167 = vadd.f32 %v5166, %v5104
    %v5168 = vadd.f32 %v5167, %v5105
    %v5169 = vadd.f32 %v5168, %v5106
    %v5170 = vadd.f32 %v5169, %v5107
    %v5171 = vadd.f32 %v5170, %v5108
    %v5172 = vadd.f32 %v5171, %v5109
    %v5173 = vadd.f32 %v5172, %v5110
    %v5174 = vadd.f32 %v5173, %v5111
    %v5175 = vadd.f32 %v5174, %v5112
    %v5176 = vadd.f32 %v5175, %v5113
    %v5177 = vadd.f32 %v5176, %v5114
    %v5178 = vadd.f32 %v5177, %v5115
    %v5179 = vadd.f32 %v5178, %v5116
    %v5180 = vadd.f32 %v5179, %v5117
    %v5181 = vadd.f32 %v5180, %v5118
    %v5182 = vadd.f32 %v5181, %v5119
    %v5183 = vadd.f32 %v5182, %v5120
    %v5184 = vadd.f32 %v5183, %v5121
    %v5185 = vrot.slane %v5184, 4
    %v5186 = vadd.f32 %v5184, %v5185
    %v5187 = vrot.slane %v5186, 2
    %v5188 = vadd.f32 %v5186, %v5187
    %v5189 = vrot.slane %v5188, 1
    %v5190 = vadd.f32 %v5188, %v5189
    %v5191 = vmul.f32 %v5190, 0.001953125
    %v5192 = vmul.f32 %v5057, %v5057
    %v5193 = vsub.f32 %v5191, %v5192
    %v5194 = vld [vmem:[%s2] sm:$0x1]
    %v5195 = vadd.f32 %v5193, 1e-05
    %v5196 = vrsqrt.pop %v5195
    %v5197 = vmul.f32 %v5194, %v5196
    %v5198 = vld [vmem:[%s3] sm:$0x1]
    %v5199 = vmul.f32 %v5057, %v5197
    %v5200 = vsub.f32 %v5198, %v5199
    %v5202 = vlaneseq
    %v5203 = vshrl.u32 %v5202, 7
    %v5204 = vsub.s32 0, %v5203
    %v5205 = vrot.slane %v5197, %v5204
    %v5207 = vmul.f32 %v4924, %v5205
    %v5208 = vmul.f32 %v4925, %v5205
    %v5209 = vmul.f32 %v4926, %v5205
    %v5210 = vmul.f32 %v4927, %v5205
    %v5211 = vmul.f32 %v4928, %v5205
    %v5212 = vmul.f32 %v4929, %v5205
    %v5213 = vmul.f32 %v4930, %v5205
    %v5214 = vmul.f32 %v4931, %v5205
    %v5215 = vmul.f32 %v4932, %v5205
    %v5216 = vmul.f32 %v4933, %v5205
    %v5217 = vmul.f32 %v4934, %v5205
    %v5218 = vmul.f32 %v4935, %v5205
    %v5219 = vmul.f32 %v4936, %v5205
    %v5220 = vmul.f32 %v4937, %v5205
    %v5221 = vmul.f32 %v4938, %v5205
    %v5222 = vmul.f32 %v4939, %v5205
    %v5223 = vmul.f32 %v4940, %v5205
    %v5224 = vmul.f32 %v4941, %v5205
    %v5225 = vmul.f32 %v4942, %v5205
    %v5226 = vmul.f32 %v4943, %v5205
    %v5227 = vmul.f32 %v4944, %v5205
    %v5228 = vmul.f32 %v4945, %v5205
    %v5229 = vmul.f32 %v4946, %v5205
    %v5230 = vmul.f32 %v4947, %v5205
    %v5231 = vmul.f32 %v4948, %v5205
    %v5232 = vmul.f32 %v4949, %v5205
    %v5233 = vmul.f32 %v4950, %v5205
    %v5234 = vmul.f32 %v4951, %v5205
    %v5235 = vmul.f32 %v4952, %v5205
    %v5236 = vmul.f32 %v4953, %v5205
    %v5237 = vmul.f32 %v4954, %v5205
    %v5238 = vmul.f32 %v4955, %v5205
    %v5239 = vmul.f32 %v4956, %v5205
    %v5240 = vmul.f32 %v4957, %v5205
    %v5241 = vmul.f32 %v4958, %v5205
    %v5242 = vmul.f32 %v4959, %v5205
    %v5243 = vmul.f32 %v4960, %v5205
    %v5244 = vmul.f32 %v4961, %v5205
    %v5245 = vmul.f32 %v4962, %v5205
    %v5246 = vmul.f32 %v4963, %v5205
    %v5247 = vmul.f32 %v4964, %v5205
    %v5248 = vmul.f32 %v4965, %v5205
    %v5249 = vmul.f32 %v4966, %v5205
    %v5250 = vmul.f32 %v4967, %v5205
    %v5251 = vmul.f32 %v4968, %v5205
    %v5252 = vmul.f32 %v4969, %v5205
    %v5253 = vmul.f32 %v4970, %v5205
    %v5254 = vmul.f32 %v4971, %v5205
    %v5255 = vmul.f32 %v4972, %v5205
    %v5256 = vmul.f32 %v4973, %v5205
    %v5257 = vmul.f32 %v4974, %v5205
    %v5258 = vmul.f32 %v4975, %v5205
    %v5259 = vmul.f32 %v4976, %v5205
    %v5260 = vmul.f32 %v4977, %v5205
    %v5261 = vmul.f32 %v4978, %v5205
    %v5262 = vmul.f32 %v4979, %v5205
    %v5263 = vmul.f32 %v4980, %v5205
    %v5264 = vmul.f32 %v4981, %v5205
    %v5265 = vmul.f32 %v4982, %v5205
    %v5266 = vmul.f32 %v4983, %v5205
    %v5267 = vmul.f32 %v4984, %v5205
    %v5268 = vmul.f32 %v4985, %v5205
    %v5269 = vmul.f32 %v4986, %v5205
    %v5270 = vmul.f32 %v4987, %v5205
    %v5272 = vlaneseq
    %v5273 = vshrl.u32 %v5272, 7
    %v5274 = vsub.s32 0, %v5273
    %v5275 = vrot.slane %v5200, %v5274
    %v5277 = vadd.f32 %v5207, %v5275
    %v5278 = vadd.f32 %v5208, %v5275
    %v5279 = vadd.f32 %v5209, %v5275
    %v5280 = vadd.f32 %v5210, %v5275
    %v5281 = vadd.f32 %v5211, %v5275
    %v5282 = vadd.f32 %v5212, %v5275
    %v5283 = vadd.f32 %v5213, %v5275
    %v5284 = vadd.f32 %v5214, %v5275
    %v5285 = vadd.f32 %v5215, %v5275
    %v5286 = vadd.f32 %v5216, %v5275
    %v5287 = vadd.f32 %v5217, %v5275
    %v5288 = vadd.f32 %v5218, %v5275
    %v5289 = vadd.f32 %v5219, %v5275
    %v5290 = vadd.f32 %v5220, %v5275
    %v5291 = vadd.f32 %v5221, %v5275
    %v5292 = vadd.f32 %v5222, %v5275
    %v5293 = vadd.f32 %v5223, %v5275
    %v5294 = vadd.f32 %v5224, %v5275
    %v5295 = vadd.f32 %v5225, %v5275
    %v5296 = vadd.f32 %v5226, %v5275
    %v5297 = vadd.f32 %v5227, %v5275
    %v5298 = vadd.f32 %v5228, %v5275
    %v5299 = vadd.f32 %v5229, %v5275
    %v5300 = vadd.f32 %v5230, %v5275
    %v5301 = vadd.f32 %v5231, %v5275
    %v5302 = vadd.f32 %v5232, %v5275
    %v5303 = vadd.f32 %v5233, %v5275
    %v5304 = vadd.f32 %v5234, %v5275
    %v5305 = vadd.f32 %v5235, %v5275
    %v5306 = vadd.f32 %v5236, %v5275
    %v5307 = vadd.f32 %v5237, %v5275
    %v5308 = vadd.f32 %v5238, %v5275
    %v5309 = vadd.f32 %v5239, %v5275
    %v5310 = vadd.f32 %v5240, %v5275
    %v5311 = vadd.f32 %v5241, %v5275
    %v5312 = vadd.f32 %v5242, %v5275
    %v5313 = vadd.f32 %v5243, %v5275
    %v5314 = vadd.f32 %v5244, %v5275
    %v5315 = vadd.f32 %v5245, %v5275
    %v5316 = vadd.f32 %v5246, %v5275
    %v5317 = vadd.f32 %v5247, %v5275
    %v5318 = vadd.f32 %v5248, %v5275
    %v5319 = vadd.f32 %v5249, %v5275
    %v5320 = vadd.f32 %v5250, %v5275
    %v5321 = vadd.f32 %v5251, %v5275
    %v5322 = vadd.f32 %v5252, %v5275
    %v5323 = vadd.f32 %v5253, %v5275
    %v5324 = vadd.f32 %v5254, %v5275
    %v5325 = vadd.f32 %v5255, %v5275
    %v5326 = vadd.f32 %v5256, %v5275
    %v5327 = vadd.f32 %v5257, %v5275
    %v5328 = vadd.f32 %v5258, %v5275
    %v5329 = vadd.f32 %v5259, %v5275
    %v5330 = vadd.f32 %v5260, %v5275
    %v5331 = vadd.f32 %v5261, %v5275
    %v5332 = vadd.f32 %v5262, %v5275
    %v5333 = vadd.f32 %v5263, %v5275
    %v5334 = vadd.f32 %v5264, %v5275
    %v5335 = vadd.f32 %v5265, %v5275
    %v5336 = vadd.f32 %v5266, %v5275
    %v5337 = vadd.f32 %v5267, %v5275
    %v5338 = vadd.f32 %v5268, %v5275
    %v5339 = vadd.f32 %v5269, %v5275
    %v5340 = vadd.f32 %v5270, %v5275
    %5341 = vst [vmem:[%s217 + $0x1] sm:$0xff] %v5277
    %5342 = vst [vmem:[%s217 + $0x9] sm:$0xff] %v5278
    %5343 = vst [vmem:[%s217 + $0x19] sm:$0xff] %v5279
    %5344 = vst [vmem:[%s217 + $0x21] sm:$0xff] %v5280
    %5345 = vst [vmem:[%s217 + $0x31] sm:$0xff] %v5281
    %5346 = vst [vmem:[%s217 + $0x39] sm:$0xff] %v5282
    %5347 = vst [vmem:[%s217 + $0x49] sm:$0xff] %v5283
    %5348 = vst [vmem:[%s217 + $0x51] sm:$0xff] %v5284
    %5349 = vst [vmem:[%s217 + $0x61] sm:$0xff] %v5285
    %5350 = vst [vmem:[%s217 + $0x69] sm:$0xff] %v5286
    %5351 = vst [vmem:[%s217 + $0x79] sm:$0xff] %v5287
    %5352 = vst [vmem:[%s217 + $0x81] sm:$0xff] %v5288
    %5353 = vst [vmem:[%s217 + $0x91] sm:$0xff] %v5289
    %5354 = vst [vmem:[%s217 + $0x99] sm:$0xff] %v5290
    %5355 = vst [vmem:[%s217 + $0xa9] sm:$0xff] %v5291
    %5356 = vst [vmem:[%s217 + $0xb1] sm:$0xff] %v5292
    %5357 = vst [vmem:[%s217 + $0xc1] sm:$0xff] %v5293
    %5358 = vst [vmem:[%s217 + $0xc9] sm:$0xff] %v5294
    %5359 = vst [vmem:[%s217 + $0xd9] sm:$0xff] %v5295
    %5360 = vst [vmem:[%s217 + $0xe1] sm:$0xff] %v5296
    %5361 = vst [vmem:[%s217 + $0xf1] sm:$0xff] %v5297
    %5362 = vst [vmem:[%s217 + $0xf9] sm:$0xff] %v5298
    %5363 = vst [vmem:[%s217 + $0x109] sm:$0xff] %v5299
    %5364 = vst [vmem:[%s217 + $0x111] sm:$0xff] %v5300
    %5365 = vst [vmem:[%s217 + $0x121] sm:$0xff] %v5301
    %5366 = vst [vmem:[%s217 + $0x129] sm:$0xff] %v5302
    %5367 = vst [vmem:[%s217 + $0x139] sm:$0xff] %v5303
    %5368 = vst [vmem:[%s217 + $0x141] sm:$0xff] %v5304
    %5369 = vst [vmem:[%s217 + $0x151] sm:$0xff] %v5305
    %5370 = vst [vmem:[%s217 + $0x159] sm:$0xff] %v5306
    %5371 = vst [vmem:[%s217 + $0x169] sm:$0xff] %v5307
    %5372 = vst [vmem:[%s217 + $0x171] sm:$0xff] %v5308
    %5373 = vst [vmem:[%s217 + $0x1b1] sm:$0xff] %v5309
    %5374 = vst [vmem:[%s217 + $0x1b9] sm:$0xff] %v5310
    %5375 = vst [vmem:[%s217 + $0x1c9] sm:$0xff] %v5311
    %5376 = vst [vmem:[%s217 + $0x1d1] sm:$0xff] %v5312
    %5377 = vst [vmem:[%s217 + $0x1e1] sm:$0xff] %v5313
    %5378 = vst [vmem:[%s217 + $0x1e9] sm:$0xff] %v5314
    %5379 = vst [vmem:[%s217 + $0x1f9] sm:$0xff] %v5315
    %5380 = vst [vmem:[%s217 + $0x201] sm:$0xff] %v5316
    %5381 = vst [vmem:[%s217 + $0x211] sm:$0xff] %v5317
    %5382 = vst [vmem:[%s217 + $0x219] sm:$0xff] %v5318
    %5383 = vst [vmem:[%s217 + $0x229] sm:$0xff] %v5319
    %5384 = vst [vmem:[%s217 + $0x231] sm:$0xff] %v5320
    %5385 = vst [vmem:[%s217 + $0x241] sm:$0xff] %v5321
    %5386 = vst [vmem:[%s217 + $0x249] sm:$0xff] %v5322
    %5387 = vst [vmem:[%s217 + $0x259] sm:$0xff] %v5323
    %5388 = vst [vmem:[%s217 + $0x261] sm:$0xff] %v5324
    %5389 = vst [vmem:[%s217 + $0x271] sm:$0xff] %v5325
    %5390 = vst [vmem:[%s217 + $0x279] sm:$0xff] %v5326
    %5391 = vst [vmem:[%s217 + $0x289] sm:$0xff] %v5327
    %5392 = vst [vmem:[%s217 + $0x291] sm:$0xff] %v5328
    %5393 = vst [vmem:[%s217 + $0x2a1] sm:$0xff] %v5329
    %5394 = vst [vmem:[%s217 + $0x2a9] sm:$0xff] %v5330
    %5395 = vst [vmem:[%s217 + $0x2b9] sm:$0xff] %v5331
    %5396 = vst [vmem:[%s217 + $0x2c1] sm:$0xff] %v5332
    %5397 = vst [vmem:[%s217 + $0x2d1] sm:$0xff] %v5333
    %5398 = vst [vmem:[%s217 + $0x2d9] sm:$0xff] %v5334
    %5399 = vst [vmem:[%s217 + $0x2e9] sm:$0xff] %v5335
    %5400 = vst [vmem:[%s217 + $0x2f1] sm:$0xff] %v5336
    %5401 = vst [vmem:[%s217 + $0x301] sm:$0xff] %v5337
    %5402 = vst [vmem:[%s217 + $0x309] sm:$0xff] %v5338
    %5403 = vst [vmem:[%s217 + $0x319] sm:$0xff] %v5339
    %5404 = vst [vmem:[%s217 + $0x321] sm:$0xff] %v5340
    %v5405 = vld [vmem:[#allocation2] sm:$0xff]
    %v5406 = vld [vmem:[#allocation2 + $0x8] sm:$0xff]
    %v5407 = vld [vmem:[#allocation2 + $0x18] sm:$0xff]
    %v5408 = vld [vmem:[#allocation2 + $0x20] sm:$0xff]
    %v5409 = vld [vmem:[#allocation2 + $0x30] sm:$0xff]
    %v5410 = vld [vmem:[#allocation2 + $0x38] sm:$0xff]
    %v5411 = vld [vmem:[#allocation2 + $0x48] sm:$0xff]
    %v5412 = vld [vmem:[#allocation2 + $0x50] sm:$0xff]
    %v5413 = vld [vmem:[#allocation2 + $0x60] sm:$0xff]
    %v5414 = vld [vmem:[#allocation2 + $0x68] sm:$0xff]
    %v5415 = vld [vmem:[#allocation2 + $0x78] sm:$0xff]
    %v5416 = vld [vmem:[#allocation2 + $0x80] sm:$0xff]
    %v5417 = vld [vmem:[#allocation2 + $0x90] sm:$0xff]
    %v5418 = vld [vmem:[#allocation2 + $0x98] sm:$0xff]
    %v5419 = vld [vmem:[#allocation2 + $0xa8] sm:$0xff]
    %v5420 = vld [vmem:[#allocation2 + $0xb0] sm:$0xff]
    %v5421 = vld [vmem:[#allocation2 + $0xc0] sm:$0xff]
    %v5422 = vld [vmem:[#allocation2 + $0xc8] sm:$0xff]
    %v5423 = vld [vmem:[#allocation2 + $0xd8] sm:$0xff]
    %v5424 = vld [vmem:[#allocation2 + $0xe0] sm:$0xff]
    %v5425 = vld [vmem:[#allocation2 + $0xf0] sm:$0xff]
    %v5426 = vld [vmem:[#allocation2 + $0xf8] sm:$0xff]
    %v5427 = vld [vmem:[#allocation2 + $0x108] sm:$0xff]
    %v5428 = vld [vmem:[#allocation2 + $0x110] sm:$0xff]
    %v5429 = vld [vmem:[#allocation2 + $0x120] sm:$0xff]
    %v5430 = vld [vmem:[#allocation2 + $0x128] sm:$0xff]
    %v5431 = vld [vmem:[#allocation2 + $0x138] sm:$0xff]
    %v5432 = vld [vmem:[#allocation2 + $0x140] sm:$0xff]
    %v5433 = vld [vmem:[#allocation2 + $0x150] sm:$0xff]
    %v5434 = vld [vmem:[#allocation2 + $0x158] sm:$0xff]
    %v5435 = vld [vmem:[#allocation2 + $0x168] sm:$0xff]
    %v5436 = vld [vmem:[#allocation2 + $0x170] sm:$0xff]
    %v5437 = vld [vmem:[#allocation2 + $0x1b0] sm:$0xff]
    %v5438 = vld [vmem:[#allocation2 + $0x1b8] sm:$0xff]
    %v5439 = vld [vmem:[#allocation2 + $0x1c8] sm:$0xff]
    %v5440 = vld [vmem:[#allocation2 + $0x1d0] sm:$0xff]
    %v5441 = vld [vmem:[#allocation2 + $0x1e0] sm:$0xff]
    %v5442 = vld [vmem:[#allocation2 + $0x1e8] sm:$0xff]
    %v5443 = vld [vmem:[#allocation2 + $0x1f8] sm:$0xff]
    %v5444 = vld [vmem:[#allocation2 + $0x200] sm:$0xff]
    %v5445 = vld [vmem:[#allocation2 + $0x210] sm:$0xff]
    %v5446 = vld [vmem:[#allocation2 + $0x218] sm:$0xff]
    %v5447 = vld [vmem:[#allocation2 + $0x228] sm:$0xff]
    %v5448 = vld [vmem:[#allocation2 + $0x230] sm:$0xff]
    %v5449 = vld [vmem:[#allocation2 + $0x240] sm:$0xff]
    %v5450 = vld [vmem:[#allocation2 + $0x248] sm:$0xff]
    %v5451 = vld [vmem:[#allocation2 + $0x258] sm:$0xff]
    %v5452 = vld [vmem:[#allocation2 + $0x260] sm:$0xff]
    %v5453 = vld [vmem:[#allocation2 + $0x270] sm:$0xff]
    %v5454 = vld [vmem:[#allocation2 + $0x278] sm:$0xff]
    %v5455 = vld [vmem:[#allocation2 + $0x288] sm:$0xff]
    %v5456 = vld [vmem:[#allocation2 + $0x290] sm:$0xff]
    %v5457 = vld [vmem:[#allocation2 + $0x2a0] sm:$0xff]
    %v5458 = vld [vmem:[#allocation2 + $0x2a8] sm:$0xff]
    %v5459 = vld [vmem:[#allocation2 + $0x2b8] sm:$0xff]
    %v5460 = vld [vmem:[#allocation2 + $0x2c0] sm:$0xff]
    %v5461 = vld [vmem:[#allocation2 + $0x2d0] sm:$0xff]
    %v5462 = vld [vmem:[#allocation2 + $0x2d8] sm:$0xff]
    %v5463 = vld [vmem:[#allocation2 + $0x2e8] sm:$0xff]
    %v5464 = vld [vmem:[#allocation2 + $0x2f0] sm:$0xff]
    %v5465 = vld [vmem:[#allocation2 + $0x300] sm:$0xff]
    %v5466 = vld [vmem:[#allocation2 + $0x308] sm:$0xff]
    %v5467 = vld [vmem:[#allocation2 + $0x318] sm:$0xff]
    %v5468 = vld [vmem:[#allocation2 + $0x320] sm:$0xff]
    %v5469 = vld [vmem:[#allocation8] sm:$0xff]
    %v5470 = vld [vmem:[#allocation8 + $0x8] sm:$0xff]
    %v5471 = vld [vmem:[#allocation8 + $0x10] sm:$0xff]
    %v5472 = vld [vmem:[#allocation8 + $0x18] sm:$0xff]
    %v5473 = vld [vmem:[#allocation8 + $0x20] sm:$0xff]
    %v5474 = vld [vmem:[#allocation8 + $0x28] sm:$0xff]
    %v5475 = vld [vmem:[#allocation8 + $0x30] sm:$0xff]
    %v5476 = vld [vmem:[#allocation8 + $0x38] sm:$0xff]
    %v5477 = vld [vmem:[#allocation8 + $0x40] sm:$0xff]
    %v5478 = vld [vmem:[#allocation8 + $0x48] sm:$0xff]
    %v5479 = vld [vmem:[#allocation8 + $0x50] sm:$0xff]
    %v5480 = vld [vmem:[#allocation8 + $0x58] sm:$0xff]
    %v5481 = vld [vmem:[#allocation8 + $0x60] sm:$0xff]
    %v5482 = vld [vmem:[#allocation8 + $0x68] sm:$0xff]
    %v5483 = vld [vmem:[#allocation8 + $0x70] sm:$0xff]
    %v5484 = vld [vmem:[#allocation8 + $0x78] sm:$0xff]
    %v5485 = vld [vmem:[#allocation2 + $0x1] sm:$0xff]
    %v5486 = vld [vmem:[#allocation2 + $0x9] sm:$0xff]
    %v5487 = vld [vmem:[#allocation2 + $0x19] sm:$0xff]
    %v5488 = vld [vmem:[#allocation2 + $0x21] sm:$0xff]
    %v5489 = vld [vmem:[#allocation2 + $0x31] sm:$0xff]
    %v5490 = vld [vmem:[#allocation2 + $0x39] sm:$0xff]
    %v5491 = vld [vmem:[#allocation2 + $0x49] sm:$0xff]
    %v5492 = vld [vmem:[#allocation2 + $0x51] sm:$0xff]
    %v5493 = vld [vmem:[#allocation2 + $0x61] sm:$0xff]
    %v5494 = vld [vmem:[#allocation2 + $0x69] sm:$0xff]
    %v5495 = vld [vmem:[#allocation2 + $0x79] sm:$0xff]
    %v5496 = vld [vmem:[#allocation2 + $0x81] sm:$0xff]
    %v5497 = vld [vmem:[#allocation2 + $0x91] sm:$0xff]
    %v5498 = vld [vmem:[#allocation2 + $0x99] sm:$0xff]
    %v5499 = vld [vmem:[#allocation2 + $0xa9] sm:$0xff]
    %v5500 = vld [vmem:[#allocation2 + $0xb1] sm:$0xff]
    %v5501 = vld [vmem:[#allocation2 + $0xc1] sm:$0xff]
    %v5502 = vld [vmem:[#allocation2 + $0xc9] sm:$0xff]
    %v5503 = vld [vmem:[#allocation2 + $0xd9] sm:$0xff]
    %v5504 = vld [vmem:[#allocation2 + $0xe1] sm:$0xff]
    %v5505 = vld [vmem:[#allocation2 + $0xf1] sm:$0xff]
    %v5506 = vld [vmem:[#allocation2 + $0xf9] sm:$0xff]
    %v5507 = vld [vmem:[#allocation2 + $0x109] sm:$0xff]
    %v5508 = vld [vmem:[#allocation2 + $0x111] sm:$0xff]
    %v5509 = vld [vmem:[#allocation2 + $0x121] sm:$0xff]
    %v5510 = vld [vmem:[#allocation2 + $0x129] sm:$0xff]
    %v5511 = vld [vmem:[#allocation2 + $0x139] sm:$0xff]
    %v5512 = vld [vmem:[#allocation2 + $0x141] sm:$0xff]
    %v5513 = vld [vmem:[#allocation2 + $0x151] sm:$0xff]
    %v5514 = vld [vmem:[#allocation2 + $0x159] sm:$0xff]
    %v5515 = vld [vmem:[#allocation2 + $0x169] sm:$0xff]
    %v5516 = vld [vmem:[#allocation2 + $0x171] sm:$0xff]
    %v5517 = vld [vmem:[#allocation2 + $0x1b1] sm:$0xff]
    %v5518 = vld [vmem:[#allocation2 + $0x1b9] sm:$0xff]
    %v5519 = vld [vmem:[#allocation2 + $0x1c9] sm:$0xff]
    %v5520 = vld [vmem:[#allocation2 + $0x1d1] sm:$0xff]
    %v5521 = vld [vmem:[#allocation2 + $0x1e1] sm:$0xff]
    %v5522 = vld [vmem:[#allocation2 + $0x1e9] sm:$0xff]
    %v5523 = vld [vmem:[#allocation2 + $0x1f9] sm:$0xff]
    %v5524 = vld [vmem:[#allocation2 + $0x201] sm:$0xff]
    %v5525 = vld [vmem:[#allocation2 + $0x211] sm:$0xff]
    %v5526 = vld [vmem:[#allocation2 + $0x219] sm:$0xff]
    %v5527 = vld [vmem:[#allocation2 + $0x229] sm:$0xff]
    %v5528 = vld [vmem:[#allocation2 + $0x231] sm:$0xff]
    %v5529 = vld [vmem:[#allocation2 + $0x241] sm:$0xff]
    %v5530 = vld [vmem:[#allocation2 + $0x249] sm:$0xff]
    %v5531 = vld [vmem:[#allocation2 + $0x259] sm:$0xff]
    %v5532 = vld [vmem:[#allocation2 + $0x261] sm:$0xff]
    %v5533 = vld [vmem:[#allocation2 + $0x271] sm:$0xff]
    %v5534 = vld [vmem:[#allocation2 + $0x279] sm:$0xff]
    %v5535 = vld [vmem:[#allocation2 + $0x289] sm:$0xff]
    %v5536 = vld [vmem:[#allocation2 + $0x291] sm:$0xff]
    %v5537 = vld [vmem:[#allocation2 + $0x2a1] sm:$0xff]
    %v5538 = vld [vmem:[#allocation2 + $0x2a9] sm:$0xff]
    %v5539 = vld [vmem:[#allocation2 + $0x2b9] sm:$0xff]
    %v5540 = vld [vmem:[#allocation2 + $0x2c1] sm:$0xff]
    %v5541 = vld [vmem:[#allocation2 + $0x2d1] sm:$0xff]
    %v5542 = vld [vmem:[#allocation2 + $0x2d9] sm:$0xff]
    %v5543 = vld [vmem:[#allocation2 + $0x2e9] sm:$0xff]
    %v5544 = vld [vmem:[#allocation2 + $0x2f1] sm:$0xff]
    %v5545 = vld [vmem:[#allocation2 + $0x301] sm:$0xff]
    %v5546 = vld [vmem:[#allocation2 + $0x309] sm:$0xff]
    %v5547 = vld [vmem:[#allocation2 + $0x319] sm:$0xff]
    %v5548 = vld [vmem:[#allocation2 + $0x321] sm:$0xff]
    %s5549 = scalar_lea.vmem [#allocation8], 128
    %v5550 = vld [vmem:[%s5549] sm:$0xff]
    %v5551 = vld [vmem:[%s5549 + $0x8] sm:$0xff]
    %v5552 = vld [vmem:[%s5549 + $0x10] sm:$0xff]
    %v5553 = vld [vmem:[%s5549 + $0x18] sm:$0xff]
    %v5554 = vld [vmem:[%s5549 + $0x20] sm:$0xff]
    %v5555 = vld [vmem:[%s5549 + $0x28] sm:$0xff]
    %v5556 = vld [vmem:[%s5549 + $0x30] sm:$0xff]
    %v5557 = vld [vmem:[%s5549 + $0x38] sm:$0xff]
    %v5558 = vld [vmem:[%s5549 + $0x40] sm:$0xff]
    %v5559 = vld [vmem:[%s5549 + $0x48] sm:$0xff]
    %v5560 = vld [vmem:[%s5549 + $0x50] sm:$0xff]
    %v5561 = vld [vmem:[%s5549 + $0x58] sm:$0xff]
    %v5562 = vld [vmem:[%s5549 + $0x60] sm:$0xff]
    %v5563 = vld [vmem:[%s5549 + $0x68] sm:$0xff]
    %v5564 = vld [vmem:[%s5549 + $0x70] sm:$0xff]
    %v5565 = vld [vmem:[%s5549 + $0x78] sm:$0xff]
    %5566 = vmatprep.subr.mxu0 0.0
    %5567 = vmatpush1.msra.mxu0 %v5550
    %5568 = vmatprep.subr.mxu0 0.0
    %5569 = vmatpush1.msra.mxu0 %v5551
    %5570 = vmatprep.subr.mxu0 0.0
    %5571 = vmatpush1.msra.mxu0 %v5552
    %5572 = vmatprep.subr.mxu0 0.0
    %5573 = vmatpush1.msra.mxu0 %v5553
    %5574 = vmatprep.subr.mxu0 0.0
    %5575 = vmatpush1.msra.mxu0 %v5554
    %5576 = vmatprep.subr.mxu0 0.0
    %5577 = vmatpush1.msra.mxu0 %v5555
    %5578 = vmatprep.subr.mxu0 0.0
    %5579 = vmatpush1.msra.mxu0 %v5556
    %5580 = vmatprep.subr.mxu0 0.0
    %5581 = vmatpush1.msra.mxu0 %v5557
    %5582 = vmatprep.subr.mxu0 0.0
    %5583 = vmatpush1.msra.mxu0 %v5558
    %5584 = vmatprep.subr.mxu0 0.0
    %5585 = vmatpush1.msra.mxu0 %v5559
    %5586 = vmatprep.subr.mxu0 0.0
    %5587 = vmatpush1.msra.mxu0 %v5560
    %5588 = vmatprep.subr.mxu0 0.0
    %5589 = vmatpush1.msra.mxu0 %v5561
    %5590 = vmatprep.subr.mxu0 0.0
    %5591 = vmatpush1.msra.mxu0 %v5562
    %5592 = vmatprep.subr.mxu0 0.0
    %5593 = vmatpush1.msra.mxu0 %v5563
    %5594 = vmatprep.subr.mxu0 0.0
    %5595 = vmatpush1.msra.mxu0 %v5564
    %5596 = vmatprep.subr.mxu0 0.0
    %5597 = vmatpush1.msra.mxu0 %v5565
    %5598 = vmatprep.subr.mxu0 0.0
    %5599 = vmatpush1.msra.mxu0 0.0
    %5600 = vmatprep.subr.mxu0 0.0
    %5601 = vmatpush1.msra.mxu0 0.0
    %5602 = vmatprep.subr.mxu0 0.0
    %5603 = vmatpush1.msra.mxu0 0.0
    %5604 = vmatprep.subr.mxu0 0.0
    %5605 = vmatpush1.msra.mxu0 0.0
    %5606 = vmatprep.subr.mxu0 0.0
    %5607 = vmatpush1.msra.mxu0 0.0
    %5608 = vmatprep.subr.mxu0 0.0
    %5609 = vmatpush1.msra.mxu0 0.0
    %5610 = vmatprep.subr.mxu0 0.0
    %5611 = vmatpush1.msra.mxu0 0.0
    %5612 = vmatprep.subr.mxu0 0.0
    %5613 = vmatpush1.msra.mxu0 0.0
    %5614 = vmatprep.subr.mxu0 0.0
    %5615 = vmatpush1.msra.mxu0 0.0
    %5616 = vmatprep.subr.mxu0 0.0
    %5617 = vmatpush1.msra.mxu0 0.0
    %5618 = vmatprep.subr.mxu0 0.0
    %5619 = vmatpush1.msra.mxu0 0.0
    %5620 = vmatprep.subr.mxu0 0.0
    %5621 = vmatpush1.msra.mxu0 0.0
    %5622 = vmatprep.subr.mxu0 0.0
    %5623 = vmatpush1.msra.mxu0 0.0
    %5624 = vmatprep.subr.mxu0 0.0
    %5625 = vmatpush1.msra.mxu0 0.0
    %5626 = vmatprep.subr.mxu0 0.0
    %5627 = vmatpush1.msra.mxu0 0.0
    %5628 = vmatprep.subr.mxu0 0.0
    %5629 = vmatpush1.msra.mxu0 0.0
    %5630 = vmatprep.mubr.f32.mxu0 0.0
    %5631 = vmatmul.mubr.f32.gmra.mrb[0].mxu0 %v5485
    %v5632 = vpop.f32.mrb[0].mxu0
    %v5633 = vadd.f32 0.0, %v5632
    %v5634 = vpop.f32.mrb[0].mxu0
    %5635 = vmatprep.mubr.f32.mxu0 0.0
    %5636 = vmatmul.mubr.f32.gmra.mrb[0].mxu0 %v5486
    %v5637 = vpop.f32.mrb[0].mxu0
    %v5638 = vadd.f32 0.0, %v5637
    %v5639 = vpop.f32.mrb[0].mxu0
    %5640 = vmatprep.mubr.f32.mxu0 0.0
    %5641 = vmatmul.mubr.f32.gmra.mrb[0].mxu0 %v5487
    %v5642 = vpop.f32.mrb[0].mxu0
    %v5643 = vadd.f32 0.0, %v5642
    %v5644 = vpop.f32.mrb[0].mxu0
    %5645 = vmatprep.mubr.f32.mxu0 0.0
    %5646 = vmatmul.mubr.f32.gmra.mrb[0].mxu0 %v5488
    %v5647 = vpop.f32.mrb[0].mxu0
    %v5648 = vadd.f32 0.0, %v5647
    %v5649 = vpop.f32.mrb[0].mxu0
    %5650 = vmatprep.mubr.f32.mxu0 0.0
    %5651 = vmatmul.mubr.f32.gmra.mrb[0].mxu0 %v5489
    %v5652 = vpop.f32.mrb[0].mxu0
    %v5653 = vadd.f32 0.0, %v5652
    %v5654 = vpop.f32.mrb[0].mxu0
    %5655 = vmatprep.mubr.f32.mxu0 0.0
    %5656 = vmatmul.mubr.f32.gmra.mrb[0].mxu0 %v5490
    %v5657 = vpop.f32.mrb[0].mxu0
    %v5658 = vadd.f32 0.0, %v5657
    %v5659 = vpop.f32.mrb[0].mxu0
    %5660 = vmatprep.mubr.f32.mxu0 0.0
    %5661 = vmatmul.mubr.f32.gmra.mrb[0].mxu0 %v5491
    %v5662 = vpop.f32.mrb[0].mxu0
    %v5663 = vadd.f32 0.0, %v5662
    %v5664 = vpop.f32.mrb[0].mxu0
    %5665 = vmatprep.mubr.f32.mxu0 0.0
    %5666 = vmatmul.mubr.f32.gmra.mrb[0].mxu0 %v5492
    %v5667 = vpop.f32.mrb[0].mxu0
    %v5668 = vadd.f32 0.0, %v5667
    %v5669 = vpop.f32.mrb[0].mxu0
    %5670 = vmatprep.mubr.f32.mxu0 0.0
    %5671 = vmatmul.mubr.f32.gmra.mrb[0].mxu0 %v5493
    %v5672 = vpop.f32.mrb[0].mxu0
    %v5673 = vadd.f32 0.0, %v5672
    %v5674 = vpop.f32.mrb[0].mxu0
    %5675 = vmatprep.mubr.f32.mxu0 0.0
    %5676 = vmatmul.mubr.f32.gmra.mrb[0].mxu0 %v5494
    %v5677 = vpop.f32.mrb[0].mxu0
    %v5678 = vadd.f32 0.0, %v5677
    %v5679 = vpop.f32.mrb[0].mxu0
    %5680 = vmatprep.mubr.f32.mxu0 0.0
    %5681 = vmatmul.mubr.f32.gmra.mrb[0].mxu0 %v5495
    %v5682 = vpop.f32.mrb[0].mxu0
    %v5683 = vadd.f32 0.0, %v5682
    %v5684 = vpop.f32.mrb[0].mxu0
    %5685 = vmatprep.mubr.f32.mxu0 0.0
    %5686 = vmatmul.mubr.f32.gmra.mrb[0].mxu0 %v5496
    %v5687 = vpop.f32.mrb[0].mxu0
    %v5688 = vadd.f32 0.0, %v5687
    %v5689 = vpop.f32.mrb[0].mxu0
    %5690 = vmatprep.mubr.f32.mxu0 0.0
    %5691 = vmatmul.mubr.f32.gmra.mrb[0].mxu0 %v5497
    %v5692 = vpop.f32.mrb[0].mxu0
    %v5693 = vadd.f32 0.0, %v5692
    %v5694 = vpop.f32.mrb[0].mxu0
    %5695 = vmatprep.mubr.f32.mxu0 0.0
    %5696 = vmatmul.mubr.f32.gmra.mrb[0].mxu0 %v5498
    %v5697 = vpop.f32.mrb[0].mxu0
    %v5698 = vadd.f32 0.0, %v5697
    %v5699 = vpop.f32.mrb[0].mxu0
    %5700 = vmatprep.mubr.f32.mxu0 0.0
    %5701 = vmatmul.mubr.f32.gmra.mrb[0].mxu0 %v5499
    %v5702 = vpop.f32.mrb[0].mxu0
    %v5703 = vadd.f32 0.0, %v5702
    %v5704 = vpop.f32.mrb[0].mxu0
    %5705 = vmatprep.mubr.f32.mxu0 0.0
    %5706 = vmatmul.mubr.f32.gmra.mrb[0].mxu0 %v5500
    %v5707 = vpop.f32.mrb[0].mxu0
    %v5708 = vadd.f32 0.0, %v5707
    %v5709 = vpop.f32.mrb[0].mxu0
    %5710 = vmatprep.mubr.f32.mxu0 0.0
    %5711 = vmatmul.mubr.f32.gmra.mrb[0].mxu0 %v5501
    %v5712 = vpop.f32.mrb[0].mxu0
    %v5713 = vadd.f32 0.0, %v5712
    %v5714 = vpop.f32.mrb[0].mxu0
    %5715 = vmatprep.mubr.f32.mxu0 0.0
    %5716 = vmatmul.mubr.f32.gmra.mrb[0].mxu0 %v5502
    %v5717 = vpop.f32.mrb[0].mxu0
    %v5718 = vadd.f32 0.0, %v5717
    %v5719 = vpop.f32.mrb[0].mxu0
    %5720 = vmatprep.mubr.f32.mxu0 0.0
    %5721 = vmatmul.mubr.f32.gmra.mrb[0].mxu0 %v5503
    %v5722 = vpop.f32.mrb[0].mxu0
    %v5723 = vadd.f32 0.0, %v5722
    %v5724 = vpop.f32.mrb[0].mxu0
    %5725 = vmatprep.mubr.f32.mxu0 0.0
    %5726 = vmatmul.mubr.f32.gmra.mrb[0].mxu0 %v5504
    %v5727 = vpop.f32.mrb[0].mxu0
    %v5728 = vadd.f32 0.0, %v5727
    %v5729 = vpop.f32.mrb[0].mxu0
    %5730 = vmatprep.mubr.f32.mxu0 0.0
    %5731 = vmatmul.mubr.f32.gmra.mrb[0].mxu0 %v5505
    %v5732 = vpop.f32.mrb[0].mxu0
    %v5733 = vadd.f32 0.0, %v5732
    %v5734 = vpop.f32.mrb[0].mxu0
    %5735 = vmatprep.mubr.f32.mxu0 0.0
    %5736 = vmatmul.mubr.f32.gmra.mrb[0].mxu0 %v5506
    %v5737 = vpop.f32.mrb[0].mxu0
    %v5738 = vadd.f32 0.0, %v5737
    %v5739 = vpop.f32.mrb[0].mxu0
    %5740 = vmatprep.mubr.f32.mxu0 0.0
    %5741 = vmatmul.mubr.f32.gmra.mrb[0].mxu0 %v5507
    %v5742 = vpop.f32.mrb[0].mxu0
    %v5743 = vadd.f32 0.0, %v5742
    %v5744 = vpop.f32.mrb[0].mxu0
    %5745 = vmatprep.mubr.f32.mxu0 0.0
    %5746 = vmatmul.mubr.f32.gmra.mrb[0].mxu0 %v5508
    %v5747 = vpop.f32.mrb[0].mxu0
    %v5748 = vadd.f32 0.0, %v5747
    %v5749 = vpop.f32.mrb[0].mxu0
    %5750 = vmatprep.mubr.f32.mxu0 0.0
    %5751 = vmatmul.mubr.f32.gmra.mrb[0].mxu0 %v5509
    %v5752 = vpop.f32.mrb[0].mxu0
    %v5753 = vadd.f32 0.0, %v5752
    %v5754 = vpop.f32.mrb[0].mxu0
    %5755 = vmatprep.mubr.f32.mxu0 0.0
    %5756 = vmatmul.mubr.f32.gmra.mrb[0].mxu0 %v5510
    %v5757 = vpop.f32.mrb[0].mxu0
    %v5758 = vadd.f32 0.0, %v5757
    %v5759 = vpop.f32.mrb[0].mxu0
    %5760 = vmatprep.mubr.f32.mxu0 0.0
    %5761 = vmatmul.mubr.f32.gmra.mrb[0].mxu0 %v5511
    %v5762 = vpop.f32.mrb[0].mxu0
    %v5763 = vadd.f32 0.0, %v5762
    %v5764 = vpop.f32.mrb[0].mxu0
    %5765 = vmatprep.mubr.f32.mxu0 0.0
    %5766 = vmatmul.mubr.f32.gmra.mrb[0].mxu0 %v5512
    %v5767 = vpop.f32.mrb[0].mxu0
    %v5768 = vadd.f32 0.0, %v5767
    %v5769 = vpop.f32.mrb[0].mxu0
    %5770 = vmatprep.mubr.f32.mxu0 0.0
    %5771 = vmatmul.mubr.f32.gmra.mrb[0].mxu0 %v5513
    %v5772 = vpop.f32.mrb[0].mxu0
    %v5773 = vadd.f32 0.0, %v5772
    %v5774 = vpop.f32.mrb[0].mxu0
    %5775 = vmatprep.mubr.f32.mxu0 0.0
    %5776 = vmatmul.mubr.f32.gmra.mrb[0].mxu0 %v5514
    %v5777 = vpop.f32.mrb[0].mxu0
    %v5778 = vadd.f32 0.0, %v5777
    %v5779 = vpop.f32.mrb[0].mxu0
    %5780 = vmatprep.mubr.f32.mxu0 0.0
    %5781 = vmatmul.mubr.f32.gmra.mrb[0].mxu0 %v5515
    %v5782 = vpop.f32.mrb[0].mxu0
    %v5783 = vadd.f32 0.0, %v5782
    %v5784 = vpop.f32.mrb[0].mxu0
    %5785 = vmatprep.mubr.f32.mxu0 0.0
    %5786 = vmatmul.mubr.f32.gmra.mrb[0].mxu0 %v5516
    %v5787 = vpop.f32.mrb[0].mxu0
    %v5788 = vadd.f32 0.0, %v5787
    %v5789 = vpop.f32.mrb[0].mxu0
    %5790 = vmatprep.mubr.f32.mxu0 0.0
    %5791 = vmatmul.mubr.f32.gmra.mrb[0].mxu0 %v5517
    %v5792 = vpop.f32.mrb[0].mxu0
    %v5793 = vadd.f32 0.0, %v5792
    %v5794 = vpop.f32.mrb[0].mxu0
    %5795 = vmatprep.mubr.f32.mxu0 0.0
    %5796 = vmatmul.mubr.f32.gmra.mrb[0].mxu0 %v5518
    %v5797 = vpop.f32.mrb[0].mxu0
    %v5798 = vadd.f32 0.0, %v5797
    %v5799 = vpop.f32.mrb[0].mxu0
    %5800 = vmatprep.mubr.f32.mxu0 0.0
    %5801 = vmatmul.mubr.f32.gmra.mrb[0].mxu0 %v5519
    %v5802 = vpop.f32.mrb[0].mxu0
    %v5803 = vadd.f32 0.0, %v5802
    %v5804 = vpop.f32.mrb[0].mxu0
    %5805 = vmatprep.mubr.f32.mxu0 0.0
    %5806 = vmatmul.mubr.f32.gmra.mrb[0].mxu0 %v5520
    %v5807 = vpop.f32.mrb[0].mxu0
    %v5808 = vadd.f32 0.0, %v5807
    %v5809 = vpop.f32.mrb[0].mxu0
    %5810 = vmatprep.mubr.f32.mxu0 0.0
    %5811 = vmatmul.mubr.f32.gmra.mrb[0].mxu0 %v5521
    %v5812 = vpop.f32.mrb[0].mxu0
    %v5813 = vadd.f32 0.0, %v5812
    %v5814 = vpop.f32.mrb[0].mxu0
    %5815 = vmatprep.mubr.f32.mxu0 0.0
    %5816 = vmatmul.mubr.f32.gmra.mrb[0].mxu0 %v5522
    %v5817 = vpop.f32.mrb[0].mxu0
    %v5818 = vadd.f32 0.0, %v5817
    %v5819 = vpop.f32.mrb[0].mxu0
    %5820 = vmatprep.mubr.f32.mxu0 0.0
    %5821 = vmatmul.mubr.f32.gmra.mrb[0].mxu0 %v5523
    %v5822 = vpop.f32.mrb[0].mxu0
    %v5823 = vadd.f32 0.0, %v5822
    %v5824 = vpop.f32.mrb[0].mxu0
    %5825 = vmatprep.mubr.f32.mxu0 0.0
    %5826 = vmatmul.mubr.f32.gmra.mrb[0].mxu0 %v5524
    %v5827 = vpop.f32.mrb[0].mxu0
    %v5828 = vadd.f32 0.0, %v5827
    %v5829 = vpop.f32.mrb[0].mxu0
    %5830 = vmatprep.mubr.f32.mxu0 0.0
    %5831 = vmatmul.mubr.f32.gmra.mrb[0].mxu0 %v5525
    %v5832 = vpop.f32.mrb[0].mxu0
    %v5833 = vadd.f32 0.0, %v5832
    %v5834 = vpop.f32.mrb[0].mxu0
    %5835 = vmatprep.mubr.f32.mxu0 0.0
    %5836 = vmatmul.mubr.f32.gmra.mrb[0].mxu0 %v5526
    %v5837 = vpop.f32.mrb[0].mxu0
    %v5838 = vadd.f32 0.0, %v5837
    %v5839 = vpop.f32.mrb[0].mxu0
    %5840 = vmatprep.mubr.f32.mxu0 0.0
    %5841 = vmatmul.mubr.f32.gmra.mrb[0].mxu0 %v5527
    %v5842 = vpop.f32.mrb[0].mxu0
    %v5843 = vadd.f32 0.0, %v5842
    %v5844 = vpop.f32.mrb[0].mxu0
    %5845 = vmatprep.mubr.f32.mxu0 0.0
    %5846 = vmatmul.mubr.f32.gmra.mrb[0].mxu0 %v5528
    %v5847 = vpop.f32.mrb[0].mxu0
    %v5848 = vadd.f32 0.0, %v5847
    %v5849 = vpop.f32.mrb[0].mxu0
    %5850 = vmatprep.mubr.f32.mxu0 0.0
    %5851 = vmatmul.mubr.f32.gmra.mrb[0].mxu0 %v5529
    %v5852 = vpop.f32.mrb[0].mxu0
    %v5853 = vadd.f32 0.0, %v5852
    %v5854 = vpop.f32.mrb[0].mxu0
    %5855 = vmatprep.mubr.f32.mxu0 0.0
    %5856 = vmatmul.mubr.f32.gmra.mrb[0].mxu0 %v5530
    %v5857 = vpop.f32.mrb[0].mxu0
    %v5858 = vadd.f32 0.0, %v5857
    %v5859 = vpop.f32.mrb[0].mxu0
    %5860 = vmatprep.mubr.f32.mxu0 0.0
    %5861 = vmatmul.mubr.f32.gmra.mrb[0].mxu0 %v5531
    %v5862 = vpop.f32.mrb[0].mxu0
    %v5863 = vadd.f32 0.0, %v5862
    %v5864 = vpop.f32.mrb[0].mxu0
    %5865 = vmatprep.mubr.f32.mxu0 0.0
    %5866 = vmatmul.mubr.f32.gmra.mrb[0].mxu0 %v5532
    %v5867 = vpop.f32.mrb[0].mxu0
    %v5868 = vadd.f32 0.0, %v5867
    %v5869 = vpop.f32.mrb[0].mxu0
    %5870 = vmatprep.mubr.f32.mxu0 0.0
    %5871 = vmatmul.mubr.f32.gmra.mrb[0].mxu0 %v5533
    %v5872 = vpop.f32.mrb[0].mxu0
    %v5873 = vadd.f32 0.0, %v5872
    %v5874 = vpop.f32.mrb[0].mxu0
    %5875 = vmatprep.mubr.f32.mxu0 0.0
    %5876 = vmatmul.mubr.f32.gmra.mrb[0].mxu0 %v5534
    %v5877 = vpop.f32.mrb[0].mxu0
    %v5878 = vadd.f32 0.0, %v5877
    %v5879 = vpop.f32.mrb[0].mxu0
    %5880 = vmatprep.mubr.f32.mxu0 0.0
    %5881 = vmatmul.mubr.f32.gmra.mrb[0].mxu0 %v5535
    %v5882 = vpop.f32.mrb[0].mxu0
    %v5883 = vadd.f32 0.0, %v5882
    %v5884 = vpop.f32.mrb[0].mxu0
    %5885 = vmatprep.mubr.f32.mxu0 0.0
    %5886 = vmatmul.mubr.f32.gmra.mrb[0].mxu0 %v5536
    %v5887 = vpop.f32.mrb[0].mxu0
    %v5888 = vadd.f32 0.0, %v5887
    %v5889 = vpop.f32.mrb[0].mxu0
    %5890 = vmatprep.mubr.f32.mxu0 0.0
    %5891 = vmatmul.mubr.f32.gmra.mrb[0].mxu0 %v5537
    %v5892 = vpop.f32.mrb[0].mxu0
    %v5893 = vadd.f32 0.0, %v5892
    %v5894 = vpop.f32.mrb[0].mxu0
    %5895 = vmatprep.mubr.f32.mxu0 0.0
    %5896 = vmatmul.mubr.f32.gmra.mrb[0].mxu0 %v5538
    %v5897 = vpop.f32.mrb[0].mxu0
    %v5898 = vadd.f32 0.0, %v5897
    %v5899 = vpop.f32.mrb[0].mxu0
    %5900 = vmatprep.mubr.f32.mxu0 0.0
    %5901 = vmatmul.mubr.f32.gmra.mrb[0].mxu0 %v5539
    %v5902 = vpop.f32.mrb[0].mxu0
    %v5903 = vadd.f32 0.0, %v5902
    %v5904 = vpop.f32.mrb[0].mxu0
    %5905 = vmatprep.mubr.f32.mxu0 0.0
    %5906 = vmatmul.mubr.f32.gmra.mrb[0].mxu0 %v5540
    %v5907 = vpop.f32.mrb[0].mxu0
    %v5908 = vadd.f32 0.0, %v5907
    %v5909 = vpop.f32.mrb[0].mxu0
    %5910 = vmatprep.mubr.f32.mxu0 0.0
    %5911 = vmatmul.mubr.f32.gmra.mrb[0].mxu0 %v5541
    %v5912 = vpop.f32.mrb[0].mxu0
    %v5913 = vadd.f32 0.0, %v5912
    %v5914 = vpop.f32.mrb[0].mxu0
    %5915 = vmatprep.mubr.f32.mxu0 0.0
    %5916 = vmatmul.mubr.f32.gmra.mrb[0].mxu0 %v5542
    %v5917 = vpop.f32.mrb[0].mxu0
    %v5918 = vadd.f32 0.0, %v5917
    %v5919 = vpop.f32.mrb[0].mxu0
    %5920 = vmatprep.mubr.f32.mxu0 0.0
    %5921 = vmatmul.mubr.f32.gmra.mrb[0].mxu0 %v5543
    %v5922 = vpop.f32.mrb[0].mxu0
    %v5923 = vadd.f32 0.0, %v5922
    %v5924 = vpop.f32.mrb[0].mxu0
    %5925 = vmatprep.mubr.f32.mxu0 0.0
    %5926 = vmatmul.mubr.f32.gmra.mrb[0].mxu0 %v5544
    %v5927 = vpop.f32.mrb[0].mxu0
    %v5928 = vadd.f32 0.0, %v5927
    %v5929 = vpop.f32.mrb[0].mxu0
    %5930 = vmatprep.mubr.f32.mxu0 0.0
    %5931 = vmatmul.mubr.f32.gmra.mrb[0].mxu0 %v5545
    %v5932 = vpop.f32.mrb[0].mxu0
    %v5933 = vadd.f32 0.0, %v5932
    %v5934 = vpop.f32.mrb[0].mxu0
    %5935 = vmatprep.mubr.f32.mxu0 0.0
    %5936 = vmatmul.mubr.f32.gmra.mrb[0].mxu0 %v5546
    %v5937 = vpop.f32.mrb[0].mxu0
    %v5938 = vadd.f32 0.0, %v5937
    %v5939 = vpop.f32.mrb[0].mxu0
    %5940 = vmatprep.mubr.f32.mxu0 0.0
    %5941 = vmatmul.mubr.f32.gmra.mrb[0].mxu0 %v5547
    %v5942 = vpop.f32.mrb[0].mxu0
    %v5943 = vadd.f32 0.0, %v5942
    %v5944 = vpop.f32.mrb[0].mxu0
    %5945 = vmatprep.mubr.f32.mxu0 0.0
    %5946 = vmatmul.mubr.f32.gmra.mrb[0].mxu0 %v5548
    %v5947 = vpop.f32.mrb[0].mxu0
    %v5948 = vadd.f32 0.0, %v5947
    %v5949 = vpop.f32.mrb[0].mxu0
    %5950 = vdwg.mxu0
    %5951 = vmatprep.subr.mxu0 0.0
    %5952 = vmatpush1.msra.mxu0 %v5469
    %5953 = vmatprep.subr.mxu0 0.0
    %5954 = vmatpush1.msra.mxu0 %v5470
    %5955 = vmatprep.subr.mxu0 0.0
    %5956 = vmatpush1.msra.mxu0 %v5471
    %5957 = vmatprep.subr.mxu0 0.0
    %5958 = vmatpush1.msra.mxu0 %v5472
    %5959 = vmatprep.subr.mxu0 0.0
    %5960 = vmatpush1.msra.mxu0 %v5473
    %5961 = vmatprep.subr.mxu0 0.0
    %5962 = vmatpush1.msra.mxu0 %v5474
    %5963 = vmatprep.subr.mxu0 0.0
    %5964 = vmatpush1.msra.mxu0 %v5475
    %5965 = vmatprep.subr.mxu0 0.0
    %5966 = vmatpush1.msra.mxu0 %v5476
    %5967 = vmatprep.subr.mxu0 0.0
    %5968 = vmatpush1.msra.mxu0 %v5477
    %5969 = vmatprep.subr.mxu0 0.0
    %5970 = vmatpush1.msra.mxu0 %v5478
    %5971 = vmatprep.subr.mxu0 0.0
    %5972 = vmatpush1.msra.mxu0 %v5479
    %5973 = vmatprep.subr.mxu0 0.0
    %5974 = vmatpush1.msra.mxu0 %v5480
    %5975 = vmatprep.subr.mxu0 0.0
    %5976 = vmatpush1.msra.mxu0 %v5481
    %5977 = vmatprep.subr.mxu0 0.0
    %5978 = vmatpush1.msra.mxu0 %v5482
    %5979 = vmatprep.subr.mxu0 0.0
    %5980 = vmatpush1.msra.mxu0 %v5483
    %5981 = vmatprep.subr.mxu0 0.0
    %5982 = vmatpush1.msra.mxu0 %v5484
    %5983 = vmatprep.subr.mxu0 0.0
    %5984 = vmatpush1.msra.mxu0 0.0
    %5985 = vmatprep.subr.mxu0 0.0
    %5986 = vmatpush1.msra.mxu0 0.0
    %5987 = vmatprep.subr.mxu0 0.0
    %5988 = vmatpush1.msra.mxu0 0.0
    %5989 = vmatprep.subr.mxu0 0.0
    %5990 = vmatpush1.msra.mxu0 0.0
    %5991 = vmatprep.subr.mxu0 0.0
    %5992 = vmatpush1.msra.mxu0 0.0
    %5993 = vmatprep.subr.mxu0 0.0
    %5994 = vmatpush1.msra.mxu0 0.0
    %5995 = vmatprep.subr.mxu0 0.0
    %5996 = vmatpush1.msra.mxu0 0.0
    %5997 = vmatprep.subr.mxu0 0.0
    %5998 = vmatpush1.msra.mxu0 0.0
    %5999 = vmatprep.subr.mxu0 0.0
    %6000 = vmatpush1.msra.mxu0 0.0
    %6001 = vmatprep.subr.mxu0 0.0
    %6002 = vmatpush1.msra.mxu0 0.0
    %6003 = vmatprep.subr.mxu0 0.0
    %6004 = vmatpush1.msra.mxu0 0.0
    %6005 = vmatprep.subr.mxu0 0.0
    %6006 = vmatpush1.msra.mxu0 0.0
    %6007 = vmatprep.subr.mxu0 0.0
    %6008 = vmatpush1.msra.mxu0 0.0
    %6009 = vmatprep.subr.mxu0 0.0
    %6010 = vmatpush1.msra.mxu0 0.0
    %6011 = vmatprep.subr.mxu0 0.0
    %6012 = vmatpush1.msra.mxu0 0.0
    %6013 = vmatprep.subr.mxu0 0.0
    %6014 = vmatpush1.msra.mxu0 0.0
    %6015 = vmatprep.mubr.f32.mxu0 0.0
    %6016 = vmatmul.mubr.f32.gmra.mrb[0].mxu0 %v5405
    %v6017 = vpop.f32.mrb[0].mxu0
    %v6018 = vadd.f32 %v5633, %v6017
    %v6019 = vpop.f32.mrb[0].mxu0
    %6020 = vmatprep.mubr.f32.mxu0 0.0
    %6021 = vmatmul.mubr.f32.gmra.mrb[0].mxu0 %v5406
    %v6022 = vpop.f32.mrb[0].mxu0
    %v6023 = vadd.f32 %v5638, %v6022
    %v6024 = vpop.f32.mrb[0].mxu0
    %6025 = vmatprep.mubr.f32.mxu0 0.0
    %6026 = vmatmul.mubr.f32.gmra.mrb[0].mxu0 %v5407
    %v6027 = vpop.f32.mrb[0].mxu0
    %v6028 = vadd.f32 %v5643, %v6027
    %v6029 = vpop.f32.mrb[0].mxu0
    %6030 = vmatprep.mubr.f32.mxu0 0.0
    %6031 = vmatmul.mubr.f32.gmra.mrb[0].mxu0 %v5408
    %v6032 = vpop.f32.mrb[0].mxu0
    %v6033 = vadd.f32 %v5648, %v6032
    %v6034 = vpop.f32.mrb[0].mxu0
    %6035 = vmatprep.mubr.f32.mxu0 0.0
    %6036 = vmatmul.mubr.f32.gmra.mrb[0].mxu0 %v5409
    %v6037 = vpop.f32.mrb[0].mxu0
    %v6038 = vadd.f32 %v5653, %v6037
    %v6039 = vpop.f32.mrb[0].mxu0
    %6040 = vmatprep.mubr.f32.mxu0 0.0
    %6041 = vmatmul.mubr.f32.gmra.mrb[0].mxu0 %v5410
    %v6042 = vpop.f32.mrb[0].mxu0
    %v6043 = vadd.f32 %v5658, %v6042
    %v6044 = vpop.f32.mrb[0].mxu0
    %6045 = vmatprep.mubr.f32.mxu0 0.0
    %6046 = vmatmul.mubr.f32.gmra.mrb[0].mxu0 %v5411
    %v6047 = vpop.f32.mrb[0].mxu0
    %v6048 = vadd.f32 %v5663, %v6047
    %v6049 = vpop.f32.mrb[0].mxu0
    %6050 = vmatprep.mubr.f32.mxu0 0.0
    %6051 = vmatmul.mubr.f32.gmra.mrb[0].mxu0 %v5412
    %v6052 = vpop.f32.mrb[0].mxu0
    %v6053 = vadd.f32 %v5668, %v6052
    %v6054 = vpop.f32.mrb[0].mxu0
    %6055 = vmatprep.mubr.f32.mxu0 0.0
    %6056 = vmatmul.mubr.f32.gmra.mrb[0].mxu0 %v5413
    %v6057 = vpop.f32.mrb[0].mxu0
    %v6058 = vadd.f32 %v5673, %v6057
    %v6059 = vpop.f32.mrb[0].mxu0
    %6060 = vmatprep.mubr.f32.mxu0 0.0
    %6061 = vmatmul.mubr.f32.gmra.mrb[0].mxu0 %v5414
    %v6062 = vpop.f32.mrb[0].mxu0
    %v6063 = vadd.f32 %v5678, %v6062
    %v6064 = vpop.f32.mrb[0].mxu0
    %6065 = vmatprep.mubr.f32.mxu0 0.0
    %6066 = vmatmul.mubr.f32.gmra.mrb[0].mxu0 %v5415
    %v6067 = vpop.f32.mrb[0].mxu0
    %v6068 = vadd.f32 %v5683, %v6067
    %v6069 = vpop.f32.mrb[0].mxu0
    %6070 = vmatprep.mubr.f32.mxu0 0.0
    %6071 = vmatmul.mubr.f32.gmra.mrb[0].mxu0 %v5416
    %v6072 = vpop.f32.mrb[0].mxu0
    %v6073 = vadd.f32 %v5688, %v6072
    %v6074 = vpop.f32.mrb[0].mxu0
    %6075 = vmatprep.mubr.f32.mxu0 0.0
    %6076 = vmatmul.mubr.f32.gmra.mrb[0].mxu0 %v5417
    %v6077 = vpop.f32.mrb[0].mxu0
    %v6078 = vadd.f32 %v5693, %v6077
    %v6079 = vpop.f32.mrb[0].mxu0
    %6080 = vmatprep.mubr.f32.mxu0 0.0
    %6081 = vmatmul.mubr.f32.gmra.mrb[0].mxu0 %v5418
    %v6082 = vpop.f32.mrb[0].mxu0
    %v6083 = vadd.f32 %v5698, %v6082
    %v6084 = vpop.f32.mrb[0].mxu0
    %6085 = vmatprep.mubr.f32.mxu0 0.0
    %6086 = vmatmul.mubr.f32.gmra.mrb[0].mxu0 %v5419
    %v6087 = vpop.f32.mrb[0].mxu0
    %v6088 = vadd.f32 %v5703, %v6087
    %v6089 = vpop.f32.mrb[0].mxu0
    %6090 = vmatprep.mubr.f32.mxu0 0.0
    %6091 = vmatmul.mubr.f32.gmra.mrb[0].mxu0 %v5420
    %v6092 = vpop.f32.mrb[0].mxu0
    %v6093 = vadd.f32 %v5708, %v6092
    %v6094 = vpop.f32.mrb[0].mxu0
    %6095 = vmatprep.mubr.f32.mxu0 0.0
    %6096 = vmatmul.mubr.f32.gmra.mrb[0].mxu0 %v5421
    %v6097 = vpop.f32.mrb[0].mxu0
    %v6098 = vadd.f32 %v5713, %v6097
    %v6099 = vpop.f32.mrb[0].mxu0
    %6100 = vmatprep.mubr.f32.mxu0 0.0
    %6101 = vmatmul.mubr.f32.gmra.mrb[0].mxu0 %v5422
    %v6102 = vpop.f32.mrb[0].mxu0
    %v6103 = vadd.f32 %v5718, %v6102
    %v6104 = vpop.f32.mrb[0].mxu0
    %6105 = vmatprep.mubr.f32.mxu0 0.0
    %6106 = vmatmul.mubr.f32.gmra.mrb[0].mxu0 %v5423
    %v6107 = vpop.f32.mrb[0].mxu0
    %v6108 = vadd.f32 %v5723, %v6107
    %v6109 = vpop.f32.mrb[0].mxu0
    %6110 = vmatprep.mubr.f32.mxu0 0.0
    %6111 = vmatmul.mubr.f32.gmra.mrb[0].mxu0 %v5424
    %v6112 = vpop.f32.mrb[0].mxu0
    %v6113 = vadd.f32 %v5728, %v6112
    %v6114 = vpop.f32.mrb[0].mxu0
    %6115 = vmatprep.mubr.f32.mxu0 0.0
    %6116 = vmatmul.mubr.f32.gmra.mrb[0].mxu0 %v5425
    %v6117 = vpop.f32.mrb[0].mxu0
    %v6118 = vadd.f32 %v5733, %v6117
    %v6119 = vpop.f32.mrb[0].mxu0
    %6120 = vmatprep.mubr.f32.mxu0 0.0
    %6121 = vmatmul.mubr.f32.gmra.mrb[0].mxu0 %v5426
    %v6122 = vpop.f32.mrb[0].mxu0
    %v6123 = vadd.f32 %v5738, %v6122
    %v6124 = vpop.f32.mrb[0].mxu0
    %6125 = vmatprep.mubr.f32.mxu0 0.0
    %6126 = vmatmul.mubr.f32.gmra.mrb[0].mxu0 %v5427
    %v6127 = vpop.f32.mrb[0].mxu0
    %v6128 = vadd.f32 %v5743, %v6127
    %v6129 = vpop.f32.mrb[0].mxu0
    %6130 = vmatprep.mubr.f32.mxu0 0.0
    %6131 = vmatmul.mubr.f32.gmra.mrb[0].mxu0 %v5428
    %v6132 = vpop.f32.mrb[0].mxu0
    %v6133 = vadd.f32 %v5748, %v6132
    %v6134 = vpop.f32.mrb[0].mxu0
    %6135 = vmatprep.mubr.f32.mxu0 0.0
    %6136 = vmatmul.mubr.f32.gmra.mrb[0].mxu0 %v5429
    %v6137 = vpop.f32.mrb[0].mxu0
    %v6138 = vadd.f32 %v5753, %v6137
    %v6139 = vpop.f32.mrb[0].mxu0
    %6140 = vmatprep.mubr.f32.mxu0 0.0
    %6141 = vmatmul.mubr.f32.gmra.mrb[0].mxu0 %v5430
    %v6142 = vpop.f32.mrb[0].mxu0
    %v6143 = vadd.f32 %v5758, %v6142
    %v6144 = vpop.f32.mrb[0].mxu0
    %6145 = vmatprep.mubr.f32.mxu0 0.0
    %6146 = vmatmul.mubr.f32.gmra.mrb[0].mxu0 %v5431
    %v6147 = vpop.f32.mrb[0].mxu0
    %v6148 = vadd.f32 %v5763, %v6147
    %v6149 = vpop.f32.mrb[0].mxu0
    %6150 = vmatprep.mubr.f32.mxu0 0.0
    %6151 = vmatmul.mubr.f32.gmra.mrb[0].mxu0 %v5432
    %v6152 = vpop.f32.mrb[0].mxu0
    %v6153 = vadd.f32 %v5768, %v6152
    %v6154 = vpop.f32.mrb[0].mxu0
    %6155 = vmatprep.mubr.f32.mxu0 0.0
    %6156 = vmatmul.mubr.f32.gmra.mrb[0].mxu0 %v5433
    %v6157 = vpop.f32.mrb[0].mxu0
    %v6158 = vadd.f32 %v5773, %v6157
    %v6159 = vpop.f32.mrb[0].mxu0
    %6160 = vmatprep.mubr.f32.mxu0 0.0
    %6161 = vmatmul.mubr.f32.gmra.mrb[0].mxu0 %v5434
    %v6162 = vpop.f32.mrb[0].mxu0
    %v6163 = vadd.f32 %v5778, %v6162
    %v6164 = vpop.f32.mrb[0].mxu0
    %6165 = vmatprep.mubr.f32.mxu0 0.0
    %6166 = vmatmul.mubr.f32.gmra.mrb[0].mxu0 %v5435
    %v6167 = vpop.f32.mrb[0].mxu0
    %v6168 = vadd.f32 %v5783, %v6167
    %v6169 = vpop.f32.mrb[0].mxu0
    %6170 = vmatprep.mubr.f32.mxu0 0.0
    %6171 = vmatmul.mubr.f32.gmra.mrb[0].mxu0 %v5436
    %v6172 = vpop.f32.mrb[0].mxu0
    %v6173 = vadd.f32 %v5788, %v6172
    %v6174 = vpop.f32.mrb[0].mxu0
    %6175 = vmatprep.mubr.f32.mxu0 0.0
    %6176 = vmatmul.mubr.f32.gmra.mrb[0].mxu0 %v5437
    %v6177 = vpop.f32.mrb[0].mxu0
    %v6178 = vadd.f32 %v5793, %v6177
    %v6179 = vpop.f32.mrb[0].mxu0
    %6180 = vmatprep.mubr.f32.mxu0 0.0
    %6181 = vmatmul.mubr.f32.gmra.mrb[0].mxu0 %v5438
    %v6182 = vpop.f32.mrb[0].mxu0
    %v6183 = vadd.f32 %v5798, %v6182
    %v6184 = vpop.f32.mrb[0].mxu0
    %6185 = vmatprep.mubr.f32.mxu0 0.0
    %6186 = vmatmul.mubr.f32.gmra.mrb[0].mxu0 %v5439
    %v6187 = vpop.f32.mrb[0].mxu0
    %v6188 = vadd.f32 %v5803, %v6187
    %v6189 = vpop.f32.mrb[0].mxu0
    %6190 = vmatprep.mubr.f32.mxu0 0.0
    %6191 = vmatmul.mubr.f32.gmra.mrb[0].mxu0 %v5440
    %v6192 = vpop.f32.mrb[0].mxu0
    %v6193 = vadd.f32 %v5808, %v6192
    %v6194 = vpop.f32.mrb[0].mxu0
    %6195 = vmatprep.mubr.f32.mxu0 0.0
    %6196 = vmatmul.mubr.f32.gmra.mrb[0].mxu0 %v5441
    %v6197 = vpop.f32.mrb[0].mxu0
    %v6198 = vadd.f32 %v5813, %v6197
    %v6199 = vpop.f32.mrb[0].mxu0
    %6200 = vmatprep.mubr.f32.mxu0 0.0
    %6201 = vmatmul.mubr.f32.gmra.mrb[0].mxu0 %v5442
    %v6202 = vpop.f32.mrb[0].mxu0
    %v6203 = vadd.f32 %v5818, %v6202
    %v6204 = vpop.f32.mrb[0].mxu0
    %6205 = vmatprep.mubr.f32.mxu0 0.0
    %6206 = vmatmul.mubr.f32.gmra.mrb[0].mxu0 %v5443
    %v6207 = vpop.f32.mrb[0].mxu0
    %v6208 = vadd.f32 %v5823, %v6207
    %v6209 = vpop.f32.mrb[0].mxu0
    %6210 = vmatprep.mubr.f32.mxu0 0.0
    %6211 = vmatmul.mubr.f32.gmra.mrb[0].mxu0 %v5444
    %v6212 = vpop.f32.mrb[0].mxu0
    %v6213 = vadd.f32 %v5828, %v6212
    %v6214 = vpop.f32.mrb[0].mxu0
    %6215 = vmatprep.mubr.f32.mxu0 0.0
    %6216 = vmatmul.mubr.f32.gmra.mrb[0].mxu0 %v5445
    %v6217 = vpop.f32.mrb[0].mxu0
    %v6218 = vadd.f32 %v5833, %v6217
    %v6219 = vpop.f32.mrb[0].mxu0
    %6220 = vmatprep.mubr.f32.mxu0 0.0
    %6221 = vmatmul.mubr.f32.gmra.mrb[0].mxu0 %v5446
    %v6222 = vpop.f32.mrb[0].mxu0
    %v6223 = vadd.f32 %v5838, %v6222
    %v6224 = vpop.f32.mrb[0].mxu0
    %6225 = vmatprep.mubr.f32.mxu0 0.0
    %6226 = vmatmul.mubr.f32.gmra.mrb[0].mxu0 %v5447
    %v6227 = vpop.f32.mrb[0].mxu0
    %v6228 = vadd.f32 %v5843, %v6227
    %v6229 = vpop.f32.mrb[0].mxu0
    %6230 = vmatprep.mubr.f32.mxu0 0.0
    %6231 = vmatmul.mubr.f32.gmra.mrb[0].mxu0 %v5448
    %v6232 = vpop.f32.mrb[0].mxu0
    %v6233 = vadd.f32 %v5848, %v6232
    %v6234 = vpop.f32.mrb[0].mxu0
    %6235 = vmatprep.mubr.f32.mxu0 0.0
    %6236 = vmatmul.mubr.f32.gmra.mrb[0].mxu0 %v5449
    %v6237 = vpop.f32.mrb[0].mxu0
    %v6238 = vadd.f32 %v5853, %v6237
    %v6239 = vpop.f32.mrb[0].mxu0
    %6240 = vmatprep.mubr.f32.mxu0 0.0
    %6241 = vmatmul.mubr.f32.gmra.mrb[0].mxu0 %v5450
    %v6242 = vpop.f32.mrb[0].mxu0
    %v6243 = vadd.f32 %v5858, %v6242
    %v6244 = vpop.f32.mrb[0].mxu0
    %6245 = vmatprep.mubr.f32.mxu0 0.0
    %6246 = vmatmul.mubr.f32.gmra.mrb[0].mxu0 %v5451
    %v6247 = vpop.f32.mrb[0].mxu0
    %v6248 = vadd.f32 %v5863, %v6247
    %v6249 = vpop.f32.mrb[0].mxu0
    %6250 = vmatprep.mubr.f32.mxu0 0.0
    %6251 = vmatmul.mubr.f32.gmra.mrb[0].mxu0 %v5452
    %v6252 = vpop.f32.mrb[0].mxu0
    %v6253 = vadd.f32 %v5868, %v6252
    %v6254 = vpop.f32.mrb[0].mxu0
    %6255 = vmatprep.mubr.f32.mxu0 0.0
    %6256 = vmatmul.mubr.f32.gmra.mrb[0].mxu0 %v5453
    %v6257 = vpop.f32.mrb[0].mxu0
    %v6258 = vadd.f32 %v5873, %v6257
    %v6259 = vpop.f32.mrb[0].mxu0
    %6260 = vmatprep.mubr.f32.mxu0 0.0
    %6261 = vmatmul.mubr.f32.gmra.mrb[0].mxu0 %v5454
    %v6262 = vpop.f32.mrb[0].mxu0
    %v6263 = vadd.f32 %v5878, %v6262
    %v6264 = vpop.f32.mrb[0].mxu0
    %6265 = vmatprep.mubr.f32.mxu0 0.0
    %6266 = vmatmul.mubr.f32.gmra.mrb[0].mxu0 %v5455
    %v6267 = vpop.f32.mrb[0].mxu0
    %v6268 = vadd.f32 %v5883, %v6267
    %v6269 = vpop.f32.mrb[0].mxu0
    %6270 = vmatprep.mubr.f32.mxu0 0.0
    %6271 = vmatmul.mubr.f32.gmra.mrb[0].mxu0 %v5456
    %v6272 = vpop.f32.mrb[0].mxu0
    %v6273 = vadd.f32 %v5888, %v6272
    %v6274 = vpop.f32.mrb[0].mxu0
    %6275 = vmatprep.mubr.f32.mxu0 0.0
    %6276 = vmatmul.mubr.f32.gmra.mrb[0].mxu0 %v5457
    %v6277 = vpop.f32.mrb[0].mxu0
    %v6278 = vadd.f32 %v5893, %v6277
    %v6279 = vpop.f32.mrb[0].mxu0
    %6280 = vmatprep.mubr.f32.mxu0 0.0
    %6281 = vmatmul.mubr.f32.gmra.mrb[0].mxu0 %v5458
    %v6282 = vpop.f32.mrb[0].mxu0
    %v6283 = vadd.f32 %v5898, %v6282
    %v6284 = vpop.f32.mrb[0].mxu0
    %6285 = vmatprep.mubr.f32.mxu0 0.0
    %6286 = vmatmul.mubr.f32.gmra.mrb[0].mxu0 %v5459
    %v6287 = vpop.f32.mrb[0].mxu0
    %v6288 = vadd.f32 %v5903, %v6287
    %v6289 = vpop.f32.mrb[0].mxu0
    %6290 = vmatprep.mubr.f32.mxu0 0.0
    %6291 = vmatmul.mubr.f32.gmra.mrb[0].mxu0 %v5460
    %v6292 = vpop.f32.mrb[0].mxu0
    %v6293 = vadd.f32 %v5908, %v6292
    %v6294 = vpop.f32.mrb[0].mxu0
    %6295 = vmatprep.mubr.f32.mxu0 0.0
    %6296 = vmatmul.mubr.f32.gmra.mrb[0].mxu0 %v5461
    %v6297 = vpop.f32.mrb[0].mxu0
    %v6298 = vadd.f32 %v5913, %v6297
    %v6299 = vpop.f32.mrb[0].mxu0
    %6300 = vmatprep.mubr.f32.mxu0 0.0
    %6301 = vmatmul.mubr.f32.gmra.mrb[0].mxu0 %v5462
    %v6302 = vpop.f32.mrb[0].mxu0
    %v6303 = vadd.f32 %v5918, %v6302
    %v6304 = vpop.f32.mrb[0].mxu0
    %6305 = vmatprep.mubr.f32.mxu0 0.0
    %6306 = vmatmul.mubr.f32.gmra.mrb[0].mxu0 %v5463
    %v6307 = vpop.f32.mrb[0].mxu0
    %v6308 = vadd.f32 %v5923, %v6307
    %v6309 = vpop.f32.mrb[0].mxu0
    %6310 = vmatprep.mubr.f32.mxu0 0.0
    %6311 = vmatmul.mubr.f32.gmra.mrb[0].mxu0 %v5464
    %v6312 = vpop.f32.mrb[0].mxu0
    %v6313 = vadd.f32 %v5928, %v6312
    %v6314 = vpop.f32.mrb[0].mxu0
    %6315 = vmatprep.mubr.f32.mxu0 0.0
    %6316 = vmatmul.mubr.f32.gmra.mrb[0].mxu0 %v5465
    %v6317 = vpop.f32.mrb[0].mxu0
    %v6318 = vadd.f32 %v5933, %v6317
    %v6319 = vpop.f32.mrb[0].mxu0
    %6320 = vmatprep.mubr.f32.mxu0 0.0
    %6321 = vmatmul.mubr.f32.gmra.mrb[0].mxu0 %v5466
    %v6322 = vpop.f32.mrb[0].mxu0
    %v6323 = vadd.f32 %v5938, %v6322
    %v6324 = vpop.f32.mrb[0].mxu0
    %6325 = vmatprep.mubr.f32.mxu0 0.0
    %6326 = vmatmul.mubr.f32.gmra.mrb[0].mxu0 %v5467
    %v6327 = vpop.f32.mrb[0].mxu0
    %v6328 = vadd.f32 %v5943, %v6327
    %v6329 = vpop.f32.mrb[0].mxu0
    %6330 = vmatprep.mubr.f32.mxu0 0.0
    %6331 = vmatmul.mubr.f32.gmra.mrb[0].mxu0 %v5468
    %v6332 = vpop.f32.mrb[0].mxu0
    %v6333 = vadd.f32 %v5948, %v6332
    %v6334 = vpop.f32.mrb[0].mxu0
    %6335 = vdwg.mxu0
    %v6336 = vld [vmem:[#allocation2 + $0x2] sm:$0xff]
    %v6337 = vld [vmem:[#allocation2 + $0xa] sm:$0xff]
    %v6338 = vld [vmem:[#allocation2 + $0x1a] sm:$0xff]
    %v6339 = vld [vmem:[#allocation2 + $0x22] sm:$0xff]
    %v6340 = vld [vmem:[#allocation2 + $0x32] sm:$0xff]
    %v6341 = vld [vmem:[#allocation2 + $0x3a] sm:$0xff]
    %v6342 = vld [vmem:[#allocation2 + $0x4a] sm:$0xff]
    %v6343 = vld [vmem:[#allocation2 + $0x52] sm:$0xff]
    %v6344 = vld [vmem:[#allocation2 + $0x62] sm:$0xff]
    %v6345 = vld [vmem:[#allocation2 + $0x6a] sm:$0xff]
    %v6346 = vld [vmem:[#allocation2 + $0x7a] sm:$0xff]
    %v6347 = vld [vmem:[#allocation2 + $0x82] sm:$0xff]
    %v6348 = vld [vmem:[#allocation2 + $0x92] sm:$0xff]
    %v6349 = vld [vmem:[#allocation2 + $0x9a] sm:$0xff]
    %v6350 = vld [vmem:[#allocation2 + $0xaa] sm:$0xff]
    %v6351 = vld [vmem:[#allocation2 + $0xb2] sm:$0xff]
    %v6352 = vld [vmem:[#allocation2 + $0xc2] sm:$0xff]
    %v6353 = vld [vmem:[#allocation2 + $0xca] sm:$0xff]
    %v6354 = vld [vmem:[#allocation2 + $0xda] sm:$0xff]
    %v6355 = vld [vmem:[#allocation2 + $0xe2] sm:$0xff]
    %v6356 = vld [vmem:[#allocation2 + $0xf2] sm:$0xff]
    %v6357 = vld [vmem:[#allocation2 + $0xfa] sm:$0xff]
    %v6358 = vld [vmem:[#allocation2 + $0x10a] sm:$0xff]
    %v6359 = vld [vmem:[#allocation2 + $0x112] sm:$0xff]
    %v6360 = vld [vmem:[#allocation2 + $0x122] sm:$0xff]
    %v6361 = vld [vmem:[#allocation2 + $0x12a] sm:$0xff]
    %v6362 = vld [vmem:[#allocation2 + $0x13a] sm:$0xff]
    %v6363 = vld [vmem:[#allocation2 + $0x142] sm:$0xff]
    %v6364 = vld [vmem:[#allocation2 + $0x152] sm:$0xff]
    %v6365 = vld [vmem:[#allocation2 + $0x15a] sm:$0xff]
    %v6366 = vld [vmem:[#allocation2 + $0x16a] sm:$0xff]
    %v6367 = vld [vmem:[#allocation2 + $0x172] sm:$0xff]
    %v6368 = vld [vmem:[#allocation2 + $0x1b2] sm:$0xff]
    %v6369 = vld [vmem:[#allocation2 + $0x1ba] sm:$0xff]
    %v6370 = vld [vmem:[#allocation2 + $0x1ca] sm:$0xff]
    %v6371 = vld [vmem:[#allocation2 + $0x1d2] sm:$0xff]
    %v6372 = vld [vmem:[#allocation2 + $0x1e2] sm:$0xff]
    %v6373 = vld [vmem:[#allocation2 + $0x1ea] sm:$0xff]
    %v6374 = vld [vmem:[#allocation2 + $0x1fa] sm:$0xff]
    %v6375 = vld [vmem:[#allocation2 + $0x202] sm:$0xff]
    %v6376 = vld [vmem:[#allocation2 + $0x212] sm:$0xff]
    %v6377 = vld [vmem:[#allocation2 + $0x21a] sm:$0xff]
    %v6378 = vld [vmem:[#allocation2 + $0x22a] sm:$0xff]
    %v6379 = vld [vmem:[#allocation2 + $0x232] sm:$0xff]
    %v6380 = vld [vmem:[#allocation2 + $0x242] sm:$0xff]
    %v6381 = vld [vmem:[#allocation2 + $0x24a] sm:$0xff]
    %v6382 = vld [vmem:[#allocation2 + $0x25a] sm:$0xff]
    %v6383 = vld [vmem:[#allocation2 + $0x262] sm:$0xff]
    %v6384 = vld [vmem:[#allocation2 + $0x272] sm:$0xff]
    %v6385 = vld [vmem:[#allocation2 + $0x27a] sm:$0xff]
    %v6386 = vld [vmem:[#allocation2 + $0x28a] sm:$0xff]
    %v6387 = vld [vmem:[#allocation2 + $0x292] sm:$0xff]
    %v6388 = vld [vmem:[#allocation2 + $0x2a2] sm:$0xff]
    %v6389 = vld [vmem:[#allocation2 + $0x2aa] sm:$0xff]
    %v6390 = vld [vmem:[#allocation2 + $0x2ba] sm:$0xff]
    %v6391 = vld [vmem:[#allocation2 + $0x2c2] sm:$0xff]
    %v6392 = vld [vmem:[#allocation2 + $0x2d2] sm:$0xff]
    %v6393 = vld [vmem:[#allocation2 + $0x2da] sm:$0xff]
    %v6394 = vld [vmem:[#allocation2 + $0x2ea] sm:$0xff]
    %v6395 = vld [vmem:[#allocation2 + $0x2f2] sm:$0xff]
    %v6396 = vld [vmem:[#allocation2 + $0x302] sm:$0xff]
    %v6397 = vld [vmem:[#allocation2 + $0x30a] sm:$0xff]
    %v6398 = vld [vmem:[#allocation2 + $0x31a] sm:$0xff]
    %v6399 = vld [vmem:[#allocation2 + $0x322] sm:$0xff]
    %s6400 = scalar_lea.vmem [#allocation8], 256
    %v6401 = vld [vmem:[%s6400] sm:$0xff]
    %v6402 = vld [vmem:[%s6400 + $0x8] sm:$0xff]
    %v6403 = vld [vmem:[%s6400 + $0x10] sm:$0xff]
    %v6404 = vld [vmem:[%s6400 + $0x18] sm:$0xff]
    %v6405 = vld [vmem:[%s6400 + $0x20] sm:$0xff]
    %v6406 = vld [vmem:[%s6400 + $0x28] sm:$0xff]
    %v6407 = vld [vmem:[%s6400 + $0x30] sm:$0xff]
    %v6408 = vld [vmem:[%s6400 + $0x38] sm:$0xff]
    %v6409 = vld [vmem:[%s6400 + $0x40] sm:$0xff]
    %v6410 = vld [vmem:[%s6400 + $0x48] sm:$0xff]
    %v6411 = vld [vmem:[%s6400 + $0x50] sm:$0xff]
    %v6412 = vld [vmem:[%s6400 + $0x58] sm:$0xff]
    %v6413 = vld [vmem:[%s6400 + $0x60] sm:$0xff]
    %v6414 = vld [vmem:[%s6400 + $0x68] sm:$0xff]
    %v6415 = vld [vmem:[%s6400 + $0x70] sm:$0xff]
    %v6416 = vld [vmem:[%s6400 + $0x78] sm:$0xff]
    %6417 = vmatprep.subr.mxu0 0.0
    %6418 = vmatpush1.msra.mxu0 %v6401
    %6419 = vmatprep.subr.mxu0 0.0
    %6420 = vmatpush1.msra.mxu0 %v6402
    %6421 = vmatprep.subr.mxu0 0.0
    %6422 = vmatpush1.msra.mxu0 %v6403
    %6423 = vmatprep.subr.mxu0 0.0
    %6424 = vmatpush1.msra.mxu0 %v6404
    %6425 = vmatprep.subr.mxu0 0.0
    %6426 = vmatpush1.msra.mxu0 %v6405
    %6427 = vmatprep.subr.mxu0 0.0
    %6428 = vmatpush1.msra.mxu0 %v6406
    %6429 = vmatprep.subr.mxu0 0.0
    %6430 = vmatpush1.msra.mxu0 %v6407
    %6431 = vmatprep.subr.mxu0 0.0
    %6432 = vmatpush1.msra.mxu0 %v6408
    %6433 = vmatprep.subr.mxu0 0.0
    %6434 = vmatpush1.msra.mxu0 %v6409
    %6435 = vmatprep.subr.mxu0 0.0
    %6436 = vmatpush1.msra.mxu0 %v6410
    %6437 = vmatprep.subr.mxu0 0.0
    %6438 = vmatpush1.msra.mxu0 %v6411
    %6439 = vmatprep.subr.mxu0 0.0
    %6440 = vmatpush1.msra.mxu0 %v6412
    %6441 = vmatprep.subr.mxu0 0.0
    %6442 = vmatpush1.msra.mxu0 %v6413
    %6443 = vmatprep.subr.mxu0 0.0
    %6444 = vmatpush1.msra.mxu0 %v6414
    %6445 = vmatprep.subr.mxu0 0.0
    %6446 = vmatpush1.msra.mxu0 %v6415
    %6447 = vmatprep.subr.mxu0 0.0
    %6448 = vmatpush1.msra.mxu0 %v6416
    %6449 = vmatprep.subr.mxu0 0.0
    %6450 = vmatpush1.msra.mxu0 0.0
    %6451 = vmatprep.subr.mxu0 0.0
    %6452 = vmatpush1.msra.mxu0 0.0
    %6453 = vmatprep.subr.mxu0 0.0
    %6454 = vmatpush1.msra.mxu0 0.0
    %6455 = vmatprep.subr.mxu0 0.0
    %6456 = vmatpush1.msra.mxu0 0.0
    %6457 = vmatprep.subr.mxu0 0.0
    %6458 = vmatpush1.msra.mxu0 0.0
    %6459 = vmatprep.subr.mxu0 0.0
    %6460 = vmatpush1.msra.mxu0 0.0
    %6461 = vmatprep.subr.mxu0 0.0
    %6462 = vmatpush1.msra.mxu0 0.0
    %6463 = vmatprep.subr.mxu0 0.0
    %6464 = vmatpush1.msra.mxu0 0.0
    %6465 = vmatprep.subr.mxu0 0.0
    %6466 = vmatpush1.msra.mxu0 0.0
    %6467 = vmatprep.subr.mxu0 0.0
    %6468 = vmatpush1.msra.mxu0 0.0
    %6469 = vmatprep.subr.mxu0 0.0
    %6470 = vmatpush1.msra.mxu0 0.0
    %6471 = vmatprep.subr.mxu0 0.0
    %6472 = vmatpush1.msra.mxu0 0.0
    %6473 = vmatprep.subr.mxu0 0.0
    %6474 = vmatpush1.msra.mxu0 0.0
    %6475 = vmatprep.subr.mxu0 0.0
    %6476 = vmatpush1.msra.mxu0 0.0
    %6477 = vmatprep.subr.mxu0 0.0
    %6478 = vmatpush1.msra.mxu0 0.0
    %6479 = vmatprep.subr.mxu0 0.0
    %6480 = vmatpush1.msra.mxu0 0.0
    %6481 = vmatprep.mubr.f32.mxu0 0.0
    %6482 = vmatmul.mubr.f32.gmra.mrb[0].mxu0 %v6336
    %v6483 = vpop.f32.mrb[0].mxu0
    %v6484 = vadd.f32 0.0, %v6483
    %v6485 = vpop.f32.mrb[0].mxu0
    %6486 = vmatprep.mubr.f32.mxu0 0.0
    %6487 = vmatmul.mubr.f32.gmra.mrb[0].mxu0 %v6337
    %v6488 = vpop.f32.mrb[0].mxu0
    %v6489 = vadd.f32 0.0, %v6488
    %v6490 = vpop.f32.mrb[0].mxu0
    %6491 = vmatprep.mubr.f32.mxu0 0.0
    %6492 = vmatmul.mubr.f32.gmra.mrb[0].mxu0 %v6338
    %v6493 = vpop.f32.mrb[0].mxu0
    %v6494 = vadd.f32 0.0, %v6493
    %v6495 = vpop.f32.mrb[0].mxu0
    %6496 = vmatprep.mubr.f32.mxu0 0.0
    %6497 = vmatmul.mubr.f32.gmra.mrb[0].mxu0 %v6339
    %v6498 = vpop.f32.mrb[0].mxu0
    %v6499 = vadd.f32 0.0, %v6498
    %v6500 = vpop.f32.mrb[0].mxu0
    %6501 = vmatprep.mubr.f32.mxu0 0.0
    %6502 = vmatmul.mubr.f32.gmra.mrb[0].mxu0 %v6340
    %v6503 = vpop.f32.mrb[0].mxu0
    %v6504 = vadd.f32 0.0, %v6503
    %v6505 = vpop.f32.mrb[0].mxu0
    %6506 = vmatprep.mubr.f32.mxu0 0.0
    %6507 = vmatmul.mubr.f32.gmra.mrb[0].mxu0 %v6341
    %v6508 = vpop.f32.mrb[0].mxu0
    %v6509 = vadd.f32 0.0, %v6508
    %v6510 = vpop.f32.mrb[0].mxu0
    %6511 = vmatprep.mubr.f32.mxu0 0.0
    %6512 = vmatmul.mubr.f32.gmra.mrb[0].mxu0 %v6342
    %v6513 = vpop.f32.mrb[0].mxu0
    %v6514 = vadd.f32 0.0, %v6513
    %v6515 = vpop.f32.mrb[0].mxu0
    %6516 = vmatprep.mubr.f32.mxu0 0.0
    %6517 = vmatmul.mubr.f32.gmra.mrb[0].mxu0 %v6343
    %v6518 = vpop.f32.mrb[0].mxu0
    %v6519 = vadd.f32 0.0, %v6518
    %v6520 = vpop.f32.mrb[0].mxu0
    %6521 = vmatprep.mubr.f32.mxu0 0.0
    %6522 = vmatmul.mubr.f32.gmra.mrb[0].mxu0 %v6344
    %v6523 = vpop.f32.mrb[0].mxu0
    %v6524 = vadd.f32 0.0, %v6523
    %v6525 = vpop.f32.mrb[0].mxu0
    %6526 = vmatprep.mubr.f32.mxu0 0.0
    %6527 = vmatmul.mubr.f32.gmra.mrb[0].mxu0 %v6345
    %v6528 = vpop.f32.mrb[0].mxu0
    %v6529 = vadd.f32 0.0, %v6528
    %v6530 = vpop.f32.mrb[0].mxu0
    %6531 = vmatprep.mubr.f32.mxu0 0.0
    %6532 = vmatmul.mubr.f32.gmra.mrb[0].mxu0 %v6346
    %v6533 = vpop.f32.mrb[0].mxu0
    %v6534 = vadd.f32 0.0, %v6533
    %v6535 = vpop.f32.mrb[0].mxu0
    %6536 = vmatprep.mubr.f32.mxu0 0.0
    %6537 = vmatmul.mubr.f32.gmra.mrb[0].mxu0 %v6347
    %v6538 = vpop.f32.mrb[0].mxu0
    %v6539 = vadd.f32 0.0, %v6538
    %v6540 = vpop.f32.mrb[0].mxu0
    %6541 = vmatprep.mubr.f32.mxu0 0.0
    %6542 = vmatmul.mubr.f32.gmra.mrb[0].mxu0 %v6348
    %v6543 = vpop.f32.mrb[0].mxu0
    %v6544 = vadd.f32 0.0, %v6543
    %v6545 = vpop.f32.mrb[0].mxu0
    %6546 = vmatprep.mubr.f32.mxu0 0.0
    %6547 = vmatmul.mubr.f32.gmra.mrb[0].mxu0 %v6349
    %v6548 = vpop.f32.mrb[0].mxu0
    %v6549 = vadd.f32 0.0, %v6548
    %v6550 = vpop.f32.mrb[0].mxu0
    %6551 = vmatprep.mubr.f32.mxu0 0.0
    %6552 = vmatmul.mubr.f32.gmra.mrb[0].mxu0 %v6350
    %v6553 = vpop.f32.mrb[0].mxu0
    %v6554 = vadd.f32 0.0, %v6553
    %v6555 = vpop.f32.mrb[0].mxu0
    %6556 = vmatprep.mubr.f32.mxu0 0.0
    %6557 = vmatmul.mubr.f32.gmra.mrb[0].mxu0 %v6351
    %v6558 = vpop.f32.mrb[0].mxu0
    %v6559 = vadd.f32 0.0, %v6558
    %v6560 = vpop.f32.mrb[0].mxu0
    %6561 = vmatprep.mubr.f32.mxu0 0.0
    %6562 = vmatmul.mubr.f32.gmra.mrb[0].mxu0 %v6352
    %v6563 = vpop.f32.mrb[0].mxu0
    %v6564 = vadd.f32 0.0, %v6563
    %v6565 = vpop.f32.mrb[0].mxu0
    %6566 = vmatprep.mubr.f32.mxu0 0.0
    %6567 = vmatmul.mubr.f32.gmra.mrb[0].mxu0 %v6353
    %v6568 = vpop.f32.mrb[0].mxu0
    %v6569 = vadd.f32 0.0, %v6568
    %v6570 = vpop.f32.mrb[0].mxu0
    %6571 = vmatprep.mubr.f32.mxu0 0.0
    %6572 = vmatmul.mubr.f32.gmra.mrb[0].mxu0 %v6354
    %v6573 = vpop.f32.mrb[0].mxu0
    %v6574 = vadd.f32 0.0, %v6573
    %v6575 = vpop.f32.mrb[0].mxu0
    %6576 = vmatprep.mubr.f32.mxu0 0.0
    %6577 = vmatmul.mubr.f32.gmra.mrb[0].mxu0 %v6355
    %v6578 = vpop.f32.mrb[0].mxu0
    %v6579 = vadd.f32 0.0, %v6578
    %v6580 = vpop.f32.mrb[0].mxu0
    %6581 = vmatprep.mubr.f32.mxu0 0.0
    %6582 = vmatmul.mubr.f32.gmra.mrb[0].mxu0 %v6356
    %v6583 = vpop.f32.mrb[0].mxu0
    %v6584 = vadd.f32 0.0, %v6583
    %v6585 = vpop.f32.mrb[0].mxu0
    %6586 = vmatprep.mubr.f32.mxu0 0.0
    %6587 = vmatmul.mubr.f32.gmra.mrb[0].mxu0 %v6357
    %v6588 = vpop.f32.mrb[0].mxu0
    %v6589 = vadd.f32 0.0, %v6588
    %v6590 = vpop.f32.mrb[0].mxu0
    %6591 = vmatprep.mubr.f32.mxu0 0.0
    %6592 = vmatmul.mubr.f32.gmra.mrb[0].mxu0 %v6358
    %v6593 = vpop.f32.mrb[0].mxu0
    %v6594 = vadd.f32 0.0, %v6593
    %v6595 = vpop.f32.mrb[0].mxu0
    %6596 = vmatprep.mubr.f32.mxu0 0.0
    %6597 = vmatmul.mubr.f32.gmra.mrb[0].mxu0 %v6359
    %v6598 = vpop.f32.mrb[0].mxu0
    %v6599 = vadd.f32 0.0, %v6598
    %v6600 = vpop.f32.mrb[0].mxu0
    %6601 = vmatprep.mubr.f32.mxu0 0.0
    %6602 = vmatmul.mubr.f32.gmra.mrb[0].mxu0 %v6360
    %v6603 = vpop.f32.mrb[0].mxu0
    %v6604 = vadd.f32 0.0, %v6603
    %v6605 = vpop.f32.mrb[0].mxu0
    %6606 = vmatprep.mubr.f32.mxu0 0.0
    %6607 = vmatmul.mubr.f32.gmra.mrb[0].mxu0 %v6361
    %v6608 = vpop.f32.mrb[0].mxu0
    %v6609 = vadd.f32 0.0, %v6608
    %v6610 = vpop.f32.mrb[0].mxu0
    %6611 = vmatprep.mubr.f32.mxu0 0.0
    %6612 = vmatmul.mubr.f32.gmra.mrb[0].mxu0 %v6362
    %v6613 = vpop.f32.mrb[0].mxu0
    %v6614 = vadd.f32 0.0, %v6613
    %v6615 = vpop.f32.mrb[0].mxu0
    %6616 = vmatprep.mubr.f32.mxu0 0.0
    %6617 = vmatmul.mubr.f32.gmra.mrb[0].mxu0 %v6363
    %v6618 = vpop.f32.mrb[0].mxu0
    %v6619 = vadd.f32 0.0, %v6618
    %v6620 = vpop.f32.mrb[0].mxu0
    %6621 = vmatprep.mubr.f32.mxu0 0.0
    %6622 = vmatmul.mubr.f32.gmra.mrb[0].mxu0 %v6364
    %v6623 = vpop.f32.mrb[0].mxu0
    %v6624 = vadd.f32 0.0, %v6623
    %v6625 = vpop.f32.mrb[0].mxu0
    %6626 = vmatprep.mubr.f32.mxu0 0.0
    %6627 = vmatmul.mubr.f32.gmra.mrb[0].mxu0 %v6365
    %v6628 = vpop.f32.mrb[0].mxu0
    %v6629 = vadd.f32 0.0, %v6628
    %v6630 = vpop.f32.mrb[0].mxu0
    %6631 = vmatprep.mubr.f32.mxu0 0.0
    %6632 = vmatmul.mubr.f32.gmra.mrb[0].mxu0 %v6366
    %v6633 = vpop.f32.mrb[0].mxu0
    %v6634 = vadd.f32 0.0, %v6633
    %v6635 = vpop.f32.mrb[0].mxu0
    %6636 = vmatprep.mubr.f32.mxu0 0.0
    %6637 = vmatmul.mubr.f32.gmra.mrb[0].mxu0 %v6367
    %v6638 = vpop.f32.mrb[0].mxu0
    %v6639 = vadd.f32 0.0, %v6638
    %v6640 = vpop.f32.mrb[0].mxu0
    %6641 = vmatprep.mubr.f32.mxu0 0.0
    %6642 = vmatmul.mubr.f32.gmra.mrb[0].mxu0 %v6368
    %v6643 = vpop.f32.mrb[0].mxu0
    %v6644 = vadd.f32 0.0, %v6643
    %v6645 = vpop.f32.mrb[0].mxu0
    %6646 = vmatprep.mubr.f32.mxu0 0.0
    %6647 = vmatmul.mubr.f32.gmra.mrb[0].mxu0 %v6369
    %v6648 = vpop.f32.mrb[0].mxu0
    %v6649 = vadd.f32 0.0, %v6648
    %v6650 = vpop.f32.mrb[0].mxu0
    %6651 = vmatprep.mubr.f32.mxu0 0.0
    %6652 = vmatmul.mubr.f32.gmra.mrb[0].mxu0 %v6370
    %v6653 = vpop.f32.mrb[0].mxu0
    %v6654 = vadd.f32 0.0, %v6653
    %v6655 = vpop.f32.mrb[0].mxu0
    %6656 = vmatprep.mubr.f32.mxu0 0.0
    %6657 = vmatmul.mubr.f32.gmra.mrb[0].mxu0 %v6371
    %v6658 = vpop.f32.mrb[0].mxu0
    %v6659 = vadd.f32 0.0, %v6658
    %v6660 = vpop.f32.mrb[0].mxu0
    %6661 = vmatprep.mubr.f32.mxu0 0.0
    %6662 = vmatmul.mubr.f32.gmra.mrb[0].mxu0 %v6372
    %v6663 = vpop.f32.mrb[0].mxu0
    %v6664 = vadd.f32 0.0, %v6663
    %v6665 = vpop.f32.mrb[0].mxu0
    %6666 = vmatprep.mubr.f32.mxu0 0.0
    %6667 = vmatmul.mubr.f32.gmra.mrb[0].mxu0 %v6373
    %v6668 = vpop.f32.mrb[0].mxu0
    %v6669 = vadd.f32 0.0, %v6668
    %v6670 = vpop.f32.mrb[0].mxu0
    %6671 = vmatprep.mubr.f32.mxu0 0.0
    %6672 = vmatmul.mubr.f32.gmra.mrb[0].mxu0 %v6374
    %v6673 = vpop.f32.mrb[0].mxu0
    %v6674 = vadd.f32 0.0, %v6673
    %v6675 = vpop.f32.mrb[0].mxu0
    %6676 = vmatprep.mubr.f32.mxu0 0.0
    %6677 = vmatmul.mubr.f32.gmra.mrb[0].mxu0 %v6375
    %v6678 = vpop.f32.mrb[0].mxu0
    %v6679 = vadd.f32 0.0, %v6678
    %v6680 = vpop.f32.mrb[0].mxu0
    %6681 = vmatprep.mubr.f32.mxu0 0.0
    %6682 = vmatmul.mubr.f32.gmra.mrb[0].mxu0 %v6376
    %v6683 = vpop.f32.mrb[0].mxu0
    %v6684 = vadd.f32 0.0, %v6683
    %v6685 = vpop.f32.mrb[0].mxu0
    %6686 = vmatprep.mubr.f32.mxu0 0.0
    %6687 = vmatmul.mubr.f32.gmra.mrb[0].mxu0 %v6377
    %v6688 = vpop.f32.mrb[0].mxu0
    %v6689 = vadd.f32 0.0, %v6688
    %v6690 = vpop.f32.mrb[0].mxu0
    %6691 = vmatprep.mubr.f32.mxu0 0.0
    %6692 = vmatmul.mubr.f32.gmra.mrb[0].mxu0 %v6378
    %v6693 = vpop.f32.mrb[0].mxu0
    %v6694 = vadd.f32 0.0, %v6693
    %v6695 = vpop.f32.mrb[0].mxu0
    %6696 = vmatprep.mubr.f32.mxu0 0.0
    %6697 = vmatmul.mubr.f32.gmra.mrb[0].mxu0 %v6379
    %v6698 = vpop.f32.mrb[0].mxu0
    %v6699 = vadd.f32 0.0, %v6698
    %v6700 = vpop.f32.mrb[0].mxu0
    %6701 = vmatprep.mubr.f32.mxu0 0.0
    %6702 = vmatmul.mubr.f32.gmra.mrb[0].mxu0 %v6380
    %v6703 = vpop.f32.mrb[0].mxu0
    %v6704 = vadd.f32 0.0, %v6703
    %v6705 = vpop.f32.mrb[0].mxu0
    %6706 = vmatprep.mubr.f32.mxu0 0.0
    %6707 = vmatmul.mubr.f32.gmra.mrb[0].mxu0 %v6381
    %v6708 = vpop.f32.mrb[0].mxu0
    %v6709 = vadd.f32 0.0, %v6708
    %v6710 = vpop.f32.mrb[0].mxu0
    %6711 = vmatprep.mubr.f32.mxu0 0.0
    %6712 = vmatmul.mubr.f32.gmra.mrb[0].mxu0 %v6382
    %v6713 = vpop.f32.mrb[0].mxu0
    %v6714 = vadd.f32 0.0, %v6713
    %v6715 = vpop.f32.mrb[0].mxu0
    %6716 = vmatprep.mubr.f32.mxu0 0.0
    %6717 = vmatmul.mubr.f32.gmra.mrb[0].mxu0 %v6383
    %v6718 = vpop.f32.mrb[0].mxu0
    %v6719 = vadd.f32 0.0, %v6718
    %v6720 = vpop.f32.mrb[0].mxu0
    %6721 = vmatprep.mubr.f32.mxu0 0.0
    %6722 = vmatmul.mubr.f32.gmra.mrb[0].mxu0 %v6384
    %v6723 = vpop.f32.mrb[0].mxu0
    %v6724 = vadd.f32 0.0, %v6723
    %v6725 = vpop.f32.mrb[0].mxu0
    %6726 = vmatprep.mubr.f32.mxu0 0.0
    %6727 = vmatmul.mubr.f32.gmra.mrb[0].mxu0 %v6385
    %v6728 = vpop.f32.mrb[0].mxu0
    %v6729 = vadd.f32 0.0, %v6728
    %v6730 = vpop.f32.mrb[0].mxu0
    %6731 = vmatprep.mubr.f32.mxu0 0.0
    %6732 = vmatmul.mubr.f32.gmra.mrb[0].mxu0 %v6386
    %v6733 = vpop.f32.mrb[0].mxu0
    %v6734 = vadd.f32 0.0, %v6733
    %v6735 = vpop.f32.mrb[0].mxu0
    %6736 = vmatprep.mubr.f32.mxu0 0.0
    %6737 = vmatmul.mubr.f32.gmra.mrb[0].mxu0 %v6387
    %v6738 = vpop.f32.mrb[0].mxu0
    %v6739 = vadd.f32 0.0, %v6738
    %v6740 = vpop.f32.mrb[0].mxu0
    %6741 = vmatprep.mubr.f32.mxu0 0.0
    %6742 = vmatmul.mubr.f32.gmra.mrb[0].mxu0 %v6388
    %v6743 = vpop.f32.mrb[0].mxu0
    %v6744 = vadd.f32 0.0, %v6743
    %v6745 = vpop.f32.mrb[0].mxu0
    %6746 = vmatprep.mubr.f32.mxu0 0.0
    %6747 = vmatmul.mubr.f32.gmra.mrb[0].mxu0 %v6389
    %v6748 = vpop.f32.mrb[0].mxu0
    %v6749 = vadd.f32 0.0, %v6748
    %v6750 = vpop.f32.mrb[0].mxu0
    %6751 = vmatprep.mubr.f32.mxu0 0.0
    %6752 = vmatmul.mubr.f32.gmra.mrb[0].mxu0 %v6390
    %v6753 = vpop.f32.mrb[0].mxu0
    %v6754 = vadd.f32 0.0, %v6753
    %v6755 = vpop.f32.mrb[0].mxu0
    %6756 = vmatprep.mubr.f32.mxu0 0.0
    %6757 = vmatmul.mubr.f32.gmra.mrb[0].mxu0 %v6391
    %v6758 = vpop.f32.mrb[0].mxu0
    %v6759 = vadd.f32 0.0, %v6758
    %v6760 = vpop.f32.mrb[0].mxu0
    %6761 = vmatprep.mubr.f32.mxu0 0.0
    %6762 = vmatmul.mubr.f32.gmra.mrb[0].mxu0 %v6392
    %v6763 = vpop.f32.mrb[0].mxu0
    %v6764 = vadd.f32 0.0, %v6763
    %v6765 = vpop.f32.mrb[0].mxu0
    %6766 = vmatprep.mubr.f32.mxu0 0.0
    %6767 = vmatmul.mubr.f32.gmra.mrb[0].mxu0 %v6393
    %v6768 = vpop.f32.mrb[0].mxu0
    %v6769 = vadd.f32 0.0, %v6768
    %v6770 = vpop.f32.mrb[0].mxu0
    %6771 = vmatprep.mubr.f32.mxu0 0.0
    %6772 = vmatmul.mubr.f32.gmra.mrb[0].mxu0 %v6394
    %v6773 = vpop.f32.mrb[0].mxu0
    %v6774 = vadd.f32 0.0, %v6773
    %v6775 = vpop.f32.mrb[0].mxu0
    %6776 = vmatprep.mubr.f32.mxu0 0.0
    %6777 = vmatmul.mubr.f32.gmra.mrb[0].mxu0 %v6395
    %v6778 = vpop.f32.mrb[0].mxu0
    %v6779 = vadd.f32 0.0, %v6778
    %v6780 = vpop.f32.mrb[0].mxu0
    %6781 = vmatprep.mubr.f32.mxu0 0.0
    %6782 = vmatmul.mubr.f32.gmra.mrb[0].mxu0 %v6396
    %v6783 = vpop.f32.mrb[0].mxu0
    %v6784 = vadd.f32 0.0, %v6783
    %v6785 = vpop.f32.mrb[0].mxu0
    %6786 = vmatprep.mubr.f32.mxu0 0.0
    %6787 = vmatmul.mubr.f32.gmra.mrb[0].mxu0 %v6397
    %v6788 = vpop.f32.mrb[0].mxu0
    %v6789 = vadd.f32 0.0, %v6788
    %v6790 = vpop.f32.mrb[0].mxu0
    %6791 = vmatprep.mubr.f32.mxu0 0.0
    %6792 = vmatmul.mubr.f32.gmra.mrb[0].mxu0 %v6398
    %v6793 = vpop.f32.mrb[0].mxu0
    %v6794 = vadd.f32 0.0, %v6793
    %v6795 = vpop.f32.mrb[0].mxu0
    %6796 = vmatprep.mubr.f32.mxu0 0.0
    %6797 = vmatmul.mubr.f32.gmra.mrb[0].mxu0 %v6399
    %v6798 = vpop.f32.mrb[0].mxu0
    %v6799 = vadd.f32 0.0, %v6798
    %v6800 = vpop.f32.mrb[0].mxu0
    %6801 = vdwg.mxu0
    %v6802 = vadd.f32 %v6018, %v6484
    %v6803 = vadd.f32 %v6023, %v6489
    %v6804 = vadd.f32 %v6028, %v6494
    %v6805 = vadd.f32 %v6033, %v6499
    %v6806 = vadd.f32 %v6038, %v6504
    %v6807 = vadd.f32 %v6043, %v6509
    %v6808 = vadd.f32 %v6048, %v6514
    %v6809 = vadd.f32 %v6053, %v6519
    %v6810 = vadd.f32 %v6058, %v6524
    %v6811 = vadd.f32 %v6063, %v6529
    %v6812 = vadd.f32 %v6068, %v6534
    %v6813 = vadd.f32 %v6073, %v6539
    %v6814 = vadd.f32 %v6078, %v6544
    %v6815 = vadd.f32 %v6083, %v6549
    %v6816 = vadd.f32 %v6088, %v6554
    %v6817 = vadd.f32 %v6093, %v6559
    %v6818 = vadd.f32 %v6098, %v6564
    %v6819 = vadd.f32 %v6103, %v6569
    %v6820 = vadd.f32 %v6108, %v6574
    %v6821 = vadd.f32 %v6113, %v6579
    %v6822 = vadd.f32 %v6118, %v6584
    %v6823 = vadd.f32 %v6123, %v6589
    %v6824 = vadd.f32 %v6128, %v6594
    %v6825 = vadd.f32 %v6133, %v6599
    %v6826 = vadd.f32 %v6138, %v6604
    %v6827 = vadd.f32 %v6143, %v6609
    %v6828 = vadd.f32 %v6148, %v6614
    %v6829 = vadd.f32 %v6153, %v6619
    %v6830 = vadd.f32 %v6158, %v6624
    %v6831 = vadd.f32 %v6163, %v6629
    %v6832 = vadd.f32 %v6168, %v6634
    %v6833 = vadd.f32 %v6173, %v6639
    %v6834 = vadd.f32 %v6178, %v6644
    %v6835 = vadd.f32 %v6183, %v6649
    %v6836 = vadd.f32 %v6188, %v6654
    %v6837 = vadd.f32 %v6193, %v6659
    %v6838 = vadd.f32 %v6198, %v6664
    %v6839 = vadd.f32 %v6203, %v6669
    %v6840 = vadd.f32 %v6208, %v6674
    %v6841 = vadd.f32 %v6213, %v6679
    %v6842 = vadd.f32 %v6218, %v6684
    %v6843 = vadd.f32 %v6223, %v6689
    %v6844 = vadd.f32 %v6228, %v6694
    %v6845 = vadd.f32 %v6233, %v6699
    %v6846 = vadd.f32 %v6238, %v6704
    %v6847 = vadd.f32 %v6243, %v6709
    %v6848 = vadd.f32 %v6248, %v6714
    %v6849 = vadd.f32 %v6253, %v6719
    %v6850 = vadd.f32 %v6258, %v6724
    %v6851 = vadd.f32 %v6263, %v6729
    %v6852 = vadd.f32 %v6268, %v6734
    %v6853 = vadd.f32 %v6273, %v6739
    %v6854 = vadd.f32 %v6278, %v6744
    %v6855 = vadd.f32 %v6283, %v6749
    %v6856 = vadd.f32 %v6288, %v6754
    %v6857 = vadd.f32 %v6293, %v6759
    %v6858 = vadd.f32 %v6298, %v6764
    %v6859 = vadd.f32 %v6303, %v6769
    %v6860 = vadd.f32 %v6308, %v6774
    %v6861 = vadd.f32 %v6313, %v6779
    %v6862 = vadd.f32 %v6318, %v6784
    %v6863 = vadd.f32 %v6323, %v6789
    %v6864 = vadd.f32 %v6328, %v6794
    %v6865 = vadd.f32 %v6333, %v6799
    %v6866 = vld [vmem:[%s217] sm:$0xff]
    %v6867 = vld [vmem:[%s217 + $0x8] sm:$0xff]
    %v6868 = vld [vmem:[%s217 + $0x18] sm:$0xff]
    %v6869 = vld [vmem:[%s217 + $0x20] sm:$0xff]
    %v6870 = vld [vmem:[%s217 + $0x30] sm:$0xff]
    %v6871 = vld [vmem:[%s217 + $0x38] sm:$0xff]
    %v6872 = vld [vmem:[%s217 + $0x48] sm:$0xff]
    %v6873 = vld [vmem:[%s217 + $0x50] sm:$0xff]
    %v6874 = vld [vmem:[%s217 + $0x60] sm:$0xff]
    %v6875 = vld [vmem:[%s217 + $0x68] sm:$0xff]
    %v6876 = vld [vmem:[%s217 + $0x78] sm:$0xff]
    %v6877 = vld [vmem:[%s217 + $0x80] sm:$0xff]
    %v6878 = vld [vmem:[%s217 + $0x90] sm:$0xff]
    %v6879 = vld [vmem:[%s217 + $0x98] sm:$0xff]
    %v6880 = vld [vmem:[%s217 + $0xa8] sm:$0xff]
    %v6881 = vld [vmem:[%s217 + $0xb0] sm:$0xff]
    %v6882 = vld [vmem:[%s217 + $0xc0] sm:$0xff]
    %v6883 = vld [vmem:[%s217 + $0xc8] sm:$0xff]
    %v6884 = vld [vmem:[%s217 + $0xd8] sm:$0xff]
    %v6885 = vld [vmem:[%s217 + $0xe0] sm:$0xff]
    %v6886 = vld [vmem:[%s217 + $0xf0] sm:$0xff]
    %v6887 = vld [vmem:[%s217 + $0xf8] sm:$0xff]
    %v6888 = vld [vmem:[%s217 + $0x108] sm:$0xff]
    %v6889 = vld [vmem:[%s217 + $0x110] sm:$0xff]
    %v6890 = vld [vmem:[%s217 + $0x120] sm:$0xff]
    %v6891 = vld [vmem:[%s217 + $0x128] sm:$0xff]
    %v6892 = vld [vmem:[%s217 + $0x138] sm:$0xff]
    %v6893 = vld [vmem:[%s217 + $0x140] sm:$0xff]
    %v6894 = vld [vmem:[%s217 + $0x150] sm:$0xff]
    %v6895 = vld [vmem:[%s217 + $0x158] sm:$0xff]
    %v6896 = vld [vmem:[%s217 + $0x168] sm:$0xff]
    %v6897 = vld [vmem:[%s217 + $0x170] sm:$0xff]
    %v6898 = vld [vmem:[%s217 + $0x1b0] sm:$0xff]
    %v6899 = vld [vmem:[%s217 + $0x1b8] sm:$0xff]
    %v6900 = vld [vmem:[%s217 + $0x1c8] sm:$0xff]
    %v6901 = vld [vmem:[%s217 + $0x1d0] sm:$0xff]
    %v6902 = vld [vmem:[%s217 + $0x1e0] sm:$0xff]
    %v6903 = vld [vmem:[%s217 + $0x1e8] sm:$0xff]
    %v6904 = vld [vmem:[%s217 + $0x1f8] sm:$0xff]
    %v6905 = vld [vmem:[%s217 + $0x200] sm:$0xff]
    %v6906 = vld [vmem:[%s217 + $0x210] sm:$0xff]
    %v6907 = vld [vmem:[%s217 + $0x218] sm:$0xff]
    %v6908 = vld [vmem:[%s217 + $0x228] sm:$0xff]
    %v6909 = vld [vmem:[%s217 + $0x230] sm:$0xff]
    %v6910 = vld [vmem:[%s217 + $0x240] sm:$0xff]
    %v6911 = vld [vmem:[%s217 + $0x248] sm:$0xff]
    %v6912 = vld [vmem:[%s217 + $0x258] sm:$0xff]
    %v6913 = vld [vmem:[%s217 + $0x260] sm:$0xff]
    %v6914 = vld [vmem:[%s217 + $0x270] sm:$0xff]
    %v6915 = vld [vmem:[%s217 + $0x278] sm:$0xff]
    %v6916 = vld [vmem:[%s217 + $0x288] sm:$0xff]
    %v6917 = vld [vmem:[%s217 + $0x290] sm:$0xff]
    %v6918 = vld [vmem:[%s217 + $0x2a0] sm:$0xff]
    %v6919 = vld [vmem:[%s217 + $0x2a8] sm:$0xff]
    %v6920 = vld [vmem:[%s217 + $0x2b8] sm:$0xff]
    %v6921 = vld [vmem:[%s217 + $0x2c0] sm:$0xff]
    %v6922 = vld [vmem:[%s217 + $0x2d0] sm:$0xff]
    %v6923 = vld [vmem:[%s217 + $0x2d8] sm:$0xff]
    %v6924 = vld [vmem:[%s217 + $0x2e8] sm:$0xff]
    %v6925 = vld [vmem:[%s217 + $0x2f0] sm:$0xff]
    %v6926 = vld [vmem:[%s217 + $0x300] sm:$0xff]
    %v6927 = vld [vmem:[%s217 + $0x308] sm:$0xff]
    %v6928 = vld [vmem:[%s217 + $0x318] sm:$0xff]
    %v6929 = vld [vmem:[%s217 + $0x320] sm:$0xff]
    %s6930 = scalar_lea.vmem [#allocation8], 384
    %v6931 = vld [vmem:[%s6930] sm:$0xff]
    %v6932 = vld [vmem:[%s6930 + $0x8] sm:$0xff]
    %v6933 = vld [vmem:[%s6930 + $0x10] sm:$0xff]
    %v6934 = vld [vmem:[%s6930 + $0x18] sm:$0xff]
    %v6935 = vld [vmem:[%s6930 + $0x20] sm:$0xff]
    %v6936 = vld [vmem:[%s6930 + $0x28] sm:$0xff]
    %v6937 = vld [vmem:[%s6930 + $0x30] sm:$0xff]
    %v6938 = vld [vmem:[%s6930 + $0x38] sm:$0xff]
    %v6939 = vld [vmem:[%s6930 + $0x40] sm:$0xff]
    %v6940 = vld [vmem:[%s6930 + $0x48] sm:$0xff]
    %v6941 = vld [vmem:[%s6930 + $0x50] sm:$0xff]
    %v6942 = vld [vmem:[%s6930 + $0x58] sm:$0xff]
    %v6943 = vld [vmem:[%s6930 + $0x60] sm:$0xff]
    %v6944 = vld [vmem:[%s6930 + $0x68] sm:$0xff]
    %v6945 = vld [vmem:[%s6930 + $0x70] sm:$0xff]
    %v6946 = vld [vmem:[%s6930 + $0x78] sm:$0xff]
    %6947 = vmatprep.subr.mxu0 0.0
    %6948 = vmatpush1.msra.mxu0 %v6931
    %6949 = vmatprep.subr.mxu0 0.0
    %6950 = vmatpush1.msra.mxu0 %v6932
    %6951 = vmatprep.subr.mxu0 0.0
    %6952 = vmatpush1.msra.mxu0 %v6933
    %6953 = vmatprep.subr.mxu0 0.0
    %6954 = vmatpush1.msra.mxu0 %v6934
    %6955 = vmatprep.subr.mxu0 0.0
    %6956 = vmatpush1.msra.mxu0 %v6935
    %6957 = vmatprep.subr.mxu0 0.0
    %6958 = vmatpush1.msra.mxu0 %v6936
    %6959 = vmatprep.subr.mxu0 0.0
    %6960 = vmatpush1.msra.mxu0 %v6937
    %6961 = vmatprep.subr.mxu0 0.0
    %6962 = vmatpush1.msra.mxu0 %v6938
    %6963 = vmatprep.subr.mxu0 0.0
    %6964 = vmatpush1.msra.mxu0 %v6939
    %6965 = vmatprep.subr.mxu0 0.0
    %6966 = vmatpush1.msra.mxu0 %v6940
    %6967 = vmatprep.subr.mxu0 0.0
    %6968 = vmatpush1.msra.mxu0 %v6941
    %6969 = vmatprep.subr.mxu0 0.0
    %6970 = vmatpush1.msra.mxu0 %v6942
    %6971 = vmatprep.subr.mxu0 0.0
    %6972 = vmatpush1.msra.mxu0 %v6943
    %6973 = vmatprep.subr.mxu0 0.0
    %6974 = vmatpush1.msra.mxu0 %v6944
    %6975 = vmatprep.subr.mxu0 0.0
    %6976 = vmatpush1.msra.mxu0 %v6945
    %6977 = vmatprep.subr.mxu0 0.0
    %6978 = vmatpush1.msra.mxu0 %v6946
    %6979 = vmatprep.subr.mxu0 0.0
    %6980 = vmatpush1.msra.mxu0 0.0
    %6981 = vmatprep.subr.mxu0 0.0
    %6982 = vmatpush1.msra.mxu0 0.0
    %6983 = vmatprep.subr.mxu0 0.0
    %6984 = vmatpush1.msra.mxu0 0.0
    %6985 = vmatprep.subr.mxu0 0.0
    %6986 = vmatpush1.msra.mxu0 0.0
    %6987 = vmatprep.subr.mxu0 0.0
    %6988 = vmatpush1.msra.mxu0 0.0
    %6989 = vmatprep.subr.mxu0 0.0
    %6990 = vmatpush1.msra.mxu0 0.0
    %6991 = vmatprep.subr.mxu0 0.0
    %6992 = vmatpush1.msra.mxu0 0.0
    %6993 = vmatprep.subr.mxu0 0.0
    %6994 = vmatpush1.msra.mxu0 0.0
    %6995 = vmatprep.subr.mxu0 0.0
    %6996 = vmatpush1.msra.mxu0 0.0
    %6997 = vmatprep.subr.mxu0 0.0
    %6998 = vmatpush1.msra.mxu0 0.0
    %6999 = vmatprep.subr.mxu0 0.0
    %7000 = vmatpush1.msra.mxu0 0.0
    %7001 = vmatprep.subr.mxu0 0.0
    %7002 = vmatpush1.msra.mxu0 0.0
    %7003 = vmatprep.subr.mxu0 0.0
    %7004 = vmatpush1.msra.mxu0 0.0
    %7005 = vmatprep.subr.mxu0 0.0
    %7006 = vmatpush1.msra.mxu0 0.0
    %7007 = vmatprep.subr.mxu0 0.0
    %7008 = vmatpush1.msra.mxu0 0.0
    %7009 = vmatprep.subr.mxu0 0.0
    %7010 = vmatpush1.msra.mxu0 0.0
    %7011 = vmatprep.mubr.f32.mxu0 0.0
    %7012 = vmatmul.mubr.f32.gmra.mrb[0].mxu0 %v6866
    %v7013 = vpop.f32.mrb[0].mxu0
    %v7014 = vadd.f32 0.0, %v7013
    %v7015 = vpop.f32.mrb[0].mxu0
    %7016 = vmatprep.mubr.f32.mxu0 0.0
    %7017 = vmatmul.mubr.f32.gmra.mrb[0].mxu0 %v6867
    %v7018 = vpop.f32.mrb[0].mxu0
    %v7019 = vadd.f32 0.0, %v7018
    %v7020 = vpop.f32.mrb[0].mxu0
    %7021 = vmatprep.mubr.f32.mxu0 0.0
    %7022 = vmatmul.mubr.f32.gmra.mrb[0].mxu0 %v6868
    %v7023 = vpop.f32.mrb[0].mxu0
    %v7024 = vadd.f32 0.0, %v7023
    %v7025 = vpop.f32.mrb[0].mxu0
    %7026 = vmatprep.mubr.f32.mxu0 0.0
    %7027 = vmatmul.mubr.f32.gmra.mrb[0].mxu0 %v6869
    %v7028 = vpop.f32.mrb[0].mxu0
    %v7029 = vadd.f32 0.0, %v7028
    %v7030 = vpop.f32.mrb[0].mxu0
    %7031 = vmatprep.mubr.f32.mxu0 0.0
    %7032 = vmatmul.mubr.f32.gmra.mrb[0].mxu0 %v6870
    %v7033 = vpop.f32.mrb[0].mxu0
    %v7034 = vadd.f32 0.0, %v7033
    %v7035 = vpop.f32.mrb[0].mxu0
    %7036 = vmatprep.mubr.f32.mxu0 0.0
    %7037 = vmatmul.mubr.f32.gmra.mrb[0].mxu0 %v6871
    %v7038 = vpop.f32.mrb[0].mxu0
    %v7039 = vadd.f32 0.0, %v7038
    %v7040 = vpop.f32.mrb[0].mxu0
    %7041 = vmatprep.mubr.f32.mxu0 0.0
    %7042 = vmatmul.mubr.f32.gmra.mrb[0].mxu0 %v6872
    %v7043 = vpop.f32.mrb[0].mxu0
    %v7044 = vadd.f32 0.0, %v7043
    %v7045 = vpop.f32.mrb[0].mxu0
    %7046 = vmatprep.mubr.f32.mxu0 0.0
    %7047 = vmatmul.mubr.f32.gmra.mrb[0].mxu0 %v6873
    %v7048 = vpop.f32.mrb[0].mxu0
    %v7049 = vadd.f32 0.0, %v7048
    %v7050 = vpop.f32.mrb[0].mxu0
    %7051 = vmatprep.mubr.f32.mxu0 0.0
    %7052 = vmatmul.mubr.f32.gmra.mrb[0].mxu0 %v6874
    %v7053 = vpop.f32.mrb[0].mxu0
    %v7054 = vadd.f32 0.0, %v7053
    %v7055 = vpop.f32.mrb[0].mxu0
    %7056 = vmatprep.mubr.f32.mxu0 0.0
    %7057 = vmatmul.mubr.f32.gmra.mrb[0].mxu0 %v6875
    %v7058 = vpop.f32.mrb[0].mxu0
    %v7059 = vadd.f32 0.0, %v7058
    %v7060 = vpop.f32.mrb[0].mxu0
    %7061 = vmatprep.mubr.f32.mxu0 0.0
    %7062 = vmatmul.mubr.f32.gmra.mrb[0].mxu0 %v6876
    %v7063 = vpop.f32.mrb[0].mxu0
    %v7064 = vadd.f32 0.0, %v7063
    %v7065 = vpop.f32.mrb[0].mxu0
    %7066 = vmatprep.mubr.f32.mxu0 0.0
    %7067 = vmatmul.mubr.f32.gmra.mrb[0].mxu0 %v6877
    %v7068 = vpop.f32.mrb[0].mxu0
    %v7069 = vadd.f32 0.0, %v7068
    %v7070 = vpop.f32.mrb[0].mxu0
    %7071 = vmatprep.mubr.f32.mxu0 0.0
    %7072 = vmatmul.mubr.f32.gmra.mrb[0].mxu0 %v6878
    %v7073 = vpop.f32.mrb[0].mxu0
    %v7074 = vadd.f32 0.0, %v7073
    %v7075 = vpop.f32.mrb[0].mxu0
    %7076 = vmatprep.mubr.f32.mxu0 0.0
    %7077 = vmatmul.mubr.f32.gmra.mrb[0].mxu0 %v6879
    %v7078 = vpop.f32.mrb[0].mxu0
    %v7079 = vadd.f32 0.0, %v7078
    %v7080 = vpop.f32.mrb[0].mxu0
    %7081 = vmatprep.mubr.f32.mxu0 0.0
    %7082 = vmatmul.mubr.f32.gmra.mrb[0].mxu0 %v6880
    %v7083 = vpop.f32.mrb[0].mxu0
    %v7084 = vadd.f32 0.0, %v7083
    %v7085 = vpop.f32.mrb[0].mxu0
    %7086 = vmatprep.mubr.f32.mxu0 0.0
    %7087 = vmatmul.mubr.f32.gmra.mrb[0].mxu0 %v6881
    %v7088 = vpop.f32.mrb[0].mxu0
    %v7089 = vadd.f32 0.0, %v7088
    %v7090 = vpop.f32.mrb[0].mxu0
    %7091 = vmatprep.mubr.f32.mxu0 0.0
    %7092 = vmatmul.mubr.f32.gmra.mrb[0].mxu0 %v6882
    %v7093 = vpop.f32.mrb[0].mxu0
    %v7094 = vadd.f32 0.0, %v7093
    %v7095 = vpop.f32.mrb[0].mxu0
    %7096 = vmatprep.mubr.f32.mxu0 0.0
    %7097 = vmatmul.mubr.f32.gmra.mrb[0].mxu0 %v6883
    %v7098 = vpop.f32.mrb[0].mxu0
    %v7099 = vadd.f32 0.0, %v7098
    %v7100 = vpop.f32.mrb[0].mxu0
    %7101 = vmatprep.mubr.f32.mxu0 0.0
    %7102 = vmatmul.mubr.f32.gmra.mrb[0].mxu0 %v6884
    %v7103 = vpop.f32.mrb[0].mxu0
    %v7104 = vadd.f32 0.0, %v7103
    %v7105 = vpop.f32.mrb[0].mxu0
    %7106 = vmatprep.mubr.f32.mxu0 0.0
    %7107 = vmatmul.mubr.f32.gmra.mrb[0].mxu0 %v6885
    %v7108 = vpop.f32.mrb[0].mxu0
    %v7109 = vadd.f32 0.0, %v7108
    %v7110 = vpop.f32.mrb[0].mxu0
    %7111 = vmatprep.mubr.f32.mxu0 0.0
    %7112 = vmatmul.mubr.f32.gmra.mrb[0].mxu0 %v6886
    %v7113 = vpop.f32.mrb[0].mxu0
    %v7114 = vadd.f32 0.0, %v7113
    %v7115 = vpop.f32.mrb[0].mxu0
    %7116 = vmatprep.mubr.f32.mxu0 0.0
    %7117 = vmatmul.mubr.f32.gmra.mrb[0].mxu0 %v6887
    %v7118 = vpop.f32.mrb[0].mxu0
    %v7119 = vadd.f32 0.0, %v7118
    %v7120 = vpop.f32.mrb[0].mxu0
    %7121 = vmatprep.mubr.f32.mxu0 0.0
    %7122 = vmatmul.mubr.f32.gmra.mrb[0].mxu0 %v6888
    %v7123 = vpop.f32.mrb[0].mxu0
    %v7124 = vadd.f32 0.0, %v7123
    %v7125 = vpop.f32.mrb[0].mxu0
    %7126 = vmatprep.mubr.f32.mxu0 0.0
    %7127 = vmatmul.mubr.f32.gmra.mrb[0].mxu0 %v6889
    %v7128 = vpop.f32.mrb[0].mxu0
    %v7129 = vadd.f32 0.0, %v7128
    %v7130 = vpop.f32.mrb[0].mxu0
    %7131 = vmatprep.mubr.f32.mxu0 0.0
    %7132 = vmatmul.mubr.f32.gmra.mrb[0].mxu0 %v6890
    %v7133 = vpop.f32.mrb[0].mxu0
    %v7134 = vadd.f32 0.0, %v7133
    %v7135 = vpop.f32.mrb[0].mxu0
    %7136 = vmatprep.mubr.f32.mxu0 0.0
    %7137 = vmatmul.mubr.f32.gmra.mrb[0].mxu0 %v6891
    %v7138 = vpop.f32.mrb[0].mxu0
    %v7139 = vadd.f32 0.0, %v7138
    %v7140 = vpop.f32.mrb[0].mxu0
    %7141 = vmatprep.mubr.f32.mxu0 0.0
    %7142 = vmatmul.mubr.f32.gmra.mrb[0].mxu0 %v6892
    %v7143 = vpop.f32.mrb[0].mxu0
    %v7144 = vadd.f32 0.0, %v7143
    %v7145 = vpop.f32.mrb[0].mxu0
    %7146 = vmatprep.mubr.f32.mxu0 0.0
    %7147 = vmatmul.mubr.f32.gmra.mrb[0].mxu0 %v6893
    %v7148 = vpop.f32.mrb[0].mxu0
    %v7149 = vadd.f32 0.0, %v7148
    %v7150 = vpop.f32.mrb[0].mxu0
    %7151 = vmatprep.mubr.f32.mxu0 0.0
    %7152 = vmatmul.mubr.f32.gmra.mrb[0].mxu0 %v6894
    %v7153 = vpop.f32.mrb[0].mxu0
    %v7154 = vadd.f32 0.0, %v7153
    %v7155 = vpop.f32.mrb[0].mxu0
    %7156 = vmatprep.mubr.f32.mxu0 0.0
    %7157 = vmatmul.mubr.f32.gmra.mrb[0].mxu0 %v6895
    %v7158 = vpop.f32.mrb[0].mxu0
    %v7159 = vadd.f32 0.0, %v7158
    %v7160 = vpop.f32.mrb[0].mxu0
    %7161 = vmatprep.mubr.f32.mxu0 0.0
    %7162 = vmatmul.mubr.f32.gmra.mrb[0].mxu0 %v6896
    %v7163 = vpop.f32.mrb[0].mxu0
    %v7164 = vadd.f32 0.0, %v7163
    %v7165 = vpop.f32.mrb[0].mxu0
    %7166 = vmatprep.mubr.f32.mxu0 0.0
    %7167 = vmatmul.mubr.f32.gmra.mrb[0].mxu0 %v6897
    %v7168 = vpop.f32.mrb[0].mxu0
    %v7169 = vadd.f32 0.0, %v7168
    %v7170 = vpop.f32.mrb[0].mxu0
    %7171 = vmatprep.mubr.f32.mxu0 0.0
    %7172 = vmatmul.mubr.f32.gmra.mrb[0].mxu0 %v6898
    %v7173 = vpop.f32.mrb[0].mxu0
    %v7174 = vadd.f32 0.0, %v7173
    %v7175 = vpop.f32.mrb[0].mxu0
    %7176 = vmatprep.mubr.f32.mxu0 0.0
    %7177 = vmatmul.mubr.f32.gmra.mrb[0].mxu0 %v6899
    %v7178 = vpop.f32.mrb[0].mxu0
    %v7179 = vadd.f32 0.0, %v7178
    %v7180 = vpop.f32.mrb[0].mxu0
    %7181 = vmatprep.mubr.f32.mxu0 0.0
    %7182 = vmatmul.mubr.f32.gmra.mrb[0].mxu0 %v6900
    %v7183 = vpop.f32.mrb[0].mxu0
    %v7184 = vadd.f32 0.0, %v7183
    %v7185 = vpop.f32.mrb[0].mxu0
    %7186 = vmatprep.mubr.f32.mxu0 0.0
    %7187 = vmatmul.mubr.f32.gmra.mrb[0].mxu0 %v6901
    %v7188 = vpop.f32.mrb[0].mxu0
    %v7189 = vadd.f32 0.0, %v7188
    %v7190 = vpop.f32.mrb[0].mxu0
    %7191 = vmatprep.mubr.f32.mxu0 0.0
    %7192 = vmatmul.mubr.f32.gmra.mrb[0].mxu0 %v6902
    %v7193 = vpop.f32.mrb[0].mxu0
    %v7194 = vadd.f32 0.0, %v7193
    %v7195 = vpop.f32.mrb[0].mxu0
    %7196 = vmatprep.mubr.f32.mxu0 0.0
    %7197 = vmatmul.mubr.f32.gmra.mrb[0].mxu0 %v6903
    %v7198 = vpop.f32.mrb[0].mxu0
    %v7199 = vadd.f32 0.0, %v7198
    %v7200 = vpop.f32.mrb[0].mxu0
    %7201 = vmatprep.mubr.f32.mxu0 0.0
    %7202 = vmatmul.mubr.f32.gmra.mrb[0].mxu0 %v6904
    %v7203 = vpop.f32.mrb[0].mxu0
    %v7204 = vadd.f32 0.0, %v7203
    %v7205 = vpop.f32.mrb[0].mxu0
    %7206 = vmatprep.mubr.f32.mxu0 0.0
    %7207 = vmatmul.mubr.f32.gmra.mrb[0].mxu0 %v6905
    %v7208 = vpop.f32.mrb[0].mxu0
    %v7209 = vadd.f32 0.0, %v7208
    %v7210 = vpop.f32.mrb[0].mxu0
    %7211 = vmatprep.mubr.f32.mxu0 0.0
    %7212 = vmatmul.mubr.f32.gmra.mrb[0].mxu0 %v6906
    %v7213 = vpop.f32.mrb[0].mxu0
    %v7214 = vadd.f32 0.0, %v7213
    %v7215 = vpop.f32.mrb[0].mxu0
    %7216 = vmatprep.mubr.f32.mxu0 0.0
    %7217 = vmatmul.mubr.f32.gmra.mrb[0].mxu0 %v6907
    %v7218 = vpop.f32.mrb[0].mxu0
    %v7219 = vadd.f32 0.0, %v7218
    %v7220 = vpop.f32.mrb[0].mxu0
    %7221 = vmatprep.mubr.f32.mxu0 0.0
    %7222 = vmatmul.mubr.f32.gmra.mrb[0].mxu0 %v6908
    %v7223 = vpop.f32.mrb[0].mxu0
    %v7224 = vadd.f32 0.0, %v7223
    %v7225 = vpop.f32.mrb[0].mxu0
    %7226 = vmatprep.mubr.f32.mxu0 0.0
    %7227 = vmatmul.mubr.f32.gmra.mrb[0].mxu0 %v6909
    %v7228 = vpop.f32.mrb[0].mxu0
    %v7229 = vadd.f32 0.0, %v7228
    %v7230 = vpop.f32.mrb[0].mxu0
    %7231 = vmatprep.mubr.f32.mxu0 0.0
    %7232 = vmatmul.mubr.f32.gmra.mrb[0].mxu0 %v6910
    %v7233 = vpop.f32.mrb[0].mxu0
    %v7234 = vadd.f32 0.0, %v7233
    %v7235 = vpop.f32.mrb[0].mxu0
    %7236 = vmatprep.mubr.f32.mxu0 0.0
    %7237 = vmatmul.mubr.f32.gmra.mrb[0].mxu0 %v6911
    %v7238 = vpop.f32.mrb[0].mxu0
    %v7239 = vadd.f32 0.0, %v7238
    %v7240 = vpop.f32.mrb[0].mxu0
    %7241 = vmatprep.mubr.f32.mxu0 0.0
    %7242 = vmatmul.mubr.f32.gmra.mrb[0].mxu0 %v6912
    %v7243 = vpop.f32.mrb[0].mxu0
    %v7244 = vadd.f32 0.0, %v7243
    %v7245 = vpop.f32.mrb[0].mxu0
    %7246 = vmatprep.mubr.f32.mxu0 0.0
    %7247 = vmatmul.mubr.f32.gmra.mrb[0].mxu0 %v6913
    %v7248 = vpop.f32.mrb[0].mxu0
    %v7249 = vadd.f32 0.0, %v7248
    %v7250 = vpop.f32.mrb[0].mxu0
    %7251 = vmatprep.mubr.f32.mxu0 0.0
    %7252 = vmatmul.mubr.f32.gmra.mrb[0].mxu0 %v6914
    %v7253 = vpop.f32.mrb[0].mxu0
    %v7254 = vadd.f32 0.0, %v7253
    %v7255 = vpop.f32.mrb[0].mxu0
    %7256 = vmatprep.mubr.f32.mxu0 0.0
    %7257 = vmatmul.mubr.f32.gmra.mrb[0].mxu0 %v6915
    %v7258 = vpop.f32.mrb[0].mxu0
    %v7259 = vadd.f32 0.0, %v7258
    %v7260 = vpop.f32.mrb[0].mxu0
    %7261 = vmatprep.mubr.f32.mxu0 0.0
    %7262 = vmatmul.mubr.f32.gmra.mrb[0].mxu0 %v6916
    %v7263 = vpop.f32.mrb[0].mxu0
    %v7264 = vadd.f32 0.0, %v7263
    %v7265 = vpop.f32.mrb[0].mxu0
    %7266 = vmatprep.mubr.f32.mxu0 0.0
    %7267 = vmatmul.mubr.f32.gmra.mrb[0].mxu0 %v6917
    %v7268 = vpop.f32.mrb[0].mxu0
    %v7269 = vadd.f32 0.0, %v7268
    %v7270 = vpop.f32.mrb[0].mxu0
    %7271 = vmatprep.mubr.f32.mxu0 0.0
    %7272 = vmatmul.mubr.f32.gmra.mrb[0].mxu0 %v6918
    %v7273 = vpop.f32.mrb[0].mxu0
    %v7274 = vadd.f32 0.0, %v7273
    %v7275 = vpop.f32.mrb[0].mxu0
    %7276 = vmatprep.mubr.f32.mxu0 0.0
    %7277 = vmatmul.mubr.f32.gmra.mrb[0].mxu0 %v6919
    %v7278 = vpop.f32.mrb[0].mxu0
    %v7279 = vadd.f32 0.0, %v7278
    %v7280 = vpop.f32.mrb[0].mxu0
    %7281 = vmatprep.mubr.f32.mxu0 0.0
    %7282 = vmatmul.mubr.f32.gmra.mrb[0].mxu0 %v6920
    %v7283 = vpop.f32.mrb[0].mxu0
    %v7284 = vadd.f32 0.0, %v7283
    %v7285 = vpop.f32.mrb[0].mxu0
    %7286 = vmatprep.mubr.f32.mxu0 0.0
    %7287 = vmatmul.mubr.f32.gmra.mrb[0].mxu0 %v6921
    %v7288 = vpop.f32.mrb[0].mxu0
    %v7289 = vadd.f32 0.0, %v7288
    %v7290 = vpop.f32.mrb[0].mxu0
    %7291 = vmatprep.mubr.f32.mxu0 0.0
    %7292 = vmatmul.mubr.f32.gmra.mrb[0].mxu0 %v6922
    %v7293 = vpop.f32.mrb[0].mxu0
    %v7294 = vadd.f32 0.0, %v7293
    %v7295 = vpop.f32.mrb[0].mxu0
    %7296 = vmatprep.mubr.f32.mxu0 0.0
    %7297 = vmatmul.mubr.f32.gmra.mrb[0].mxu0 %v6923
    %v7298 = vpop.f32.mrb[0].mxu0
    %v7299 = vadd.f32 0.0, %v7298
    %v7300 = vpop.f32.mrb[0].mxu0
    %7301 = vmatprep.mubr.f32.mxu0 0.0
    %7302 = vmatmul.mubr.f32.gmra.mrb[0].mxu0 %v6924
    %v7303 = vpop.f32.mrb[0].mxu0
    %v7304 = vadd.f32 0.0, %v7303
    %v7305 = vpop.f32.mrb[0].mxu0
    %7306 = vmatprep.mubr.f32.mxu0 0.0
    %7307 = vmatmul.mubr.f32.gmra.mrb[0].mxu0 %v6925
    %v7308 = vpop.f32.mrb[0].mxu0
    %v7309 = vadd.f32 0.0, %v7308
    %v7310 = vpop.f32.mrb[0].mxu0
    %7311 = vmatprep.mubr.f32.mxu0 0.0
    %7312 = vmatmul.mubr.f32.gmra.mrb[0].mxu0 %v6926
    %v7313 = vpop.f32.mrb[0].mxu0
    %v7314 = vadd.f32 0.0, %v7313
    %v7315 = vpop.f32.mrb[0].mxu0
    %7316 = vmatprep.mubr.f32.mxu0 0.0
    %7317 = vmatmul.mubr.f32.gmra.mrb[0].mxu0 %v6927
    %v7318 = vpop.f32.mrb[0].mxu0
    %v7319 = vadd.f32 0.0, %v7318
    %v7320 = vpop.f32.mrb[0].mxu0
    %7321 = vmatprep.mubr.f32.mxu0 0.0
    %7322 = vmatmul.mubr.f32.gmra.mrb[0].mxu0 %v6928
    %v7323 = vpop.f32.mrb[0].mxu0
    %v7324 = vadd.f32 0.0, %v7323
    %v7325 = vpop.f32.mrb[0].mxu0
    %7326 = vmatprep.mubr.f32.mxu0 0.0
    %7327 = vmatmul.mubr.f32.gmra.mrb[0].mxu0 %v6929
    %v7328 = vpop.f32.mrb[0].mxu0
    %v7329 = vadd.f32 0.0, %v7328
    %v7330 = vpop.f32.mrb[0].mxu0
    %7331 = vdwg.mxu0
    %v7332 = vadd.f32 %v6802, %v7014
    %v7333 = vadd.f32 %v6803, %v7019
    %v7334 = vadd.f32 %v6804, %v7024
    %v7335 = vadd.f32 %v6805, %v7029
    %v7336 = vadd.f32 %v6806, %v7034
    %v7337 = vadd.f32 %v6807, %v7039
    %v7338 = vadd.f32 %v6808, %v7044
    %v7339 = vadd.f32 %v6809, %v7049
    %v7340 = vadd.f32 %v6810, %v7054
    %v7341 = vadd.f32 %v6811, %v7059
    %v7342 = vadd.f32 %v6812, %v7064
    %v7343 = vadd.f32 %v6813, %v7069
    %v7344 = vadd.f32 %v6814, %v7074
    %v7345 = vadd.f32 %v6815, %v7079
    %v7346 = vadd.f32 %v6816, %v7084
    %v7347 = vadd.f32 %v6817, %v7089
    %v7348 = vadd.f32 %v6818, %v7094
    %v7349 = vadd.f32 %v6819, %v7099
    %v7350 = vadd.f32 %v6820, %v7104
    %v7351 = vadd.f32 %v6821, %v7109
    %v7352 = vadd.f32 %v6822, %v7114
    %v7353 = vadd.f32 %v6823, %v7119
    %v7354 = vadd.f32 %v6824, %v7124
    %v7355 = vadd.f32 %v6825, %v7129
    %v7356 = vadd.f32 %v6826, %v7134
    %v7357 = vadd.f32 %v6827, %v7139
    %v7358 = vadd.f32 %v6828, %v7144
    %v7359 = vadd.f32 %v6829, %v7149
    %v7360 = vadd.f32 %v6830, %v7154
    %v7361 = vadd.f32 %v6831, %v7159
    %v7362 = vadd.f32 %v6832, %v7164
    %v7363 = vadd.f32 %v6833, %v7169
    %v7364 = vadd.f32 %v6834, %v7174
    %v7365 = vadd.f32 %v6835, %v7179
    %v7366 = vadd.f32 %v6836, %v7184
    %v7367 = vadd.f32 %v6837, %v7189
    %v7368 = vadd.f32 %v6838, %v7194
    %v7369 = vadd.f32 %v6839, %v7199
    %v7370 = vadd.f32 %v6840, %v7204
    %v7371 = vadd.f32 %v6841, %v7209
    %v7372 = vadd.f32 %v6842, %v7214
    %v7373 = vadd.f32 %v6843, %v7219
    %v7374 = vadd.f32 %v6844, %v7224
    %v7375 = vadd.f32 %v6845, %v7229
    %v7376 = vadd.f32 %v6846, %v7234
    %v7377 = vadd.f32 %v6847, %v7239
    %v7378 = vadd.f32 %v6848, %v7244
    %v7379 = vadd.f32 %v6849, %v7249
    %v7380 = vadd.f32 %v6850, %v7254
    %v7381 = vadd.f32 %v6851, %v7259
    %v7382 = vadd.f32 %v6852, %v7264
    %v7383 = vadd.f32 %v6853, %v7269
    %v7384 = vadd.f32 %v6854, %v7274
    %v7385 = vadd.f32 %v6855, %v7279
    %v7386 = vadd.f32 %v6856, %v7284
    %v7387 = vadd.f32 %v6857, %v7289
    %v7388 = vadd.f32 %v6858, %v7294
    %v7389 = vadd.f32 %v6859, %v7299
    %v7390 = vadd.f32 %v6860, %v7304
    %v7391 = vadd.f32 %v6861, %v7309
    %v7392 = vadd.f32 %v6862, %v7314
    %v7393 = vadd.f32 %v6863, %v7319
    %v7394 = vadd.f32 %v6864, %v7324
    %v7395 = vadd.f32 %v6865, %v7329
    %v7396 = vld [vmem:[%s217 + $0x1] sm:$0xff]
    %v7397 = vld [vmem:[%s217 + $0x9] sm:$0xff]
    %v7398 = vld [vmem:[%s217 + $0x19] sm:$0xff]
    %v7399 = vld [vmem:[%s217 + $0x21] sm:$0xff]
    %v7400 = vld [vmem:[%s217 + $0x31] sm:$0xff]
    %v7401 = vld [vmem:[%s217 + $0x39] sm:$0xff]
    %v7402 = vld [vmem:[%s217 + $0x49] sm:$0xff]
    %v7403 = vld [vmem:[%s217 + $0x51] sm:$0xff]
    %v7404 = vld [vmem:[%s217 + $0x61] sm:$0xff]
    %v7405 = vld [vmem:[%s217 + $0x69] sm:$0xff]
    %v7406 = vld [vmem:[%s217 + $0x79] sm:$0xff]
    %v7407 = vld [vmem:[%s217 + $0x81] sm:$0xff]
    %v7408 = vld [vmem:[%s217 + $0x91] sm:$0xff]
    %v7409 = vld [vmem:[%s217 + $0x99] sm:$0xff]
    %v7410 = vld [vmem:[%s217 + $0xa9] sm:$0xff]
    %v7411 = vld [vmem:[%s217 + $0xb1] sm:$0xff]
    %v7412 = vld [vmem:[%s217 + $0xc1] sm:$0xff]
    %v7413 = vld [vmem:[%s217 + $0xc9] sm:$0xff]
    %v7414 = vld [vmem:[%s217 + $0xd9] sm:$0xff]
    %v7415 = vld [vmem:[%s217 + $0xe1] sm:$0xff]
    %v7416 = vld [vmem:[%s217 + $0xf1] sm:$0xff]
    %v7417 = vld [vmem:[%s217 + $0xf9] sm:$0xff]
    %v7418 = vld [vmem:[%s217 + $0x109] sm:$0xff]
    %v7419 = vld [vmem:[%s217 + $0x111] sm:$0xff]
    %v7420 = vld [vmem:[%s217 + $0x121] sm:$0xff]
    %v7421 = vld [vmem:[%s217 + $0x129] sm:$0xff]
    %v7422 = vld [vmem:[%s217 + $0x139] sm:$0xff]
    %v7423 = vld [vmem:[%s217 + $0x141] sm:$0xff]
    %v7424 = vld [vmem:[%s217 + $0x151] sm:$0xff]
    %v7425 = vld [vmem:[%s217 + $0x159] sm:$0xff]
    %v7426 = vld [vmem:[%s217 + $0x169] sm:$0xff]
    %v7427 = vld [vmem:[%s217 + $0x171] sm:$0xff]
    %v7428 = vld [vmem:[%s217 + $0x1b1] sm:$0xff]
    %v7429 = vld [vmem:[%s217 + $0x1b9] sm:$0xff]
    %v7430 = vld [vmem:[%s217 + $0x1c9] sm:$0xff]
    %v7431 = vld [vmem:[%s217 + $0x1d1] sm:$0xff]
    %v7432 = vld [vmem:[%s217 + $0x1e1] sm:$0xff]
    %v7433 = vld [vmem:[%s217 + $0x1e9] sm:$0xff]
    %v7434 = vld [vmem:[%s217 + $0x1f9] sm:$0xff]
    %v7435 = vld [vmem:[%s217 + $0x201] sm:$0xff]
    %v7436 = vld [vmem:[%s217 + $0x211] sm:$0xff]
    %v7437 = vld [vmem:[%s217 + $0x219] sm:$0xff]
    %v7438 = vld [vmem:[%s217 + $0x229] sm:$0xff]
    %v7439 = vld [vmem:[%s217 + $0x231] sm:$0xff]
    %v7440 = vld [vmem:[%s217 + $0x241] sm:$0xff]
    %v7441 = vld [vmem:[%s217 + $0x249] sm:$0xff]
    %v7442 = vld [vmem:[%s217 + $0x259] sm:$0xff]
    %v7443 = vld [vmem:[%s217 + $0x261] sm:$0xff]
    %v7444 = vld [vmem:[%s217 + $0x271] sm:$0xff]
    %v7445 = vld [vmem:[%s217 + $0x279] sm:$0xff]
    %v7446 = vld [vmem:[%s217 + $0x289] sm:$0xff]
    %v7447 = vld [vmem:[%s217 + $0x291] sm:$0xff]
    %v7448 = vld [vmem:[%s217 + $0x2a1] sm:$0xff]
    %v7449 = vld [vmem:[%s217 + $0x2a9] sm:$0xff]
    %v7450 = vld [vmem:[%s217 + $0x2b9] sm:$0xff]
    %v7451 = vld [vmem:[%s217 + $0x2c1] sm:$0xff]
    %v7452 = vld [vmem:[%s217 + $0x2d1] sm:$0xff]
    %v7453 = vld [vmem:[%s217 + $0x2d9] sm:$0xff]
    %v7454 = vld [vmem:[%s217 + $0x2e9] sm:$0xff]
    %v7455 = vld [vmem:[%s217 + $0x2f1] sm:$0xff]
    %v7456 = vld [vmem:[%s217 + $0x301] sm:$0xff]
    %v7457 = vld [vmem:[%s217 + $0x309] sm:$0xff]
    %v7458 = vld [vmem:[%s217 + $0x319] sm:$0xff]
    %v7459 = vld [vmem:[%s217 + $0x321] sm:$0xff]
    %s7460 = scalar_lea.vmem [#allocation8], 512
    %v7461 = vld [vmem:[%s7460] sm:$0xff]
    %v7462 = vld [vmem:[%s7460 + $0x8] sm:$0xff]
    %v7463 = vld [vmem:[%s7460 + $0x10] sm:$0xff]
    %v7464 = vld [vmem:[%s7460 + $0x18] sm:$0xff]
    %v7465 = vld [vmem:[%s7460 + $0x20] sm:$0xff]
    %v7466 = vld [vmem:[%s7460 + $0x28] sm:$0xff]
    %v7467 = vld [vmem:[%s7460 + $0x30] sm:$0xff]
    %v7468 = vld [vmem:[%s7460 + $0x38] sm:$0xff]
    %v7469 = vld [vmem:[%s7460 + $0x40] sm:$0xff]
    %v7470 = vld [vmem:[%s7460 + $0x48] sm:$0xff]
    %v7471 = vld [vmem:[%s7460 + $0x50] sm:$0xff]
    %v7472 = vld [vmem:[%s7460 + $0x58] sm:$0xff]
    %v7473 = vld [vmem:[%s7460 + $0x60] sm:$0xff]
    %v7474 = vld [vmem:[%s7460 + $0x68] sm:$0xff]
    %v7475 = vld [vmem:[%s7460 + $0x70] sm:$0xff]
    %v7476 = vld [vmem:[%s7460 + $0x78] sm:$0xff]
    %7477 = vmatprep.subr.mxu0 0.0
    %7478 = vmatpush1.msra.mxu0 %v7461
    %7479 = vmatprep.subr.mxu0 0.0
    %7480 = vmatpush1.msra.mxu0 %v7462
    %7481 = vmatprep.subr.mxu0 0.0
    %7482 = vmatpush1.msra.mxu0 %v7463
    %7483 = vmatprep.subr.mxu0 0.0
    %7484 = vmatpush1.msra.mxu0 %v7464
    %7485 = vmatprep.subr.mxu0 0.0
    %7486 = vmatpush1.msra.mxu0 %v7465
    %7487 = vmatprep.subr.mxu0 0.0
    %7488 = vmatpush1.msra.mxu0 %v7466
    %7489 = vmatprep.subr.mxu0 0.0
    %7490 = vmatpush1.msra.mxu0 %v7467
    %7491 = vmatprep.subr.mxu0 0.0
    %7492 = vmatpush1.msra.mxu0 %v7468
    %7493 = vmatprep.subr.mxu0 0.0
    %7494 = vmatpush1.msra.mxu0 %v7469
    %7495 = vmatprep.subr.mxu0 0.0
    %7496 = vmatpush1.msra.mxu0 %v7470
    %7497 = vmatprep.subr.mxu0 0.0
    %7498 = vmatpush1.msra.mxu0 %v7471
    %7499 = vmatprep.subr.mxu0 0.0
    %7500 = vmatpush1.msra.mxu0 %v7472
    %7501 = vmatprep.subr.mxu0 0.0
    %7502 = vmatpush1.msra.mxu0 %v7473
    %7503 = vmatprep.subr.mxu0 0.0
    %7504 = vmatpush1.msra.mxu0 %v7474
    %7505 = vmatprep.subr.mxu0 0.0
    %7506 = vmatpush1.msra.mxu0 %v7475
    %7507 = vmatprep.subr.mxu0 0.0
    %7508 = vmatpush1.msra.mxu0 %v7476
    %7509 = vmatprep.subr.mxu0 0.0
    %7510 = vmatpush1.msra.mxu0 0.0
    %7511 = vmatprep.subr.mxu0 0.0
    %7512 = vmatpush1.msra.mxu0 0.0
    %7513 = vmatprep.subr.mxu0 0.0
    %7514 = vmatpush1.msra.mxu0 0.0
    %7515 = vmatprep.subr.mxu0 0.0
    %7516 = vmatpush1.msra.mxu0 0.0
    %7517 = vmatprep.subr.mxu0 0.0
    %7518 = vmatpush1.msra.mxu0 0.0
    %7519 = vmatprep.subr.mxu0 0.0
    %7520 = vmatpush1.msra.mxu0 0.0
    %7521 = vmatprep.subr.mxu0 0.0
    %7522 = vmatpush1.msra.mxu0 0.0
    %7523 = vmatprep.subr.mxu0 0.0
    %7524 = vmatpush1.msra.mxu0 0.0
    %7525 = vmatprep.subr.mxu0 0.0
    %7526 = vmatpush1.msra.mxu0 0.0
    %7527 = vmatprep.subr.mxu0 0.0
    %7528 = vmatpush1.msra.mxu0 0.0
    %7529 = vmatprep.subr.mxu0 0.0
    %7530 = vmatpush1.msra.mxu0 0.0
    %7531 = vmatprep.subr.mxu0 0.0
    %7532 = vmatpush1.msra.mxu0 0.0
    %7533 = vmatprep.subr.mxu0 0.0
    %7534 = vmatpush1.msra.mxu0 0.0
    %7535 = vmatprep.subr.mxu0 0.0
    %7536 = vmatpush1.msra.mxu0 0.0
    %7537 = vmatprep.subr.mxu0 0.0
    %7538 = vmatpush1.msra.mxu0 0.0
    %7539 = vmatprep.subr.mxu0 0.0
    %7540 = vmatpush1.msra.mxu0 0.0
    %7541 = vmatprep.mubr.f32.mxu0 0.0
    %7542 = vmatmul.mubr.f32.gmra.mrb[0].mxu0 %v7396
    %v7543 = vpop.f32.mrb[0].mxu0
    %v7544 = vadd.f32 0.0, %v7543
    %v7545 = vpop.f32.mrb[0].mxu0
    %7546 = vmatprep.mubr.f32.mxu0 0.0
    %7547 = vmatmul.mubr.f32.gmra.mrb[0].mxu0 %v7397
    %v7548 = vpop.f32.mrb[0].mxu0
    %v7549 = vadd.f32 0.0, %v7548
    %v7550 = vpop.f32.mrb[0].mxu0
    %7551 = vmatprep.mubr.f32.mxu0 0.0
    %7552 = vmatmul.mubr.f32.gmra.mrb[0].mxu0 %v7398
    %v7553 = vpop.f32.mrb[0].mxu0
    %v7554 = vadd.f32 0.0, %v7553
    %v7555 = vpop.f32.mrb[0].mxu0
    %7556 = vmatprep.mubr.f32.mxu0 0.0
    %7557 = vmatmul.mubr.f32.gmra.mrb[0].mxu0 %v7399
    %v7558 = vpop.f32.mrb[0].mxu0
    %v7559 = vadd.f32 0.0, %v7558
    %v7560 = vpop.f32.mrb[0].mxu0
    %7561 = vmatprep.mubr.f32.mxu0 0.0
    %7562 = vmatmul.mubr.f32.gmra.mrb[0].mxu0 %v7400
    %v7563 = vpop.f32.mrb[0].mxu0
    %v7564 = vadd.f32 0.0, %v7563
    %v7565 = vpop.f32.mrb[0].mxu0
    %7566 = vmatprep.mubr.f32.mxu0 0.0
    %7567 = vmatmul.mubr.f32.gmra.mrb[0].mxu0 %v7401
    %v7568 = vpop.f32.mrb[0].mxu0
    %v7569 = vadd.f32 0.0, %v7568
    %v7570 = vpop.f32.mrb[0].mxu0
    %7571 = vmatprep.mubr.f32.mxu0 0.0
    %7572 = vmatmul.mubr.f32.gmra.mrb[0].mxu0 %v7402
    %v7573 = vpop.f32.mrb[0].mxu0
    %v7574 = vadd.f32 0.0, %v7573
    %v7575 = vpop.f32.mrb[0].mxu0
    %7576 = vmatprep.mubr.f32.mxu0 0.0
    %7577 = vmatmul.mubr.f32.gmra.mrb[0].mxu0 %v7403
    %v7578 = vpop.f32.mrb[0].mxu0
    %v7579 = vadd.f32 0.0, %v7578
    %v7580 = vpop.f32.mrb[0].mxu0
    %7581 = vmatprep.mubr.f32.mxu0 0.0
    %7582 = vmatmul.mubr.f32.gmra.mrb[0].mxu0 %v7404
    %v7583 = vpop.f32.mrb[0].mxu0
    %v7584 = vadd.f32 0.0, %v7583
    %v7585 = vpop.f32.mrb[0].mxu0
    %7586 = vmatprep.mubr.f32.mxu0 0.0
    %7587 = vmatmul.mubr.f32.gmra.mrb[0].mxu0 %v7405
    %v7588 = vpop.f32.mrb[0].mxu0
    %v7589 = vadd.f32 0.0, %v7588
    %v7590 = vpop.f32.mrb[0].mxu0
    %7591 = vmatprep.mubr.f32.mxu0 0.0
    %7592 = vmatmul.mubr.f32.gmra.mrb[0].mxu0 %v7406
    %v7593 = vpop.f32.mrb[0].mxu0
    %v7594 = vadd.f32 0.0, %v7593
    %v7595 = vpop.f32.mrb[0].mxu0
    %7596 = vmatprep.mubr.f32.mxu0 0.0
    %7597 = vmatmul.mubr.f32.gmra.mrb[0].mxu0 %v7407
    %v7598 = vpop.f32.mrb[0].mxu0
    %v7599 = vadd.f32 0.0, %v7598
    %v7600 = vpop.f32.mrb[0].mxu0
    %7601 = vmatprep.mubr.f32.mxu0 0.0
    %7602 = vmatmul.mubr.f32.gmra.mrb[0].mxu0 %v7408
    %v7603 = vpop.f32.mrb[0].mxu0
    %v7604 = vadd.f32 0.0, %v7603
    %v7605 = vpop.f32.mrb[0].mxu0
    %7606 = vmatprep.mubr.f32.mxu0 0.0
    %7607 = vmatmul.mubr.f32.gmra.mrb[0].mxu0 %v7409
    %v7608 = vpop.f32.mrb[0].mxu0
    %v7609 = vadd.f32 0.0, %v7608
    %v7610 = vpop.f32.mrb[0].mxu0
    %7611 = vmatprep.mubr.f32.mxu0 0.0
    %7612 = vmatmul.mubr.f32.gmra.mrb[0].mxu0 %v7410
    %v7613 = vpop.f32.mrb[0].mxu0
    %v7614 = vadd.f32 0.0, %v7613
    %v7615 = vpop.f32.mrb[0].mxu0
    %7616 = vmatprep.mubr.f32.mxu0 0.0
    %7617 = vmatmul.mubr.f32.gmra.mrb[0].mxu0 %v7411
    %v7618 = vpop.f32.mrb[0].mxu0
    %v7619 = vadd.f32 0.0, %v7618
    %v7620 = vpop.f32.mrb[0].mxu0
    %7621 = vmatprep.mubr.f32.mxu0 0.0
    %7622 = vmatmul.mubr.f32.gmra.mrb[0].mxu0 %v7412
    %v7623 = vpop.f32.mrb[0].mxu0
    %v7624 = vadd.f32 0.0, %v7623
    %v7625 = vpop.f32.mrb[0].mxu0
    %7626 = vmatprep.mubr.f32.mxu0 0.0
    %7627 = vmatmul.mubr.f32.gmra.mrb[0].mxu0 %v7413
    %v7628 = vpop.f32.mrb[0].mxu0
    %v7629 = vadd.f32 0.0, %v7628
    %v7630 = vpop.f32.mrb[0].mxu0
    %7631 = vmatprep.mubr.f32.mxu0 0.0
    %7632 = vmatmul.mubr.f32.gmra.mrb[0].mxu0 %v7414
    %v7633 = vpop.f32.mrb[0].mxu0
    %v7634 = vadd.f32 0.0, %v7633
    %v7635 = vpop.f32.mrb[0].mxu0
    %7636 = vmatprep.mubr.f32.mxu0 0.0
    %7637 = vmatmul.mubr.f32.gmra.mrb[0].mxu0 %v7415
    %v7638 = vpop.f32.mrb[0].mxu0
    %v7639 = vadd.f32 0.0, %v7638
    %v7640 = vpop.f32.mrb[0].mxu0
    %7641 = vmatprep.mubr.f32.mxu0 0.0
    %7642 = vmatmul.mubr.f32.gmra.mrb[0].mxu0 %v7416
    %v7643 = vpop.f32.mrb[0].mxu0
    %v7644 = vadd.f32 0.0, %v7643
    %v7645 = vpop.f32.mrb[0].mxu0
    %7646 = vmatprep.mubr.f32.mxu0 0.0
    %7647 = vmatmul.mubr.f32.gmra.mrb[0].mxu0 %v7417
    %v7648 = vpop.f32.mrb[0].mxu0
    %v7649 = vadd.f32 0.0, %v7648
    %v7650 = vpop.f32.mrb[0].mxu0
    %7651 = vmatprep.mubr.f32.mxu0 0.0
    %7652 = vmatmul.mubr.f32.gmra.mrb[0].mxu0 %v7418
    %v7653 = vpop.f32.mrb[0].mxu0
    %v7654 = vadd.f32 0.0, %v7653
    %v7655 = vpop.f32.mrb[0].mxu0
    %7656 = vmatprep.mubr.f32.mxu0 0.0
    %7657 = vmatmul.mubr.f32.gmra.mrb[0].mxu0 %v7419
    %v7658 = vpop.f32.mrb[0].mxu0
    %v7659 = vadd.f32 0.0, %v7658
    %v7660 = vpop.f32.mrb[0].mxu0
    %7661 = vmatprep.mubr.f32.mxu0 0.0
    %7662 = vmatmul.mubr.f32.gmra.mrb[0].mxu0 %v7420
    %v7663 = vpop.f32.mrb[0].mxu0
    %v7664 = vadd.f32 0.0, %v7663
    %v7665 = vpop.f32.mrb[0].mxu0
    %7666 = vmatprep.mubr.f32.mxu0 0.0
    %7667 = vmatmul.mubr.f32.gmra.mrb[0].mxu0 %v7421
    %v7668 = vpop.f32.mrb[0].mxu0
    %v7669 = vadd.f32 0.0, %v7668
    %v7670 = vpop.f32.mrb[0].mxu0
    %7671 = vmatprep.mubr.f32.mxu0 0.0
    %7672 = vmatmul.mubr.f32.gmra.mrb[0].mxu0 %v7422
    %v7673 = vpop.f32.mrb[0].mxu0
    %v7674 = vadd.f32 0.0, %v7673
    %v7675 = vpop.f32.mrb[0].mxu0
    %7676 = vmatprep.mubr.f32.mxu0 0.0
    %7677 = vmatmul.mubr.f32.gmra.mrb[0].mxu0 %v7423
    %v7678 = vpop.f32.mrb[0].mxu0
    %v7679 = vadd.f32 0.0, %v7678
    %v7680 = vpop.f32.mrb[0].mxu0
    %7681 = vmatprep.mubr.f32.mxu0 0.0
    %7682 = vmatmul.mubr.f32.gmra.mrb[0].mxu0 %v7424
    %v7683 = vpop.f32.mrb[0].mxu0
    %v7684 = vadd.f32 0.0, %v7683
    %v7685 = vpop.f32.mrb[0].mxu0
    %7686 = vmatprep.mubr.f32.mxu0 0.0
    %7687 = vmatmul.mubr.f32.gmra.mrb[0].mxu0 %v7425
    %v7688 = vpop.f32.mrb[0].mxu0
    %v7689 = vadd.f32 0.0, %v7688
    %v7690 = vpop.f32.mrb[0].mxu0
    %7691 = vmatprep.mubr.f32.mxu0 0.0
    %7692 = vmatmul.mubr.f32.gmra.mrb[0].mxu0 %v7426
    %v7693 = vpop.f32.mrb[0].mxu0
    %v7694 = vadd.f32 0.0, %v7693
    %v7695 = vpop.f32.mrb[0].mxu0
    %7696 = vmatprep.mubr.f32.mxu0 0.0
    %7697 = vmatmul.mubr.f32.gmra.mrb[0].mxu0 %v7427
    %v7698 = vpop.f32.mrb[0].mxu0
    %v7699 = vadd.f32 0.0, %v7698
    %v7700 = vpop.f32.mrb[0].mxu0
    %7701 = vmatprep.mubr.f32.mxu0 0.0
    %7702 = vmatmul.mubr.f32.gmra.mrb[0].mxu0 %v7428
    %v7703 = vpop.f32.mrb[0].mxu0
    %v7704 = vadd.f32 0.0, %v7703
    %v7705 = vpop.f32.mrb[0].mxu0
    %7706 = vmatprep.mubr.f32.mxu0 0.0
    %7707 = vmatmul.mubr.f32.gmra.mrb[0].mxu0 %v7429
    %v7708 = vpop.f32.mrb[0].mxu0
    %v7709 = vadd.f32 0.0, %v7708
    %v7710 = vpop.f32.mrb[0].mxu0
    %7711 = vmatprep.mubr.f32.mxu0 0.0
    %7712 = vmatmul.mubr.f32.gmra.mrb[0].mxu0 %v7430
    %v7713 = vpop.f32.mrb[0].mxu0
    %v7714 = vadd.f32 0.0, %v7713
    %v7715 = vpop.f32.mrb[0].mxu0
    %7716 = vmatprep.mubr.f32.mxu0 0.0
    %7717 = vmatmul.mubr.f32.gmra.mrb[0].mxu0 %v7431
    %v7718 = vpop.f32.mrb[0].mxu0
    %v7719 = vadd.f32 0.0, %v7718
    %v7720 = vpop.f32.mrb[0].mxu0
    %7721 = vmatprep.mubr.f32.mxu0 0.0
    %7722 = vmatmul.mubr.f32.gmra.mrb[0].mxu0 %v7432
    %v7723 = vpop.f32.mrb[0].mxu0
    %v7724 = vadd.f32 0.0, %v7723
    %v7725 = vpop.f32.mrb[0].mxu0
    %7726 = vmatprep.mubr.f32.mxu0 0.0
    %7727 = vmatmul.mubr.f32.gmra.mrb[0].mxu0 %v7433
    %v7728 = vpop.f32.mrb[0].mxu0
    %v7729 = vadd.f32 0.0, %v7728
    %v7730 = vpop.f32.mrb[0].mxu0
    %7731 = vmatprep.mubr.f32.mxu0 0.0
    %7732 = vmatmul.mubr.f32.gmra.mrb[0].mxu0 %v7434
    %v7733 = vpop.f32.mrb[0].mxu0
    %v7734 = vadd.f32 0.0, %v7733
    %v7735 = vpop.f32.mrb[0].mxu0
    %7736 = vmatprep.mubr.f32.mxu0 0.0
    %7737 = vmatmul.mubr.f32.gmra.mrb[0].mxu0 %v7435
    %v7738 = vpop.f32.mrb[0].mxu0
    %v7739 = vadd.f32 0.0, %v7738
    %v7740 = vpop.f32.mrb[0].mxu0
    %7741 = vmatprep.mubr.f32.mxu0 0.0
    %7742 = vmatmul.mubr.f32.gmra.mrb[0].mxu0 %v7436
    %v7743 = vpop.f32.mrb[0].mxu0
    %v7744 = vadd.f32 0.0, %v7743
    %v7745 = vpop.f32.mrb[0].mxu0
    %7746 = vmatprep.mubr.f32.mxu0 0.0
    %7747 = vmatmul.mubr.f32.gmra.mrb[0].mxu0 %v7437
    %v7748 = vpop.f32.mrb[0].mxu0
    %v7749 = vadd.f32 0.0, %v7748
    %v7750 = vpop.f32.mrb[0].mxu0
    %7751 = vmatprep.mubr.f32.mxu0 0.0
    %7752 = vmatmul.mubr.f32.gmra.mrb[0].mxu0 %v7438
    %v7753 = vpop.f32.mrb[0].mxu0
    %v7754 = vadd.f32 0.0, %v7753
    %v7755 = vpop.f32.mrb[0].mxu0
    %7756 = vmatprep.mubr.f32.mxu0 0.0
    %7757 = vmatmul.mubr.f32.gmra.mrb[0].mxu0 %v7439
    %v7758 = vpop.f32.mrb[0].mxu0
    %v7759 = vadd.f32 0.0, %v7758
    %v7760 = vpop.f32.mrb[0].mxu0
    %7761 = vmatprep.mubr.f32.mxu0 0.0
    %7762 = vmatmul.mubr.f32.gmra.mrb[0].mxu0 %v7440
    %v7763 = vpop.f32.mrb[0].mxu0
    %v7764 = vadd.f32 0.0, %v7763
    %v7765 = vpop.f32.mrb[0].mxu0
    %7766 = vmatprep.mubr.f32.mxu0 0.0
    %7767 = vmatmul.mubr.f32.gmra.mrb[0].mxu0 %v7441
    %v7768 = vpop.f32.mrb[0].mxu0
    %v7769 = vadd.f32 0.0, %v7768
    %v7770 = vpop.f32.mrb[0].mxu0
    %7771 = vmatprep.mubr.f32.mxu0 0.0
    %7772 = vmatmul.mubr.f32.gmra.mrb[0].mxu0 %v7442
    %v7773 = vpop.f32.mrb[0].mxu0
    %v7774 = vadd.f32 0.0, %v7773
    %v7775 = vpop.f32.mrb[0].mxu0
    %7776 = vmatprep.mubr.f32.mxu0 0.0
    %7777 = vmatmul.mubr.f32.gmra.mrb[0].mxu0 %v7443
    %v7778 = vpop.f32.mrb[0].mxu0
    %v7779 = vadd.f32 0.0, %v7778
    %v7780 = vpop.f32.mrb[0].mxu0
    %7781 = vmatprep.mubr.f32.mxu0 0.0
    %7782 = vmatmul.mubr.f32.gmra.mrb[0].mxu0 %v7444
    %v7783 = vpop.f32.mrb[0].mxu0
    %v7784 = vadd.f32 0.0, %v7783
    %v7785 = vpop.f32.mrb[0].mxu0
    %7786 = vmatprep.mubr.f32.mxu0 0.0
    %7787 = vmatmul.mubr.f32.gmra.mrb[0].mxu0 %v7445
    %v7788 = vpop.f32.mrb[0].mxu0
    %v7789 = vadd.f32 0.0, %v7788
    %v7790 = vpop.f32.mrb[0].mxu0
    %7791 = vmatprep.mubr.f32.mxu0 0.0
    %7792 = vmatmul.mubr.f32.gmra.mrb[0].mxu0 %v7446
    %v7793 = vpop.f32.mrb[0].mxu0
    %v7794 = vadd.f32 0.0, %v7793
    %v7795 = vpop.f32.mrb[0].mxu0
    %7796 = vmatprep.mubr.f32.mxu0 0.0
    %7797 = vmatmul.mubr.f32.gmra.mrb[0].mxu0 %v7447
    %v7798 = vpop.f32.mrb[0].mxu0
    %v7799 = vadd.f32 0.0, %v7798
    %v7800 = vpop.f32.mrb[0].mxu0
    %7801 = vmatprep.mubr.f32.mxu0 0.0
    %7802 = vmatmul.mubr.f32.gmra.mrb[0].mxu0 %v7448
    %v7803 = vpop.f32.mrb[0].mxu0
    %v7804 = vadd.f32 0.0, %v7803
    %v7805 = vpop.f32.mrb[0].mxu0
    %7806 = vmatprep.mubr.f32.mxu0 0.0
    %7807 = vmatmul.mubr.f32.gmra.mrb[0].mxu0 %v7449
    %v7808 = vpop.f32.mrb[0].mxu0
    %v7809 = vadd.f32 0.0, %v7808
    %v7810 = vpop.f32.mrb[0].mxu0
    %7811 = vmatprep.mubr.f32.mxu0 0.0
    %7812 = vmatmul.mubr.f32.gmra.mrb[0].mxu0 %v7450
    %v7813 = vpop.f32.mrb[0].mxu0
    %v7814 = vadd.f32 0.0, %v7813
    %v7815 = vpop.f32.mrb[0].mxu0
    %7816 = vmatprep.mubr.f32.mxu0 0.0
    %7817 = vmatmul.mubr.f32.gmra.mrb[0].mxu0 %v7451
    %v7818 = vpop.f32.mrb[0].mxu0
    %v7819 = vadd.f32 0.0, %v7818
    %v7820 = vpop.f32.mrb[0].mxu0
    %7821 = vmatprep.mubr.f32.mxu0 0.0
    %7822 = vmatmul.mubr.f32.gmra.mrb[0].mxu0 %v7452
    %v7823 = vpop.f32.mrb[0].mxu0
    %v7824 = vadd.f32 0.0, %v7823
    %v7825 = vpop.f32.mrb[0].mxu0
    %7826 = vmatprep.mubr.f32.mxu0 0.0
    %7827 = vmatmul.mubr.f32.gmra.mrb[0].mxu0 %v7453
    %v7828 = vpop.f32.mrb[0].mxu0
    %v7829 = vadd.f32 0.0, %v7828
    %v7830 = vpop.f32.mrb[0].mxu0
    %7831 = vmatprep.mubr.f32.mxu0 0.0
    %7832 = vmatmul.mubr.f32.gmra.mrb[0].mxu0 %v7454
    %v7833 = vpop.f32.mrb[0].mxu0
    %v7834 = vadd.f32 0.0, %v7833
    %v7835 = vpop.f32.mrb[0].mxu0
    %7836 = vmatprep.mubr.f32.mxu0 0.0
    %7837 = vmatmul.mubr.f32.gmra.mrb[0].mxu0 %v7455
    %v7838 = vpop.f32.mrb[0].mxu0
    %v7839 = vadd.f32 0.0, %v7838
    %v7840 = vpop.f32.mrb[0].mxu0
    %7841 = vmatprep.mubr.f32.mxu0 0.0
    %7842 = vmatmul.mubr.f32.gmra.mrb[0].mxu0 %v7456
    %v7843 = vpop.f32.mrb[0].mxu0
    %v7844 = vadd.f32 0.0, %v7843
    %v7845 = vpop.f32.mrb[0].mxu0
    %7846 = vmatprep.mubr.f32.mxu0 0.0
    %7847 = vmatmul.mubr.f32.gmra.mrb[0].mxu0 %v7457
    %v7848 = vpop.f32.mrb[0].mxu0
    %v7849 = vadd.f32 0.0, %v7848
    %v7850 = vpop.f32.mrb[0].mxu0
    %7851 = vmatprep.mubr.f32.mxu0 0.0
    %7852 = vmatmul.mubr.f32.gmra.mrb[0].mxu0 %v7458
    %v7853 = vpop.f32.mrb[0].mxu0
    %v7854 = vadd.f32 0.0, %v7853
    %v7855 = vpop.f32.mrb[0].mxu0
    %7856 = vmatprep.mubr.f32.mxu0 0.0
    %7857 = vmatmul.mubr.f32.gmra.mrb[0].mxu0 %v7459
    %v7858 = vpop.f32.mrb[0].mxu0
    %v7859 = vadd.f32 0.0, %v7858
    %v7860 = vpop.f32.mrb[0].mxu0
    %7861 = vdwg.mxu0
    %v7862 = vadd.f32 %v7332, %v7544
    %v7863 = vadd.f32 %v7333, %v7549
    %v7864 = vadd.f32 %v7334, %v7554
    %v7865 = vadd.f32 %v7335, %v7559
    %v7866 = vadd.f32 %v7336, %v7564
    %v7867 = vadd.f32 %v7337, %v7569
    %v7868 = vadd.f32 %v7338, %v7574
    %v7869 = vadd.f32 %v7339, %v7579
    %v7870 = vadd.f32 %v7340, %v7584
    %v7871 = vadd.f32 %v7341, %v7589
    %v7872 = vadd.f32 %v7342, %v7594
    %v7873 = vadd.f32 %v7343, %v7599
    %v7874 = vadd.f32 %v7344, %v7604
    %v7875 = vadd.f32 %v7345, %v7609
    %v7876 = vadd.f32 %v7346, %v7614
    %v7877 = vadd.f32 %v7347, %v7619
    %v7878 = vadd.f32 %v7348, %v7624
    %v7879 = vadd.f32 %v7349, %v7629
    %v7880 = vadd.f32 %v7350, %v7634
    %v7881 = vadd.f32 %v7351, %v7639
    %v7882 = vadd.f32 %v7352, %v7644
    %v7883 = vadd.f32 %v7353, %v7649
    %v7884 = vadd.f32 %v7354, %v7654
    %v7885 = vadd.f32 %v7355, %v7659
    %v7886 = vadd.f32 %v7356, %v7664
    %v7887 = vadd.f32 %v7357, %v7669
    %v7888 = vadd.f32 %v7358, %v7674
    %v7889 = vadd.f32 %v7359, %v7679
    %v7890 = vadd.f32 %v7360, %v7684
    %v7891 = vadd.f32 %v7361, %v7689
    %v7892 = vadd.f32 %v7362, %v7694
    %v7893 = vadd.f32 %v7363, %v7699
    %v7894 = vadd.f32 %v7364, %v7704
    %v7895 = vadd.f32 %v7365, %v7709
    %v7896 = vadd.f32 %v7366, %v7714
    %v7897 = vadd.f32 %v7367, %v7719
    %v7898 = vadd.f32 %v7368, %v7724
    %v7899 = vadd.f32 %v7369, %v7729
    %v7900 = vadd.f32 %v7370, %v7734
    %v7901 = vadd.f32 %v7371, %v7739
    %v7902 = vadd.f32 %v7372, %v7744
    %v7903 = vadd.f32 %v7373, %v7749
    %v7904 = vadd.f32 %v7374, %v7754
    %v7905 = vadd.f32 %v7375, %v7759
    %v7906 = vadd.f32 %v7376, %v7764
    %v7907 = vadd.f32 %v7377, %v7769
    %v7908 = vadd.f32 %v7378, %v7774
    %v7909 = vadd.f32 %v7379, %v7779
    %v7910 = vadd.f32 %v7380, %v7784
    %v7911 = vadd.f32 %v7381, %v7789
    %v7912 = vadd.f32 %v7382, %v7794
    %v7913 = vadd.f32 %v7383, %v7799
    %v7914 = vadd.f32 %v7384, %v7804
    %v7915 = vadd.f32 %v7385, %v7809
    %v7916 = vadd.f32 %v7386, %v7814
    %v7917 = vadd.f32 %v7387, %v7819
    %v7918 = vadd.f32 %v7388, %v7824
    %v7919 = vadd.f32 %v7389, %v7829
    %v7920 = vadd.f32 %v7390, %v7834
    %v7921 = vadd.f32 %v7391, %v7839
    %v7922 = vadd.f32 %v7392, %v7844
    %v7923 = vadd.f32 %v7393, %v7849
    %v7924 = vadd.f32 %v7394, %v7854
    %v7925 = vadd.f32 %v7395, %v7859
    %v7926 = vld [vmem:[%s217 + $0x2] sm:$0xff]
    %v7927 = vld [vmem:[%s217 + $0xa] sm:$0xff]
    %v7928 = vld [vmem:[%s217 + $0x1a] sm:$0xff]
    %v7929 = vld [vmem:[%s217 + $0x22] sm:$0xff]
    %v7930 = vld [vmem:[%s217 + $0x32] sm:$0xff]
    %v7931 = vld [vmem:[%s217 + $0x3a] sm:$0xff]
    %v7932 = vld [vmem:[%s217 + $0x4a] sm:$0xff]
    %v7933 = vld [vmem:[%s217 + $0x52] sm:$0xff]
    %v7934 = vld [vmem:[%s217 + $0x62] sm:$0xff]
    %v7935 = vld [vmem:[%s217 + $0x6a] sm:$0xff]
    %v7936 = vld [vmem:[%s217 + $0x7a] sm:$0xff]
    %v7937 = vld [vmem:[%s217 + $0x82] sm:$0xff]
    %v7938 = vld [vmem:[%s217 + $0x92] sm:$0xff]
    %v7939 = vld [vmem:[%s217 + $0x9a] sm:$0xff]
    %v7940 = vld [vmem:[%s217 + $0xaa] sm:$0xff]
    %v7941 = vld [vmem:[%s217 + $0xb2] sm:$0xff]
    %v7942 = vld [vmem:[%s217 + $0xc2] sm:$0xff]
    %v7943 = vld [vmem:[%s217 + $0xca] sm:$0xff]
    %v7944 = vld [vmem:[%s217 + $0xda] sm:$0xff]
    %v7945 = vld [vmem:[%s217 + $0xe2] sm:$0xff]
    %v7946 = vld [vmem:[%s217 + $0xf2] sm:$0xff]
    %v7947 = vld [vmem:[%s217 + $0xfa] sm:$0xff]
    %v7948 = vld [vmem:[%s217 + $0x10a] sm:$0xff]
    %v7949 = vld [vmem:[%s217 + $0x112] sm:$0xff]
    %v7950 = vld [vmem:[%s217 + $0x122] sm:$0xff]
    %v7951 = vld [vmem:[%s217 + $0x12a] sm:$0xff]
    %v7952 = vld [vmem:[%s217 + $0x13a] sm:$0xff]
    %v7953 = vld [vmem:[%s217 + $0x142] sm:$0xff]
    %v7954 = vld [vmem:[%s217 + $0x152] sm:$0xff]
    %v7955 = vld [vmem:[%s217 + $0x15a] sm:$0xff]
    %v7956 = vld [vmem:[%s217 + $0x16a] sm:$0xff]
    %v7957 = vld [vmem:[%s217 + $0x172] sm:$0xff]
    %v7958 = vld [vmem:[%s217 + $0x1b2] sm:$0xff]
    %v7959 = vld [vmem:[%s217 + $0x1ba] sm:$0xff]
    %v7960 = vld [vmem:[%s217 + $0x1ca] sm:$0xff]
    %v7961 = vld [vmem:[%s217 + $0x1d2] sm:$0xff]
    %v7962 = vld [vmem:[%s217 + $0x1e2] sm:$0xff]
    %v7963 = vld [vmem:[%s217 + $0x1ea] sm:$0xff]
    %v7964 = vld [vmem:[%s217 + $0x1fa] sm:$0xff]
    %v7965 = vld [vmem:[%s217 + $0x202] sm:$0xff]
    %v7966 = vld [vmem:[%s217 + $0x212] sm:$0xff]
    %v7967 = vld [vmem:[%s217 + $0x21a] sm:$0xff]
    %v7968 = vld [vmem:[%s217 + $0x22a] sm:$0xff]
    %v7969 = vld [vmem:[%s217 + $0x232] sm:$0xff]
    %v7970 = vld [vmem:[%s217 + $0x242] sm:$0xff]
    %v7971 = vld [vmem:[%s217 + $0x24a] sm:$0xff]
    %v7972 = vld [vmem:[%s217 + $0x25a] sm:$0xff]
    %v7973 = vld [vmem:[%s217 + $0x262] sm:$0xff]
    %v7974 = vld [vmem:[%s217 + $0x272] sm:$0xff]
    %v7975 = vld [vmem:[%s217 + $0x27a] sm:$0xff]
    %v7976 = vld [vmem:[%s217 + $0x28a] sm:$0xff]
    %v7977 = vld [vmem:[%s217 + $0x292] sm:$0xff]
    %v7978 = vld [vmem:[%s217 + $0x2a2] sm:$0xff]
    %v7979 = vld [vmem:[%s217 + $0x2aa] sm:$0xff]
    %v7980 = vld [vmem:[%s217 + $0x2ba] sm:$0xff]
    %v7981 = vld [vmem:[%s217 + $0x2c2] sm:$0xff]
    %v7982 = vld [vmem:[%s217 + $0x2d2] sm:$0xff]
    %v7983 = vld [vmem:[%s217 + $0x2da] sm:$0xff]
    %v7984 = vld [vmem:[%s217 + $0x2ea] sm:$0xff]
    %v7985 = vld [vmem:[%s217 + $0x2f2] sm:$0xff]
    %v7986 = vld [vmem:[%s217 + $0x302] sm:$0xff]
    %v7987 = vld [vmem:[%s217 + $0x30a] sm:$0xff]
    %v7988 = vld [vmem:[%s217 + $0x31a] sm:$0xff]
    %v7989 = vld [vmem:[%s217 + $0x322] sm:$0xff]
    %s7990 = scalar_lea.vmem [#allocation8], 640
    %v7991 = vld [vmem:[%s7990] sm:$0xff]
    %v7992 = vld [vmem:[%s7990 + $0x8] sm:$0xff]
    %v7993 = vld [vmem:[%s7990 + $0x10] sm:$0xff]
    %v7994 = vld [vmem:[%s7990 + $0x18] sm:$0xff]
    %v7995 = vld [vmem:[%s7990 + $0x20] sm:$0xff]
    %v7996 = vld [vmem:[%s7990 + $0x28] sm:$0xff]
    %v7997 = vld [vmem:[%s7990 + $0x30] sm:$0xff]
    %v7998 = vld [vmem:[%s7990 + $0x38] sm:$0xff]
    %v7999 = vld [vmem:[%s7990 + $0x40] sm:$0xff]
    %v8000 = vld [vmem:[%s7990 + $0x48] sm:$0xff]
    %v8001 = vld [vmem:[%s7990 + $0x50] sm:$0xff]
    %v8002 = vld [vmem:[%s7990 + $0x58] sm:$0xff]
    %v8003 = vld [vmem:[%s7990 + $0x60] sm:$0xff]
    %v8004 = vld [vmem:[%s7990 + $0x68] sm:$0xff]
    %v8005 = vld [vmem:[%s7990 + $0x70] sm:$0xff]
    %v8006 = vld [vmem:[%s7990 + $0x78] sm:$0xff]
    %8007 = vmatprep.subr.mxu0 0.0
    %8008 = vmatpush1.msra.mxu0 %v7991
    %8009 = vmatprep.subr.mxu0 0.0
    %8010 = vmatpush1.msra.mxu0 %v7992
    %8011 = vmatprep.subr.mxu0 0.0
    %8012 = vmatpush1.msra.mxu0 %v7993
    %8013 = vmatprep.subr.mxu0 0.0
    %8014 = vmatpush1.msra.mxu0 %v7994
    %8015 = vmatprep.subr.mxu0 0.0
    %8016 = vmatpush1.msra.mxu0 %v7995
    %8017 = vmatprep.subr.mxu0 0.0
    %8018 = vmatpush1.msra.mxu0 %v7996
    %8019 = vmatprep.subr.mxu0 0.0
    %8020 = vmatpush1.msra.mxu0 %v7997
    %8021 = vmatprep.subr.mxu0 0.0
    %8022 = vmatpush1.msra.mxu0 %v7998
    %8023 = vmatprep.subr.mxu0 0.0
    %8024 = vmatpush1.msra.mxu0 %v7999
    %8025 = vmatprep.subr.mxu0 0.0
    %8026 = vmatpush1.msra.mxu0 %v8000
    %8027 = vmatprep.subr.mxu0 0.0
    %8028 = vmatpush1.msra.mxu0 %v8001
    %8029 = vmatprep.subr.mxu0 0.0
    %8030 = vmatpush1.msra.mxu0 %v8002
    %8031 = vmatprep.subr.mxu0 0.0
    %8032 = vmatpush1.msra.mxu0 %v8003
    %8033 = vmatprep.subr.mxu0 0.0
    %8034 = vmatpush1.msra.mxu0 %v8004
    %8035 = vmatprep.subr.mxu0 0.0
    %8036 = vmatpush1.msra.mxu0 %v8005
    %8037 = vmatprep.subr.mxu0 0.0
    %8038 = vmatpush1.msra.mxu0 %v8006
    %8039 = vmatprep.subr.mxu0 0.0
    %8040 = vmatpush1.msra.mxu0 0.0
    %8041 = vmatprep.subr.mxu0 0.0
    %8042 = vmatpush1.msra.mxu0 0.0
    %8043 = vmatprep.subr.mxu0 0.0
    %8044 = vmatpush1.msra.mxu0 0.0
    %8045 = vmatprep.subr.mxu0 0.0
    %8046 = vmatpush1.msra.mxu0 0.0
    %8047 = vmatprep.subr.mxu0 0.0
    %8048 = vmatpush1.msra.mxu0 0.0
    %8049 = vmatprep.subr.mxu0 0.0
    %8050 = vmatpush1.msra.mxu0 0.0
    %8051 = vmatprep.subr.mxu0 0.0
    %8052 = vmatpush1.msra.mxu0 0.0
    %8053 = vmatprep.subr.mxu0 0.0
    %8054 = vmatpush1.msra.mxu0 0.0
    %8055 = vmatprep.subr.mxu0 0.0
    %8056 = vmatpush1.msra.mxu0 0.0
    %8057 = vmatprep.subr.mxu0 0.0
    %8058 = vmatpush1.msra.mxu0 0.0
    %8059 = vmatprep.subr.mxu0 0.0
    %8060 = vmatpush1.msra.mxu0 0.0
    %8061 = vmatprep.subr.mxu0 0.0
    %8062 = vmatpush1.msra.mxu0 0.0
    %8063 = vmatprep.subr.mxu0 0.0
    %8064 = vmatpush1.msra.mxu0 0.0
    %8065 = vmatprep.subr.mxu0 0.0
    %8066 = vmatpush1.msra.mxu0 0.0
    %8067 = vmatprep.subr.mxu0 0.0
    %8068 = vmatpush1.msra.mxu0 0.0
    %8069 = vmatprep.subr.mxu0 0.0
    %8070 = vmatpush1.msra.mxu0 0.0
    %8071 = vmatprep.mubr.f32.mxu0 0.0
    %8072 = vmatmul.mubr.f32.gmra.mrb[0].mxu0 %v7926
    %v8073 = vpop.f32.mrb[0].mxu0
    %v8074 = vadd.f32 0.0, %v8073
    %v8075 = vpop.f32.mrb[0].mxu0
    %8076 = vmatprep.mubr.f32.mxu0 0.0
    %8077 = vmatmul.mubr.f32.gmra.mrb[0].mxu0 %v7927
    %v8078 = vpop.f32.mrb[0].mxu0
    %v8079 = vadd.f32 0.0, %v8078
    %v8080 = vpop.f32.mrb[0].mxu0
    %8081 = vmatprep.mubr.f32.mxu0 0.0
    %8082 = vmatmul.mubr.f32.gmra.mrb[0].mxu0 %v7928
    %v8083 = vpop.f32.mrb[0].mxu0
    %v8084 = vadd.f32 0.0, %v8083
    %v8085 = vpop.f32.mrb[0].mxu0
    %8086 = vmatprep.mubr.f32.mxu0 0.0
    %8087 = vmatmul.mubr.f32.gmra.mrb[0].mxu0 %v7929
    %v8088 = vpop.f32.mrb[0].mxu0
    %v8089 = vadd.f32 0.0, %v8088
    %v8090 = vpop.f32.mrb[0].mxu0
    %8091 = vmatprep.mubr.f32.mxu0 0.0
    %8092 = vmatmul.mubr.f32.gmra.mrb[0].mxu0 %v7930
    %v8093 = vpop.f32.mrb[0].mxu0
    %v8094 = vadd.f32 0.0, %v8093
    %v8095 = vpop.f32.mrb[0].mxu0
    %8096 = vmatprep.mubr.f32.mxu0 0.0
    %8097 = vmatmul.mubr.f32.gmra.mrb[0].mxu0 %v7931
    %v8098 = vpop.f32.mrb[0].mxu0
    %v8099 = vadd.f32 0.0, %v8098
    %v8100 = vpop.f32.mrb[0].mxu0
    %8101 = vmatprep.mubr.f32.mxu0 0.0
    %8102 = vmatmul.mubr.f32.gmra.mrb[0].mxu0 %v7932
    %v8103 = vpop.f32.mrb[0].mxu0
    %v8104 = vadd.f32 0.0, %v8103
    %v8105 = vpop.f32.mrb[0].mxu0
    %8106 = vmatprep.mubr.f32.mxu0 0.0
    %8107 = vmatmul.mubr.f32.gmra.mrb[0].mxu0 %v7933
    %v8108 = vpop.f32.mrb[0].mxu0
    %v8109 = vadd.f32 0.0, %v8108
    %v8110 = vpop.f32.mrb[0].mxu0
    %8111 = vmatprep.mubr.f32.mxu0 0.0
    %8112 = vmatmul.mubr.f32.gmra.mrb[0].mxu0 %v7934
    %v8113 = vpop.f32.mrb[0].mxu0
    %v8114 = vadd.f32 0.0, %v8113
    %v8115 = vpop.f32.mrb[0].mxu0
    %8116 = vmatprep.mubr.f32.mxu0 0.0
    %8117 = vmatmul.mubr.f32.gmra.mrb[0].mxu0 %v7935
    %v8118 = vpop.f32.mrb[0].mxu0
    %v8119 = vadd.f32 0.0, %v8118
    %v8120 = vpop.f32.mrb[0].mxu0
    %8121 = vmatprep.mubr.f32.mxu0 0.0
    %8122 = vmatmul.mubr.f32.gmra.mrb[0].mxu0 %v7936
    %v8123 = vpop.f32.mrb[0].mxu0
    %v8124 = vadd.f32 0.0, %v8123
    %v8125 = vpop.f32.mrb[0].mxu0
    %8126 = vmatprep.mubr.f32.mxu0 0.0
    %8127 = vmatmul.mubr.f32.gmra.mrb[0].mxu0 %v7937
    %v8128 = vpop.f32.mrb[0].mxu0
    %v8129 = vadd.f32 0.0, %v8128
    %v8130 = vpop.f32.mrb[0].mxu0
    %8131 = vmatprep.mubr.f32.mxu0 0.0
    %8132 = vmatmul.mubr.f32.gmra.mrb[0].mxu0 %v7938
    %v8133 = vpop.f32.mrb[0].mxu0
    %v8134 = vadd.f32 0.0, %v8133
    %v8135 = vpop.f32.mrb[0].mxu0
    %8136 = vmatprep.mubr.f32.mxu0 0.0
    %8137 = vmatmul.mubr.f32.gmra.mrb[0].mxu0 %v7939
    %v8138 = vpop.f32.mrb[0].mxu0
    %v8139 = vadd.f32 0.0, %v8138
    %v8140 = vpop.f32.mrb[0].mxu0
    %8141 = vmatprep.mubr.f32.mxu0 0.0
    %8142 = vmatmul.mubr.f32.gmra.mrb[0].mxu0 %v7940
    %v8143 = vpop.f32.mrb[0].mxu0
    %v8144 = vadd.f32 0.0, %v8143
    %v8145 = vpop.f32.mrb[0].mxu0
    %8146 = vmatprep.mubr.f32.mxu0 0.0
    %8147 = vmatmul.mubr.f32.gmra.mrb[0].mxu0 %v7941
    %v8148 = vpop.f32.mrb[0].mxu0
    %v8149 = vadd.f32 0.0, %v8148
    %v8150 = vpop.f32.mrb[0].mxu0
    %8151 = vmatprep.mubr.f32.mxu0 0.0
    %8152 = vmatmul.mubr.f32.gmra.mrb[0].mxu0 %v7942
    %v8153 = vpop.f32.mrb[0].mxu0
    %v8154 = vadd.f32 0.0, %v8153
    %v8155 = vpop.f32.mrb[0].mxu0
    %8156 = vmatprep.mubr.f32.mxu0 0.0
    %8157 = vmatmul.mubr.f32.gmra.mrb[0].mxu0 %v7943
    %v8158 = vpop.f32.mrb[0].mxu0
    %v8159 = vadd.f32 0.0, %v8158
    %v8160 = vpop.f32.mrb[0].mxu0
    %8161 = vmatprep.mubr.f32.mxu0 0.0
    %8162 = vmatmul.mubr.f32.gmra.mrb[0].mxu0 %v7944
    %v8163 = vpop.f32.mrb[0].mxu0
    %v8164 = vadd.f32 0.0, %v8163
    %v8165 = vpop.f32.mrb[0].mxu0
    %8166 = vmatprep.mubr.f32.mxu0 0.0
    %8167 = vmatmul.mubr.f32.gmra.mrb[0].mxu0 %v7945
    %v8168 = vpop.f32.mrb[0].mxu0
    %v8169 = vadd.f32 0.0, %v8168
    %v8170 = vpop.f32.mrb[0].mxu0
    %8171 = vmatprep.mubr.f32.mxu0 0.0
    %8172 = vmatmul.mubr.f32.gmra.mrb[0].mxu0 %v7946
    %v8173 = vpop.f32.mrb[0].mxu0
    %v8174 = vadd.f32 0.0, %v8173
    %v8175 = vpop.f32.mrb[0].mxu0
    %8176 = vmatprep.mubr.f32.mxu0 0.0
    %8177 = vmatmul.mubr.f32.gmra.mrb[0].mxu0 %v7947
    %v8178 = vpop.f32.mrb[0].mxu0
    %v8179 = vadd.f32 0.0, %v8178
    %v8180 = vpop.f32.mrb[0].mxu0
    %8181 = vmatprep.mubr.f32.mxu0 0.0
    %8182 = vmatmul.mubr.f32.gmra.mrb[0].mxu0 %v7948
    %v8183 = vpop.f32.mrb[0].mxu0
    %v8184 = vadd.f32 0.0, %v8183
    %v8185 = vpop.f32.mrb[0].mxu0
    %8186 = vmatprep.mubr.f32.mxu0 0.0
    %8187 = vmatmul.mubr.f32.gmra.mrb[0].mxu0 %v7949
    %v8188 = vpop.f32.mrb[0].mxu0
    %v8189 = vadd.f32 0.0, %v8188
    %v8190 = vpop.f32.mrb[0].mxu0
    %8191 = vmatprep.mubr.f32.mxu0 0.0
    %8192 = vmatmul.mubr.f32.gmra.mrb[0].mxu0 %v7950
    %v8193 = vpop.f32.mrb[0].mxu0
    %v8194 = vadd.f32 0.0, %v8193
    %v8195 = vpop.f32.mrb[0].mxu0
    %8196 = vmatprep.mubr.f32.mxu0 0.0
    %8197 = vmatmul.mubr.f32.gmra.mrb[0].mxu0 %v7951
    %v8198 = vpop.f32.mrb[0].mxu0
    %v8199 = vadd.f32 0.0, %v8198
    %v8200 = vpop.f32.mrb[0].mxu0
    %8201 = vmatprep.mubr.f32.mxu0 0.0
    %8202 = vmatmul.mubr.f32.gmra.mrb[0].mxu0 %v7952
    %v8203 = vpop.f32.mrb[0].mxu0
    %v8204 = vadd.f32 0.0, %v8203
    %v8205 = vpop.f32.mrb[0].mxu0
    %8206 = vmatprep.mubr.f32.mxu0 0.0
    %8207 = vmatmul.mubr.f32.gmra.mrb[0].mxu0 %v7953
    %v8208 = vpop.f32.mrb[0].mxu0
    %v8209 = vadd.f32 0.0, %v8208
    %v8210 = vpop.f32.mrb[0].mxu0
    %8211 = vmatprep.mubr.f32.mxu0 0.0
    %8212 = vmatmul.mubr.f32.gmra.mrb[0].mxu0 %v7954
    %v8213 = vpop.f32.mrb[0].mxu0
    %v8214 = vadd.f32 0.0, %v8213
    %v8215 = vpop.f32.mrb[0].mxu0
    %8216 = vmatprep.mubr.f32.mxu0 0.0
    %8217 = vmatmul.mubr.f32.gmra.mrb[0].mxu0 %v7955
    %v8218 = vpop.f32.mrb[0].mxu0
    %v8219 = vadd.f32 0.0, %v8218
    %v8220 = vpop.f32.mrb[0].mxu0
    %8221 = vmatprep.mubr.f32.mxu0 0.0
    %8222 = vmatmul.mubr.f32.gmra.mrb[0].mxu0 %v7956
    %v8223 = vpop.f32.mrb[0].mxu0
    %v8224 = vadd.f32 0.0, %v8223
    %v8225 = vpop.f32.mrb[0].mxu0
    %8226 = vmatprep.mubr.f32.mxu0 0.0
    %8227 = vmatmul.mubr.f32.gmra.mrb[0].mxu0 %v7957
    %v8228 = vpop.f32.mrb[0].mxu0
    %v8229 = vadd.f32 0.0, %v8228
    %v8230 = vpop.f32.mrb[0].mxu0
    %8231 = vmatprep.mubr.f32.mxu0 0.0
    %8232 = vmatmul.mubr.f32.gmra.mrb[0].mxu0 %v7958
    %v8233 = vpop.f32.mrb[0].mxu0
    %v8234 = vadd.f32 0.0, %v8233
    %v8235 = vpop.f32.mrb[0].mxu0
    %8236 = vmatprep.mubr.f32.mxu0 0.0
    %8237 = vmatmul.mubr.f32.gmra.mrb[0].mxu0 %v7959
    %v8238 = vpop.f32.mrb[0].mxu0
    %v8239 = vadd.f32 0.0, %v8238
    %v8240 = vpop.f32.mrb[0].mxu0
    %8241 = vmatprep.mubr.f32.mxu0 0.0
    %8242 = vmatmul.mubr.f32.gmra.mrb[0].mxu0 %v7960
    %v8243 = vpop.f32.mrb[0].mxu0
    %v8244 = vadd.f32 0.0, %v8243
    %v8245 = vpop.f32.mrb[0].mxu0
    %8246 = vmatprep.mubr.f32.mxu0 0.0
    %8247 = vmatmul.mubr.f32.gmra.mrb[0].mxu0 %v7961
    %v8248 = vpop.f32.mrb[0].mxu0
    %v8249 = vadd.f32 0.0, %v8248
    %v8250 = vpop.f32.mrb[0].mxu0
    %8251 = vmatprep.mubr.f32.mxu0 0.0
    %8252 = vmatmul.mubr.f32.gmra.mrb[0].mxu0 %v7962
    %v8253 = vpop.f32.mrb[0].mxu0
    %v8254 = vadd.f32 0.0, %v8253
    %v8255 = vpop.f32.mrb[0].mxu0
    %8256 = vmatprep.mubr.f32.mxu0 0.0
    %8257 = vmatmul.mubr.f32.gmra.mrb[0].mxu0 %v7963
    %v8258 = vpop.f32.mrb[0].mxu0
    %v8259 = vadd.f32 0.0, %v8258
    %v8260 = vpop.f32.mrb[0].mxu0
    %8261 = vmatprep.mubr.f32.mxu0 0.0
    %8262 = vmatmul.mubr.f32.gmra.mrb[0].mxu0 %v7964
    %v8263 = vpop.f32.mrb[0].mxu0
    %v8264 = vadd.f32 0.0, %v8263
    %v8265 = vpop.f32.mrb[0].mxu0
    %8266 = vmatprep.mubr.f32.mxu0 0.0
    %8267 = vmatmul.mubr.f32.gmra.mrb[0].mxu0 %v7965
    %v8268 = vpop.f32.mrb[0].mxu0
    %v8269 = vadd.f32 0.0, %v8268
    %v8270 = vpop.f32.mrb[0].mxu0
    %8271 = vmatprep.mubr.f32.mxu0 0.0
    %8272 = vmatmul.mubr.f32.gmra.mrb[0].mxu0 %v7966
    %v8273 = vpop.f32.mrb[0].mxu0
    %v8274 = vadd.f32 0.0, %v8273
    %v8275 = vpop.f32.mrb[0].mxu0
    %8276 = vmatprep.mubr.f32.mxu0 0.0
    %8277 = vmatmul.mubr.f32.gmra.mrb[0].mxu0 %v7967
    %v8278 = vpop.f32.mrb[0].mxu0
    %v8279 = vadd.f32 0.0, %v8278
    %v8280 = vpop.f32.mrb[0].mxu0
    %8281 = vmatprep.mubr.f32.mxu0 0.0
    %8282 = vmatmul.mubr.f32.gmra.mrb[0].mxu0 %v7968
    %v8283 = vpop.f32.mrb[0].mxu0
    %v8284 = vadd.f32 0.0, %v8283
    %v8285 = vpop.f32.mrb[0].mxu0
    %8286 = vmatprep.mubr.f32.mxu0 0.0
    %8287 = vmatmul.mubr.f32.gmra.mrb[0].mxu0 %v7969
    %v8288 = vpop.f32.mrb[0].mxu0
    %v8289 = vadd.f32 0.0, %v8288
    %v8290 = vpop.f32.mrb[0].mxu0
    %8291 = vmatprep.mubr.f32.mxu0 0.0
    %8292 = vmatmul.mubr.f32.gmra.mrb[0].mxu0 %v7970
    %v8293 = vpop.f32.mrb[0].mxu0
    %v8294 = vadd.f32 0.0, %v8293
    %v8295 = vpop.f32.mrb[0].mxu0
    %8296 = vmatprep.mubr.f32.mxu0 0.0
    %8297 = vmatmul.mubr.f32.gmra.mrb[0].mxu0 %v7971
    %v8298 = vpop.f32.mrb[0].mxu0
    %v8299 = vadd.f32 0.0, %v8298
    %v8300 = vpop.f32.mrb[0].mxu0
    %8301 = vmatprep.mubr.f32.mxu0 0.0
    %8302 = vmatmul.mubr.f32.gmra.mrb[0].mxu0 %v7972
    %v8303 = vpop.f32.mrb[0].mxu0
    %v8304 = vadd.f32 0.0, %v8303
    %v8305 = vpop.f32.mrb[0].mxu0
    %8306 = vmatprep.mubr.f32.mxu0 0.0
    %8307 = vmatmul.mubr.f32.gmra.mrb[0].mxu0 %v7973
    %v8308 = vpop.f32.mrb[0].mxu0
    %v8309 = vadd.f32 0.0, %v8308
    %v8310 = vpop.f32.mrb[0].mxu0
    %8311 = vmatprep.mubr.f32.mxu0 0.0
    %8312 = vmatmul.mubr.f32.gmra.mrb[0].mxu0 %v7974
    %v8313 = vpop.f32.mrb[0].mxu0
    %v8314 = vadd.f32 0.0, %v8313
    %v8315 = vpop.f32.mrb[0].mxu0
    %8316 = vmatprep.mubr.f32.mxu0 0.0
    %8317 = vmatmul.mubr.f32.gmra.mrb[0].mxu0 %v7975
    %v8318 = vpop.f32.mrb[0].mxu0
    %v8319 = vadd.f32 0.0, %v8318
    %v8320 = vpop.f32.mrb[0].mxu0
    %8321 = vmatprep.mubr.f32.mxu0 0.0
    %8322 = vmatmul.mubr.f32.gmra.mrb[0].mxu0 %v7976
    %v8323 = vpop.f32.mrb[0].mxu0
    %v8324 = vadd.f32 0.0, %v8323
    %v8325 = vpop.f32.mrb[0].mxu0
    %8326 = vmatprep.mubr.f32.mxu0 0.0
    %8327 = vmatmul.mubr.f32.gmra.mrb[0].mxu0 %v7977
    %v8328 = vpop.f32.mrb[0].mxu0
    %v8329 = vadd.f32 0.0, %v8328
    %v8330 = vpop.f32.mrb[0].mxu0
    %8331 = vmatprep.mubr.f32.mxu0 0.0
    %8332 = vmatmul.mubr.f32.gmra.mrb[0].mxu0 %v7978
    %v8333 = vpop.f32.mrb[0].mxu0
    %v8334 = vadd.f32 0.0, %v8333
    %v8335 = vpop.f32.mrb[0].mxu0
    %8336 = vmatprep.mubr.f32.mxu0 0.0
    %8337 = vmatmul.mubr.f32.gmra.mrb[0].mxu0 %v7979
    %v8338 = vpop.f32.mrb[0].mxu0
    %v8339 = vadd.f32 0.0, %v8338
    %v8340 = vpop.f32.mrb[0].mxu0
    %8341 = vmatprep.mubr.f32.mxu0 0.0
    %8342 = vmatmul.mubr.f32.gmra.mrb[0].mxu0 %v7980
    %v8343 = vpop.f32.mrb[0].mxu0
    %v8344 = vadd.f32 0.0, %v8343
    %v8345 = vpop.f32.mrb[0].mxu0
    %8346 = vmatprep.mubr.f32.mxu0 0.0
    %8347 = vmatmul.mubr.f32.gmra.mrb[0].mxu0 %v7981
    %v8348 = vpop.f32.mrb[0].mxu0
    %v8349 = vadd.f32 0.0, %v8348
    %v8350 = vpop.f32.mrb[0].mxu0
    %8351 = vmatprep.mubr.f32.mxu0 0.0
    %8352 = vmatmul.mubr.f32.gmra.mrb[0].mxu0 %v7982
    %v8353 = vpop.f32.mrb[0].mxu0
    %v8354 = vadd.f32 0.0, %v8353
    %v8355 = vpop.f32.mrb[0].mxu0
    %8356 = vmatprep.mubr.f32.mxu0 0.0
    %8357 = vmatmul.mubr.f32.gmra.mrb[0].mxu0 %v7983
    %v8358 = vpop.f32.mrb[0].mxu0
    %v8359 = vadd.f32 0.0, %v8358
    %v8360 = vpop.f32.mrb[0].mxu0
    %8361 = vmatprep.mubr.f32.mxu0 0.0
    %8362 = vmatmul.mubr.f32.gmra.mrb[0].mxu0 %v7984
    %v8363 = vpop.f32.mrb[0].mxu0
    %v8364 = vadd.f32 0.0, %v8363
    %v8365 = vpop.f32.mrb[0].mxu0
    %8366 = vmatprep.mubr.f32.mxu0 0.0
    %8367 = vmatmul.mubr.f32.gmra.mrb[0].mxu0 %v7985
    %v8368 = vpop.f32.mrb[0].mxu0
    %v8369 = vadd.f32 0.0, %v8368
    %v8370 = vpop.f32.mrb[0].mxu0
    %8371 = vmatprep.mubr.f32.mxu0 0.0
    %8372 = vmatmul.mubr.f32.gmra.mrb[0].mxu0 %v7986
    %v8373 = vpop.f32.mrb[0].mxu0
    %v8374 = vadd.f32 0.0, %v8373
    %v8375 = vpop.f32.mrb[0].mxu0
    %8376 = vmatprep.mubr.f32.mxu0 0.0
    %8377 = vmatmul.mubr.f32.gmra.mrb[0].mxu0 %v7987
    %v8378 = vpop.f32.mrb[0].mxu0
    %v8379 = vadd.f32 0.0, %v8378
    %v8380 = vpop.f32.mrb[0].mxu0
    %8381 = vmatprep.mubr.f32.mxu0 0.0
    %8382 = vmatmul.mubr.f32.gmra.mrb[0].mxu0 %v7988
    %v8383 = vpop.f32.mrb[0].mxu0
    %v8384 = vadd.f32 0.0, %v8383
    %v8385 = vpop.f32.mrb[0].mxu0
    %8386 = vmatprep.mubr.f32.mxu0 0.0
    %8387 = vmatmul.mubr.f32.gmra.mrb[0].mxu0 %v7989
    %v8388 = vpop.f32.mrb[0].mxu0
    %v8389 = vadd.f32 0.0, %v8388
    %v8390 = vpop.f32.mrb[0].mxu0
    %8391 = vdwg.mxu0
    %v8392 = vadd.f32 %v7862, %v8074
    %v8393 = vadd.f32 %v7863, %v8079
    %v8394 = vadd.f32 %v7864, %v8084
    %v8395 = vadd.f32 %v7865, %v8089
    %v8396 = vadd.f32 %v7866, %v8094
    %v8397 = vadd.f32 %v7867, %v8099
    %v8398 = vadd.f32 %v7868, %v8104
    %v8399 = vadd.f32 %v7869, %v8109
    %v8400 = vadd.f32 %v7870, %v8114
    %v8401 = vadd.f32 %v7871, %v8119
    %v8402 = vadd.f32 %v7872, %v8124
    %v8403 = vadd.f32 %v7873, %v8129
    %v8404 = vadd.f32 %v7874, %v8134
    %v8405 = vadd.f32 %v7875, %v8139
    %v8406 = vadd.f32 %v7876, %v8144
    %v8407 = vadd.f32 %v7877, %v8149
    %v8408 = vadd.f32 %v7878, %v8154
    %v8409 = vadd.f32 %v7879, %v8159
    %v8410 = vadd.f32 %v7880, %v8164
    %v8411 = vadd.f32 %v7881, %v8169
    %v8412 = vadd.f32 %v7882, %v8174
    %v8413 = vadd.f32 %v7883, %v8179
    %v8414 = vadd.f32 %v7884, %v8184
    %v8415 = vadd.f32 %v7885, %v8189
    %v8416 = vadd.f32 %v7886, %v8194
    %v8417 = vadd.f32 %v7887, %v8199
    %v8418 = vadd.f32 %v7888, %v8204
    %v8419 = vadd.f32 %v7889, %v8209
    %v8420 = vadd.f32 %v7890, %v8214
    %v8421 = vadd.f32 %v7891, %v8219
    %v8422 = vadd.f32 %v7892, %v8224
    %v8423 = vadd.f32 %v7893, %v8229
    %v8424 = vadd.f32 %v7894, %v8234
    %v8425 = vadd.f32 %v7895, %v8239
    %v8426 = vadd.f32 %v7896, %v8244
    %v8427 = vadd.f32 %v7897, %v8249
    %v8428 = vadd.f32 %v7898, %v8254
    %v8429 = vadd.f32 %v7899, %v8259
    %v8430 = vadd.f32 %v7900, %v8264
    %v8431 = vadd.f32 %v7901, %v8269
    %v8432 = vadd.f32 %v7902, %v8274
    %v8433 = vadd.f32 %v7903, %v8279
    %v8434 = vadd.f32 %v7904, %v8284
    %v8435 = vadd.f32 %v7905, %v8289
    %v8436 = vadd.f32 %v7906, %v8294
    %v8437 = vadd.f32 %v7907, %v8299
    %v8438 = vadd.f32 %v7908, %v8304
    %v8439 = vadd.f32 %v7909, %v8309
    %v8440 = vadd.f32 %v7910, %v8314
    %v8441 = vadd.f32 %v7911, %v8319
    %v8442 = vadd.f32 %v7912, %v8324
    %v8443 = vadd.f32 %v7913, %v8329
    %v8444 = vadd.f32 %v7914, %v8334
    %v8445 = vadd.f32 %v7915, %v8339
    %v8446 = vadd.f32 %v7916, %v8344
    %v8447 = vadd.f32 %v7917, %v8349
    %v8448 = vadd.f32 %v7918, %v8354
    %v8449 = vadd.f32 %v7919, %v8359
    %v8450 = vadd.f32 %v7920, %v8364
    %v8451 = vadd.f32 %v7921, %v8369
    %v8452 = vadd.f32 %v7922, %v8374
    %v8453 = vadd.f32 %v7923, %v8379
    %v8454 = vadd.f32 %v7924, %v8384
    %v8455 = vadd.f32 %v7925, %v8389
    %v8456 = vld [vmem:[%s3333] sm:$0xff]
    %v8457 = vld [vmem:[%s3333 + $0x8] sm:$0xff]
    %v8458 = vld [vmem:[%s3333 + $0x18] sm:$0xff]
    %v8459 = vld [vmem:[%s3333 + $0x20] sm:$0xff]
    %v8460 = vld [vmem:[%s3333 + $0x30] sm:$0xff]
    %v8461 = vld [vmem:[%s3333 + $0x38] sm:$0xff]
    %v8462 = vld [vmem:[%s3333 + $0x48] sm:$0xff]
    %v8463 = vld [vmem:[%s3333 + $0x50] sm:$0xff]
    %v8464 = vld [vmem:[%s3333 + $0x60] sm:$0xff]
    %v8465 = vld [vmem:[%s3333 + $0x68] sm:$0xff]
    %v8466 = vld [vmem:[%s3333 + $0x78] sm:$0xff]
    %v8467 = vld [vmem:[%s3333 + $0x80] sm:$0xff]
    %v8468 = vld [vmem:[%s3333 + $0x90] sm:$0xff]
    %v8469 = vld [vmem:[%s3333 + $0x98] sm:$0xff]
    %v8470 = vld [vmem:[%s3333 + $0xa8] sm:$0xff]
    %v8471 = vld [vmem:[%s3333 + $0xb0] sm:$0xff]
    %v8472 = vld [vmem:[%s3333 + $0xc0] sm:$0xff]
    %v8473 = vld [vmem:[%s3333 + $0xc8] sm:$0xff]
    %v8474 = vld [vmem:[%s3333 + $0xd8] sm:$0xff]
    %v8475 = vld [vmem:[%s3333 + $0xe0] sm:$0xff]
    %v8476 = vld [vmem:[%s3333 + $0xf0] sm:$0xff]
    %v8477 = vld [vmem:[%s3333 + $0xf8] sm:$0xff]
    %v8478 = vld [vmem:[%s3333 + $0x108] sm:$0xff]
    %v8479 = vld [vmem:[%s3333 + $0x110] sm:$0xff]
    %v8480 = vld [vmem:[%s3333 + $0x120] sm:$0xff]
    %v8481 = vld [vmem:[%s3333 + $0x128] sm:$0xff]
    %v8482 = vld [vmem:[%s3333 + $0x138] sm:$0xff]
    %v8483 = vld [vmem:[%s3333 + $0x140] sm:$0xff]
    %v8484 = vld [vmem:[%s3333 + $0x150] sm:$0xff]
    %v8485 = vld [vmem:[%s3333 + $0x158] sm:$0xff]
    %v8486 = vld [vmem:[%s3333 + $0x168] sm:$0xff]
    %v8487 = vld [vmem:[%s3333 + $0x170] sm:$0xff]
    %v8488 = vld [vmem:[%s3333 + $0x1b0] sm:$0xff]
    %v8489 = vld [vmem:[%s3333 + $0x1b8] sm:$0xff]
    %v8490 = vld [vmem:[%s3333 + $0x1c8] sm:$0xff]
    %v8491 = vld [vmem:[%s3333 + $0x1d0] sm:$0xff]
    %v8492 = vld [vmem:[%s3333 + $0x1e0] sm:$0xff]
    %v8493 = vld [vmem:[%s3333 + $0x1e8] sm:$0xff]
    %v8494 = vld [vmem:[%s3333 + $0x1f8] sm:$0xff]
    %v8495 = vld [vmem:[%s3333 + $0x200] sm:$0xff]
    %v8496 = vld [vmem:[%s3333 + $0x210] sm:$0xff]
    %v8497 = vld [vmem:[%s3333 + $0x218] sm:$0xff]
    %v8498 = vld [vmem:[%s3333 + $0x228] sm:$0xff]
    %v8499 = vld [vmem:[%s3333 + $0x230] sm:$0xff]
    %v8500 = vld [vmem:[%s3333 + $0x240] sm:$0xff]
    %v8501 = vld [vmem:[%s3333 + $0x248] sm:$0xff]
    %v8502 = vld [vmem:[%s3333 + $0x258] sm:$0xff]
    %v8503 = vld [vmem:[%s3333 + $0x260] sm:$0xff]
    %v8504 = vld [vmem:[%s3333 + $0x270] sm:$0xff]
    %v8505 = vld [vmem:[%s3333 + $0x278] sm:$0xff]
    %v8506 = vld [vmem:[%s3333 + $0x288] sm:$0xff]
    %v8507 = vld [vmem:[%s3333 + $0x290] sm:$0xff]
    %v8508 = vld [vmem:[%s3333 + $0x2a0] sm:$0xff]
    %v8509 = vld [vmem:[%s3333 + $0x2a8] sm:$0xff]
    %v8510 = vld [vmem:[%s3333 + $0x2b8] sm:$0xff]
    %v8511 = vld [vmem:[%s3333 + $0x2c0] sm:$0xff]
    %v8512 = vld [vmem:[%s3333 + $0x2d0] sm:$0xff]
    %v8513 = vld [vmem:[%s3333 + $0x2d8] sm:$0xff]
    %v8514 = vld [vmem:[%s3333 + $0x2e8] sm:$0xff]
    %v8515 = vld [vmem:[%s3333 + $0x2f0] sm:$0xff]
    %v8516 = vld [vmem:[%s3333 + $0x300] sm:$0xff]
    %v8517 = vld [vmem:[%s3333 + $0x308] sm:$0xff]
    %v8518 = vld [vmem:[%s3333 + $0x318] sm:$0xff]
    %v8519 = vld [vmem:[%s3333 + $0x320] sm:$0xff]
    %s8520 = scalar_lea.vmem [#allocation8], 768
    %v8521 = vld [vmem:[%s8520] sm:$0xff]
    %v8522 = vld [vmem:[%s8520 + $0x8] sm:$0xff]
    %v8523 = vld [vmem:[%s8520 + $0x10] sm:$0xff]
    %v8524 = vld [vmem:[%s8520 + $0x18] sm:$0xff]
    %v8525 = vld [vmem:[%s8520 + $0x20] sm:$0xff]
    %v8526 = vld [vmem:[%s8520 + $0x28] sm:$0xff]
    %v8527 = vld [vmem:[%s8520 + $0x30] sm:$0xff]
    %v8528 = vld [vmem:[%s8520 + $0x38] sm:$0xff]
    %v8529 = vld [vmem:[%s8520 + $0x40] sm:$0xff]
    %v8530 = vld [vmem:[%s8520 + $0x48] sm:$0xff]
    %v8531 = vld [vmem:[%s8520 + $0x50] sm:$0xff]
    %v8532 = vld [vmem:[%s8520 + $0x58] sm:$0xff]
    %v8533 = vld [vmem:[%s8520 + $0x60] sm:$0xff]
    %v8534 = vld [vmem:[%s8520 + $0x68] sm:$0xff]
    %v8535 = vld [vmem:[%s8520 + $0x70] sm:$0xff]
    %v8536 = vld [vmem:[%s8520 + $0x78] sm:$0xff]
    %8537 = vmatprep.subr.mxu0 0.0
    %8538 = vmatpush1.msra.mxu0 %v8521
    %8539 = vmatprep.subr.mxu0 0.0
    %8540 = vmatpush1.msra.mxu0 %v8522
    %8541 = vmatprep.subr.mxu0 0.0
    %8542 = vmatpush1.msra.mxu0 %v8523
    %8543 = vmatprep.subr.mxu0 0.0
    %8544 = vmatpush1.msra.mxu0 %v8524
    %8545 = vmatprep.subr.mxu0 0.0
    %8546 = vmatpush1.msra.mxu0 %v8525
    %8547 = vmatprep.subr.mxu0 0.0
    %8548 = vmatpush1.msra.mxu0 %v8526
    %8549 = vmatprep.subr.mxu0 0.0
    %8550 = vmatpush1.msra.mxu0 %v8527
    %8551 = vmatprep.subr.mxu0 0.0
    %8552 = vmatpush1.msra.mxu0 %v8528
    %8553 = vmatprep.subr.mxu0 0.0
    %8554 = vmatpush1.msra.mxu0 %v8529
    %8555 = vmatprep.subr.mxu0 0.0
    %8556 = vmatpush1.msra.mxu0 %v8530
    %8557 = vmatprep.subr.mxu0 0.0
    %8558 = vmatpush1.msra.mxu0 %v8531
    %8559 = vmatprep.subr.mxu0 0.0
    %8560 = vmatpush1.msra.mxu0 %v8532
    %8561 = vmatprep.subr.mxu0 0.0
    %8562 = vmatpush1.msra.mxu0 %v8533
    %8563 = vmatprep.subr.mxu0 0.0
    %8564 = vmatpush1.msra.mxu0 %v8534
    %8565 = vmatprep.subr.mxu0 0.0
    %8566 = vmatpush1.msra.mxu0 %v8535
    %8567 = vmatprep.subr.mxu0 0.0
    %8568 = vmatpush1.msra.mxu0 %v8536
    %8569 = vmatprep.subr.mxu0 0.0
    %8570 = vmatpush1.msra.mxu0 0.0
    %8571 = vmatprep.subr.mxu0 0.0
    %8572 = vmatpush1.msra.mxu0 0.0
    %8573 = vmatprep.subr.mxu0 0.0
    %8574 = vmatpush1.msra.mxu0 0.0
    %8575 = vmatprep.subr.mxu0 0.0
    %8576 = vmatpush1.msra.mxu0 0.0
    %8577 = vmatprep.subr.mxu0 0.0
    %8578 = vmatpush1.msra.mxu0 0.0
    %8579 = vmatprep.subr.mxu0 0.0
    %8580 = vmatpush1.msra.mxu0 0.0
    %8581 = vmatprep.subr.mxu0 0.0
    %8582 = vmatpush1.msra.mxu0 0.0
    %8583 = vmatprep.subr.mxu0 0.0
    %8584 = vmatpush1.msra.mxu0 0.0
    %8585 = vmatprep.subr.mxu0 0.0
    %8586 = vmatpush1.msra.mxu0 0.0
    %8587 = vmatprep.subr.mxu0 0.0
    %8588 = vmatpush1.msra.mxu0 0.0
    %8589 = vmatprep.subr.mxu0 0.0
    %8590 = vmatpush1.msra.mxu0 0.0
    %8591 = vmatprep.subr.mxu0 0.0
    %8592 = vmatpush1.msra.mxu0 0.0
    %8593 = vmatprep.subr.mxu0 0.0
    %8594 = vmatpush1.msra.mxu0 0.0
    %8595 = vmatprep.subr.mxu0 0.0
    %8596 = vmatpush1.msra.mxu0 0.0
    %8597 = vmatprep.subr.mxu0 0.0
    %8598 = vmatpush1.msra.mxu0 0.0
    %8599 = vmatprep.subr.mxu0 0.0
    %8600 = vmatpush1.msra.mxu0 0.0
    %8601 = vmatprep.mubr.f32.mxu0 0.0
    %8602 = vmatmul.mubr.f32.gmra.mrb[0].mxu0 %v8456
    %v8603 = vpop.f32.mrb[0].mxu0
    %v8604 = vadd.f32 0.0, %v8603
    %v8605 = vpop.f32.mrb[0].mxu0
    %8606 = vmatprep.mubr.f32.mxu0 0.0
    %8607 = vmatmul.mubr.f32.gmra.mrb[0].mxu0 %v8457
    %v8608 = vpop.f32.mrb[0].mxu0
    %v8609 = vadd.f32 0.0, %v8608
    %v8610 = vpop.f32.mrb[0].mxu0
    %8611 = vmatprep.mubr.f32.mxu0 0.0
    %8612 = vmatmul.mubr.f32.gmra.mrb[0].mxu0 %v8458
    %v8613 = vpop.f32.mrb[0].mxu0
    %v8614 = vadd.f32 0.0, %v8613
    %v8615 = vpop.f32.mrb[0].mxu0
    %8616 = vmatprep.mubr.f32.mxu0 0.0
    %8617 = vmatmul.mubr.f32.gmra.mrb[0].mxu0 %v8459
    %v8618 = vpop.f32.mrb[0].mxu0
    %v8619 = vadd.f32 0.0, %v8618
    %v8620 = vpop.f32.mrb[0].mxu0
    %8621 = vmatprep.mubr.f32.mxu0 0.0
    %8622 = vmatmul.mubr.f32.gmra.mrb[0].mxu0 %v8460
    %v8623 = vpop.f32.mrb[0].mxu0
    %v8624 = vadd.f32 0.0, %v8623
    %v8625 = vpop.f32.mrb[0].mxu0
    %8626 = vmatprep.mubr.f32.mxu0 0.0
    %8627 = vmatmul.mubr.f32.gmra.mrb[0].mxu0 %v8461
    %v8628 = vpop.f32.mrb[0].mxu0
    %v8629 = vadd.f32 0.0, %v8628
    %v8630 = vpop.f32.mrb[0].mxu0
    %8631 = vmatprep.mubr.f32.mxu0 0.0
    %8632 = vmatmul.mubr.f32.gmra.mrb[0].mxu0 %v8462
    %v8633 = vpop.f32.mrb[0].mxu0
    %v8634 = vadd.f32 0.0, %v8633
    %v8635 = vpop.f32.mrb[0].mxu0
    %8636 = vmatprep.mubr.f32.mxu0 0.0
    %8637 = vmatmul.mubr.f32.gmra.mrb[0].mxu0 %v8463
    %v8638 = vpop.f32.mrb[0].mxu0
    %v8639 = vadd.f32 0.0, %v8638
    %v8640 = vpop.f32.mrb[0].mxu0
    %8641 = vmatprep.mubr.f32.mxu0 0.0
    %8642 = vmatmul.mubr.f32.gmra.mrb[0].mxu0 %v8464
    %v8643 = vpop.f32.mrb[0].mxu0
    %v8644 = vadd.f32 0.0, %v8643
    %v8645 = vpop.f32.mrb[0].mxu0
    %8646 = vmatprep.mubr.f32.mxu0 0.0
    %8647 = vmatmul.mubr.f32.gmra.mrb[0].mxu0 %v8465
    %v8648 = vpop.f32.mrb[0].mxu0
    %v8649 = vadd.f32 0.0, %v8648
    %v8650 = vpop.f32.mrb[0].mxu0
    %8651 = vmatprep.mubr.f32.mxu0 0.0
    %8652 = vmatmul.mubr.f32.gmra.mrb[0].mxu0 %v8466
    %v8653 = vpop.f32.mrb[0].mxu0
    %v8654 = vadd.f32 0.0, %v8653
    %v8655 = vpop.f32.mrb[0].mxu0
    %8656 = vmatprep.mubr.f32.mxu0 0.0
    %8657 = vmatmul.mubr.f32.gmra.mrb[0].mxu0 %v8467
    %v8658 = vpop.f32.mrb[0].mxu0
    %v8659 = vadd.f32 0.0, %v8658
    %v8660 = vpop.f32.mrb[0].mxu0
    %8661 = vmatprep.mubr.f32.mxu0 0.0
    %8662 = vmatmul.mubr.f32.gmra.mrb[0].mxu0 %v8468
    %v8663 = vpop.f32.mrb[0].mxu0
    %v8664 = vadd.f32 0.0, %v8663
    %v8665 = vpop.f32.mrb[0].mxu0
    %8666 = vmatprep.mubr.f32.mxu0 0.0
    %8667 = vmatmul.mubr.f32.gmra.mrb[0].mxu0 %v8469
    %v8668 = vpop.f32.mrb[0].mxu0
    %v8669 = vadd.f32 0.0, %v8668
    %v8670 = vpop.f32.mrb[0].mxu0
    %8671 = vmatprep.mubr.f32.mxu0 0.0
    %8672 = vmatmul.mubr.f32.gmra.mrb[0].mxu0 %v8470
    %v8673 = vpop.f32.mrb[0].mxu0
    %v8674 = vadd.f32 0.0, %v8673
    %v8675 = vpop.f32.mrb[0].mxu0
    %8676 = vmatprep.mubr.f32.mxu0 0.0
    %8677 = vmatmul.mubr.f32.gmra.mrb[0].mxu0 %v8471
    %v8678 = vpop.f32.mrb[0].mxu0
    %v8679 = vadd.f32 0.0, %v8678
    %v8680 = vpop.f32.mrb[0].mxu0
    %8681 = vmatprep.mubr.f32.mxu0 0.0
    %8682 = vmatmul.mubr.f32.gmra.mrb[0].mxu0 %v8472
    %v8683 = vpop.f32.mrb[0].mxu0
    %v8684 = vadd.f32 0.0, %v8683
    %v8685 = vpop.f32.mrb[0].mxu0
    %8686 = vmatprep.mubr.f32.mxu0 0.0
    %8687 = vmatmul.mubr.f32.gmra.mrb[0].mxu0 %v8473
    %v8688 = vpop.f32.mrb[0].mxu0
    %v8689 = vadd.f32 0.0, %v8688
    %v8690 = vpop.f32.mrb[0].mxu0
    %8691 = vmatprep.mubr.f32.mxu0 0.0
    %8692 = vmatmul.mubr.f32.gmra.mrb[0].mxu0 %v8474
    %v8693 = vpop.f32.mrb[0].mxu0
    %v8694 = vadd.f32 0.0, %v8693
    %v8695 = vpop.f32.mrb[0].mxu0
    %8696 = vmatprep.mubr.f32.mxu0 0.0
    %8697 = vmatmul.mubr.f32.gmra.mrb[0].mxu0 %v8475
    %v8698 = vpop.f32.mrb[0].mxu0
    %v8699 = vadd.f32 0.0, %v8698
    %v8700 = vpop.f32.mrb[0].mxu0
    %8701 = vmatprep.mubr.f32.mxu0 0.0
    %8702 = vmatmul.mubr.f32.gmra.mrb[0].mxu0 %v8476
    %v8703 = vpop.f32.mrb[0].mxu0
    %v8704 = vadd.f32 0.0, %v8703
    %v8705 = vpop.f32.mrb[0].mxu0
    %8706 = vmatprep.mubr.f32.mxu0 0.0
    %8707 = vmatmul.mubr.f32.gmra.mrb[0].mxu0 %v8477
    %v8708 = vpop.f32.mrb[0].mxu0
    %v8709 = vadd.f32 0.0, %v8708
    %v8710 = vpop.f32.mrb[0].mxu0
    %8711 = vmatprep.mubr.f32.mxu0 0.0
    %8712 = vmatmul.mubr.f32.gmra.mrb[0].mxu0 %v8478
    %v8713 = vpop.f32.mrb[0].mxu0
    %v8714 = vadd.f32 0.0, %v8713
    %v8715 = vpop.f32.mrb[0].mxu0
    %8716 = vmatprep.mubr.f32.mxu0 0.0
    %8717 = vmatmul.mubr.f32.gmra.mrb[0].mxu0 %v8479
    %v8718 = vpop.f32.mrb[0].mxu0
    %v8719 = vadd.f32 0.0, %v8718
    %v8720 = vpop.f32.mrb[0].mxu0
    %8721 = vmatprep.mubr.f32.mxu0 0.0
    %8722 = vmatmul.mubr.f32.gmra.mrb[0].mxu0 %v8480
    %v8723 = vpop.f32.mrb[0].mxu0
    %v8724 = vadd.f32 0.0, %v8723
    %v8725 = vpop.f32.mrb[0].mxu0
    %8726 = vmatprep.mubr.f32.mxu0 0.0
    %8727 = vmatmul.mubr.f32.gmra.mrb[0].mxu0 %v8481
    %v8728 = vpop.f32.mrb[0].mxu0
    %v8729 = vadd.f32 0.0, %v8728
    %v8730 = vpop.f32.mrb[0].mxu0
    %8731 = vmatprep.mubr.f32.mxu0 0.0
    %8732 = vmatmul.mubr.f32.gmra.mrb[0].mxu0 %v8482
    %v8733 = vpop.f32.mrb[0].mxu0
    %v8734 = vadd.f32 0.0, %v8733
    %v8735 = vpop.f32.mrb[0].mxu0
    %8736 = vmatprep.mubr.f32.mxu0 0.0
    %8737 = vmatmul.mubr.f32.gmra.mrb[0].mxu0 %v8483
    %v8738 = vpop.f32.mrb[0].mxu0
    %v8739 = vadd.f32 0.0, %v8738
    %v8740 = vpop.f32.mrb[0].mxu0
    %8741 = vmatprep.mubr.f32.mxu0 0.0
    %8742 = vmatmul.mubr.f32.gmra.mrb[0].mxu0 %v8484
    %v8743 = vpop.f32.mrb[0].mxu0
    %v8744 = vadd.f32 0.0, %v8743
    %v8745 = vpop.f32.mrb[0].mxu0
    %8746 = vmatprep.mubr.f32.mxu0 0.0
    %8747 = vmatmul.mubr.f32.gmra.mrb[0].mxu0 %v8485
    %v8748 = vpop.f32.mrb[0].mxu0
    %v8749 = vadd.f32 0.0, %v8748
    %v8750 = vpop.f32.mrb[0].mxu0
    %8751 = vmatprep.mubr.f32.mxu0 0.0
    %8752 = vmatmul.mubr.f32.gmra.mrb[0].mxu0 %v8486
    %v8753 = vpop.f32.mrb[0].mxu0
    %v8754 = vadd.f32 0.0, %v8753
    %v8755 = vpop.f32.mrb[0].mxu0
    %8756 = vmatprep.mubr.f32.mxu0 0.0
    %8757 = vmatmul.mubr.f32.gmra.mrb[0].mxu0 %v8487
    %v8758 = vpop.f32.mrb[0].mxu0
    %v8759 = vadd.f32 0.0, %v8758
    %v8760 = vpop.f32.mrb[0].mxu0
    %8761 = vmatprep.mubr.f32.mxu0 0.0
    %8762 = vmatmul.mubr.f32.gmra.mrb[0].mxu0 %v8488
    %v8763 = vpop.f32.mrb[0].mxu0
    %v8764 = vadd.f32 0.0, %v8763
    %v8765 = vpop.f32.mrb[0].mxu0
    %8766 = vmatprep.mubr.f32.mxu0 0.0
    %8767 = vmatmul.mubr.f32.gmra.mrb[0].mxu0 %v8489
    %v8768 = vpop.f32.mrb[0].mxu0
    %v8769 = vadd.f32 0.0, %v8768
    %v8770 = vpop.f32.mrb[0].mxu0
    %8771 = vmatprep.mubr.f32.mxu0 0.0
    %8772 = vmatmul.mubr.f32.gmra.mrb[0].mxu0 %v8490
    %v8773 = vpop.f32.mrb[0].mxu0
    %v8774 = vadd.f32 0.0, %v8773
    %v8775 = vpop.f32.mrb[0].mxu0
    %8776 = vmatprep.mubr.f32.mxu0 0.0
    %8777 = vmatmul.mubr.f32.gmra.mrb[0].mxu0 %v8491
    %v8778 = vpop.f32.mrb[0].mxu0
    %v8779 = vadd.f32 0.0, %v8778
    %v8780 = vpop.f32.mrb[0].mxu0
    %8781 = vmatprep.mubr.f32.mxu0 0.0
    %8782 = vmatmul.mubr.f32.gmra.mrb[0].mxu0 %v8492
    %v8783 = vpop.f32.mrb[0].mxu0
    %v8784 = vadd.f32 0.0, %v8783
    %v8785 = vpop.f32.mrb[0].mxu0
    %8786 = vmatprep.mubr.f32.mxu0 0.0
    %8787 = vmatmul.mubr.f32.gmra.mrb[0].mxu0 %v8493
    %v8788 = vpop.f32.mrb[0].mxu0
    %v8789 = vadd.f32 0.0, %v8788
    %v8790 = vpop.f32.mrb[0].mxu0
    %8791 = vmatprep.mubr.f32.mxu0 0.0
    %8792 = vmatmul.mubr.f32.gmra.mrb[0].mxu0 %v8494
    %v8793 = vpop.f32.mrb[0].mxu0
    %v8794 = vadd.f32 0.0, %v8793
    %v8795 = vpop.f32.mrb[0].mxu0
    %8796 = vmatprep.mubr.f32.mxu0 0.0
    %8797 = vmatmul.mubr.f32.gmra.mrb[0].mxu0 %v8495
    %v8798 = vpop.f32.mrb[0].mxu0
    %v8799 = vadd.f32 0.0, %v8798
    %v8800 = vpop.f32.mrb[0].mxu0
    %8801 = vmatprep.mubr.f32.mxu0 0.0
    %8802 = vmatmul.mubr.f32.gmra.mrb[0].mxu0 %v8496
    %v8803 = vpop.f32.mrb[0].mxu0
    %v8804 = vadd.f32 0.0, %v8803
    %v8805 = vpop.f32.mrb[0].mxu0
    %8806 = vmatprep.mubr.f32.mxu0 0.0
    %8807 = vmatmul.mubr.f32.gmra.mrb[0].mxu0 %v8497
    %v8808 = vpop.f32.mrb[0].mxu0
    %v8809 = vadd.f32 0.0, %v8808
    %v8810 = vpop.f32.mrb[0].mxu0
    %8811 = vmatprep.mubr.f32.mxu0 0.0
    %8812 = vmatmul.mubr.f32.gmra.mrb[0].mxu0 %v8498
    %v8813 = vpop.f32.mrb[0].mxu0
    %v8814 = vadd.f32 0.0, %v8813
    %v8815 = vpop.f32.mrb[0].mxu0
    %8816 = vmatprep.mubr.f32.mxu0 0.0
    %8817 = vmatmul.mubr.f32.gmra.mrb[0].mxu0 %v8499
    %v8818 = vpop.f32.mrb[0].mxu0
    %v8819 = vadd.f32 0.0, %v8818
    %v8820 = vpop.f32.mrb[0].mxu0
    %8821 = vmatprep.mubr.f32.mxu0 0.0
    %8822 = vmatmul.mubr.f32.gmra.mrb[0].mxu0 %v8500
    %v8823 = vpop.f32.mrb[0].mxu0
    %v8824 = vadd.f32 0.0, %v8823
    %v8825 = vpop.f32.mrb[0].mxu0
    %8826 = vmatprep.mubr.f32.mxu0 0.0
    %8827 = vmatmul.mubr.f32.gmra.mrb[0].mxu0 %v8501
    %v8828 = vpop.f32.mrb[0].mxu0
    %v8829 = vadd.f32 0.0, %v8828
    %v8830 = vpop.f32.mrb[0].mxu0
    %8831 = vmatprep.mubr.f32.mxu0 0.0
    %8832 = vmatmul.mubr.f32.gmra.mrb[0].mxu0 %v8502
    %v8833 = vpop.f32.mrb[0].mxu0
    %v8834 = vadd.f32 0.0, %v8833
    %v8835 = vpop.f32.mrb[0].mxu0
    %8836 = vmatprep.mubr.f32.mxu0 0.0
    %8837 = vmatmul.mubr.f32.gmra.mrb[0].mxu0 %v8503
    %v8838 = vpop.f32.mrb[0].mxu0
    %v8839 = vadd.f32 0.0, %v8838
    %v8840 = vpop.f32.mrb[0].mxu0
    %8841 = vmatprep.mubr.f32.mxu0 0.0
    %8842 = vmatmul.mubr.f32.gmra.mrb[0].mxu0 %v8504
    %v8843 = vpop.f32.mrb[0].mxu0
    %v8844 = vadd.f32 0.0, %v8843
    %v8845 = vpop.f32.mrb[0].mxu0
    %8846 = vmatprep.mubr.f32.mxu0 0.0
    %8847 = vmatmul.mubr.f32.gmra.mrb[0].mxu0 %v8505
    %v8848 = vpop.f32.mrb[0].mxu0
    %v8849 = vadd.f32 0.0, %v8848
    %v8850 = vpop.f32.mrb[0].mxu0
    %8851 = vmatprep.mubr.f32.mxu0 0.0
    %8852 = vmatmul.mubr.f32.gmra.mrb[0].mxu0 %v8506
    %v8853 = vpop.f32.mrb[0].mxu0
    %v8854 = vadd.f32 0.0, %v8853
    %v8855 = vpop.f32.mrb[0].mxu0
    %8856 = vmatprep.mubr.f32.mxu0 0.0
    %8857 = vmatmul.mubr.f32.gmra.mrb[0].mxu0 %v8507
    %v8858 = vpop.f32.mrb[0].mxu0
    %v8859 = vadd.f32 0.0, %v8858
    %v8860 = vpop.f32.mrb[0].mxu0
    %8861 = vmatprep.mubr.f32.mxu0 0.0
    %8862 = vmatmul.mubr.f32.gmra.mrb[0].mxu0 %v8508
    %v8863 = vpop.f32.mrb[0].mxu0
    %v8864 = vadd.f32 0.0, %v8863
    %v8865 = vpop.f32.mrb[0].mxu0
    %8866 = vmatprep.mubr.f32.mxu0 0.0
    %8867 = vmatmul.mubr.f32.gmra.mrb[0].mxu0 %v8509
    %v8868 = vpop.f32.mrb[0].mxu0
    %v8869 = vadd.f32 0.0, %v8868
    %v8870 = vpop.f32.mrb[0].mxu0
    %8871 = vmatprep.mubr.f32.mxu0 0.0
    %8872 = vmatmul.mubr.f32.gmra.mrb[0].mxu0 %v8510
    %v8873 = vpop.f32.mrb[0].mxu0
    %v8874 = vadd.f32 0.0, %v8873
    %v8875 = vpop.f32.mrb[0].mxu0
    %8876 = vmatprep.mubr.f32.mxu0 0.0
    %8877 = vmatmul.mubr.f32.gmra.mrb[0].mxu0 %v8511
    %v8878 = vpop.f32.mrb[0].mxu0
    %v8879 = vadd.f32 0.0, %v8878
    %v8880 = vpop.f32.mrb[0].mxu0
    %8881 = vmatprep.mubr.f32.mxu0 0.0
    %8882 = vmatmul.mubr.f32.gmra.mrb[0].mxu0 %v8512
    %v8883 = vpop.f32.mrb[0].mxu0
    %v8884 = vadd.f32 0.0, %v8883
    %v8885 = vpop.f32.mrb[0].mxu0
    %8886 = vmatprep.mubr.f32.mxu0 0.0
    %8887 = vmatmul.mubr.f32.gmra.mrb[0].mxu0 %v8513
    %v8888 = vpop.f32.mrb[0].mxu0
    %v8889 = vadd.f32 0.0, %v8888
    %v8890 = vpop.f32.mrb[0].mxu0
    %8891 = vmatprep.mubr.f32.mxu0 0.0
    %8892 = vmatmul.mubr.f32.gmra.mrb[0].mxu0 %v8514
    %v8893 = vpop.f32.mrb[0].mxu0
    %v8894 = vadd.f32 0.0, %v8893
    %v8895 = vpop.f32.mrb[0].mxu0
    %8896 = vmatprep.mubr.f32.mxu0 0.0
    %8897 = vmatmul.mubr.f32.gmra.mrb[0].mxu0 %v8515
    %v8898 = vpop.f32.mrb[0].mxu0
    %v8899 = vadd.f32 0.0, %v8898
    %v8900 = vpop.f32.mrb[0].mxu0
    %8901 = vmatprep.mubr.f32.mxu0 0.0
    %8902 = vmatmul.mubr.f32.gmra.mrb[0].mxu0 %v8516
    %v8903 = vpop.f32.mrb[0].mxu0
    %v8904 = vadd.f32 0.0, %v8903
    %v8905 = vpop.f32.mrb[0].mxu0
    %8906 = vmatprep.mubr.f32.mxu0 0.0
    %8907 = vmatmul.mubr.f32.gmra.mrb[0].mxu0 %v8517
    %v8908 = vpop.f32.mrb[0].mxu0
    %v8909 = vadd.f32 0.0, %v8908
    %v8910 = vpop.f32.mrb[0].mxu0
    %8911 = vmatprep.mubr.f32.mxu0 0.0
    %8912 = vmatmul.mubr.f32.gmra.mrb[0].mxu0 %v8518
    %v8913 = vpop.f32.mrb[0].mxu0
    %v8914 = vadd.f32 0.0, %v8913
    %v8915 = vpop.f32.mrb[0].mxu0
    %8916 = vmatprep.mubr.f32.mxu0 0.0
    %8917 = vmatmul.mubr.f32.gmra.mrb[0].mxu0 %v8519
    %v8918 = vpop.f32.mrb[0].mxu0
    %v8919 = vadd.f32 0.0, %v8918
    %v8920 = vpop.f32.mrb[0].mxu0
    %8921 = vdwg.mxu0
    %v8922 = vadd.f32 %v8392, %v8604
    %v8923 = vadd.f32 %v8393, %v8609
    %v8924 = vadd.f32 %v8394, %v8614
    %v8925 = vadd.f32 %v8395, %v8619
    %v8926 = vadd.f32 %v8396, %v8624
    %v8927 = vadd.f32 %v8397, %v8629
    %v8928 = vadd.f32 %v8398, %v8634
    %v8929 = vadd.f32 %v8399, %v8639
    %v8930 = vadd.f32 %v8400, %v8644
    %v8931 = vadd.f32 %v8401, %v8649
    %v8932 = vadd.f32 %v8402, %v8654
    %v8933 = vadd.f32 %v8403, %v8659
    %v8934 = vadd.f32 %v8404, %v8664
    %v8935 = vadd.f32 %v8405, %v8669
    %v8936 = vadd.f32 %v8406, %v8674
    %v8937 = vadd.f32 %v8407, %v8679
    %v8938 = vadd.f32 %v8408, %v8684
    %v8939 = vadd.f32 %v8409, %v8689
    %v8940 = vadd.f32 %v8410, %v8694
    %v8941 = vadd.f32 %v8411, %v8699
    %v8942 = vadd.f32 %v8412, %v8704
    %v8943 = vadd.f32 %v8413, %v8709
    %v8944 = vadd.f32 %v8414, %v8714
    %v8945 = vadd.f32 %v8415, %v8719
    %v8946 = vadd.f32 %v8416, %v8724
    %v8947 = vadd.f32 %v8417, %v8729
    %v8948 = vadd.f32 %v8418, %v8734
    %v8949 = vadd.f32 %v8419, %v8739
    %v8950 = vadd.f32 %v8420, %v8744
    %v8951 = vadd.f32 %v8421, %v8749
    %v8952 = vadd.f32 %v8422, %v8754
    %v8953 = vadd.f32 %v8423, %v8759
    %v8954 = vadd.f32 %v8424, %v8764
    %v8955 = vadd.f32 %v8425, %v8769
    %v8956 = vadd.f32 %v8426, %v8774
    %v8957 = vadd.f32 %v8427, %v8779
    %v8958 = vadd.f32 %v8428, %v8784
    %v8959 = vadd.f32 %v8429, %v8789
    %v8960 = vadd.f32 %v8430, %v8794
    %v8961 = vadd.f32 %v8431, %v8799
    %v8962 = vadd.f32 %v8432, %v8804
    %v8963 = vadd.f32 %v8433, %v8809
    %v8964 = vadd.f32 %v8434, %v8814
    %v8965 = vadd.f32 %v8435, %v8819
    %v8966 = vadd.f32 %v8436, %v8824
    %v8967 = vadd.f32 %v8437, %v8829
    %v8968 = vadd.f32 %v8438, %v8834
    %v8969 = vadd.f32 %v8439, %v8839
    %v8970 = vadd.f32 %v8440, %v8844
    %v8971 = vadd.f32 %v8441, %v8849
    %v8972 = vadd.f32 %v8442, %v8854
    %v8973 = vadd.f32 %v8443, %v8859
    %v8974 = vadd.f32 %v8444, %v8864
    %v8975 = vadd.f32 %v8445, %v8869
    %v8976 = vadd.f32 %v8446, %v8874
    %v8977 = vadd.f32 %v8447, %v8879
    %v8978 = vadd.f32 %v8448, %v8884
    %v8979 = vadd.f32 %v8449, %v8889
    %v8980 = vadd.f32 %v8450, %v8894
    %v8981 = vadd.f32 %v8451, %v8899
    %v8982 = vadd.f32 %v8452, %v8904
    %v8983 = vadd.f32 %v8453, %v8909
    %v8984 = vadd.f32 %v8454, %v8914
    %v8985 = vadd.f32 %v8455, %v8919
    %v8986 = vld [vmem:[%s3333 + $0x1] sm:$0xff]
    %v8987 = vld [vmem:[%s3333 + $0x9] sm:$0xff]
    %v8988 = vld [vmem:[%s3333 + $0x19] sm:$0xff]
    %v8989 = vld [vmem:[%s3333 + $0x21] sm:$0xff]
    %v8990 = vld [vmem:[%s3333 + $0x31] sm:$0xff]
    %v8991 = vld [vmem:[%s3333 + $0x39] sm:$0xff]
    %v8992 = vld [vmem:[%s3333 + $0x49] sm:$0xff]
    %v8993 = vld [vmem:[%s3333 + $0x51] sm:$0xff]
    %v8994 = vld [vmem:[%s3333 + $0x61] sm:$0xff]
    %v8995 = vld [vmem:[%s3333 + $0x69] sm:$0xff]
    %v8996 = vld [vmem:[%s3333 + $0x79] sm:$0xff]
    %v8997 = vld [vmem:[%s3333 + $0x81] sm:$0xff]
    %v8998 = vld [vmem:[%s3333 + $0x91] sm:$0xff]
    %v8999 = vld [vmem:[%s3333 + $0x99] sm:$0xff]
    %v9000 = vld [vmem:[%s3333 + $0xa9] sm:$0xff]
    %v9001 = vld [vmem:[%s3333 + $0xb1] sm:$0xff]
    %v9002 = vld [vmem:[%s3333 + $0xc1] sm:$0xff]
    %v9003 = vld [vmem:[%s3333 + $0xc9] sm:$0xff]
    %v9004 = vld [vmem:[%s3333 + $0xd9] sm:$0xff]
    %v9005 = vld [vmem:[%s3333 + $0xe1] sm:$0xff]
    %v9006 = vld [vmem:[%s3333 + $0xf1] sm:$0xff]
    %v9007 = vld [vmem:[%s3333 + $0xf9] sm:$0xff]
    %v9008 = vld [vmem:[%s3333 + $0x109] sm:$0xff]
    %v9009 = vld [vmem:[%s3333 + $0x111] sm:$0xff]
    %v9010 = vld [vmem:[%s3333 + $0x121] sm:$0xff]
    %v9011 = vld [vmem:[%s3333 + $0x129] sm:$0xff]
    %v9012 = vld [vmem:[%s3333 + $0x139] sm:$0xff]
    %v9013 = vld [vmem:[%s3333 + $0x141] sm:$0xff]
    %v9014 = vld [vmem:[%s3333 + $0x151] sm:$0xff]
    %v9015 = vld [vmem:[%s3333 + $0x159] sm:$0xff]
    %v9016 = vld [vmem:[%s3333 + $0x169] sm:$0xff]
    %v9017 = vld [vmem:[%s3333 + $0x171] sm:$0xff]
    %v9018 = vld [vmem:[%s3333 + $0x1b1] sm:$0xff]
    %v9019 = vld [vmem:[%s3333 + $0x1b9] sm:$0xff]
    %v9020 = vld [vmem:[%s3333 + $0x1c9] sm:$0xff]
    %v9021 = vld [vmem:[%s3333 + $0x1d1] sm:$0xff]
    %v9022 = vld [vmem:[%s3333 + $0x1e1] sm:$0xff]
    %v9023 = vld [vmem:[%s3333 + $0x1e9] sm:$0xff]
    %v9024 = vld [vmem:[%s3333 + $0x1f9] sm:$0xff]
    %v9025 = vld [vmem:[%s3333 + $0x201] sm:$0xff]
    %v9026 = vld [vmem:[%s3333 + $0x211] sm:$0xff]
    %v9027 = vld [vmem:[%s3333 + $0x219] sm:$0xff]
    %v9028 = vld [vmem:[%s3333 + $0x229] sm:$0xff]
    %v9029 = vld [vmem:[%s3333 + $0x231] sm:$0xff]
    %v9030 = vld [vmem:[%s3333 + $0x241] sm:$0xff]
    %v9031 = vld [vmem:[%s3333 + $0x249] sm:$0xff]
    %v9032 = vld [vmem:[%s3333 + $0x259] sm:$0xff]
    %v9033 = vld [vmem:[%s3333 + $0x261] sm:$0xff]
    %v9034 = vld [vmem:[%s3333 + $0x271] sm:$0xff]
    %v9035 = vld [vmem:[%s3333 + $0x279] sm:$0xff]
    %v9036 = vld [vmem:[%s3333 + $0x289] sm:$0xff]
    %v9037 = vld [vmem:[%s3333 + $0x291] sm:$0xff]
    %v9038 = vld [vmem:[%s3333 + $0x2a1] sm:$0xff]
    %v9039 = vld [vmem:[%s3333 + $0x2a9] sm:$0xff]
    %v9040 = vld [vmem:[%s3333 + $0x2b9] sm:$0xff]
    %v9041 = vld [vmem:[%s3333 + $0x2c1] sm:$0xff]
    %v9042 = vld [vmem:[%s3333 + $0x2d1] sm:$0xff]
    %v9043 = vld [vmem:[%s3333 + $0x2d9] sm:$0xff]
    %v9044 = vld [vmem:[%s3333 + $0x2e9] sm:$0xff]
    %v9045 = vld [vmem:[%s3333 + $0x2f1] sm:$0xff]
    %v9046 = vld [vmem:[%s3333 + $0x301] sm:$0xff]
    %v9047 = vld [vmem:[%s3333 + $0x309] sm:$0xff]
    %v9048 = vld [vmem:[%s3333 + $0x319] sm:$0xff]
    %v9049 = vld [vmem:[%s3333 + $0x321] sm:$0xff]
    %s9050 = scalar_lea.vmem [#allocation8], 896
    %v9051 = vld [vmem:[%s9050] sm:$0xff]
    %v9052 = vld [vmem:[%s9050 + $0x8] sm:$0xff]
    %v9053 = vld [vmem:[%s9050 + $0x10] sm:$0xff]
    %v9054 = vld [vmem:[%s9050 + $0x18] sm:$0xff]
    %v9055 = vld [vmem:[%s9050 + $0x20] sm:$0xff]
    %v9056 = vld [vmem:[%s9050 + $0x28] sm:$0xff]
    %v9057 = vld [vmem:[%s9050 + $0x30] sm:$0xff]
    %v9058 = vld [vmem:[%s9050 + $0x38] sm:$0xff]
    %v9059 = vld [vmem:[%s9050 + $0x40] sm:$0xff]
    %v9060 = vld [vmem:[%s9050 + $0x48] sm:$0xff]
    %v9061 = vld [vmem:[%s9050 + $0x50] sm:$0xff]
    %v9062 = vld [vmem:[%s9050 + $0x58] sm:$0xff]
    %v9063 = vld [vmem:[%s9050 + $0x60] sm:$0xff]
    %v9064 = vld [vmem:[%s9050 + $0x68] sm:$0xff]
    %v9065 = vld [vmem:[%s9050 + $0x70] sm:$0xff]
    %v9066 = vld [vmem:[%s9050 + $0x78] sm:$0xff]
    %9067 = vmatprep.subr.mxu0 0.0
    %9068 = vmatpush1.msra.mxu0 %v9051
    %9069 = vmatprep.subr.mxu0 0.0
    %9070 = vmatpush1.msra.mxu0 %v9052
    %9071 = vmatprep.subr.mxu0 0.0
    %9072 = vmatpush1.msra.mxu0 %v9053
    %9073 = vmatprep.subr.mxu0 0.0
    %9074 = vmatpush1.msra.mxu0 %v9054
    %9075 = vmatprep.subr.mxu0 0.0
    %9076 = vmatpush1.msra.mxu0 %v9055
    %9077 = vmatprep.subr.mxu0 0.0
    %9078 = vmatpush1.msra.mxu0 %v9056
    %9079 = vmatprep.subr.mxu0 0.0
    %9080 = vmatpush1.msra.mxu0 %v9057
    %9081 = vmatprep.subr.mxu0 0.0
    %9082 = vmatpush1.msra.mxu0 %v9058
    %9083 = vmatprep.subr.mxu0 0.0
    %9084 = vmatpush1.msra.mxu0 %v9059
    %9085 = vmatprep.subr.mxu0 0.0
    %9086 = vmatpush1.msra.mxu0 %v9060
    %9087 = vmatprep.subr.mxu0 0.0
    %9088 = vmatpush1.msra.mxu0 %v9061
    %9089 = vmatprep.subr.mxu0 0.0
    %9090 = vmatpush1.msra.mxu0 %v9062
    %9091 = vmatprep.subr.mxu0 0.0
    %9092 = vmatpush1.msra.mxu0 %v9063
    %9093 = vmatprep.subr.mxu0 0.0
    %9094 = vmatpush1.msra.mxu0 %v9064
    %9095 = vmatprep.subr.mxu0 0.0
    %9096 = vmatpush1.msra.mxu0 %v9065
    %9097 = vmatprep.subr.mxu0 0.0
    %9098 = vmatpush1.msra.mxu0 %v9066
    %9099 = vmatprep.subr.mxu0 0.0
    %9100 = vmatpush1.msra.mxu0 0.0
    %9101 = vmatprep.subr.mxu0 0.0
    %9102 = vmatpush1.msra.mxu0 0.0
    %9103 = vmatprep.subr.mxu0 0.0
    %9104 = vmatpush1.msra.mxu0 0.0
    %9105 = vmatprep.subr.mxu0 0.0
    %9106 = vmatpush1.msra.mxu0 0.0
    %9107 = vmatprep.subr.mxu0 0.0
    %9108 = vmatpush1.msra.mxu0 0.0
    %9109 = vmatprep.subr.mxu0 0.0
    %9110 = vmatpush1.msra.mxu0 0.0
    %9111 = vmatprep.subr.mxu0 0.0
    %9112 = vmatpush1.msra.mxu0 0.0
    %9113 = vmatprep.subr.mxu0 0.0
    %9114 = vmatpush1.msra.mxu0 0.0
    %9115 = vmatprep.subr.mxu0 0.0
    %9116 = vmatpush1.msra.mxu0 0.0
    %9117 = vmatprep.subr.mxu0 0.0
    %9118 = vmatpush1.msra.mxu0 0.0
    %9119 = vmatprep.subr.mxu0 0.0
    %9120 = vmatpush1.msra.mxu0 0.0
    %9121 = vmatprep.subr.mxu0 0.0
    %9122 = vmatpush1.msra.mxu0 0.0
    %9123 = vmatprep.subr.mxu0 0.0
    %9124 = vmatpush1.msra.mxu0 0.0
    %9125 = vmatprep.subr.mxu0 0.0
    %9126 = vmatpush1.msra.mxu0 0.0
    %9127 = vmatprep.subr.mxu0 0.0
    %9128 = vmatpush1.msra.mxu0 0.0
    %9129 = vmatprep.subr.mxu0 0.0
    %9130 = vmatpush1.msra.mxu0 0.0
    %9131 = vmatprep.mubr.f32.mxu0 0.0
    %9132 = vmatmul.mubr.f32.gmra.mrb[0].mxu0 %v8986
    %v9133 = vpop.f32.mrb[0].mxu0
    %v9134 = vadd.f32 0.0, %v9133
    %v9135 = vpop.f32.mrb[0].mxu0
    %9136 = vmatprep.mubr.f32.mxu0 0.0
    %9137 = vmatmul.mubr.f32.gmra.mrb[0].mxu0 %v8987
    %v9138 = vpop.f32.mrb[0].mxu0
    %v9139 = vadd.f32 0.0, %v9138
    %v9140 = vpop.f32.mrb[0].mxu0
    %9141 = vmatprep.mubr.f32.mxu0 0.0
    %9142 = vmatmul.mubr.f32.gmra.mrb[0].mxu0 %v8988
    %v9143 = vpop.f32.mrb[0].mxu0
    %v9144 = vadd.f32 0.0, %v9143
    %v9145 = vpop.f32.mrb[0].mxu0
    %9146 = vmatprep.mubr.f32.mxu0 0.0
    %9147 = vmatmul.mubr.f32.gmra.mrb[0].mxu0 %v8989
    %v9148 = vpop.f32.mrb[0].mxu0
    %v9149 = vadd.f32 0.0, %v9148
    %v9150 = vpop.f32.mrb[0].mxu0
    %9151 = vmatprep.mubr.f32.mxu0 0.0
    %9152 = vmatmul.mubr.f32.gmra.mrb[0].mxu0 %v8990
    %v9153 = vpop.f32.mrb[0].mxu0
    %v9154 = vadd.f32 0.0, %v9153
    %v9155 = vpop.f32.mrb[0].mxu0
    %9156 = vmatprep.mubr.f32.mxu0 0.0
    %9157 = vmatmul.mubr.f32.gmra.mrb[0].mxu0 %v8991
    %v9158 = vpop.f32.mrb[0].mxu0
    %v9159 = vadd.f32 0.0, %v9158
    %v9160 = vpop.f32.mrb[0].mxu0
    %9161 = vmatprep.mubr.f32.mxu0 0.0
    %9162 = vmatmul.mubr.f32.gmra.mrb[0].mxu0 %v8992
    %v9163 = vpop.f32.mrb[0].mxu0
    %v9164 = vadd.f32 0.0, %v9163
    %v9165 = vpop.f32.mrb[0].mxu0
    %9166 = vmatprep.mubr.f32.mxu0 0.0
    %9167 = vmatmul.mubr.f32.gmra.mrb[0].mxu0 %v8993
    %v9168 = vpop.f32.mrb[0].mxu0
    %v9169 = vadd.f32 0.0, %v9168
    %v9170 = vpop.f32.mrb[0].mxu0
    %9171 = vmatprep.mubr.f32.mxu0 0.0
    %9172 = vmatmul.mubr.f32.gmra.mrb[0].mxu0 %v8994
    %v9173 = vpop.f32.mrb[0].mxu0
    %v9174 = vadd.f32 0.0, %v9173
    %v9175 = vpop.f32.mrb[0].mxu0
    %9176 = vmatprep.mubr.f32.mxu0 0.0
    %9177 = vmatmul.mubr.f32.gmra.mrb[0].mxu0 %v8995
    %v9178 = vpop.f32.mrb[0].mxu0
    %v9179 = vadd.f32 0.0, %v9178
    %v9180 = vpop.f32.mrb[0].mxu0
    %9181 = vmatprep.mubr.f32.mxu0 0.0
    %9182 = vmatmul.mubr.f32.gmra.mrb[0].mxu0 %v8996
    %v9183 = vpop.f32.mrb[0].mxu0
    %v9184 = vadd.f32 0.0, %v9183
    %v9185 = vpop.f32.mrb[0].mxu0
    %9186 = vmatprep.mubr.f32.mxu0 0.0
    %9187 = vmatmul.mubr.f32.gmra.mrb[0].mxu0 %v8997
    %v9188 = vpop.f32.mrb[0].mxu0
    %v9189 = vadd.f32 0.0, %v9188
    %v9190 = vpop.f32.mrb[0].mxu0
    %9191 = vmatprep.mubr.f32.mxu0 0.0
    %9192 = vmatmul.mubr.f32.gmra.mrb[0].mxu0 %v8998
    %v9193 = vpop.f32.mrb[0].mxu0
    %v9194 = vadd.f32 0.0, %v9193
    %v9195 = vpop.f32.mrb[0].mxu0
    %9196 = vmatprep.mubr.f32.mxu0 0.0
    %9197 = vmatmul.mubr.f32.gmra.mrb[0].mxu0 %v8999
    %v9198 = vpop.f32.mrb[0].mxu0
    %v9199 = vadd.f32 0.0, %v9198
    %v9200 = vpop.f32.mrb[0].mxu0
    %9201 = vmatprep.mubr.f32.mxu0 0.0
    %9202 = vmatmul.mubr.f32.gmra.mrb[0].mxu0 %v9000
    %v9203 = vpop.f32.mrb[0].mxu0
    %v9204 = vadd.f32 0.0, %v9203
    %v9205 = vpop.f32.mrb[0].mxu0
    %9206 = vmatprep.mubr.f32.mxu0 0.0
    %9207 = vmatmul.mubr.f32.gmra.mrb[0].mxu0 %v9001
    %v9208 = vpop.f32.mrb[0].mxu0
    %v9209 = vadd.f32 0.0, %v9208
    %v9210 = vpop.f32.mrb[0].mxu0
    %9211 = vmatprep.mubr.f32.mxu0 0.0
    %9212 = vmatmul.mubr.f32.gmra.mrb[0].mxu0 %v9002
    %v9213 = vpop.f32.mrb[0].mxu0
    %v9214 = vadd.f32 0.0, %v9213
    %v9215 = vpop.f32.mrb[0].mxu0
    %9216 = vmatprep.mubr.f32.mxu0 0.0
    %9217 = vmatmul.mubr.f32.gmra.mrb[0].mxu0 %v9003
    %v9218 = vpop.f32.mrb[0].mxu0
    %v9219 = vadd.f32 0.0, %v9218
    %v9220 = vpop.f32.mrb[0].mxu0
    %9221 = vmatprep.mubr.f32.mxu0 0.0
    %9222 = vmatmul.mubr.f32.gmra.mrb[0].mxu0 %v9004
    %v9223 = vpop.f32.mrb[0].mxu0
    %v9224 = vadd.f32 0.0, %v9223
    %v9225 = vpop.f32.mrb[0].mxu0
    %9226 = vmatprep.mubr.f32.mxu0 0.0
    %9227 = vmatmul.mubr.f32.gmra.mrb[0].mxu0 %v9005
    %v9228 = vpop.f32.mrb[0].mxu0
    %v9229 = vadd.f32 0.0, %v9228
    %v9230 = vpop.f32.mrb[0].mxu0
    %9231 = vmatprep.mubr.f32.mxu0 0.0
    %9232 = vmatmul.mubr.f32.gmra.mrb[0].mxu0 %v9006
    %v9233 = vpop.f32.mrb[0].mxu0
    %v9234 = vadd.f32 0.0, %v9233
    %v9235 = vpop.f32.mrb[0].mxu0
    %9236 = vmatprep.mubr.f32.mxu0 0.0
    %9237 = vmatmul.mubr.f32.gmra.mrb[0].mxu0 %v9007
    %v9238 = vpop.f32.mrb[0].mxu0
    %v9239 = vadd.f32 0.0, %v9238
    %v9240 = vpop.f32.mrb[0].mxu0
    %9241 = vmatprep.mubr.f32.mxu0 0.0
    %9242 = vmatmul.mubr.f32.gmra.mrb[0].mxu0 %v9008
    %v9243 = vpop.f32.mrb[0].mxu0
    %v9244 = vadd.f32 0.0, %v9243
    %v9245 = vpop.f32.mrb[0].mxu0
    %9246 = vmatprep.mubr.f32.mxu0 0.0
    %9247 = vmatmul.mubr.f32.gmra.mrb[0].mxu0 %v9009
    %v9248 = vpop.f32.mrb[0].mxu0
    %v9249 = vadd.f32 0.0, %v9248
    %v9250 = vpop.f32.mrb[0].mxu0
    %9251 = vmatprep.mubr.f32.mxu0 0.0
    %9252 = vmatmul.mubr.f32.gmra.mrb[0].mxu0 %v9010
    %v9253 = vpop.f32.mrb[0].mxu0
    %v9254 = vadd.f32 0.0, %v9253
    %v9255 = vpop.f32.mrb[0].mxu0
    %9256 = vmatprep.mubr.f32.mxu0 0.0
    %9257 = vmatmul.mubr.f32.gmra.mrb[0].mxu0 %v9011
    %v9258 = vpop.f32.mrb[0].mxu0
    %v9259 = vadd.f32 0.0, %v9258
    %v9260 = vpop.f32.mrb[0].mxu0
    %9261 = vmatprep.mubr.f32.mxu0 0.0
    %9262 = vmatmul.mubr.f32.gmra.mrb[0].mxu0 %v9012
    %v9263 = vpop.f32.mrb[0].mxu0
    %v9264 = vadd.f32 0.0, %v9263
    %v9265 = vpop.f32.mrb[0].mxu0
    %9266 = vmatprep.mubr.f32.mxu0 0.0
    %9267 = vmatmul.mubr.f32.gmra.mrb[0].mxu0 %v9013
    %v9268 = vpop.f32.mrb[0].mxu0
    %v9269 = vadd.f32 0.0, %v9268
    %v9270 = vpop.f32.mrb[0].mxu0
    %9271 = vmatprep.mubr.f32.mxu0 0.0
    %9272 = vmatmul.mubr.f32.gmra.mrb[0].mxu0 %v9014
    %v9273 = vpop.f32.mrb[0].mxu0
    %v9274 = vadd.f32 0.0, %v9273
    %v9275 = vpop.f32.mrb[0].mxu0
    %9276 = vmatprep.mubr.f32.mxu0 0.0
    %9277 = vmatmul.mubr.f32.gmra.mrb[0].mxu0 %v9015
    %v9278 = vpop.f32.mrb[0].mxu0
    %v9279 = vadd.f32 0.0, %v9278
    %v9280 = vpop.f32.mrb[0].mxu0
    %9281 = vmatprep.mubr.f32.mxu0 0.0
    %9282 = vmatmul.mubr.f32.gmra.mrb[0].mxu0 %v9016
    %v9283 = vpop.f32.mrb[0].mxu0
    %v9284 = vadd.f32 0.0, %v9283
    %v9285 = vpop.f32.mrb[0].mxu0
    %9286 = vmatprep.mubr.f32.mxu0 0.0
    %9287 = vmatmul.mubr.f32.gmra.mrb[0].mxu0 %v9017
    %v9288 = vpop.f32.mrb[0].mxu0
    %v9289 = vadd.f32 0.0, %v9288
    %v9290 = vpop.f32.mrb[0].mxu0
    %9291 = vmatprep.mubr.f32.mxu0 0.0
    %9292 = vmatmul.mubr.f32.gmra.mrb[0].mxu0 %v9018
    %v9293 = vpop.f32.mrb[0].mxu0
    %v9294 = vadd.f32 0.0, %v9293
    %v9295 = vpop.f32.mrb[0].mxu0
    %9296 = vmatprep.mubr.f32.mxu0 0.0
    %9297 = vmatmul.mubr.f32.gmra.mrb[0].mxu0 %v9019
    %v9298 = vpop.f32.mrb[0].mxu0
    %v9299 = vadd.f32 0.0, %v9298
    %v9300 = vpop.f32.mrb[0].mxu0
    %9301 = vmatprep.mubr.f32.mxu0 0.0
    %9302 = vmatmul.mubr.f32.gmra.mrb[0].mxu0 %v9020
    %v9303 = vpop.f32.mrb[0].mxu0
    %v9304 = vadd.f32 0.0, %v9303
    %v9305 = vpop.f32.mrb[0].mxu0
    %9306 = vmatprep.mubr.f32.mxu0 0.0
    %9307 = vmatmul.mubr.f32.gmra.mrb[0].mxu0 %v9021
    %v9308 = vpop.f32.mrb[0].mxu0
    %v9309 = vadd.f32 0.0, %v9308
    %v9310 = vpop.f32.mrb[0].mxu0
    %9311 = vmatprep.mubr.f32.mxu0 0.0
    %9312 = vmatmul.mubr.f32.gmra.mrb[0].mxu0 %v9022
    %v9313 = vpop.f32.mrb[0].mxu0
    %v9314 = vadd.f32 0.0, %v9313
    %v9315 = vpop.f32.mrb[0].mxu0
    %9316 = vmatprep.mubr.f32.mxu0 0.0
    %9317 = vmatmul.mubr.f32.gmra.mrb[0].mxu0 %v9023
    %v9318 = vpop.f32.mrb[0].mxu0
    %v9319 = vadd.f32 0.0, %v9318
    %v9320 = vpop.f32.mrb[0].mxu0
    %9321 = vmatprep.mubr.f32.mxu0 0.0
    %9322 = vmatmul.mubr.f32.gmra.mrb[0].mxu0 %v9024
    %v9323 = vpop.f32.mrb[0].mxu0
    %v9324 = vadd.f32 0.0, %v9323
    %v9325 = vpop.f32.mrb[0].mxu0
    %9326 = vmatprep.mubr.f32.mxu0 0.0
    %9327 = vmatmul.mubr.f32.gmra.mrb[0].mxu0 %v9025
    %v9328 = vpop.f32.mrb[0].mxu0
    %v9329 = vadd.f32 0.0, %v9328
    %v9330 = vpop.f32.mrb[0].mxu0
    %9331 = vmatprep.mubr.f32.mxu0 0.0
    %9332 = vmatmul.mubr.f32.gmra.mrb[0].mxu0 %v9026
    %v9333 = vpop.f32.mrb[0].mxu0
    %v9334 = vadd.f32 0.0, %v9333
    %v9335 = vpop.f32.mrb[0].mxu0
    %9336 = vmatprep.mubr.f32.mxu0 0.0
    %9337 = vmatmul.mubr.f32.gmra.mrb[0].mxu0 %v9027
    %v9338 = vpop.f32.mrb[0].mxu0
    %v9339 = vadd.f32 0.0, %v9338
    %v9340 = vpop.f32.mrb[0].mxu0
    %9341 = vmatprep.mubr.f32.mxu0 0.0
    %9342 = vmatmul.mubr.f32.gmra.mrb[0].mxu0 %v9028
    %v9343 = vpop.f32.mrb[0].mxu0
    %v9344 = vadd.f32 0.0, %v9343
    %v9345 = vpop.f32.mrb[0].mxu0
    %9346 = vmatprep.mubr.f32.mxu0 0.0
    %9347 = vmatmul.mubr.f32.gmra.mrb[0].mxu0 %v9029
    %v9348 = vpop.f32.mrb[0].mxu0
    %v9349 = vadd.f32 0.0, %v9348
    %v9350 = vpop.f32.mrb[0].mxu0
    %9351 = vmatprep.mubr.f32.mxu0 0.0
    %9352 = vmatmul.mubr.f32.gmra.mrb[0].mxu0 %v9030
    %v9353 = vpop.f32.mrb[0].mxu0
    %v9354 = vadd.f32 0.0, %v9353
    %v9355 = vpop.f32.mrb[0].mxu0
    %9356 = vmatprep.mubr.f32.mxu0 0.0
    %9357 = vmatmul.mubr.f32.gmra.mrb[0].mxu0 %v9031
    %v9358 = vpop.f32.mrb[0].mxu0
    %v9359 = vadd.f32 0.0, %v9358
    %v9360 = vpop.f32.mrb[0].mxu0
    %9361 = vmatprep.mubr.f32.mxu0 0.0
    %9362 = vmatmul.mubr.f32.gmra.mrb[0].mxu0 %v9032
    %v9363 = vpop.f32.mrb[0].mxu0
    %v9364 = vadd.f32 0.0, %v9363
    %v9365 = vpop.f32.mrb[0].mxu0
    %9366 = vmatprep.mubr.f32.mxu0 0.0
    %9367 = vmatmul.mubr.f32.gmra.mrb[0].mxu0 %v9033
    %v9368 = vpop.f32.mrb[0].mxu0
    %v9369 = vadd.f32 0.0, %v9368
    %v9370 = vpop.f32.mrb[0].mxu0
    %9371 = vmatprep.mubr.f32.mxu0 0.0
    %9372 = vmatmul.mubr.f32.gmra.mrb[0].mxu0 %v9034
    %v9373 = vpop.f32.mrb[0].mxu0
    %v9374 = vadd.f32 0.0, %v9373
    %v9375 = vpop.f32.mrb[0].mxu0
    %9376 = vmatprep.mubr.f32.mxu0 0.0
    %9377 = vmatmul.mubr.f32.gmra.mrb[0].mxu0 %v9035
    %v9378 = vpop.f32.mrb[0].mxu0
    %v9379 = vadd.f32 0.0, %v9378
    %v9380 = vpop.f32.mrb[0].mxu0
    %9381 = vmatprep.mubr.f32.mxu0 0.0
    %9382 = vmatmul.mubr.f32.gmra.mrb[0].mxu0 %v9036
    %v9383 = vpop.f32.mrb[0].mxu0
    %v9384 = vadd.f32 0.0, %v9383
    %v9385 = vpop.f32.mrb[0].mxu0
    %9386 = vmatprep.mubr.f32.mxu0 0.0
    %9387 = vmatmul.mubr.f32.gmra.mrb[0].mxu0 %v9037
    %v9388 = vpop.f32.mrb[0].mxu0
    %v9389 = vadd.f32 0.0, %v9388
    %v9390 = vpop.f32.mrb[0].mxu0
    %9391 = vmatprep.mubr.f32.mxu0 0.0
    %9392 = vmatmul.mubr.f32.gmra.mrb[0].mxu0 %v9038
    %v9393 = vpop.f32.mrb[0].mxu0
    %v9394 = vadd.f32 0.0, %v9393
    %v9395 = vpop.f32.mrb[0].mxu0
    %9396 = vmatprep.mubr.f32.mxu0 0.0
    %9397 = vmatmul.mubr.f32.gmra.mrb[0].mxu0 %v9039
    %v9398 = vpop.f32.mrb[0].mxu0
    %v9399 = vadd.f32 0.0, %v9398
    %v9400 = vpop.f32.mrb[0].mxu0
    %9401 = vmatprep.mubr.f32.mxu0 0.0
    %9402 = vmatmul.mubr.f32.gmra.mrb[0].mxu0 %v9040
    %v9403 = vpop.f32.mrb[0].mxu0
    %v9404 = vadd.f32 0.0, %v9403
    %v9405 = vpop.f32.mrb[0].mxu0
    %9406 = vmatprep.mubr.f32.mxu0 0.0
    %9407 = vmatmul.mubr.f32.gmra.mrb[0].mxu0 %v9041
    %v9408 = vpop.f32.mrb[0].mxu0
    %v9409 = vadd.f32 0.0, %v9408
    %v9410 = vpop.f32.mrb[0].mxu0
    %9411 = vmatprep.mubr.f32.mxu0 0.0
    %9412 = vmatmul.mubr.f32.gmra.mrb[0].mxu0 %v9042
    %v9413 = vpop.f32.mrb[0].mxu0
    %v9414 = vadd.f32 0.0, %v9413
    %v9415 = vpop.f32.mrb[0].mxu0
    %9416 = vmatprep.mubr.f32.mxu0 0.0
    %9417 = vmatmul.mubr.f32.gmra.mrb[0].mxu0 %v9043
    %v9418 = vpop.f32.mrb[0].mxu0
    %v9419 = vadd.f32 0.0, %v9418
    %v9420 = vpop.f32.mrb[0].mxu0
    %9421 = vmatprep.mubr.f32.mxu0 0.0
    %9422 = vmatmul.mubr.f32.gmra.mrb[0].mxu0 %v9044
    %v9423 = vpop.f32.mrb[0].mxu0
    %v9424 = vadd.f32 0.0, %v9423
    %v9425 = vpop.f32.mrb[0].mxu0
    %9426 = vmatprep.mubr.f32.mxu0 0.0
    %9427 = vmatmul.mubr.f32.gmra.mrb[0].mxu0 %v9045
    %v9428 = vpop.f32.mrb[0].mxu0
    %v9429 = vadd.f32 0.0, %v9428
    %v9430 = vpop.f32.mrb[0].mxu0
    %9431 = vmatprep.mubr.f32.mxu0 0.0
    %9432 = vmatmul.mubr.f32.gmra.mrb[0].mxu0 %v9046
    %v9433 = vpop.f32.mrb[0].mxu0
    %v9434 = vadd.f32 0.0, %v9433
    %v9435 = vpop.f32.mrb[0].mxu0
    %9436 = vmatprep.mubr.f32.mxu0 0.0
    %9437 = vmatmul.mubr.f32.gmra.mrb[0].mxu0 %v9047
    %v9438 = vpop.f32.mrb[0].mxu0
    %v9439 = vadd.f32 0.0, %v9438
    %v9440 = vpop.f32.mrb[0].mxu0
    %9441 = vmatprep.mubr.f32.mxu0 0.0
    %9442 = vmatmul.mubr.f32.gmra.mrb[0].mxu0 %v9048
    %v9443 = vpop.f32.mrb[0].mxu0
    %v9444 = vadd.f32 0.0, %v9443
    %v9445 = vpop.f32.mrb[0].mxu0
    %9446 = vmatprep.mubr.f32.mxu0 0.0
    %9447 = vmatmul.mubr.f32.gmra.mrb[0].mxu0 %v9049
    %v9448 = vpop.f32.mrb[0].mxu0
    %v9449 = vadd.f32 0.0, %v9448
    %v9450 = vpop.f32.mrb[0].mxu0
    %9451 = vdwg.mxu0
    %v9452 = vadd.f32 %v8922, %v9134
    %v9453 = vadd.f32 %v8923, %v9139
    %v9454 = vadd.f32 %v8924, %v9144
    %v9455 = vadd.f32 %v8925, %v9149
    %v9456 = vadd.f32 %v8926, %v9154
    %v9457 = vadd.f32 %v8927, %v9159
    %v9458 = vadd.f32 %v8928, %v9164
    %v9459 = vadd.f32 %v8929, %v9169
    %v9460 = vadd.f32 %v8930, %v9174
    %v9461 = vadd.f32 %v8931, %v9179
    %v9462 = vadd.f32 %v8932, %v9184
    %v9463 = vadd.f32 %v8933, %v9189
    %v9464 = vadd.f32 %v8934, %v9194
    %v9465 = vadd.f32 %v8935, %v9199
    %v9466 = vadd.f32 %v8936, %v9204
    %v9467 = vadd.f32 %v8937, %v9209
    %v9468 = vadd.f32 %v8938, %v9214
    %v9469 = vadd.f32 %v8939, %v9219
    %v9470 = vadd.f32 %v8940, %v9224
    %v9471 = vadd.f32 %v8941, %v9229
    %v9472 = vadd.f32 %v8942, %v9234
    %v9473 = vadd.f32 %v8943, %v9239
    %v9474 = vadd.f32 %v8944, %v9244
    %v9475 = vadd.f32 %v8945, %v9249
    %v9476 = vadd.f32 %v8946, %v9254
    %v9477 = vadd.f32 %v8947, %v9259
    %v9478 = vadd.f32 %v8948, %v9264
    %v9479 = vadd.f32 %v8949, %v9269
    %v9480 = vadd.f32 %v8950, %v9274
    %v9481 = vadd.f32 %v8951, %v9279
    %v9482 = vadd.f32 %v8952, %v9284
    %v9483 = vadd.f32 %v8953, %v9289
    %v9484 = vadd.f32 %v8954, %v9294
    %v9485 = vadd.f32 %v8955, %v9299
    %v9486 = vadd.f32 %v8956, %v9304
    %v9487 = vadd.f32 %v8957, %v9309
    %v9488 = vadd.f32 %v8958, %v9314
    %v9489 = vadd.f32 %v8959, %v9319
    %v9490 = vadd.f32 %v8960, %v9324
    %v9491 = vadd.f32 %v8961, %v9329
    %v9492 = vadd.f32 %v8962, %v9334
    %v9493 = vadd.f32 %v8963, %v9339
    %v9494 = vadd.f32 %v8964, %v9344
    %v9495 = vadd.f32 %v8965, %v9349
    %v9496 = vadd.f32 %v8966, %v9354
    %v9497 = vadd.f32 %v8967, %v9359
    %v9498 = vadd.f32 %v8968, %v9364
    %v9499 = vadd.f32 %v8969, %v9369
    %v9500 = vadd.f32 %v8970, %v9374
    %v9501 = vadd.f32 %v8971, %v9379
    %v9502 = vadd.f32 %v8972, %v9384
    %v9503 = vadd.f32 %v8973, %v9389
    %v9504 = vadd.f32 %v8974, %v9394
    %v9505 = vadd.f32 %v8975, %v9399
    %v9506 = vadd.f32 %v8976, %v9404
    %v9507 = vadd.f32 %v8977, %v9409
    %v9508 = vadd.f32 %v8978, %v9414
    %v9509 = vadd.f32 %v8979, %v9419
    %v9510 = vadd.f32 %v8980, %v9424
    %v9511 = vadd.f32 %v8981, %v9429
    %v9512 = vadd.f32 %v8982, %v9434
    %v9513 = vadd.f32 %v8983, %v9439
    %v9514 = vadd.f32 %v8984, %v9444
    %v9515 = vadd.f32 %v8985, %v9449
    %v9516 = vld [vmem:[%s3333 + $0x2] sm:$0xff]
    %v9517 = vld [vmem:[%s3333 + $0xa] sm:$0xff]
    %v9518 = vld [vmem:[%s3333 + $0x1a] sm:$0xff]
    %v9519 = vld [vmem:[%s3333 + $0x22] sm:$0xff]
    %v9520 = vld [vmem:[%s3333 + $0x32] sm:$0xff]
    %v9521 = vld [vmem:[%s3333 + $0x3a] sm:$0xff]
    %v9522 = vld [vmem:[%s3333 + $0x4a] sm:$0xff]
    %v9523 = vld [vmem:[%s3333 + $0x52] sm:$0xff]
    %v9524 = vld [vmem:[%s3333 + $0x62] sm:$0xff]
    %v9525 = vld [vmem:[%s3333 + $0x6a] sm:$0xff]
    %v9526 = vld [vmem:[%s3333 + $0x7a] sm:$0xff]
    %v9527 = vld [vmem:[%s3333 + $0x82] sm:$0xff]
    %v9528 = vld [vmem:[%s3333 + $0x92] sm:$0xff]
    %v9529 = vld [vmem:[%s3333 + $0x9a] sm:$0xff]
    %v9530 = vld [vmem:[%s3333 + $0xaa] sm:$0xff]
    %v9531 = vld [vmem:[%s3333 + $0xb2] sm:$0xff]
    %v9532 = vld [vmem:[%s3333 + $0xc2] sm:$0xff]
    %v9533 = vld [vmem:[%s3333 + $0xca] sm:$0xff]
    %v9534 = vld [vmem:[%s3333 + $0xda] sm:$0xff]
    %v9535 = vld [vmem:[%s3333 + $0xe2] sm:$0xff]
    %v9536 = vld [vmem:[%s3333 + $0xf2] sm:$0xff]
    %v9537 = vld [vmem:[%s3333 + $0xfa] sm:$0xff]
    %v9538 = vld [vmem:[%s3333 + $0x10a] sm:$0xff]
    %v9539 = vld [vmem:[%s3333 + $0x112] sm:$0xff]
    %v9540 = vld [vmem:[%s3333 + $0x122] sm:$0xff]
    %v9541 = vld [vmem:[%s3333 + $0x12a] sm:$0xff]
    %v9542 = vld [vmem:[%s3333 + $0x13a] sm:$0xff]
    %v9543 = vld [vmem:[%s3333 + $0x142] sm:$0xff]
    %v9544 = vld [vmem:[%s3333 + $0x152] sm:$0xff]
    %v9545 = vld [vmem:[%s3333 + $0x15a] sm:$0xff]
    %v9546 = vld [vmem:[%s3333 + $0x16a] sm:$0xff]
    %v9547 = vld [vmem:[%s3333 + $0x172] sm:$0xff]
    %v9548 = vld [vmem:[%s3333 + $0x1b2] sm:$0xff]
    %v9549 = vld [vmem:[%s3333 + $0x1ba] sm:$0xff]
    %v9550 = vld [vmem:[%s3333 + $0x1ca] sm:$0xff]
    %v9551 = vld [vmem:[%s3333 + $0x1d2] sm:$0xff]
    %v9552 = vld [vmem:[%s3333 + $0x1e2] sm:$0xff]
    %v9553 = vld [vmem:[%s3333 + $0x1ea] sm:$0xff]
    %v9554 = vld [vmem:[%s3333 + $0x1fa] sm:$0xff]
    %v9555 = vld [vmem:[%s3333 + $0x202] sm:$0xff]
    %v9556 = vld [vmem:[%s3333 + $0x212] sm:$0xff]
    %v9557 = vld [vmem:[%s3333 + $0x21a] sm:$0xff]
    %v9558 = vld [vmem:[%s3333 + $0x22a] sm:$0xff]
    %v9559 = vld [vmem:[%s3333 + $0x232] sm:$0xff]
    %v9560 = vld [vmem:[%s3333 + $0x242] sm:$0xff]
    %v9561 = vld [vmem:[%s3333 + $0x24a] sm:$0xff]
    %v9562 = vld [vmem:[%s3333 + $0x25a] sm:$0xff]
    %v9563 = vld [vmem:[%s3333 + $0x262] sm:$0xff]
    %v9564 = vld [vmem:[%s3333 + $0x272] sm:$0xff]
    %v9565 = vld [vmem:[%s3333 + $0x27a] sm:$0xff]
    %v9566 = vld [vmem:[%s3333 + $0x28a] sm:$0xff]
    %v9567 = vld [vmem:[%s3333 + $0x292] sm:$0xff]
    %v9568 = vld [vmem:[%s3333 + $0x2a2] sm:$0xff]
    %v9569 = vld [vmem:[%s3333 + $0x2aa] sm:$0xff]
    %v9570 = vld [vmem:[%s3333 + $0x2ba] sm:$0xff]
    %v9571 = vld [vmem:[%s3333 + $0x2c2] sm:$0xff]
    %v9572 = vld [vmem:[%s3333 + $0x2d2] sm:$0xff]
    %v9573 = vld [vmem:[%s3333 + $0x2da] sm:$0xff]
    %v9574 = vld [vmem:[%s3333 + $0x2ea] sm:$0xff]
    %v9575 = vld [vmem:[%s3333 + $0x2f2] sm:$0xff]
    %v9576 = vld [vmem:[%s3333 + $0x302] sm:$0xff]
    %v9577 = vld [vmem:[%s3333 + $0x30a] sm:$0xff]
    %v9578 = vld [vmem:[%s3333 + $0x31a] sm:$0xff]
    %v9579 = vld [vmem:[%s3333 + $0x322] sm:$0xff]
    %s9580 = scalar_lea.vmem [#allocation8], 1024
    %v9581 = vld [vmem:[%s9580] sm:$0xff]
    %v9582 = vld [vmem:[%s9580 + $0x8] sm:$0xff]
    %v9583 = vld [vmem:[%s9580 + $0x10] sm:$0xff]
    %v9584 = vld [vmem:[%s9580 + $0x18] sm:$0xff]
    %v9585 = vld [vmem:[%s9580 + $0x20] sm:$0xff]
    %v9586 = vld [vmem:[%s9580 + $0x28] sm:$0xff]
    %v9587 = vld [vmem:[%s9580 + $0x30] sm:$0xff]
    %v9588 = vld [vmem:[%s9580 + $0x38] sm:$0xff]
    %v9589 = vld [vmem:[%s9580 + $0x40] sm:$0xff]
    %v9590 = vld [vmem:[%s9580 + $0x48] sm:$0xff]
    %v9591 = vld [vmem:[%s9580 + $0x50] sm:$0xff]
    %v9592 = vld [vmem:[%s9580 + $0x58] sm:$0xff]
    %v9593 = vld [vmem:[%s9580 + $0x60] sm:$0xff]
    %v9594 = vld [vmem:[%s9580 + $0x68] sm:$0xff]
    %v9595 = vld [vmem:[%s9580 + $0x70] sm:$0xff]
    %v9596 = vld [vmem:[%s9580 + $0x78] sm:$0xff]
    %9597 = vmatprep.subr.mxu0 0.0
    %9598 = vmatpush1.msra.mxu0 %v9581
    %9599 = vmatprep.subr.mxu0 0.0
    %9600 = vmatpush1.msra.mxu0 %v9582
    %9601 = vmatprep.subr.mxu0 0.0
    %9602 = vmatpush1.msra.mxu0 %v9583
    %9603 = vmatprep.subr.mxu0 0.0
    %9604 = vmatpush1.msra.mxu0 %v9584
    %9605 = vmatprep.subr.mxu0 0.0
    %9606 = vmatpush1.msra.mxu0 %v9585
    %9607 = vmatprep.subr.mxu0 0.0
    %9608 = vmatpush1.msra.mxu0 %v9586
    %9609 = vmatprep.subr.mxu0 0.0
    %9610 = vmatpush1.msra.mxu0 %v9587
    %9611 = vmatprep.subr.mxu0 0.0
    %9612 = vmatpush1.msra.mxu0 %v9588
    %9613 = vmatprep.subr.mxu0 0.0
    %9614 = vmatpush1.msra.mxu0 %v9589
    %9615 = vmatprep.subr.mxu0 0.0
    %9616 = vmatpush1.msra.mxu0 %v9590
    %9617 = vmatprep.subr.mxu0 0.0
    %9618 = vmatpush1.msra.mxu0 %v9591
    %9619 = vmatprep.subr.mxu0 0.0
    %9620 = vmatpush1.msra.mxu0 %v9592
    %9621 = vmatprep.subr.mxu0 0.0
    %9622 = vmatpush1.msra.mxu0 %v9593
    %9623 = vmatprep.subr.mxu0 0.0
    %9624 = vmatpush1.msra.mxu0 %v9594
    %9625 = vmatprep.subr.mxu0 0.0
    %9626 = vmatpush1.msra.mxu0 %v9595
    %9627 = vmatprep.subr.mxu0 0.0
    %9628 = vmatpush1.msra.mxu0 %v9596
    %9629 = vmatprep.subr.mxu0 0.0
    %9630 = vmatpush1.msra.mxu0 0.0
    %9631 = vmatprep.subr.mxu0 0.0
    %9632 = vmatpush1.msra.mxu0 0.0
    %9633 = vmatprep.subr.mxu0 0.0
    %9634 = vmatpush1.msra.mxu0 0.0
    %9635 = vmatprep.subr.mxu0 0.0
    %9636 = vmatpush1.msra.mxu0 0.0
    %9637 = vmatprep.subr.mxu0 0.0
    %9638 = vmatpush1.msra.mxu0 0.0
    %9639 = vmatprep.subr.mxu0 0.0
    %9640 = vmatpush1.msra.mxu0 0.0
    %9641 = vmatprep.subr.mxu0 0.0
    %9642 = vmatpush1.msra.mxu0 0.0
    %9643 = vmatprep.subr.mxu0 0.0
    %9644 = vmatpush1.msra.mxu0 0.0
    %9645 = vmatprep.subr.mxu0 0.0
    %9646 = vmatpush1.msra.mxu0 0.0
    %9647 = vmatprep.subr.mxu0 0.0
    %9648 = vmatpush1.msra.mxu0 0.0
    %9649 = vmatprep.subr.mxu0 0.0
    %9650 = vmatpush1.msra.mxu0 0.0
    %9651 = vmatprep.subr.mxu0 0.0
    %9652 = vmatpush1.msra.mxu0 0.0
    %9653 = vmatprep.subr.mxu0 0.0
    %9654 = vmatpush1.msra.mxu0 0.0
    %9655 = vmatprep.subr.mxu0 0.0
    %9656 = vmatpush1.msra.mxu0 0.0
    %9657 = vmatprep.subr.mxu0 0.0
    %9658 = vmatpush1.msra.mxu0 0.0
    %9659 = vmatprep.subr.mxu0 0.0
    %9660 = vmatpush1.msra.mxu0 0.0
    %9661 = vmatprep.mubr.f32.mxu0 0.0
    %9662 = vmatmul.mubr.f32.gmra.mrb[0].mxu0 %v9516
    %v9663 = vpop.f32.mrb[0].mxu0
    %v9664 = vadd.f32 0.0, %v9663
    %v9665 = vpop.f32.mrb[0].mxu0
    %9666 = vmatprep.mubr.f32.mxu0 0.0
    %9667 = vmatmul.mubr.f32.gmra.mrb[0].mxu0 %v9517
    %v9668 = vpop.f32.mrb[0].mxu0
    %v9669 = vadd.f32 0.0, %v9668
    %v9670 = vpop.f32.mrb[0].mxu0
    %9671 = vmatprep.mubr.f32.mxu0 0.0
    %9672 = vmatmul.mubr.f32.gmra.mrb[0].mxu0 %v9518
    %v9673 = vpop.f32.mrb[0].mxu0
    %v9674 = vadd.f32 0.0, %v9673
    %v9675 = vpop.f32.mrb[0].mxu0
    %9676 = vmatprep.mubr.f32.mxu0 0.0
    %9677 = vmatmul.mubr.f32.gmra.mrb[0].mxu0 %v9519
    %v9678 = vpop.f32.mrb[0].mxu0
    %v9679 = vadd.f32 0.0, %v9678
    %v9680 = vpop.f32.mrb[0].mxu0
    %9681 = vmatprep.mubr.f32.mxu0 0.0
    %9682 = vmatmul.mubr.f32.gmra.mrb[0].mxu0 %v9520
    %v9683 = vpop.f32.mrb[0].mxu0
    %v9684 = vadd.f32 0.0, %v9683
    %v9685 = vpop.f32.mrb[0].mxu0
    %9686 = vmatprep.mubr.f32.mxu0 0.0
    %9687 = vmatmul.mubr.f32.gmra.mrb[0].mxu0 %v9521
    %v9688 = vpop.f32.mrb[0].mxu0
    %v9689 = vadd.f32 0.0, %v9688
    %v9690 = vpop.f32.mrb[0].mxu0
    %9691 = vmatprep.mubr.f32.mxu0 0.0
    %9692 = vmatmul.mubr.f32.gmra.mrb[0].mxu0 %v9522
    %v9693 = vpop.f32.mrb[0].mxu0
    %v9694 = vadd.f32 0.0, %v9693
    %v9695 = vpop.f32.mrb[0].mxu0
    %9696 = vmatprep.mubr.f32.mxu0 0.0
    %9697 = vmatmul.mubr.f32.gmra.mrb[0].mxu0 %v9523
    %v9698 = vpop.f32.mrb[0].mxu0
    %v9699 = vadd.f32 0.0, %v9698
    %v9700 = vpop.f32.mrb[0].mxu0
    %9701 = vmatprep.mubr.f32.mxu0 0.0
    %9702 = vmatmul.mubr.f32.gmra.mrb[0].mxu0 %v9524
    %v9703 = vpop.f32.mrb[0].mxu0
    %v9704 = vadd.f32 0.0, %v9703
    %v9705 = vpop.f32.mrb[0].mxu0
    %9706 = vmatprep.mubr.f32.mxu0 0.0
    %9707 = vmatmul.mubr.f32.gmra.mrb[0].mxu0 %v9525
    %v9708 = vpop.f32.mrb[0].mxu0
    %v9709 = vadd.f32 0.0, %v9708
    %v9710 = vpop.f32.mrb[0].mxu0
    %9711 = vmatprep.mubr.f32.mxu0 0.0
    %9712 = vmatmul.mubr.f32.gmra.mrb[0].mxu0 %v9526
    %v9713 = vpop.f32.mrb[0].mxu0
    %v9714 = vadd.f32 0.0, %v9713
    %v9715 = vpop.f32.mrb[0].mxu0
    %9716 = vmatprep.mubr.f32.mxu0 0.0
    %9717 = vmatmul.mubr.f32.gmra.mrb[0].mxu0 %v9527
    %v9718 = vpop.f32.mrb[0].mxu0
    %v9719 = vadd.f32 0.0, %v9718
    %v9720 = vpop.f32.mrb[0].mxu0
    %9721 = vmatprep.mubr.f32.mxu0 0.0
    %9722 = vmatmul.mubr.f32.gmra.mrb[0].mxu0 %v9528
    %v9723 = vpop.f32.mrb[0].mxu0
    %v9724 = vadd.f32 0.0, %v9723
    %v9725 = vpop.f32.mrb[0].mxu0
    %9726 = vmatprep.mubr.f32.mxu0 0.0
    %9727 = vmatmul.mubr.f32.gmra.mrb[0].mxu0 %v9529
    %v9728 = vpop.f32.mrb[0].mxu0
    %v9729 = vadd.f32 0.0, %v9728
    %v9730 = vpop.f32.mrb[0].mxu0
    %9731 = vmatprep.mubr.f32.mxu0 0.0
    %9732 = vmatmul.mubr.f32.gmra.mrb[0].mxu0 %v9530
    %v9733 = vpop.f32.mrb[0].mxu0
    %v9734 = vadd.f32 0.0, %v9733
    %v9735 = vpop.f32.mrb[0].mxu0
    %9736 = vmatprep.mubr.f32.mxu0 0.0
    %9737 = vmatmul.mubr.f32.gmra.mrb[0].mxu0 %v9531
    %v9738 = vpop.f32.mrb[0].mxu0
    %v9739 = vadd.f32 0.0, %v9738
    %v9740 = vpop.f32.mrb[0].mxu0
    %9741 = vmatprep.mubr.f32.mxu0 0.0
    %9742 = vmatmul.mubr.f32.gmra.mrb[0].mxu0 %v9532
    %v9743 = vpop.f32.mrb[0].mxu0
    %v9744 = vadd.f32 0.0, %v9743
    %v9745 = vpop.f32.mrb[0].mxu0
    %9746 = vmatprep.mubr.f32.mxu0 0.0
    %9747 = vmatmul.mubr.f32.gmra.mrb[0].mxu0 %v9533
    %v9748 = vpop.f32.mrb[0].mxu0
    %v9749 = vadd.f32 0.0, %v9748
    %v9750 = vpop.f32.mrb[0].mxu0
    %9751 = vmatprep.mubr.f32.mxu0 0.0
    %9752 = vmatmul.mubr.f32.gmra.mrb[0].mxu0 %v9534
    %v9753 = vpop.f32.mrb[0].mxu0
    %v9754 = vadd.f32 0.0, %v9753
    %v9755 = vpop.f32.mrb[0].mxu0
    %9756 = vmatprep.mubr.f32.mxu0 0.0
    %9757 = vmatmul.mubr.f32.gmra.mrb[0].mxu0 %v9535
    %v9758 = vpop.f32.mrb[0].mxu0
    %v9759 = vadd.f32 0.0, %v9758
    %v9760 = vpop.f32.mrb[0].mxu0
    %9761 = vmatprep.mubr.f32.mxu0 0.0
    %9762 = vmatmul.mubr.f32.gmra.mrb[0].mxu0 %v9536
    %v9763 = vpop.f32.mrb[0].mxu0
    %v9764 = vadd.f32 0.0, %v9763
    %v9765 = vpop.f32.mrb[0].mxu0
    %9766 = vmatprep.mubr.f32.mxu0 0.0
    %9767 = vmatmul.mubr.f32.gmra.mrb[0].mxu0 %v9537
    %v9768 = vpop.f32.mrb[0].mxu0
    %v9769 = vadd.f32 0.0, %v9768
    %v9770 = vpop.f32.mrb[0].mxu0
    %9771 = vmatprep.mubr.f32.mxu0 0.0
    %9772 = vmatmul.mubr.f32.gmra.mrb[0].mxu0 %v9538
    %v9773 = vpop.f32.mrb[0].mxu0
    %v9774 = vadd.f32 0.0, %v9773
    %v9775 = vpop.f32.mrb[0].mxu0
    %9776 = vmatprep.mubr.f32.mxu0 0.0
    %9777 = vmatmul.mubr.f32.gmra.mrb[0].mxu0 %v9539
    %v9778 = vpop.f32.mrb[0].mxu0
    %v9779 = vadd.f32 0.0, %v9778
    %v9780 = vpop.f32.mrb[0].mxu0
    %9781 = vmatprep.mubr.f32.mxu0 0.0
    %9782 = vmatmul.mubr.f32.gmra.mrb[0].mxu0 %v9540
    %v9783 = vpop.f32.mrb[0].mxu0
    %v9784 = vadd.f32 0.0, %v9783
    %v9785 = vpop.f32.mrb[0].mxu0
    %9786 = vmatprep.mubr.f32.mxu0 0.0
    %9787 = vmatmul.mubr.f32.gmra.mrb[0].mxu0 %v9541
    %v9788 = vpop.f32.mrb[0].mxu0
    %v9789 = vadd.f32 0.0, %v9788
    %v9790 = vpop.f32.mrb[0].mxu0
    %9791 = vmatprep.mubr.f32.mxu0 0.0
    %9792 = vmatmul.mubr.f32.gmra.mrb[0].mxu0 %v9542
    %v9793 = vpop.f32.mrb[0].mxu0
    %v9794 = vadd.f32 0.0, %v9793
    %v9795 = vpop.f32.mrb[0].mxu0
    %9796 = vmatprep.mubr.f32.mxu0 0.0
    %9797 = vmatmul.mubr.f32.gmra.mrb[0].mxu0 %v9543
    %v9798 = vpop.f32.mrb[0].mxu0
    %v9799 = vadd.f32 0.0, %v9798
    %v9800 = vpop.f32.mrb[0].mxu0
    %9801 = vmatprep.mubr.f32.mxu0 0.0
    %9802 = vmatmul.mubr.f32.gmra.mrb[0].mxu0 %v9544
    %v9803 = vpop.f32.mrb[0].mxu0
    %v9804 = vadd.f32 0.0, %v9803
    %v9805 = vpop.f32.mrb[0].mxu0
    %9806 = vmatprep.mubr.f32.mxu0 0.0
    %9807 = vmatmul.mubr.f32.gmra.mrb[0].mxu0 %v9545
    %v9808 = vpop.f32.mrb[0].mxu0
    %v9809 = vadd.f32 0.0, %v9808
    %v9810 = vpop.f32.mrb[0].mxu0
    %9811 = vmatprep.mubr.f32.mxu0 0.0
    %9812 = vmatmul.mubr.f32.gmra.mrb[0].mxu0 %v9546
    %v9813 = vpop.f32.mrb[0].mxu0
    %v9814 = vadd.f32 0.0, %v9813
    %v9815 = vpop.f32.mrb[0].mxu0
    %9816 = vmatprep.mubr.f32.mxu0 0.0
    %9817 = vmatmul.mubr.f32.gmra.mrb[0].mxu0 %v9547
    %v9818 = vpop.f32.mrb[0].mxu0
    %v9819 = vadd.f32 0.0, %v9818
    %v9820 = vpop.f32.mrb[0].mxu0
    %9821 = vmatprep.mubr.f32.mxu0 0.0
    %9822 = vmatmul.mubr.f32.gmra.mrb[0].mxu0 %v9548
    %v9823 = vpop.f32.mrb[0].mxu0
    %v9824 = vadd.f32 0.0, %v9823
    %v9825 = vpop.f32.mrb[0].mxu0
    %9826 = vmatprep.mubr.f32.mxu0 0.0
    %9827 = vmatmul.mubr.f32.gmra.mrb[0].mxu0 %v9549
    %v9828 = vpop.f32.mrb[0].mxu0
    %v9829 = vadd.f32 0.0, %v9828
    %v9830 = vpop.f32.mrb[0].mxu0
    %9831 = vmatprep.mubr.f32.mxu0 0.0
    %9832 = vmatmul.mubr.f32.gmra.mrb[0].mxu0 %v9550
    %v9833 = vpop.f32.mrb[0].mxu0
    %v9834 = vadd.f32 0.0, %v9833
    %v9835 = vpop.f32.mrb[0].mxu0
    %9836 = vmatprep.mubr.f32.mxu0 0.0
    %9837 = vmatmul.mubr.f32.gmra.mrb[0].mxu0 %v9551
    %v9838 = vpop.f32.mrb[0].mxu0
    %v9839 = vadd.f32 0.0, %v9838
    %v9840 = vpop.f32.mrb[0].mxu0
    %9841 = vmatprep.mubr.f32.mxu0 0.0
    %9842 = vmatmul.mubr.f32.gmra.mrb[0].mxu0 %v9552
    %v9843 = vpop.f32.mrb[0].mxu0
    %v9844 = vadd.f32 0.0, %v9843
    %v9845 = vpop.f32.mrb[0].mxu0
    %9846 = vmatprep.mubr.f32.mxu0 0.0
    %9847 = vmatmul.mubr.f32.gmra.mrb[0].mxu0 %v9553
    %v9848 = vpop.f32.mrb[0].mxu0
    %v9849 = vadd.f32 0.0, %v9848
    %v9850 = vpop.f32.mrb[0].mxu0
    %9851 = vmatprep.mubr.f32.mxu0 0.0
    %9852 = vmatmul.mubr.f32.gmra.mrb[0].mxu0 %v9554
    %v9853 = vpop.f32.mrb[0].mxu0
    %v9854 = vadd.f32 0.0, %v9853
    %v9855 = vpop.f32.mrb[0].mxu0
    %9856 = vmatprep.mubr.f32.mxu0 0.0
    %9857 = vmatmul.mubr.f32.gmra.mrb[0].mxu0 %v9555
    %v9858 = vpop.f32.mrb[0].mxu0
    %v9859 = vadd.f32 0.0, %v9858
    %v9860 = vpop.f32.mrb[0].mxu0
    %9861 = vmatprep.mubr.f32.mxu0 0.0
    %9862 = vmatmul.mubr.f32.gmra.mrb[0].mxu0 %v9556
    %v9863 = vpop.f32.mrb[0].mxu0
    %v9864 = vadd.f32 0.0, %v9863
    %v9865 = vpop.f32.mrb[0].mxu0
    %9866 = vmatprep.mubr.f32.mxu0 0.0
    %9867 = vmatmul.mubr.f32.gmra.mrb[0].mxu0 %v9557
    %v9868 = vpop.f32.mrb[0].mxu0
    %v9869 = vadd.f32 0.0, %v9868
    %v9870 = vpop.f32.mrb[0].mxu0
    %9871 = vmatprep.mubr.f32.mxu0 0.0
    %9872 = vmatmul.mubr.f32.gmra.mrb[0].mxu0 %v9558
    %v9873 = vpop.f32.mrb[0].mxu0
    %v9874 = vadd.f32 0.0, %v9873
    %v9875 = vpop.f32.mrb[0].mxu0
    %9876 = vmatprep.mubr.f32.mxu0 0.0
    %9877 = vmatmul.mubr.f32.gmra.mrb[0].mxu0 %v9559
    %v9878 = vpop.f32.mrb[0].mxu0
    %v9879 = vadd.f32 0.0, %v9878
    %v9880 = vpop.f32.mrb[0].mxu0
    %9881 = vmatprep.mubr.f32.mxu0 0.0
    %9882 = vmatmul.mubr.f32.gmra.mrb[0].mxu0 %v9560
    %v9883 = vpop.f32.mrb[0].mxu0
    %v9884 = vadd.f32 0.0, %v9883
    %v9885 = vpop.f32.mrb[0].mxu0
    %9886 = vmatprep.mubr.f32.mxu0 0.0
    %9887 = vmatmul.mubr.f32.gmra.mrb[0].mxu0 %v9561
    %v9888 = vpop.f32.mrb[0].mxu0
    %v9889 = vadd.f32 0.0, %v9888
    %v9890 = vpop.f32.mrb[0].mxu0
    %9891 = vmatprep.mubr.f32.mxu0 0.0
    %9892 = vmatmul.mubr.f32.gmra.mrb[0].mxu0 %v9562
    %v9893 = vpop.f32.mrb[0].mxu0
    %v9894 = vadd.f32 0.0, %v9893
    %v9895 = vpop.f32.mrb[0].mxu0
    %9896 = vmatprep.mubr.f32.mxu0 0.0
    %9897 = vmatmul.mubr.f32.gmra.mrb[0].mxu0 %v9563
    %v9898 = vpop.f32.mrb[0].mxu0
    %v9899 = vadd.f32 0.0, %v9898
    %v9900 = vpop.f32.mrb[0].mxu0
    %9901 = vmatprep.mubr.f32.mxu0 0.0
    %9902 = vmatmul.mubr.f32.gmra.mrb[0].mxu0 %v9564
    %v9903 = vpop.f32.mrb[0].mxu0
    %v9904 = vadd.f32 0.0, %v9903
    %v9905 = vpop.f32.mrb[0].mxu0
    %9906 = vmatprep.mubr.f32.mxu0 0.0
    %9907 = vmatmul.mubr.f32.gmra.mrb[0].mxu0 %v9565
    %v9908 = vpop.f32.mrb[0].mxu0
    %v9909 = vadd.f32 0.0, %v9908
    %v9910 = vpop.f32.mrb[0].mxu0
    %9911 = vmatprep.mubr.f32.mxu0 0.0
    %9912 = vmatmul.mubr.f32.gmra.mrb[0].mxu0 %v9566
    %v9913 = vpop.f32.mrb[0].mxu0
    %v9914 = vadd.f32 0.0, %v9913
    %v9915 = vpop.f32.mrb[0].mxu0
    %9916 = vmatprep.mubr.f32.mxu0 0.0
    %9917 = vmatmul.mubr.f32.gmra.mrb[0].mxu0 %v9567
    %v9918 = vpop.f32.mrb[0].mxu0
    %v9919 = vadd.f32 0.0, %v9918
    %v9920 = vpop.f32.mrb[0].mxu0
    %9921 = vmatprep.mubr.f32.mxu0 0.0
    %9922 = vmatmul.mubr.f32.gmra.mrb[0].mxu0 %v9568
    %v9923 = vpop.f32.mrb[0].mxu0
    %v9924 = vadd.f32 0.0, %v9923
    %v9925 = vpop.f32.mrb[0].mxu0
    %9926 = vmatprep.mubr.f32.mxu0 0.0
    %9927 = vmatmul.mubr.f32.gmra.mrb[0].mxu0 %v9569
    %v9928 = vpop.f32.mrb[0].mxu0
    %v9929 = vadd.f32 0.0, %v9928
    %v9930 = vpop.f32.mrb[0].mxu0
    %9931 = vmatprep.mubr.f32.mxu0 0.0
    %9932 = vmatmul.mubr.f32.gmra.mrb[0].mxu0 %v9570
    %v9933 = vpop.f32.mrb[0].mxu0
    %v9934 = vadd.f32 0.0, %v9933
    %v9935 = vpop.f32.mrb[0].mxu0
    %9936 = vmatprep.mubr.f32.mxu0 0.0
    %9937 = vmatmul.mubr.f32.gmra.mrb[0].mxu0 %v9571
    %v9938 = vpop.f32.mrb[0].mxu0
    %v9939 = vadd.f32 0.0, %v9938
    %v9940 = vpop.f32.mrb[0].mxu0
    %9941 = vmatprep.mubr.f32.mxu0 0.0
    %9942 = vmatmul.mubr.f32.gmra.mrb[0].mxu0 %v9572
    %v9943 = vpop.f32.mrb[0].mxu0
    %v9944 = vadd.f32 0.0, %v9943
    %v9945 = vpop.f32.mrb[0].mxu0
    %9946 = vmatprep.mubr.f32.mxu0 0.0
    %9947 = vmatmul.mubr.f32.gmra.mrb[0].mxu0 %v9573
    %v9948 = vpop.f32.mrb[0].mxu0
    %v9949 = vadd.f32 0.0, %v9948
    %v9950 = vpop.f32.mrb[0].mxu0
    %9951 = vmatprep.mubr.f32.mxu0 0.0
    %9952 = vmatmul.mubr.f32.gmra.mrb[0].mxu0 %v9574
    %v9953 = vpop.f32.mrb[0].mxu0
    %v9954 = vadd.f32 0.0, %v9953
    %v9955 = vpop.f32.mrb[0].mxu0
    %9956 = vmatprep.mubr.f32.mxu0 0.0
    %9957 = vmatmul.mubr.f32.gmra.mrb[0].mxu0 %v9575
    %v9958 = vpop.f32.mrb[0].mxu0
    %v9959 = vadd.f32 0.0, %v9958
    %v9960 = vpop.f32.mrb[0].mxu0
    %9961 = vmatprep.mubr.f32.mxu0 0.0
    %9962 = vmatmul.mubr.f32.gmra.mrb[0].mxu0 %v9576
    %v9963 = vpop.f32.mrb[0].mxu0
    %v9964 = vadd.f32 0.0, %v9963
    %v9965 = vpop.f32.mrb[0].mxu0
    %9966 = vmatprep.mubr.f32.mxu0 0.0
    %9967 = vmatmul.mubr.f32.gmra.mrb[0].mxu0 %v9577
    %v9968 = vpop.f32.mrb[0].mxu0
    %v9969 = vadd.f32 0.0, %v9968
    %v9970 = vpop.f32.mrb[0].mxu0
    %9971 = vmatprep.mubr.f32.mxu0 0.0
    %9972 = vmatmul.mubr.f32.gmra.mrb[0].mxu0 %v9578
    %v9973 = vpop.f32.mrb[0].mxu0
    %v9974 = vadd.f32 0.0, %v9973
    %v9975 = vpop.f32.mrb[0].mxu0
    %9976 = vmatprep.mubr.f32.mxu0 0.0
    %9977 = vmatmul.mubr.f32.gmra.mrb[0].mxu0 %v9579
    %v9978 = vpop.f32.mrb[0].mxu0
    %v9979 = vadd.f32 0.0, %v9978
    %v9980 = vpop.f32.mrb[0].mxu0
    %9981 = vdwg.mxu0
    %v9982 = vadd.f32 %v9452, %v9664
    %v9983 = vadd.f32 %v9453, %v9669
    %v9984 = vadd.f32 %v9454, %v9674
    %v9985 = vadd.f32 %v9455, %v9679
    %v9986 = vadd.f32 %v9456, %v9684
    %v9987 = vadd.f32 %v9457, %v9689
    %v9988 = vadd.f32 %v9458, %v9694
    %v9989 = vadd.f32 %v9459, %v9699
    %v9990 = vadd.f32 %v9460, %v9704
    %v9991 = vadd.f32 %v9461, %v9709
    %v9992 = vadd.f32 %v9462, %v9714
    %v9993 = vadd.f32 %v9463, %v9719
    %v9994 = vadd.f32 %v9464, %v9724
    %v9995 = vadd.f32 %v9465, %v9729
    %v9996 = vadd.f32 %v9466, %v9734
    %v9997 = vadd.f32 %v9467, %v9739
    %v9998 = vadd.f32 %v9468, %v9744
    %v9999 = vadd.f32 %v9469, %v9749
    %v10000 = vadd.f32 %v9470, %v9754
    %v10001 = vadd.f32 %v9471, %v9759
    %v10002 = vadd.f32 %v9472, %v9764
    %v10003 = vadd.f32 %v9473, %v9769
    %v10004 = vadd.f32 %v9474, %v9774
    %v10005 = vadd.f32 %v9475, %v9779
    %v10006 = vadd.f32 %v9476, %v9784
    %v10007 = vadd.f32 %v9477, %v9789
    %v10008 = vadd.f32 %v9478, %v9794
    %v10009 = vadd.f32 %v9479, %v9799
    %v10010 = vadd.f32 %v9480, %v9804
    %v10011 = vadd.f32 %v9481, %v9809
    %v10012 = vadd.f32 %v9482, %v9814
    %v10013 = vadd.f32 %v9483, %v9819
    %v10014 = vadd.f32 %v9484, %v9824
    %v10015 = vadd.f32 %v9485, %v9829
    %v10016 = vadd.f32 %v9486, %v9834
    %v10017 = vadd.f32 %v9487, %v9839
    %v10018 = vadd.f32 %v9488, %v9844
    %v10019 = vadd.f32 %v9489, %v9849
    %v10020 = vadd.f32 %v9490, %v9854
    %v10021 = vadd.f32 %v9491, %v9859
    %v10022 = vadd.f32 %v9492, %v9864
    %v10023 = vadd.f32 %v9493, %v9869
    %v10024 = vadd.f32 %v9494, %v9874
    %v10025 = vadd.f32 %v9495, %v9879
    %v10026 = vadd.f32 %v9496, %v9884
    %v10027 = vadd.f32 %v9497, %v9889
    %v10028 = vadd.f32 %v9498, %v9894
    %v10029 = vadd.f32 %v9499, %v9899
    %v10030 = vadd.f32 %v9500, %v9904
    %v10031 = vadd.f32 %v9501, %v9909
    %v10032 = vadd.f32 %v9502, %v9914
    %v10033 = vadd.f32 %v9503, %v9919
    %v10034 = vadd.f32 %v9504, %v9924
    %v10035 = vadd.f32 %v9505, %v9929
    %v10036 = vadd.f32 %v9506, %v9934
    %v10037 = vadd.f32 %v9507, %v9939
    %v10038 = vadd.f32 %v9508, %v9944
    %v10039 = vadd.f32 %v9509, %v9949
    %v10040 = vadd.f32 %v9510, %v9954
    %v10041 = vadd.f32 %v9511, %v9959
    %v10042 = vadd.f32 %v9512, %v9964
    %v10043 = vadd.f32 %v9513, %v9969
    %v10044 = vadd.f32 %v9514, %v9974
    %v10045 = vadd.f32 %v9515, %v9979
    %v10046 = vtanh.pop %v9982
    %v10047 = vtanh.pop %v9983
    %v10048 = vtanh.pop %v9984
    %v10049 = vtanh.pop %v9985
    %v10050 = vtanh.pop %v9986
    %v10051 = vtanh.pop %v9987
    %v10052 = vtanh.pop %v9988
    %v10053 = vtanh.pop %v9989
    %v10054 = vtanh.pop %v9990
    %v10055 = vtanh.pop %v9991
    %v10056 = vtanh.pop %v9992
    %v10057 = vtanh.pop %v9993
    %v10058 = vtanh.pop %v9994
    %v10059 = vtanh.pop %v9995
    %v10060 = vtanh.pop %v9996
    %v10061 = vtanh.pop %v9997
    %v10062 = vtanh.pop %v9998
    %v10063 = vtanh.pop %v9999
    %v10064 = vtanh.pop %v10000
    %v10065 = vtanh.pop %v10001
    %v10066 = vtanh.pop %v10002
    %v10067 = vtanh.pop %v10003
    %v10068 = vtanh.pop %v10004
    %v10069 = vtanh.pop %v10005
    %v10070 = vtanh.pop %v10006
    %v10071 = vtanh.pop %v10007
    %v10072 = vtanh.pop %v10008
    %v10073 = vtanh.pop %v10009
    %v10074 = vtanh.pop %v10010
    %v10075 = vtanh.pop %v10011
    %v10076 = vtanh.pop %v10012
    %v10077 = vtanh.pop %v10013
    %v10078 = vtanh.pop %v10014
    %v10079 = vtanh.pop %v10015
    %v10080 = vtanh.pop %v10016
    %v10081 = vtanh.pop %v10017
    %v10082 = vtanh.pop %v10018
    %v10083 = vtanh.pop %v10019
    %v10084 = vtanh.pop %v10020
    %v10085 = vtanh.pop %v10021
    %v10086 = vtanh.pop %v10022
    %v10087 = vtanh.pop %v10023
    %v10088 = vtanh.pop %v10024
    %v10089 = vtanh.pop %v10025
    %v10090 = vtanh.pop %v10026
    %v10091 = vtanh.pop %v10027
    %v10092 = vtanh.pop %v10028
    %v10093 = vtanh.pop %v10029
    %v10094 = vtanh.pop %v10030
    %v10095 = vtanh.pop %v10031
    %v10096 = vtanh.pop %v10032
    %v10097 = vtanh.pop %v10033
    %v10098 = vtanh.pop %v10034
    %v10099 = vtanh.pop %v10035
    %v10100 = vtanh.pop %v10036
    %v10101 = vtanh.pop %v10037
    %v10102 = vtanh.pop %v10038
    %v10103 = vtanh.pop %v10039
    %v10104 = vtanh.pop %v10040
    %v10105 = vtanh.pop %v10041
    %v10106 = vtanh.pop %v10042
    %v10107 = vtanh.pop %v10043
    %v10108 = vtanh.pop %v10044
    %v10109 = vtanh.pop %v10045
    %v10110 = vadd.f32 %v10046, %v10047
    %v10111 = vadd.f32 %v10110, %v10048
    %v10112 = vadd.f32 %v10111, %v10049
    %v10113 = vadd.f32 %v10112, %v10050
    %v10114 = vadd.f32 %v10113, %v10051
    %v10115 = vadd.f32 %v10114, %v10052
    %v10116 = vadd.f32 %v10115, %v10053
    %v10117 = vadd.f32 %v10116, %v10054
    %v10118 = vadd.f32 %v10117, %v10055
    %v10119 = vadd.f32 %v10118, %v10056
    %v10120 = vadd.f32 %v10119, %v10057
    %v10121 = vadd.f32 %v10120, %v10058
    %v10122 = vadd.f32 %v10121, %v10059
    %v10123 = vadd.f32 %v10122, %v10060
    %v10124 = vadd.f32 %v10123, %v10061
    %v10125 = vadd.f32 %v10124, %v10062
    %v10126 = vadd.f32 %v10125, %v10063
    %v10127 = vadd.f32 %v10126, %v10064
    %v10128 = vadd.f32 %v10127, %v10065
    %v10129 = vadd.f32 %v10128, %v10066
    %v10130 = vadd.f32 %v10129, %v10067
    %v10131 = vadd.f32 %v10130, %v10068
    %v10132 = vadd.f32 %v10131, %v10069
    %v10133 = vadd.f32 %v10132, %v10070
    %v10134 = vadd.f32 %v10133, %v10071
    %v10135 = vadd.f32 %v10134, %v10072
    %v10136 = vadd.f32 %v10135, %v10073
    %v10137 = vadd.f32 %v10136, %v10074
    %v10138 = vadd.f32 %v10137, %v10075
    %v10139 = vadd.f32 %v10138, %v10076
    %v10140 = vadd.f32 %v10139, %v10077
    %v10141 = vadd.f32 %v10140, %v10078
    %v10142 = vadd.f32 %v10141, %v10079
    %v10143 = vadd.f32 %v10142, %v10080
    %v10144 = vadd.f32 %v10143, %v10081
    %v10145 = vadd.f32 %v10144, %v10082
    %v10146 = vadd.f32 %v10145, %v10083
    %v10147 = vadd.f32 %v10146, %v10084
    %v10148 = vadd.f32 %v10147, %v10085
    %v10149 = vadd.f32 %v10148, %v10086
    %v10150 = vadd.f32 %v10149, %v10087
    %v10151 = vadd.f32 %v10150, %v10088
    %v10152 = vadd.f32 %v10151, %v10089
    %v10153 = vadd.f32 %v10152, %v10090
    %v10154 = vadd.f32 %v10153, %v10091
    %v10155 = vadd.f32 %v10154, %v10092
    %v10156 = vadd.f32 %v10155, %v10093
    %v10157 = vadd.f32 %v10156, %v10094
    %v10158 = vadd.f32 %v10157, %v10095
    %v10159 = vadd.f32 %v10158, %v10096
    %v10160 = vadd.f32 %v10159, %v10097
    %v10161 = vadd.f32 %v10160, %v10098
    %v10162 = vadd.f32 %v10161, %v10099
    %v10163 = vadd.f32 %v10162, %v10100
    %v10164 = vadd.f32 %v10163, %v10101
    %v10165 = vadd.f32 %v10164, %v10102
    %v10166 = vadd.f32 %v10165, %v10103
    %v10167 = vadd.f32 %v10166, %v10104
    %v10168 = vadd.f32 %v10167, %v10105
    %v10169 = vadd.f32 %v10168, %v10106
    %v10170 = vadd.f32 %v10169, %v10107
    %v10171 = vadd.f32 %v10170, %v10108
    %v10172 = vadd.f32 %v10171, %v10109
    %v10173 = vrot.slane %v10172, 4
    %v10174 = vadd.f32 %v10172, %v10173
    %v10175 = vrot.slane %v10174, 2
    %v10176 = vadd.f32 %v10174, %v10175
    %v10177 = vrot.slane %v10176, 1
    %v10178 = vadd.f32 %v10176, %v10177
    %v10179 = vmul.f32 %v10178, 0.001953125
    %v10180 = vmul.f32 %v10046, %v10046
    %v10181 = vmul.f32 %v10047, %v10047
    %v10182 = vmul.f32 %v10048, %v10048
    %v10183 = vmul.f32 %v10049, %v10049
    %v10184 = vmul.f32 %v10050, %v10050
    %v10185 = vmul.f32 %v10051, %v10051
    %v10186 = vmul.f32 %v10052, %v10052
    %v10187 = vmul.f32 %v10053, %v10053
    %v10188 = vmul.f32 %v10054, %v10054
    %v10189 = vmul.f32 %v10055, %v10055
    %v10190 = vmul.f32 %v10056, %v10056
    %v10191 = vmul.f32 %v10057, %v10057
    %v10192 = vmul.f32 %v10058, %v10058
    %v10193 = vmul.f32 %v10059, %v10059
    %v10194 = vmul.f32 %v10060, %v10060
    %v10195 = vmul.f32 %v10061, %v10061
    %v10196 = vmul.f32 %v10062, %v10062
    %v10197 = vmul.f32 %v10063, %v10063
    %v10198 = vmul.f32 %v10064, %v10064
    %v10199 = vmul.f32 %v10065, %v10065
    %v10200 = vmul.f32 %v10066, %v10066
    %v10201 = vmul.f32 %v10067, %v10067
    %v10202 = vmul.f32 %v10068, %v10068
    %v10203 = vmul.f32 %v10069, %v10069
    %v10204 = vmul.f32 %v10070, %v10070
    %v10205 = vmul.f32 %v10071, %v10071
    %v10206 = vmul.f32 %v10072, %v10072
    %v10207 = vmul.f32 %v10073, %v10073
    %v10208 = vmul.f32 %v10074, %v10074
    %v10209 = vmul.f32 %v10075, %v10075
    %v10210 = vmul.f32 %v10076, %v10076
    %v10211 = vmul.f32 %v10077, %v10077
    %v10212 = vmul.f32 %v10078, %v10078
    %v10213 = vmul.f32 %v10079, %v10079
    %v10214 = vmul.f32 %v10080, %v10080
    %v10215 = vmul.f32 %v10081, %v10081
    %v10216 = vmul.f32 %v10082, %v10082
    %v10217 = vmul.f32 %v10083, %v10083
    %v10218 = vmul.f32 %v10084, %v10084
    %v10219 = vmul.f32 %v10085, %v10085
    %v10220 = vmul.f32 %v10086, %v10086
    %v10221 = vmul.f32 %v10087, %v10087
    %v10222 = vmul.f32 %v10088, %v10088
    %v10223 = vmul.f32 %v10089, %v10089
    %v10224 = vmul.f32 %v10090, %v10090
    %v10225 = vmul.f32 %v10091, %v10091
    %v10226 = vmul.f32 %v10092, %v10092
    %v10227 = vmul.f32 %v10093, %v10093
    %v10228 = vmul.f32 %v10094, %v10094
    %v10229 = vmul.f32 %v10095, %v10095
    %v10230 = vmul.f32 %v10096, %v10096
    %v10231 = vmul.f32 %v10097, %v10097
    %v10232 = vmul.f32 %v10098, %v10098
    %v10233 = vmul.f32 %v10099, %v10099
    %v10234 = vmul.f32 %v10100, %v10100
    %v10235 = vmul.f32 %v10101, %v10101
    %v10236 = vmul.f32 %v10102, %v10102
    %v10237 = vmul.f32 %v10103, %v10103
    %v10238 = vmul.f32 %v10104, %v10104
    %v10239 = vmul.f32 %v10105, %v10105
    %v10240 = vmul.f32 %v10106, %v10106
    %v10241 = vmul.f32 %v10107, %v10107
    %v10242 = vmul.f32 %v10108, %v10108
    %v10243 = vmul.f32 %v10109, %v10109
    %v10244 = vadd.f32 %v10180, %v10181
    %v10245 = vadd.f32 %v10244, %v10182
    %v10246 = vadd.f32 %v10245, %v10183
    %v10247 = vadd.f32 %v10246, %v10184
    %v10248 = vadd.f32 %v10247, %v10185
    %v10249 = vadd.f32 %v10248, %v10186
    %v10250 = vadd.f32 %v10249, %v10187
    %v10251 = vadd.f32 %v10250, %v10188
    %v10252 = vadd.f32 %v10251, %v10189
    %v10253 = vadd.f32 %v10252, %v10190
    %v10254 = vadd.f32 %v10253, %v10191
    %v10255 = vadd.f32 %v10254, %v10192
    %v10256 = vadd.f32 %v10255, %v10193
    %v10257 = vadd.f32 %v10256, %v10194
    %v10258 = vadd.f32 %v10257, %v10195
    %v10259 = vadd.f32 %v10258, %v10196
    %v10260 = vadd.f32 %v10259, %v10197
    %v10261 = vadd.f32 %v10260, %v10198
    %v10262 = vadd.f32 %v10261, %v10199
    %v10263 = vadd.f32 %v10262, %v10200
    %v10264 = vadd.f32 %v10263, %v10201
    %v10265 = vadd.f32 %v10264, %v10202
    %v10266 = vadd.f32 %v10265, %v10203
    %v10267 = vadd.f32 %v10266, %v10204
    %v10268 = vadd.f32 %v10267, %v10205
    %v10269 = vadd.f32 %v10268, %v10206
    %v10270 = vadd.f32 %v10269, %v10207
    %v10271 = vadd.f32 %v10270, %v10208
    %v10272 = vadd.f32 %v10271, %v10209
    %v10273 = vadd.f32 %v10272, %v10210
    %v10274 = vadd.f32 %v10273, %v10211
    %v10275 = vadd.f32 %v10274, %v10212
    %v10276 = vadd.f32 %v10275, %v10213
    %v10277 = vadd.f32 %v10276, %v10214
    %v10278 = vadd.f32 %v10277, %v10215
    %v10279 = vadd.f32 %v10278, %v10216
    %v10280 = vadd.f32 %v10279, %v10217
    %v10281 = vadd.f32 %v10280, %v10218
    %v10282 = vadd.f32 %v10281, %v10219
    %v10283 = vadd.f32 %v10282, %v10220
    %v10284 = vadd.f32 %v10283, %v10221
    %v10285 = vadd.f32 %v10284, %v10222
    %v10286 = vadd.f32 %v10285, %v10223
    %v10287 = vadd.f32 %v10286, %v10224
    %v10288 = vadd.f32 %v10287, %v10225
    %v10289 = vadd.f32 %v10288, %v10226
    %v10290 = vadd.f32 %v10289, %v10227
    %v10291 = vadd.f32 %v10290, %v10228
    %v10292 = vadd.f32 %v10291, %v10229
    %v10293 = vadd.f32 %v10292, %v10230
    %v10294 = vadd.f32 %v10293, %v10231
    %v10295 = vadd.f32 %v10294, %v10232
    %v10296 = vadd.f32 %v10295, %v10233
    %v10297 = vadd.f32 %v10296, %v10234
    %v10298 = vadd.f32 %v10297, %v10235
    %v10299 = vadd.f32 %v10298, %v10236
    %v10300 = vadd.f32 %v10299, %v10237
    %v10301 = vadd.f32 %v10300, %v10238
    %v10302 = vadd.f32 %v10301, %v10239
    %v10303 = vadd.f32 %v10302, %v10240
    %v10304 = vadd.f32 %v10303, %v10241
    %v10305 = vadd.f32 %v10304, %v10242
    %v10306 = vadd.f32 %v10305, %v10243
    %v10307 = vrot.slane %v10306, 4
    %v10308 = vadd.f32 %v10306, %v10307
    %v10309 = vrot.slane %v10308, 2
    %v10310 = vadd.f32 %v10308, %v10309
    %v10311 = vrot.slane %v10310, 1
    %v10312 = vadd.f32 %v10310, %v10311
    %v10313 = vmul.f32 %v10312, 0.001953125
    %v10314 = vmul.f32 %v10179, %v10179
    %v10315 = vsub.f32 %v10313, %v10314
    %v10316 = vld [vmem:[%s5] sm:$0x1]
    %v10317 = vadd.f32 %v10315, 1e-05
    %v10318 = vrsqrt.pop %v10317
    %v10319 = vmul.f32 %v10316, %v10318
    %v10320 = vld [vmem:[%s6] sm:$0x1]
    %v10321 = vmul.f32 %v10179, %v10319
    %v10322 = vsub.f32 %v10320, %v10321
    %v10324 = vlaneseq
    %v10325 = vshrl.u32 %v10324, 7
    %v10326 = vsub.s32 0, %v10325
    %v10327 = vrot.slane %v10319, %v10326
    %v10329 = vmul.f32 %v10046, %v10327
    %v10330 = vmul.f32 %v10047, %v10327
    %v10331 = vmul.f32 %v10048, %v10327
    %v10332 = vmul.f32 %v10049, %v10327
    %v10333 = vmul.f32 %v10050, %v10327
    %v10334 = vmul.f32 %v10051, %v10327
    %v10335 = vmul.f32 %v10052, %v10327
    %v10336 = vmul.f32 %v10053, %v10327
    %v10337 = vmul.f32 %v10054, %v10327
    %v10338 = vmul.f32 %v10055, %v10327
    %v10339 = vmul.f32 %v10056, %v10327
    %v10340 = vmul.f32 %v10057, %v10327
    %v10341 = vmul.f32 %v10058, %v10327
    %v10342 = vmul.f32 %v10059, %v10327
    %v10343 = vmul.f32 %v10060, %v10327
    %v10344 = vmul.f32 %v10061, %v10327
    %v10345 = vmul.f32 %v10062, %v10327
    %v10346 = vmul.f32 %v10063, %v10327
    %v10347 = vmul.f32 %v10064, %v10327
    %v10348 = vmul.f32 %v10065, %v10327
    %v10349 = vmul.f32 %v10066, %v10327
    %v10350 = vmul.f32 %v10067, %v10327
    %v10351 = vmul.f32 %v10068, %v10327
    %v10352 = vmul.f32 %v10069, %v10327
    %v10353 = vmul.f32 %v10070, %v10327
    %v10354 = vmul.f32 %v10071, %v10327
    %v10355 = vmul.f32 %v10072, %v10327
    %v10356 = vmul.f32 %v10073, %v10327
    %v10357 = vmul.f32 %v10074, %v10327
    %v10358 = vmul.f32 %v10075, %v10327
    %v10359 = vmul.f32 %v10076, %v10327
    %v10360 = vmul.f32 %v10077, %v10327
    %v10361 = vmul.f32 %v10078, %v10327
    %v10362 = vmul.f32 %v10079, %v10327
    %v10363 = vmul.f32 %v10080, %v10327
    %v10364 = vmul.f32 %v10081, %v10327
    %v10365 = vmul.f32 %v10082, %v10327
    %v10366 = vmul.f32 %v10083, %v10327
    %v10367 = vmul.f32 %v10084, %v10327
    %v10368 = vmul.f32 %v10085, %v10327
    %v10369 = vmul.f32 %v10086, %v10327
    %v10370 = vmul.f32 %v10087, %v10327
    %v10371 = vmul.f32 %v10088, %v10327
    %v10372 = vmul.f32 %v10089, %v10327
    %v10373 = vmul.f32 %v10090, %v10327
    %v10374 = vmul.f32 %v10091, %v10327
    %v10375 = vmul.f32 %v10092, %v10327
    %v10376 = vmul.f32 %v10093, %v10327
    %v10377 = vmul.f32 %v10094, %v10327
    %v10378 = vmul.f32 %v10095, %v10327
    %v10379 = vmul.f32 %v10096, %v10327
    %v10380 = vmul.f32 %v10097, %v10327
    %v10381 = vmul.f32 %v10098, %v10327
    %v10382 = vmul.f32 %v10099, %v10327
    %v10383 = vmul.f32 %v10100, %v10327
    %v10384 = vmul.f32 %v10101, %v10327
    %v10385 = vmul.f32 %v10102, %v10327
    %v10386 = vmul.f32 %v10103, %v10327
    %v10387 = vmul.f32 %v10104, %v10327
    %v10388 = vmul.f32 %v10105, %v10327
    %v10389 = vmul.f32 %v10106, %v10327
    %v10390 = vmul.f32 %v10107, %v10327
    %v10391 = vmul.f32 %v10108, %v10327
    %v10392 = vmul.f32 %v10109, %v10327
    %v10394 = vlaneseq
    %v10395 = vshrl.u32 %v10394, 7
    %v10396 = vsub.s32 0, %v10395
    %v10397 = vrot.slane %v10322, %v10396
    %v10399 = vadd.f32 %v10329, %v10397
    %v10400 = vadd.f32 %v10330, %v10397
    %v10401 = vadd.f32 %v10331, %v10397
    %v10402 = vadd.f32 %v10332, %v10397
    %v10403 = vadd.f32 %v10333, %v10397
    %v10404 = vadd.f32 %v10334, %v10397
    %v10405 = vadd.f32 %v10335, %v10397
    %v10406 = vadd.f32 %v10336, %v10397
    %v10407 = vadd.f32 %v10337, %v10397
    %v10408 = vadd.f32 %v10338, %v10397
    %v10409 = vadd.f32 %v10339, %v10397
    %v10410 = vadd.f32 %v10340, %v10397
    %v10411 = vadd.f32 %v10341, %v10397
    %v10412 = vadd.f32 %v10342, %v10397
    %v10413 = vadd.f32 %v10343, %v10397
    %v10414 = vadd.f32 %v10344, %v10397
    %v10415 = vadd.f32 %v10345, %v10397
    %v10416 = vadd.f32 %v10346, %v10397
    %v10417 = vadd.f32 %v10347, %v10397
    %v10418 = vadd.f32 %v10348, %v10397
    %v10419 = vadd.f32 %v10349, %v10397
    %v10420 = vadd.f32 %v10350, %v10397
    %v10421 = vadd.f32 %v10351, %v10397
    %v10422 = vadd.f32 %v10352, %v10397
    %v10423 = vadd.f32 %v10353, %v10397
    %v10424 = vadd.f32 %v10354, %v10397
    %v10425 = vadd.f32 %v10355, %v10397
    %v10426 = vadd.f32 %v10356, %v10397
    %v10427 = vadd.f32 %v10357, %v10397
    %v10428 = vadd.f32 %v10358, %v10397
    %v10429 = vadd.f32 %v10359, %v10397
    %v10430 = vadd.f32 %v10360, %v10397
    %v10431 = vadd.f32 %v10361, %v10397
    %v10432 = vadd.f32 %v10362, %v10397
    %v10433 = vadd.f32 %v10363, %v10397
    %v10434 = vadd.f32 %v10364, %v10397
    %v10435 = vadd.f32 %v10365, %v10397
    %v10436 = vadd.f32 %v10366, %v10397
    %v10437 = vadd.f32 %v10367, %v10397
    %v10438 = vadd.f32 %v10368, %v10397
    %v10439 = vadd.f32 %v10369, %v10397
    %v10440 = vadd.f32 %v10370, %v10397
    %v10441 = vadd.f32 %v10371, %v10397
    %v10442 = vadd.f32 %v10372, %v10397
    %v10443 = vadd.f32 %v10373, %v10397
    %v10444 = vadd.f32 %v10374, %v10397
    %v10445 = vadd.f32 %v10375, %v10397
    %v10446 = vadd.f32 %v10376, %v10397
    %v10447 = vadd.f32 %v10377, %v10397
    %v10448 = vadd.f32 %v10378, %v10397
    %v10449 = vadd.f32 %v10379, %v10397
    %v10450 = vadd.f32 %v10380, %v10397
    %v10451 = vadd.f32 %v10381, %v10397
    %v10452 = vadd.f32 %v10382, %v10397
    %v10453 = vadd.f32 %v10383, %v10397
    %v10454 = vadd.f32 %v10384, %v10397
    %v10455 = vadd.f32 %v10385, %v10397
    %v10456 = vadd.f32 %v10386, %v10397
    %v10457 = vadd.f32 %v10387, %v10397
    %v10458 = vadd.f32 %v10388, %v10397
    %v10459 = vadd.f32 %v10389, %v10397
    %v10460 = vadd.f32 %v10390, %v10397
    %v10461 = vadd.f32 %v10391, %v10397
    %v10462 = vadd.f32 %v10392, %v10397
    %v10463 = vadd.f32 %v10399, %v153
    %v10464 = vadd.f32 %v10400, %v154
    %v10465 = vadd.f32 %v10401, %v155
    %v10466 = vadd.f32 %v10402, %v156
    %v10467 = vadd.f32 %v10403, %v157
    %v10468 = vadd.f32 %v10404, %v158
    %v10469 = vadd.f32 %v10405, %v159
    %v10470 = vadd.f32 %v10406, %v160
    %v10471 = vadd.f32 %v10407, %v161
    %v10472 = vadd.f32 %v10408, %v162
    %v10473 = vadd.f32 %v10409, %v163
    %v10474 = vadd.f32 %v10410, %v164
    %v10475 = vadd.f32 %v10411, %v165
    %v10476 = vadd.f32 %v10412, %v166
    %v10477 = vadd.f32 %v10413, %v167
    %v10478 = vadd.f32 %v10414, %v168
    %v10479 = vadd.f32 %v10415, %v169
    %v10480 = vadd.f32 %v10416, %v170
    %v10481 = vadd.f32 %v10417, %v171
    %v10482 = vadd.f32 %v10418, %v172
    %v10483 = vadd.f32 %v10419, %v173
    %v10484 = vadd.f32 %v10420, %v174
    %v10485 = vadd.f32 %v10421, %v175
    %v10486 = vadd.f32 %v10422, %v176
    %v10487 = vadd.f32 %v10423, %v177
    %v10488 = vadd.f32 %v10424, %v178
    %v10489 = vadd.f32 %v10425, %v179
    %v10490 = vadd.f32 %v10426, %v180
    %v10491 = vadd.f32 %v10427, %v181
    %v10492 = vadd.f32 %v10428, %v182
    %v10493 = vadd.f32 %v10429, %v183
    %v10494 = vadd.f32 %v10430, %v184
    %v10495 = vadd.f32 %v10431, %v185
    %v10496 = vadd.f32 %v10432, %v186
    %v10497 = vadd.f32 %v10433, %v187
    %v10498 = vadd.f32 %v10434, %v188
    %v10499 = vadd.f32 %v10435, %v189
    %v10500 = vadd.f32 %v10436, %v190
    %v10501 = vadd.f32 %v10437, %v191
    %v10502 = vadd.f32 %v10438, %v192
    %v10503 = vadd.f32 %v10439, %v193
    %v10504 = vadd.f32 %v10440, %v194
    %v10505 = vadd.f32 %v10441, %v195
    %v10506 = vadd.f32 %v10442, %v196
    %v10507 = vadd.f32 %v10443, %v197
    %v10508 = vadd.f32 %v10444, %v198
    %v10509 = vadd.f32 %v10445, %v199
    %v10510 = vadd.f32 %v10446, %v200
    %v10511 = vadd.f32 %v10447, %v201
    %v10512 = vadd.f32 %v10448, %v202
    %v10513 = vadd.f32 %v10449, %v203
    %v10514 = vadd.f32 %v10450, %v204
    %v10515 = vadd.f32 %v10451, %v205
    %v10516 = vadd.f32 %v10452, %v206
    %v10517 = vadd.f32 %v10453, %v207
    %v10518 = vadd.f32 %v10454, %v208
    %v10519 = vadd.f32 %v10455, %v209
    %v10520 = vadd.f32 %v10456, %v210
    %v10521 = vadd.f32 %v10457, %v211
    %v10522 = vadd.f32 %v10458, %v212
    %v10523 = vadd.f32 %v10459, %v213
    %v10524 = vadd.f32 %v10460, %v214
    %v10525 = vadd.f32 %v10461, %v215
    %v10526 = vadd.f32 %v10462, %v216
    %10527 = vst [vmem:[#allocation9] sm:$0xff] %v10463
    %10528 = vst [vmem:[#allocation9 + $0x8] sm:$0xff] %v10464
    %10529 = vst [vmem:[#allocation9 + $0x10] sm:$0xff] %v10465
    %10530 = vst [vmem:[#allocation9 + $0x18] sm:$0xff] %v10466
    %10531 = vst [vmem:[#allocation9 + $0x20] sm:$0xff] %v10467
    %10532 = vst [vmem:[#allocation9 + $0x28] sm:$0xff] %v10468
    %10533 = vst [vmem:[#allocation9 + $0x30] sm:$0xff] %v10469
    %10534 = vst [vmem:[#allocation9 + $0x38] sm:$0xff] %v10470
    %10535 = vst [vmem:[#allocation9 + $0x40] sm:$0xff] %v10471
    %10536 = vst [vmem:[#allocation9 + $0x48] sm:$0xff] %v10472
    %10537 = vst [vmem:[#allocation9 + $0x50] sm:$0xff] %v10473
    %10538 = vst [vmem:[#allocation9 + $0x58] sm:$0xff] %v10474
    %10539 = vst [vmem:[#allocation9 + $0x60] sm:$0xff] %v10475
    %10540 = vst [vmem:[#allocation9 + $0x68] sm:$0xff] %v10476
    %10541 = vst [vmem:[#allocation9 + $0x70] sm:$0xff] %v10477
    %10542 = vst [vmem:[#allocation9 + $0x78] sm:$0xff] %v10478
    %10543 = vst [vmem:[#allocation9 + $0x80] sm:$0xff] %v10479
    %10544 = vst [vmem:[#allocation9 + $0x88] sm:$0xff] %v10480
    %10545 = vst [vmem:[#allocation9 + $0x90] sm:$0xff] %v10481
    %10546 = vst [vmem:[#allocation9 + $0x98] sm:$0xff] %v10482
    %10547 = vst [vmem:[#allocation9 + $0xa0] sm:$0xff] %v10483
    %10548 = vst [vmem:[#allocation9 + $0xa8] sm:$0xff] %v10484
    %10549 = vst [vmem:[#allocation9 + $0xb0] sm:$0xff] %v10485
    %10550 = vst [vmem:[#allocation9 + $0xb8] sm:$0xff] %v10486
    %10551 = vst [vmem:[#allocation9 + $0xc0] sm:$0xff] %v10487
    %10552 = vst [vmem:[#allocation9 + $0xc8] sm:$0xff] %v10488
    %10553 = vst [vmem:[#allocation9 + $0xd0] sm:$0xff] %v10489
    %10554 = vst [vmem:[#allocation9 + $0xd8] sm:$0xff] %v10490
    %10555 = vst [vmem:[#allocation9 + $0xe0] sm:$0xff] %v10491
    %10556 = vst [vmem:[#allocation9 + $0xe8] sm:$0xff] %v10492
    %10557 = vst [vmem:[#allocation9 + $0xf0] sm:$0xff] %v10493
    %10558 = vst [vmem:[#allocation9 + $0xf8] sm:$0xff] %v10494
    %10559 = vst [vmem:[#allocation9 + $0x100] sm:$0xff] %v10495
    %10560 = vst [vmem:[#allocation9 + $0x108] sm:$0xff] %v10496
    %10561 = vst [vmem:[#allocation9 + $0x110] sm:$0xff] %v10497
    %10562 = vst [vmem:[#allocation9 + $0x118] sm:$0xff] %v10498
    %10563 = vst [vmem:[#allocation9 + $0x120] sm:$0xff] %v10499
    %10564 = vst [vmem:[#allocation9 + $0x128] sm:$0xff] %v10500
    %10565 = vst [vmem:[#allocation9 + $0x130] sm:$0xff] %v10501
    %10566 = vst [vmem:[#allocation9 + $0x138] sm:$0xff] %v10502
    %10567 = vst [vmem:[#allocation9 + $0x140] sm:$0xff] %v10503
    %10568 = vst [vmem:[#allocation9 + $0x148] sm:$0xff] %v10504
    %10569 = vst [vmem:[#allocation9 + $0x150] sm:$0xff] %v10505
    %10570 = vst [vmem:[#allocation9 + $0x158] sm:$0xff] %v10506
    %10571 = vst [vmem:[#allocation9 + $0x160] sm:$0xff] %v10507
    %10572 = vst [vmem:[#allocation9 + $0x168] sm:$0xff] %v10508
    %10573 = vst [vmem:[#allocation9 + $0x170] sm:$0xff] %v10509
    %10574 = vst [vmem:[#allocation9 + $0x178] sm:$0xff] %v10510
    %10575 = vst [vmem:[#allocation9 + $0x180] sm:$0xff] %v10511
    %10576 = vst [vmem:[#allocation9 + $0x188] sm:$0xff] %v10512
    %10577 = vst [vmem:[#allocation9 + $0x190] sm:$0xff] %v10513
    %10578 = vst [vmem:[#allocation9 + $0x198] sm:$0xff] %v10514
    %10579 = vst [vmem:[#allocation9 + $0x1a0] sm:$0xff] %v10515
    %10580 = vst [vmem:[#allocation9 + $0x1a8] sm:$0xff] %v10516
    %10581 = vst [vmem:[#allocation9 + $0x1b0] sm:$0xff] %v10517
    %10582 = vst [vmem:[#allocation9 + $0x1b8] sm:$0xff] %v10518
    %10583 = vst [vmem:[#allocation9 + $0x1c0] sm:$0xff] %v10519
    %10584 = vst [vmem:[#allocation9 + $0x1c8] sm:$0xff] %v10520
    %10585 = vst [vmem:[#allocation9 + $0x1d0] sm:$0xff] %v10521
    %10586 = vst [vmem:[#allocation9 + $0x1d8] sm:$0xff] %v10522
    %10587 = vst [vmem:[#allocation9 + $0x1e0] sm:$0xff] %v10523
    %10588 = vst [vmem:[#allocation9 + $0x1e8] sm:$0xff] %v10524
    %10589 = vst [vmem:[#allocation9 + $0x1f0] sm:$0xff] %v10525
    %10590 = vst [vmem:[#allocation9 + $0x1f8] sm:$0xff] %v10526
    // Predicated region
    $region42: #{tpu_custom_call.1} parent=1 // pred_check
      _
    $region43: #{tpu_custom_call.1} parent=1 // pred_check_branch
      %10592 = sbr.rel (0) target = $region45
    $region44: #{tpu_custom_call.1} parent=1 // pred_region
      %s10594 = ssub.s32 8192, 8192
      %10595 = vsyncadd [#allocation5], %s10594
      %s10596 = sshll.u32 [#allocation9], 4
      %s10597 = int_to_ptr.vmem [resolvable:$true] %s10596
      %10602 = dma.vmem_to_hbm [thread:$0]  %s10597, 8192, %s7, [#allocation5], 128, 128, 8
    $region45: #{tpu_custom_call.1} parent=1 // pred_fallthru
      _
    // Predicated region
    $region46: #{tpu_custom_call.1} parent=1 // pred_check
      _
    $region47: #{tpu_custom_call.1} parent=1 // pred_check_branch
      %10604 = sbr.rel (0) target = $region49
    $region48: #{tpu_custom_call.1} parent=1 // pred_region
      %10605 = dma.done [#allocation5], 8192
    $region49: #{tpu_custom_call.1} parent=1 // pred_fallthru
      _
    %10606 = vsyncpa [#allocation4], 1
    %10607 = vsyncpa [#allocation7], 1
    %10608 = vsyncpa [#allocation5], 1

</llo_original>
